<compile_context>
chip_gen: v7x
topology: tpu7x:2x2x1
jax: 0.10.0
libtpu: 0.0.40
codegen_flags: <defaults>
</compile_context>

<pallas_src>
import jax
import jax.numpy as jnp
from jax.experimental import pallas as pl
from jax.experimental.pallas import tpu as pltpu

EPS = 1e-5  # PyTorch BatchNorm default eps


# ---------------------------------------------------------------------------
# Pallas kernel: one (tm, K) x (K, N) matmul block + fused bias add
# ---------------------------------------------------------------------------
def _matmul_bias_kernel(a_ref, b_ref, bias_ref, o_ref):
    o_ref[...] = jnp.dot(a_ref[...], b_ref[...],
                         preferred_element_type=jnp.float32) + bias_ref[...]


def _round_up(x, m):
    return (x + m - 1) // m * m


def pallas_matmul_bias(a, b, bias, tm=512):
    """out = a @ b + bias.  a:(M,K), b:(K,N), bias:(N,).

    Full K and full N are single blocks (no zero padding); only M is tiled
    (padded minimally to a multiple of 8 / tm).  Operands run through the MXU
    in bf16 with f32 accumulation.
    """
    M, K = a.shape
    K2, N = b.shape
    assert K == K2
    a = a.astype(jnp.bfloat16)
    b = b.astype(jnp.bfloat16)
    bias = bias.astype(jnp.float32).reshape(1, N)

    Mp = _round_up(M, 8)
    if Mp <= tm:
        tm = Mp                      # single full-M block
    else:
        Mp = _round_up(M, tm)
    if Mp != M:
        a = jnp.pad(a, ((0, Mp - M), (0, 0)))

    out = pl.pallas_call(
        _matmul_bias_kernel,
        out_shape=jax.ShapeDtypeStruct((Mp, N), jnp.float32),
        grid_spec=pltpu.PrefetchScalarGridSpec(
            num_scalar_prefetch=0,
            grid=(Mp // tm,),
            in_specs=[
                pl.BlockSpec((tm, K), lambda i: (i, 0)),
                pl.BlockSpec((K, N), lambda i: (0, 0)),
                pl.BlockSpec((1, N), lambda i: (0, 0)),
            ],
            out_specs=pl.BlockSpec((tm, N), lambda i: (i, 0)),
        ),
        compiler_params=pltpu.CompilerParams(
            dimension_semantics=("parallel",)),
    )(a, b, bias)
    return out[:M] if Mp != M else out


# ---------------------------------------------------------------------------
# Channels-last im2col glue (trace-time loops over the small kernel window)
# ---------------------------------------------------------------------------
def im2col2d_cl(x, kh, kw, stride, pad):
    N, H, W, C = x.shape
    if pad:
        x = jnp.pad(x, ((0, 0), (pad, pad), (pad, pad), (0, 0)))
    OH = (H + 2 * pad - kh) // stride + 1
    OW = (W + 2 * pad - kw) // stride + 1
    cols = [x[:, i:i + stride * OH:stride, j:j + stride * OW:stride, :]
            for i in range(kh) for j in range(kw)]
    col = cols[0] if len(cols) == 1 else jnp.concatenate(cols, axis=-1)
    return col.reshape(N * OH * OW, kh * kw * C), OH, OW


def im2col3d_cl(x, kd, kh, kw, stride, pad):
    N, D, H, W, C = x.shape
    sd, sh, sw = stride
    pd, ph, pw = pad
    if pd or ph or pw:
        x = jnp.pad(x, ((0, 0), (pd, pd), (ph, ph), (pw, pw), (0, 0)))
    OD = (D + 2 * pd - kd) // sd + 1
    OH = (H + 2 * ph - kh) // sh + 1
    OW = (W + 2 * pw - kw) // sw + 1
    cols = [x[:, a:a + sd * OD:sd, i:i + sh * OH:sh, j:j + sw * OW:sw, :]
            for a in range(kd) for i in range(kh) for j in range(kw)]
    col = cols[0] if len(cols) == 1 else jnp.concatenate(cols, axis=-1)
    return col.reshape(N * OD * OH * OW, kd * kh * kw * C), OD, OH, OW


def conv2d_cl(x, w, b, stride, pad):
    """x: (N,H,W,C) channels-last; w: (OC,IC,KH,KW) PyTorch layout."""
    oc, ic, kh, kw = w.shape
    col, OH, OW = im2col2d_cl(x.astype(jnp.bfloat16), kh, kw, stride, pad)
    w2 = w.transpose(2, 3, 1, 0).reshape(kh * kw * ic, oc)  # tap-major, C inner
    out = pallas_matmul_bias(col, w2, b)
    return out.reshape(x.shape[0], OH, OW, oc)


def conv3d_cl(x, w, b, stride, pad):
    """x: (N,D,H,W,C) channels-last; w: (OC,IC,KD,KH,KW) PyTorch layout."""
    oc, ic, kd, kh, kw = w.shape
    col, OD, OH, OW = im2col3d_cl(x.astype(jnp.bfloat16), kd, kh, kw, stride, pad)
    w2 = w.transpose(2, 3, 4, 1, 0).reshape(kd * kh * kw * ic, oc)
    out = pallas_matmul_bias(col, w2, b)
    return out.reshape(x.shape[0], OD, OH, OW, oc)


# ---------------------------------------------------------------------------
# BatchNorm (training mode: batch statistics, biased variance) + blocks
# ---------------------------------------------------------------------------
def bn_train(x, gamma, beta):
    axes = tuple(range(x.ndim - 1))          # all dims except channel (last)
    mean = jnp.mean(x, axes, keepdims=True)
    var = jnp.mean(jnp.square(x - mean), axes, keepdims=True)
    return (x - mean) * jax.lax.rsqrt(var + EPS) * gamma + beta


def relu(x):
    return jnp.maximum(x, 0.0)


def res3d_block(p, x):
    out = conv3d_cl(x, p['w1'], p['b1'], (1, 1, 1), (1, 1, 1))
    out = relu(bn_train(out, p['g1'], p['be1']))
    out = conv3d_cl(out, p['w2'], p['b2'], (1, 1, 1), (1, 1, 1))
    out = bn_train(out, p['g2'], p['be2'])
    return relu(x + out)


def restnet_block2d(p, x):
    x1 = conv2d_cl(x, p['w0'], p['b0'], 2, 0)
    out = conv2d_cl(x1, p['w1'], p['b1'], 1, 1)
    out = relu(bn_train(out, p['g1'], p['be1']))
    out = conv2d_cl(out, p['w2'], p['b2'], 1, 1)
    out = bn_train(out, p['g2'], p['be2'])
    return relu(x1 + out)


def basic_block(p, x, stride):
    residual = x
    zeros = jnp.zeros((p['w1'].shape[0],), jnp.float32)
    out = conv2d_cl(x, p['w1'], zeros, stride, 1)           # bias=False convs
    out = relu(bn_train(out, p['g1'], p['be1']))
    out = conv2d_cl(out, p['w2'], zeros, 1, 1)
    out = bn_train(out, p['g2'], p['be2'])
    if 'wd' in p:
        residual = conv2d_cl(x, p['wd'], zeros, stride, 0)
        residual = bn_train(residual, p['gd'], p['bed'])
    return relu(out + residual)


def forward(params, x):
    # Input arrives in PyTorch NCDHW layout; go channels-last (NDHWC) once.
    h = x.transpose(0, 2, 3, 4, 1)                          # (N, 30, 28, 28, 1)
    # conv3d_1: 1x1x1 conv, 1 input channel, stride (2,1,1) -> scale + bias.
    h = (h[:, ::2] * params['c3d1_w'].reshape(1, 1, 1, 1, -1)
         + params['c3d1_b'].reshape(1, 1, 1, 1, -1))        # (N, 15, 28, 28, 8)
    h = relu(bn_train(h, params['c3d1_g'], params['c3d1_be']))
    h = res3d_block(params['l3_3d'], h)
    # conv3d_2 / layer2_3d
    h = conv3d_cl(h, params['c3d2_w'], params['c3d2_b'], (2, 1, 1), (0, 0, 0))
    h = relu(bn_train(h, params['c3d2_g'], params['c3d2_be']))
    h = res3d_block(params['l2_3d'], h)                     # (N, 7, 28, 28, 16)
    # conv3d_3 / layer1_3d
    h = conv3d_cl(h, params['c3d3_w'], params['c3d3_b'], (2, 1, 1), (0, 0, 0))
    h = relu(bn_train(h, params['c3d3_g'], params['c3d3_be']))
    h = res3d_block(params['l1_3d'], h)                     # (N, 3, 28, 28, 32)
    # PyTorch reshape(N,-1,28,28) on NCDHW flattens (C, D) -> 96 channels,
    # ordered c*3+d.  In channels-last that is transpose D behind C.
    n = h.shape[0]
    h2 = h.transpose(0, 2, 3, 4, 1).reshape(n, 28, 28, 96)  # NHWC
    # layer1 (RestNetBasicBlock 96 -> 128, spatial 28 -> 14)
    h2 = restnet_block2d(params['layer1'], h2)              # (N, 14, 14, 128)
    # layer2: 3 BasicBlocks, first strided with downsample (14 -> 7)
    h2 = basic_block(params['l2b0'], h2, 2)
    h2 = basic_block(params['l2b1'], h2, 1)
    h2 = basic_block(params['l2b2'], h2, 1)
    # adaptive avg-pool to 1x1, then fc3 (Linear 128 -> 16)
    pooled = jnp.mean(h2, axis=(1, 2))                      # (N, 128)
    out = pooled @ params['fc3_w'].T + params['fc3_b']      # tiny: plain jnp
    return out, out


# ---------------------------------------------------------------------------
# Deterministic synthetic parameter initialization (shapes from __init__)
# ---------------------------------------------------------------------------
class KeyGen:
    def __init__(self, seed):
        self.key = jax.random.PRNGKey(seed)

    def __call__(self):
        self.key, sub = jax.random.split(self.key)
        return sub


def init_params(seed=1):
    kg = KeyGen(seed)

    def conv2d(oc, ic, k):
        n = k * k * oc                        # PyTorch custom init in __init__
        w = jax.random.normal(kg(), (oc, ic, k, k), jnp.float32) * (2.0 / n) ** 0.5
        b = 0.01 * jax.random.normal(kg(), (oc,), jnp.float32)
        return w, b

    def conv3d(oc, ic, kd, kh, kw):
        fan = ic * kd * kh * kw
        w = jax.random.normal(kg(), (oc, ic, kd, kh, kw), jnp.float32) * (2.0 / fan) ** 0.5
        b = 0.01 * jax.random.normal(kg(), (oc,), jnp.float32)
        return w, b

    def bn(c):
        return jnp.ones((c,), jnp.float32), jnp.zeros((c,), jnp.float32)

    def res3d(c):
        w1, b1 = conv3d(c, c, 3, 3, 3)
        g1, be1 = bn(c)
        w2, b2 = conv3d(c, c, 3, 3, 3)
        g2, be2 = bn(c)
        return dict(w1=w1, b1=b1, g1=g1, be1=be1,
                    w2=w2, b2=b2, g2=g2, be2=be2)

    def basicblock(cin, cout, downsample):
        d = {}
        d['w1'], _ = conv2d(cout, cin, 3)     # conv3x3: bias=False
        d['g1'], d['be1'] = bn(cout)
        d['w2'], _ = conv2d(cout, cout, 3)
        d['g2'], d['be2'] = bn(cout)
        if downsample:
            d['wd'], _ = conv2d(cout, cin, 1)  # downsample conv: bias=False
            d['gd'], d['bed'] = bn(cout)
        return d

    p = {}
    p['c3d1_w'], p['c3d1_b'] = conv3d(8, 1, 1, 1, 1)
    p['c3d1_g'], p['c3d1_be'] = bn(8)
    p['c3d2_w'], p['c3d2_b'] = conv3d(16, 8, 3, 1, 1)
    p['c3d2_g'], p['c3d2_be'] = bn(16)
    p['c3d3_w'], p['c3d3_b'] = conv3d(32, 16, 3, 1, 1)
    p['c3d3_g'], p['c3d3_be'] = bn(32)
    p['l3_3d'] = res3d(8)
    p['l2_3d'] = res3d(16)
    p['l1_3d'] = res3d(32)

    w0, b0 = conv2d(128, 96, 1)
    w1, b1 = conv2d(128, 128, 3)
    g1, be1 = bn(128)
    w2, b2 = conv2d(128, 128, 3)
    g2, be2 = bn(128)
    p['layer1'] = dict(w0=w0, b0=b0, w1=w1, b1=b1, g1=g1, be1=be1,
                       w2=w2, b2=b2, g2=g2, be2=be2)

    p['l2b0'] = basicblock(128, 128, True)
    p['l2b1'] = basicblock(128, 128, False)
    p['l2b2'] = basicblock(128, 128, False)

    p['fc3_w'] = jax.random.normal(kg(), (16, 128), jnp.float32) * (1.0 / 128) ** 0.5
    p['fc3_b'] = 0.01 * jax.random.normal(kg(), (16,), jnp.float32)
    return p


# ---------------------------------------------------------------------------
if __name__ == "__main__":
    params = init_params(seed=1)
    # Input shape forced by the architecture: (N, 1, 30, 28, 28).
    x = jax.random.normal(jax.random.PRNGKey(0), (2, 1, 30, 28, 28), jnp.float32)
    out, out_dup = jax.jit(forward)(params, x)
    jax.block_until_ready(out)
    assert out.shape == (2, 16) and out_dup.shape == (2, 16)
    assert bool(jnp.all(jnp.isfinite(out)))
    print("KERNEL_OK")
</pallas_src>

<mosaic_0001>
module attributes {stable_mosaic.version = 11 : i64} {
  func.func @_matmul_bias_kernel(%arg0: i32, %arg1: memref<512x216xbf16, #tpu.memory_space<vmem>>, %arg2: memref<216x8xbf16, #tpu.memory_space<vmem>>, %arg3: memref<1x8xf32, #tpu.memory_space<vmem>>, %arg4: memref<512x8xf32, #tpu.memory_space<vmem>>) attributes {dimension_semantics = [#tpu.dimension_semantics<parallel>], iteration_bounds = array<i64: 46>, scalar_prefetch = 0 : i64, scratch_operands = 0 : i64, tpu.core_type = #tpu.core_type<tc>, window_params = [{transform_indices = @transform_0, window_bounds = array<i64: 512, 216>}, {pipeline_mode = #tpu.pipeline_mode<synchronous>, transform_indices = @transform_1, window_bounds = array<i64: 216, 8>}, {pipeline_mode = #tpu.pipeline_mode<synchronous>, transform_indices = @transform_2, window_bounds = array<i64: 1, 8>}, {transform_indices = @transform_3, window_bounds = array<i64: 512, 8>}]} {
    %c0 = arith.constant 0 : index
    %c0_0 = arith.constant 0 : index
    %0 = vector.load %arg1[%c0, %c0_0] : memref<512x216xbf16, #tpu.memory_space<vmem>>, vector<512x216xbf16>
    %c0_1 = arith.constant 0 : index
    %c0_2 = arith.constant 0 : index
    %1 = vector.load %arg2[%c0_1, %c0_2] : memref<216x8xbf16, #tpu.memory_space<vmem>>, vector<216x8xbf16>
    %cst = arith.constant dense<0.000000e+00> : vector<512x8xf32>
    %2 = tpu.matmul %0, %1, %cst {dimension_numbers = #tpu.dot_dimension_numbers<[1], [0], [0], [1], [0, 0, 1, 1], [], []>} : vector<512x216xbf16>, vector<216x8xbf16>, vector<512x8xf32> -> vector<512x8xf32>
    %c0_3 = arith.constant 0 : index
    %c0_4 = arith.constant 0 : index
    %3 = vector.load %arg3[%c0_3, %c0_4] : memref<1x8xf32, #tpu.memory_space<vmem>>, vector<1x8xf32>
    %4 = vector.broadcast %3 : vector<1x8xf32> to vector<512x8xf32>
    %5 = arith.addf %2, %4 : vector<512x8xf32>
    %c0_5 = arith.constant 0 : index
    %c0_6 = arith.constant 0 : index
    %6 = vector.load %arg4[%c0_5, %c0_6] : memref<512x8xf32, #tpu.memory_space<vmem>>, vector<512x8xf32>
    tpu.vector_store %arg4[%c0_5, %c0_6], %5 {strides = array<i32>} : memref<512x8xf32, #tpu.memory_space<vmem>>, vector<512x8xf32>,
    return
  }
  func.func @transform_0(%arg0: i32) -> (i32, i32) {
    %c0_i32 = arith.constant 0 : i32
    %c0_i32_0 = arith.constant 0 : i32
    return %arg0, %c0_i32 : i32, i32
  }
  func.func @transform_1(%arg0: i32) -> (i32, i32) {
    %c0_i32 = arith.constant 0 : i32
    %c0_i32_0 = arith.constant 0 : i32
    %c0_i32_1 = arith.constant 0 : i32
    return %c0_i32, %c0_i32_0 : i32, i32
  }
  func.func @transform_2(%arg0: i32) -> (i32, i32) {
    %c0_i32 = arith.constant 0 : i32
    %c0_i32_0 = arith.constant 0 : i32
    %c0_i32_1 = arith.constant 0 : i32
    return %c0_i32, %c0_i32_0 : i32, i32
  }
  func.func @transform_3(%arg0: i32) -> (i32, i32) {
    %c0_i32 = arith.constant 0 : i32
    %c0_i32_0 = arith.constant 0 : i32
    return %arg0, %c0_i32 : i32, i32
  }
}

module attributes {stable_mosaic.version = 11 : i64} {
  func.func @_matmul_bias_kernel(%arg0: i32, %arg1: memref<512x24xbf16, #tpu.memory_space<vmem>>, %arg2: memref<24x16xbf16, #tpu.memory_space<vmem>>, %arg3: memref<1x16xf32, #tpu.memory_space<vmem>>, %arg4: memref<512x16xf32, #tpu.memory_space<vmem>>) attributes {dimension_semantics = [#tpu.dimension_semantics<parallel>], iteration_bounds = array<i64: 22>, scalar_prefetch = 0 : i64, scratch_operands = 0 : i64, tpu.core_type = #tpu.core_type<tc>, window_params = [{transform_indices = @transform_0, window_bounds = array<i64: 512, 24>}, {pipeline_mode = #tpu.pipeline_mode<synchronous>, transform_indices = @transform_1, window_bounds = array<i64: 24, 16>}, {pipeline_mode = #tpu.pipeline_mode<synchronous>, transform_indices = @transform_2, window_bounds = array<i64: 1, 16>}, {transform_indices = @transform_3, window_bounds = array<i64: 512, 16>}]} {
    %c0 = arith.constant 0 : index
    %c0_0 = arith.constant 0 : index
    %0 = vector.load %arg1[%c0, %c0_0] : memref<512x24xbf16, #tpu.memory_space<vmem>>, vector<512x24xbf16>
    %c0_1 = arith.constant 0 : index
    %c0_2 = arith.constant 0 : index
    %1 = vector.load %arg2[%c0_1, %c0_2] : memref<24x16xbf16, #tpu.memory_space<vmem>>, vector<24x16xbf16>
    %cst = arith.constant dense<0.000000e+00> : vector<512x16xf32>
    %2 = tpu.matmul %0, %1, %cst {dimension_numbers = #tpu.dot_dimension_numbers<[1], [0], [0], [1], [0, 0, 1, 1], [], []>} : vector<512x24xbf16>, vector<24x16xbf16>, vector<512x16xf32> -> vector<512x16xf32>
    %c0_3 = arith.constant 0 : index
    %c0_4 = arith.constant 0 : index
    %3 = vector.load %arg3[%c0_3, %c0_4] : memref<1x16xf32, #tpu.memory_space<vmem>>, vector<1x16xf32>
    %4 = vector.broadcast %3 : vector<1x16xf32> to vector<512x16xf32>
    %5 = arith.addf %2, %4 : vector<512x16xf32>
    %c0_5 = arith.constant 0 : index
    %c0_6 = arith.constant 0 : index
    %6 = vector.load %arg4[%c0_5, %c0_6] : memref<512x16xf32, #tpu.memory_space<vmem>>, vector<512x16xf32>
    tpu.vector_store %arg4[%c0_5, %c0_6], %5 {strides = array<i32>} : memref<512x16xf32, #tpu.memory_space<vmem>>, vector<512x16xf32>,
    return
  }
  func.func @transform_0(%arg0: i32) -> (i32, i32) {
    %c0_i32 = arith.constant 0 : i32
    %c0_i32_0 = arith.constant 0 : i32
    return %arg0, %c0_i32 : i32, i32
  }
  func.func @transform_1(%arg0: i32) -> (i32, i32) {
    %c0_i32 = arith.constant 0 : i32
    %c0_i32_0 = arith.constant 0 : i32
    %c0_i32_1 = arith.constant 0 : i32
    return %c0_i32, %c0_i32_0 : i32, i32
  }
  func.func @transform_2(%arg0: i32) -> (i32, i32) {
    %c0_i32 = arith.constant 0 : i32
    %c0_i32_0 = arith.constant 0 : i32
    %c0_i32_1 = arith.constant 0 : i32
    return %c0_i32, %c0_i32_0 : i32, i32
  }
  func.func @transform_3(%arg0: i32) -> (i32, i32) {
    %c0_i32 = arith.constant 0 : i32
    %c0_i32_0 = arith.constant 0 : i32
    return %arg0, %c0_i32 : i32, i32
  }
}

module attributes {stable_mosaic.version = 11 : i64} {
  func.func @_matmul_bias_kernel(%arg0: i32, %arg1: memref<512x432xbf16, #tpu.memory_space<vmem>>, %arg2: memref<432x16xbf16, #tpu.memory_space<vmem>>, %arg3: memref<1x16xf32, #tpu.memory_space<vmem>>, %arg4: memref<512x16xf32, #tpu.memory_space<vmem>>) attributes {dimension_semantics = [#tpu.dimension_semantics<parallel>], iteration_bounds = array<i64: 22>, scalar_prefetch = 0 : i64, scratch_operands = 0 : i64, tpu.core_type = #tpu.core_type<tc>, window_params = [{transform_indices = @transform_0, window_bounds = array<i64: 512, 432>}, {pipeline_mode = #tpu.pipeline_mode<synchronous>, transform_indices = @transform_1, window_bounds = array<i64: 432, 16>}, {pipeline_mode = #tpu.pipeline_mode<synchronous>, transform_indices = @transform_2, window_bounds = array<i64: 1, 16>}, {transform_indices = @transform_3, window_bounds = array<i64: 512, 16>}]} {
    %c0 = arith.constant 0 : index
    %c0_0 = arith.constant 0 : index
    %0 = vector.load %arg1[%c0, %c0_0] : memref<512x432xbf16, #tpu.memory_space<vmem>>, vector<512x432xbf16>
    %c0_1 = arith.constant 0 : index
    %c0_2 = arith.constant 0 : index
    %1 = vector.load %arg2[%c0_1, %c0_2] : memref<432x16xbf16, #tpu.memory_space<vmem>>, vector<432x16xbf16>
    %cst = arith.constant dense<0.000000e+00> : vector<512x16xf32>
    %2 = tpu.matmul %0, %1, %cst {dimension_numbers = #tpu.dot_dimension_numbers<[1], [0], [0], [1], [0, 0, 1, 1], [], []>} : vector<512x432xbf16>, vector<432x16xbf16>, vector<512x16xf32> -> vector<512x16xf32>
    %c0_3 = arith.constant 0 : index
    %c0_4 = arith.constant 0 : index
    %3 = vector.load %arg3[%c0_3, %c0_4] : memref<1x16xf32, #tpu.memory_space<vmem>>, vector<1x16xf32>
    %4 = vector.broadcast %3 : vector<1x16xf32> to vector<512x16xf32>
    %5 = arith.addf %2, %4 : vector<512x16xf32>
    %c0_5 = arith.constant 0 : index
    %c0_6 = arith.constant 0 : index
    %6 = vector.load %arg4[%c0_5, %c0_6] : memref<512x16xf32, #tpu.memory_space<vmem>>, vector<512x16xf32>
    tpu.vector_store %arg4[%c0_5, %c0_6], %5 {strides = array<i32>} : memref<512x16xf32, #tpu.memory_space<vmem>>, vector<512x16xf32>,
    return
  }
  func.func @transform_0(%arg0: i32) -> (i32, i32) {
    %c0_i32 = arith.constant 0 : i32
    %c0_i32_0 = arith.constant 0 : i32
    return %arg0, %c0_i32 : i32, i32
  }
  func.func @transform_1(%arg0: i32) -> (i32, i32) {
    %c0_i32 = arith.constant 0 : i32
    %c0_i32_0 = arith.constant 0 : i32
    %c0_i32_1 = arith.constant 0 : i32
    return %c0_i32, %c0_i32_0 : i32, i32
  }
  func.func @transform_2(%arg0: i32) -> (i32, i32) {
    %c0_i32 = arith.constant 0 : i32
    %c0_i32_0 = arith.constant 0 : i32
    %c0_i32_1 = arith.constant 0 : i32
    return %c0_i32, %c0_i32_0 : i32, i32
  }
  func.func @transform_3(%arg0: i32) -> (i32, i32) {
    %c0_i32 = arith.constant 0 : i32
    %c0_i32_0 = arith.constant 0 : i32
    return %arg0, %c0_i32 : i32, i32
  }
}

module attributes {stable_mosaic.version = 11 : i64} {
  func.func @_matmul_bias_kernel(%arg0: i32, %arg1: memref<512x48xbf16, #tpu.memory_space<vmem>>, %arg2: memref<48x32xbf16, #tpu.memory_space<vmem>>, %arg3: memref<1x32xf32, #tpu.memory_space<vmem>>, %arg4: memref<512x32xf32, #tpu.memory_space<vmem>>) attributes {dimension_semantics = [#tpu.dimension_semantics<parallel>], iteration_bounds = array<i64: 10>, scalar_prefetch = 0 : i64, scratch_operands = 0 : i64, tpu.core_type = #tpu.core_type<tc>, window_params = [{transform_indices = @transform_0, window_bounds = array<i64: 512, 48>}, {pipeline_mode = #tpu.pipeline_mode<synchronous>, transform_indices = @transform_1, window_bounds = array<i64: 48, 32>}, {pipeline_mode = #tpu.pipeline_mode<synchronous>, transform_indices = @transform_2, window_bounds = array<i64: 1, 32>}, {transform_indices = @transform_3, window_bounds = array<i64: 512, 32>}]} {
    %c0 = arith.constant 0 : index
    %c0_0 = arith.constant 0 : index
    %0 = vector.load %arg1[%c0, %c0_0] : memref<512x48xbf16, #tpu.memory_space<vmem>>, vector<512x48xbf16>
    %c0_1 = arith.constant 0 : index
    %c0_2 = arith.constant 0 : index
    %1 = vector.load %arg2[%c0_1, %c0_2] : memref<48x32xbf16, #tpu.memory_space<vmem>>, vector<48x32xbf16>
    %cst = arith.constant dense<0.000000e+00> : vector<512x32xf32>
    %2 = tpu.matmul %0, %1, %cst {dimension_numbers = #tpu.dot_dimension_numbers<[1], [0], [0], [1], [0, 0, 1, 1], [], []>} : vector<512x48xbf16>, vector<48x32xbf16>, vector<512x32xf32> -> vector<512x32xf32>
    %c0_3 = arith.constant 0 : index
    %c0_4 = arith.constant 0 : index
    %3 = vector.load %arg3[%c0_3, %c0_4] : memref<1x32xf32, #tpu.memory_space<vmem>>, vector<1x32xf32>
    %4 = vector.broadcast %3 : vector<1x32xf32> to vector<512x32xf32>
    %5 = arith.addf %2, %4 : vector<512x32xf32>
    %c0_5 = arith.constant 0 : index
    %c0_6 = arith.constant 0 : index
    %6 = vector.load %arg4[%c0_5, %c0_6] : memref<512x32xf32, #tpu.memory_space<vmem>>, vector<512x32xf32>
    tpu.vector_store %arg4[%c0_5, %c0_6], %5 {strides = array<i32>} : memref<512x32xf32, #tpu.memory_space<vmem>>, vector<512x32xf32>,
    return
  }
  func.func @transform_0(%arg0: i32) -> (i32, i32) {
    %c0_i32 = arith.constant 0 : i32
    %c0_i32_0 = arith.constant 0 : i32
    return %arg0, %c0_i32 : i32, i32
  }
  func.func @transform_1(%arg0: i32) -> (i32, i32) {
    %c0_i32 = arith.constant 0 : i32
    %c0_i32_0 = arith.constant 0 : i32
    %c0_i32_1 = arith.constant 0 : i32
    return %c0_i32, %c0_i32_0 : i32, i32
  }
  func.func @transform_2(%arg0: i32) -> (i32, i32) {
    %c0_i32 = arith.constant 0 : i32
    %c0_i32_0 = arith.constant 0 : i32
    %c0_i32_1 = arith.constant 0 : i32
    return %c0_i32, %c0_i32_0 : i32, i32
  }
  func.func @transform_3(%arg0: i32) -> (i32, i32) {
    %c0_i32 = arith.constant 0 : i32
    %c0_i32_0 = arith.constant 0 : i32
    return %arg0, %c0_i32 : i32, i32
  }
}

module attributes {stable_mosaic.version = 11 : i64} {
  func.func @_matmul_bias_kernel(%arg0: i32, %arg1: memref<512x864xbf16, #tpu.memory_space<vmem>>, %arg2: memref<864x32xbf16, #tpu.memory_space<vmem>>, %arg3: memref<1x32xf32, #tpu.memory_space<vmem>>, %arg4: memref<512x32xf32, #tpu.memory_space<vmem>>) attributes {dimension_semantics = [#tpu.dimension_semantics<parallel>], iteration_bounds = array<i64: 10>, scalar_prefetch = 0 : i64, scratch_operands = 0 : i64, tpu.core_type = #tpu.core_type<tc>, window_params = [{transform_indices = @transform_0, window_bounds = array<i64: 512, 864>}, {pipeline_mode = #tpu.pipeline_mode<synchronous>, transform_indices = @transform_1, window_bounds = array<i64: 864, 32>}, {pipeline_mode = #tpu.pipeline_mode<synchronous>, transform_indices = @transform_2, window_bounds = array<i64: 1, 32>}, {transform_indices = @transform_3, window_bounds = array<i64: 512, 32>}]} {
    %c0 = arith.constant 0 : index
    %c0_0 = arith.constant 0 : index
    %0 = vector.load %arg1[%c0, %c0_0] : memref<512x864xbf16, #tpu.memory_space<vmem>>, vector<512x864xbf16>
    %c0_1 = arith.constant 0 : index
    %c0_2 = arith.constant 0 : index
    %1 = vector.load %arg2[%c0_1, %c0_2] : memref<864x32xbf16, #tpu.memory_space<vmem>>, vector<864x32xbf16>
    %cst = arith.constant dense<0.000000e+00> : vector<512x32xf32>
    %2 = tpu.matmul %0, %1, %cst {dimension_numbers = #tpu.dot_dimension_numbers<[1], [0], [0], [1], [0, 0, 1, 1], [], []>} : vector<512x864xbf16>, vector<864x32xbf16>, vector<512x32xf32> -> vector<512x32xf32>
    %c0_3 = arith.constant 0 : index
    %c0_4 = arith.constant 0 : index
    %3 = vector.load %arg3[%c0_3, %c0_4] : memref<1x32xf32, #tpu.memory_space<vmem>>, vector<1x32xf32>
    %4 = vector.broadcast %3 : vector<1x32xf32> to vector<512x32xf32>
    %5 = arith.addf %2, %4 : vector<512x32xf32>
    %c0_5 = arith.constant 0 : index
    %c0_6 = arith.constant 0 : index
    %6 = vector.load %arg4[%c0_5, %c0_6] : memref<512x32xf32, #tpu.memory_space<vmem>>, vector<512x32xf32>
    tpu.vector_store %arg4[%c0_5, %c0_6], %5 {strides = array<i32>} : memref<512x32xf32, #tpu.memory_space<vmem>>, vector<512x32xf32>,
    return
  }
  func.func @transform_0(%arg0: i32) -> (i32, i32) {
    %c0_i32 = arith.constant 0 : i32
    %c0_i32_0 = arith.constant 0 : i32
    return %arg0, %c0_i32 : i32, i32
  }
  func.func @transform_1(%arg0: i32) -> (i32, i32) {
    %c0_i32 = arith.constant 0 : i32
    %c0_i32_0 = arith.constant 0 : i32
    %c0_i32_1 = arith.constant 0 : i32
    return %c0_i32, %c0_i32_0 : i32, i32
  }
  func.func @transform_2(%arg0: i32) -> (i32, i32) {
    %c0_i32 = arith.constant 0 : i32
    %c0_i32_0 = arith.constant 0 : i32
    %c0_i32_1 = arith.constant 0 : i32
    return %c0_i32, %c0_i32_0 : i32, i32
  }
  func.func @transform_3(%arg0: i32) -> (i32, i32) {
    %c0_i32 = arith.constant 0 : i32
    %c0_i32_0 = arith.constant 0 : i32
    return %arg0, %c0_i32 : i32, i32
  }
}

module attributes {stable_mosaic.version = 11 : i64} {
  func.func @_matmul_bias_kernel(%arg0: i32, %arg1: memref<392x96xbf16, #tpu.memory_space<vmem>>, %arg2: memref<96x128xbf16, #tpu.memory_space<vmem>>, %arg3: memref<1x128xf32, #tpu.memory_space<vmem>>, %arg4: memref<392x128xf32, #tpu.memory_space<vmem>>) attributes {dimension_semantics = [#tpu.dimension_semantics<parallel>], iteration_bounds = array<i64: 1>, scalar_prefetch = 0 : i64, scratch_operands = 0 : i64, tpu.core_type = #tpu.core_type<tc>, window_params = [{transform_indices = @transform_0, window_bounds = array<i64: 392, 96>}, {pipeline_mode = #tpu.pipeline_mode<synchronous>, transform_indices = @transform_1, window_bounds = array<i64: 96, 128>}, {pipeline_mode = #tpu.pipeline_mode<synchronous>, transform_indices = @transform_2, window_bounds = array<i64: 1, 128>}, {transform_indices = @transform_3, window_bounds = array<i64: 392, 128>}]} {
    %c0 = arith.constant 0 : index
    %c0_0 = arith.constant 0 : index
    %0 = vector.load %arg1[%c0, %c0_0] : memref<392x96xbf16, #tpu.memory_space<vmem>>, vector<392x96xbf16>
    %c0_1 = arith.constant 0 : index
    %c0_2 = arith.constant 0 : index
    %1 = vector.load %arg2[%c0_1, %c0_2] : memref<96x128xbf16, #tpu.memory_space<vmem>>, vector<96x128xbf16>
    %cst = arith.constant dense<0.000000e+00> : vector<392x128xf32>
    %2 = tpu.matmul %0, %1, %cst {dimension_numbers = #tpu.dot_dimension_numbers<[1], [0], [0], [1], [0, 0, 1, 1], [], []>} : vector<392x96xbf16>, vector<96x128xbf16>, vector<392x128xf32> -> vector<392x128xf32>
    %c0_3 = arith.constant 0 : index
    %c0_4 = arith.constant 0 : index
    %3 = vector.load %arg3[%c0_3, %c0_4] : memref<1x128xf32, #tpu.memory_space<vmem>>, vector<1x128xf32>
    %4 = vector.broadcast %3 : vector<1x128xf32> to vector<392x128xf32>
    %5 = arith.addf %2, %4 : vector<392x128xf32>
    %c0_5 = arith.constant 0 : index
    %c0_6 = arith.constant 0 : index
    %6 = vector.load %arg4[%c0_5, %c0_6] : memref<392x128xf32, #tpu.memory_space<vmem>>, vector<392x128xf32>
    tpu.vector_store %arg4[%c0_5, %c0_6], %5 {strides = array<i32>} : memref<392x128xf32, #tpu.memory_space<vmem>>, vector<392x128xf32>,
    return
  }
  func.func @transform_0(%arg0: i32) -> (i32, i32) {
    %c0_i32 = arith.constant 0 : i32
    %c0_i32_0 = arith.constant 0 : i32
    return %arg0, %c0_i32 : i32, i32
  }
  func.func @transform_1(%arg0: i32) -> (i32, i32) {
    %c0_i32 = arith.constant 0 : i32
    %c0_i32_0 = arith.constant 0 : i32
    %c0_i32_1 = arith.constant 0 : i32
    return %c0_i32, %c0_i32_0 : i32, i32
  }
  func.func @transform_2(%arg0: i32) -> (i32, i32) {
    %c0_i32 = arith.constant 0 : i32
    %c0_i32_0 = arith.constant 0 : i32
    %c0_i32_1 = arith.constant 0 : i32
    return %c0_i32, %c0_i32_0 : i32, i32
  }
  func.func @transform_3(%arg0: i32) -> (i32, i32) {
    %c0_i32 = arith.constant 0 : i32
    %c0_i32_0 = arith.constant 0 : i32
    return %arg0, %c0_i32 : i32, i32
  }
}

module attributes {stable_mosaic.version = 11 : i64} {
  func.func @_matmul_bias_kernel(%arg0: i32, %arg1: memref<392x1152xbf16, #tpu.memory_space<vmem>>, %arg2: memref<1152x128xbf16, #tpu.memory_space<vmem>>, %arg3: memref<1x128xf32, #tpu.memory_space<vmem>>, %arg4: memref<392x128xf32, #tpu.memory_space<vmem>>) attributes {dimension_semantics = [#tpu.dimension_semantics<parallel>], iteration_bounds = array<i64: 1>, scalar_prefetch = 0 : i64, scratch_operands = 0 : i64, tpu.core_type = #tpu.core_type<tc>, window_params = [{transform_indices = @transform_0, window_bounds = array<i64: 392, 1152>}, {pipeline_mode = #tpu.pipeline_mode<synchronous>, transform_indices = @transform_1, window_bounds = array<i64: 1152, 128>}, {pipeline_mode = #tpu.pipeline_mode<synchronous>, transform_indices = @transform_2, window_bounds = array<i64: 1, 128>}, {transform_indices = @transform_3, window_bounds = array<i64: 392, 128>}]} {
    %c0 = arith.constant 0 : index
    %c0_0 = arith.constant 0 : index
    %0 = vector.load %arg1[%c0, %c0_0] : memref<392x1152xbf16, #tpu.memory_space<vmem>>, vector<392x1152xbf16>
    %c0_1 = arith.constant 0 : index
    %c0_2 = arith.constant 0 : index
    %1 = vector.load %arg2[%c0_1, %c0_2] : memref<1152x128xbf16, #tpu.memory_space<vmem>>, vector<1152x128xbf16>
    %cst = arith.constant dense<0.000000e+00> : vector<392x128xf32>
    %2 = tpu.matmul %0, %1, %cst {dimension_numbers = #tpu.dot_dimension_numbers<[1], [0], [0], [1], [0, 0, 1, 1], [], []>} : vector<392x1152xbf16>, vector<1152x128xbf16>, vector<392x128xf32> -> vector<392x128xf32>
    %c0_3 = arith.constant 0 : index
    %c0_4 = arith.constant 0 : index
    %3 = vector.load %arg3[%c0_3, %c0_4] : memref<1x128xf32, #tpu.memory_space<vmem>>, vector<1x128xf32>
    %4 = vector.broadcast %3 : vector<1x128xf32> to vector<392x128xf32>
    %5 = arith.addf %2, %4 : vector<392x128xf32>
    %c0_5 = arith.constant 0 : index
    %c0_6 = arith.constant 0 : index
    %6 = vector.load %arg4[%c0_5, %c0_6] : memref<392x128xf32, #tpu.memory_space<vmem>>, vector<392x128xf32>
    tpu.vector_store %arg4[%c0_5, %c0_6], %5 {strides = array<i32>} : memref<392x128xf32, #tpu.memory_space<vmem>>, vector<392x128xf32>,
    return
  }
  func.func @transform_0(%arg0: i32) -> (i32, i32) {
    %c0_i32 = arith.constant 0 : i32
    %c0_i32_0 = arith.constant 0 : i32
    return %arg0, %c0_i32 : i32, i32
  }
  func.func @transform_1(%arg0: i32) -> (i32, i32) {
    %c0_i32 = arith.constant 0 : i32
    %c0_i32_0 = arith.constant 0 : i32
    %c0_i32_1 = arith.constant 0 : i32
    return %c0_i32, %c0_i32_0 : i32, i32
  }
  func.func @transform_2(%arg0: i32) -> (i32, i32) {
    %c0_i32 = arith.constant 0 : i32
    %c0_i32_0 = arith.constant 0 : i32
    %c0_i32_1 = arith.constant 0 : i32
    return %c0_i32, %c0_i32_0 : i32, i32
  }
  func.func @transform_3(%arg0: i32) -> (i32, i32) {
    %c0_i32 = arith.constant 0 : i32
    %c0_i32_0 = arith.constant 0 : i32
    return %arg0, %c0_i32 : i32, i32
  }
}

module attributes {stable_mosaic.version = 11 : i64} {
  func.func @_matmul_bias_kernel(%arg0: i32, %arg1: memref<104x1152xbf16, #tpu.memory_space<vmem>>, %arg2: memref<1152x128xbf16, #tpu.memory_space<vmem>>, %arg3: memref<1x128xf32, #tpu.memory_space<vmem>>, %arg4: memref<104x128xf32, #tpu.memory_space<vmem>>) attributes {dimension_semantics = [#tpu.dimension_semantics<parallel>], iteration_bounds = array<i64: 1>, scalar_prefetch = 0 : i64, scratch_operands = 0 : i64, tpu.core_type = #tpu.core_type<tc>, window_params = [{transform_indices = @transform_0, window_bounds = array<i64: 104, 1152>}, {pipeline_mode = #tpu.pipeline_mode<synchronous>, transform_indices = @transform_1, window_bounds = array<i64: 1152, 128>}, {pipeline_mode = #tpu.pipeline_mode<synchronous>, transform_indices = @transform_2, window_bounds = array<i64: 1, 128>}, {transform_indices = @transform_3, window_bounds = array<i64: 104, 128>}]} {
    %c0 = arith.constant 0 : index
    %c0_0 = arith.constant 0 : index
    %0 = vector.load %arg1[%c0, %c0_0] : memref<104x1152xbf16, #tpu.memory_space<vmem>>, vector<104x1152xbf16>
    %c0_1 = arith.constant 0 : index
    %c0_2 = arith.constant 0 : index
    %1 = vector.load %arg2[%c0_1, %c0_2] : memref<1152x128xbf16, #tpu.memory_space<vmem>>, vector<1152x128xbf16>
    %cst = arith.constant dense<0.000000e+00> : vector<104x128xf32>
    %2 = tpu.matmul %0, %1, %cst {dimension_numbers = #tpu.dot_dimension_numbers<[1], [0], [0], [1], [0, 0, 1, 1], [], []>} : vector<104x1152xbf16>, vector<1152x128xbf16>, vector<104x128xf32> -> vector<104x128xf32>
    %c0_3 = arith.constant 0 : index
    %c0_4 = arith.constant 0 : index
    %3 = vector.load %arg3[%c0_3, %c0_4] : memref<1x128xf32, #tpu.memory_space<vmem>>, vector<1x128xf32>
    %4 = vector.broadcast %3 : vector<1x128xf32> to vector<104x128xf32>
    %5 = arith.addf %2, %4 : vector<104x128xf32>
    %c0_5 = arith.constant 0 : index
    %c0_6 = arith.constant 0 : index
    %6 = vector.load %arg4[%c0_5, %c0_6] : memref<104x128xf32, #tpu.memory_space<vmem>>, vector<104x128xf32>
    tpu.vector_store %arg4[%c0_5, %c0_6], %5 {strides = array<i32>} : memref<104x128xf32, #tpu.memory_space<vmem>>, vector<104x128xf32>,
    return
  }
  func.func @transform_0(%arg0: i32) -> (i32, i32) {
    %c0_i32 = arith.constant 0 : i32
    %c0_i32_0 = arith.constant 0 : i32
    return %arg0, %c0_i32 : i32, i32
  }
  func.func @transform_1(%arg0: i32) -> (i32, i32) {
    %c0_i32 = arith.constant 0 : i32
    %c0_i32_0 = arith.constant 0 : i32
    %c0_i32_1 = arith.constant 0 : i32
    return %c0_i32, %c0_i32_0 : i32, i32
  }
  func.func @transform_2(%arg0: i32) -> (i32, i32) {
    %c0_i32 = arith.constant 0 : i32
    %c0_i32_0 = arith.constant 0 : i32
    %c0_i32_1 = arith.constant 0 : i32
    return %c0_i32, %c0_i32_0 : i32, i32
  }
  func.func @transform_3(%arg0: i32) -> (i32, i32) {
    %c0_i32 = arith.constant 0 : i32
    %c0_i32_0 = arith.constant 0 : i32
    return %arg0, %c0_i32 : i32, i32
  }
}

module attributes {stable_mosaic.version = 11 : i64} {
  func.func @_matmul_bias_kernel(%arg0: i32, %arg1: memref<104x128xbf16, #tpu.memory_space<vmem>>, %arg2: memref<128x128xbf16, #tpu.memory_space<vmem>>, %arg3: memref<1x128xf32, #tpu.memory_space<vmem>>, %arg4: memref<104x128xf32, #tpu.memory_space<vmem>>) attributes {dimension_semantics = [#tpu.dimension_semantics<parallel>], iteration_bounds = array<i64: 1>, scalar_prefetch = 0 : i64, scratch_operands = 0 : i64, tpu.core_type = #tpu.core_type<tc>, window_params = [{transform_indices = @transform_0, window_bounds = array<i64: 104, 128>}, {pipeline_mode = #tpu.pipeline_mode<synchronous>, transform_indices = @transform_1, window_bounds = array<i64: 128, 128>}, {pipeline_mode = #tpu.pipeline_mode<synchronous>, transform_indices = @transform_2, window_bounds = array<i64: 1, 128>}, {transform_indices = @transform_3, window_bounds = array<i64: 104, 128>}]} {
    %c0 = arith.constant 0 : index
    %c0_0 = arith.constant 0 : index
    %0 = vector.load %arg1[%c0, %c0_0] : memref<104x128xbf16, #tpu.memory_space<vmem>>, vector<104x128xbf16>
    %c0_1 = arith.constant 0 : index
    %c0_2 = arith.constant 0 : index
    %1 = vector.load %arg2[%c0_1, %c0_2] : memref<128x128xbf16, #tpu.memory_space<vmem>>, vector<128x128xbf16>
    %cst = arith.constant dense<0.000000e+00> : vector<104x128xf32>
    %2 = tpu.matmul %0, %1, %cst {dimension_numbers = #tpu.dot_dimension_numbers<[1], [0], [0], [1], [0, 0, 1, 1], [], []>} : vector<104x128xbf16>, vector<128x128xbf16>, vector<104x128xf32> -> vector<104x128xf32>
    %c0_3 = arith.constant 0 : index
    %c0_4 = arith.constant 0 : index
    %3 = vector.load %arg3[%c0_3, %c0_4] : memref<1x128xf32, #tpu.memory_space<vmem>>, vector<1x128xf32>
    %4 = vector.broadcast %3 : vector<1x128xf32> to vector<104x128xf32>
    %5 = arith.addf %2, %4 : vector<104x128xf32>
    %c0_5 = arith.constant 0 : index
    %c0_6 = arith.constant 0 : index
    %6 = vector.load %arg4[%c0_5, %c0_6] : memref<104x128xf32, #tpu.memory_space<vmem>>, vector<104x128xf32>
    tpu.vector_store %arg4[%c0_5, %c0_6], %5 {strides = array<i32>} : memref<104x128xf32, #tpu.memory_space<vmem>>, vector<104x128xf32>,
    return
  }
  func.func @transform_0(%arg0: i32) -> (i32, i32) {
    %c0_i32 = arith.constant 0 : i32
    %c0_i32_0 = arith.constant 0 : i32
    return %arg0, %c0_i32 : i32, i32
  }
  func.func @transform_1(%arg0: i32) -> (i32, i32) {
    %c0_i32 = arith.constant 0 : i32
    %c0_i32_0 = arith.constant 0 : i32
    %c0_i32_1 = arith.constant 0 : i32
    return %c0_i32, %c0_i32_0 : i32, i32
  }
  func.func @transform_2(%arg0: i32) -> (i32, i32) {
    %c0_i32 = arith.constant 0 : i32
    %c0_i32_0 = arith.constant 0 : i32
    %c0_i32_1 = arith.constant 0 : i32
    return %c0_i32, %c0_i32_0 : i32, i32
  }
  func.func @transform_3(%arg0: i32) -> (i32, i32) {
    %c0_i32 = arith.constant 0 : i32
    %c0_i32_0 = arith.constant 0 : i32
    return %arg0, %c0_i32 : i32, i32
  }
}

</mosaic_0001>

<llo_original>
// kernel: forward.18
$region0: #{forward.18}
  #allocation0 [shape = 'u32[]', space=smem, size = 0x4, offset = 0x4, fixed_abs, tag = 'smem constant byte address 0x4 - core index']
  #allocation1 [shape = 'u32[144,128]{1,0:T(1,128)}', space=vmem, size = 0x12000, scoped, tag = 'internal scratch']
  %s0 = inlined_call_operand.vmem [shape: bf16[23552,216], index: 0, kind: input, shape index: {}]
  %s1 = inlined_call_operand.vmem [shape: bf16[216,8], index: 1, kind: input, shape index: {}]
  %s2 = inlined_call_operand.vmem [shape: f32[1,8], index: 2, kind: input, shape index: {}]
  %s3 = inlined_call_operand.vmem [shape: f32[23552,8], index: 3, kind: output, shape index: {}]
  %s4 = sld [smem:[#allocation0]]
  $region45: #{forward.18} parent=0
    _
  %s6 = ssub.s32 1, %s4
  %s7 = scalar_select 0, %s6, %s4
  loop: start=0, step=1, limit=48
  $region2: #{forward.18} parent=0 // loop_pre_header
    _
  $region3: #{forward.18} parent=0 // loop_header
    %s9 = sphi 0, %s13
    %p10 = scmp.ge.s32.totalorder %s9, 48
    %s19 = sphi 0, %s21
    %s22 = sphi 0, %s19
    %s23 = sphi 0, %s22
    %s39 = sphi 0, %s23
    %s43 = sphi 0, %s43
    %s45 = sphi 0, %s43
    %s46 = sphi 0, %s45
    %s60 = sphi 0, %s46
    %s64 = sphi 0, %s64
    %s66 = sphi 0, %s64
    %s67 = sphi 0, %s66
    %s81 = sphi 0, %s67
    %s87 = sphi 0, %s89
    %s90 = sphi 0, %s87
    %s91 = sphi 0, %s90
    %s107 = sphi 0, %s91
  $region4: #{forward.18} parent=0 // loop_header_branch
    %12 = sbr.rel (%p10) target = $region8
  $region5: #{forward.18} parent=0 // loop_body
    %s14 = ssub.s32 %s9, 1
    %s15 = ssub.s32 %s9, 2
    %s16 = sadd.s32 %s9, 1
    %s17 = ssub.s32 %s9, %s16
    %p18 = scmp.eq.s32.totalorder %s17, 0
    %s20 = sadd.s32 %s19, 1
    %s21 = scalar_select %p18, %s19, %s20
    %p24 = pneg %p18
    %p25 = scmp.eq.s32.totalorder %s9, 45
    %p26 = por %p24, %p25
    %p27 = scmp.ne.s32.totalorder %s19, %s22
    %p28 = scmp.eq.s32.totalorder %s9, 0
    %p29 = por %p27, %p28
    %p30 = scmp.ne.s32.totalorder %s19, %s22
    %p31 = scmp.eq.s32.totalorder %s14, 45
    %p32 = por %p30, %p31
    %p33 = scmp.ne.s32.totalorder %s22, %s23
    %p34 = scmp.eq.s32.totalorder %s14, 0
    %p35 = por %p33, %p34
    %p36 = scmp.ne.s32.totalorder %s22, %s23
    %p37 = scmp.eq.s32.totalorder %s15, 45
    %p38 = por %p36, %p37
    %p40 = scmp.ne.s32.totalorder %s23, %s39
    %p41 = scmp.eq.s32.totalorder %s15, 0
    %p42 = por %p40, %p41
    %s44 = sadd.s32 %s43, 1
    %p47 = scmp.eq.s32.totalorder %s9, 45
    %p48 = scmp.ne.s32.totalorder %s43, %s45
    %p49 = scmp.eq.s32.totalorder %s9, 0
    %p50 = por %p48, %p49
    %p51 = scmp.ne.s32.totalorder %s43, %s45
    %p52 = scmp.eq.s32.totalorder %s14, 45
    %p53 = por %p51, %p52
    %p54 = scmp.ne.s32.totalorder %s45, %s46
    %p55 = scmp.eq.s32.totalorder %s14, 0
    %p56 = por %p54, %p55
    %p57 = scmp.ne.s32.totalorder %s45, %s46
    %p58 = scmp.eq.s32.totalorder %s15, 45
    %p59 = por %p57, %p58
    %p61 = scmp.ne.s32.totalorder %s46, %s60
    %p62 = scmp.eq.s32.totalorder %s15, 0
    %p63 = por %p61, %p62
    %s65 = sadd.s32 %s64, 1
    %p68 = scmp.eq.s32.totalorder %s9, 45
    %p69 = scmp.ne.s32.totalorder %s64, %s66
    %p70 = scmp.eq.s32.totalorder %s9, 0
    %p71 = por %p69, %p70
    %p72 = scmp.ne.s32.totalorder %s64, %s66
    %p73 = scmp.eq.s32.totalorder %s14, 45
    %p74 = por %p72, %p73
    %p75 = scmp.ne.s32.totalorder %s66, %s67
    %p76 = scmp.eq.s32.totalorder %s14, 0
    %p77 = por %p75, %p76
    %p78 = scmp.ne.s32.totalorder %s66, %s67
    %p79 = scmp.eq.s32.totalorder %s15, 45
    %p80 = por %p78, %p79
    %p82 = scmp.ne.s32.totalorder %s67, %s81
    %p83 = scmp.eq.s32.totalorder %s15, 0
    %p84 = por %p82, %p83
    %s85 = ssub.s32 %s9, %s16
    %p86 = scmp.eq.s32.totalorder %s85, 0
    %s88 = sadd.s32 %s87, 1
    %s89 = scalar_select %p86, %s87, %s88
    %p92 = pneg %p86
    %p93 = scmp.eq.s32.totalorder %s9, 45
    %p94 = por %p92, %p93
    %p95 = scmp.ne.s32.totalorder %s87, %s90
    %p96 = scmp.eq.s32.totalorder %s9, 0
    %p97 = por %p95, %p96
    %p98 = scmp.ne.s32.totalorder %s87, %s90
    %p99 = scmp.eq.s32.totalorder %s14, 45
    %p100 = por %p98, %p99
    %p101 = scmp.ne.s32.totalorder %s90, %s91
    %p102 = scmp.eq.s32.totalorder %s14, 0
    %p103 = por %p101, %p102
    %p104 = scmp.ne.s32.totalorder %s90, %s91
    %p105 = scmp.eq.s32.totalorder %s15, 45
    %p106 = por %p104, %p105
    %p108 = scmp.ne.s32.totalorder %s91, %s107
    %p109 = scmp.eq.s32.totalorder %s15, 0
    %p110 = por %p108, %p109
    %p111 = scmp.le.s32.totalorder 1, %s9
    %p112 = scmp.lt.s32.totalorder %s9, 47
    %p113 = pnand %p111, %p112
    %p114 = pneg %p113
    // Predicated region
    $region9: #{forward.18} parent=5 // pred_check
      _
    $region10: #{forward.18} parent=5 // pred_check_branch
      %116 = sbr.rel (%p113) target = $region12
    $region11: #{forward.18} parent=5 // pred_region
      %s117 = ssub.s32 %s9, 1
      // Predicated region
      $region13: #{forward.18} parent=11 // pred_check
        %p118 = pneg %p56
      $region14: #{forward.18} parent=11 // pred_check_branch
        %120 = sbr.rel (%p118) target = $region16
      $region15: #{forward.18} parent=11 // pred_region
        _
      $region16: #{forward.18} parent=11 // pred_fallthru
        _
      // Predicated region
      $region17: #{forward.18} parent=11 // pred_check
        %p121 = pneg %p77
      $region18: #{forward.18} parent=11 // pred_check_branch
        %123 = sbr.rel (%p121) target = $region20
      $region19: #{forward.18} parent=11 // pred_region
        _
      $region20: #{forward.18} parent=11 // pred_fallthru
        _
    $region12: #{forward.18} parent=5 // pred_fallthru
      _
    %p124 = scmp.lt.s32.totalorder %s9, 46
    // Predicated region
    $region21: #{forward.18} parent=5 // pred_check
      %p125 = pneg %p124
    $region22: #{forward.18} parent=5 // pred_check_branch
      %127 = sbr.rel (%p125) target = $region24
    $region23: #{forward.18} parent=5 // pred_region
      // Predicated region
      $region25: #{forward.18} parent=23 // pred_check
        %p128 = pneg %p29
      $region26: #{forward.18} parent=23 // pred_check_branch
        %130 = sbr.rel (%p128) target = $region28
      $region27: #{forward.18} parent=23 // pred_region
        %s131 = smul.u32 64, %s9
        %p132 = scmp.lt.s32.totalorder %s131, 2943
        %s133 = scalar_select %p132, %s131, 2943
        %s134 = smul.addr %s133, 2
        %s135 = smul.addr %s134, 4
        %s136 = scalar_lea.vmem %s0, %s135
        %s137 = smul.u32 64, %s9
      $region28: #{forward.18} parent=23 // pred_fallthru
        _
    $region24: #{forward.18} parent=5 // pred_fallthru
      _
    %p138 = scmp.le.s32.totalorder 1, %s9
    %p139 = scmp.lt.s32.totalorder %s9, 47
    %p140 = pnand %p138, %p139
    %p141 = pneg %p140
    // Predicated region
    $region29: #{forward.18} parent=5 // pred_check
      _
    $region30: #{forward.18} parent=5 // pred_check_branch
      %143 = sbr.rel (%p140) target = $region32
    $region31: #{forward.18} parent=5 // pred_region
      %s144 = ssub.s32 %s9, 1
      %s145 = smul.u32 64, %s14
      %p146 = scmp.lt.s32.totalorder %s145, 2943
      %s147 = scalar_select %p146, %s145, 2943
      %s148 = smul.addr %s147, 2
      %s149 = smul.addr %s148, 4
      %s150 = scalar_lea.vmem %s0, %s149
      %p151 = pneg %p35
      %p152 = pneg %p32
      %p153 = pneg %p56
      %p154 = pneg %p53
      %p155 = pneg %p77
      %p156 = pneg %p74
      %p157 = pneg %p103
      %p158 = pneg %p100
      %s159 = smul.u32 64, %s14
      %p160 = scmp.lt.s32.totalorder %s159, 2943
      %s161 = scalar_select %p160, %s159, 2943
      %s162 = smul.addr %s161, 8
      %s163 = scalar_lea.vmem %s3, %s162
      %s164 = smul.u32 64, %s14
      %p165 = scmp.lt.s32.totalorder %s164, 2943
      %s166 = scalar_select %p165, %s164, 2943
      %s167 = smul.addr %s166, 2
      %s168 = smul.addr %s167, 4
      %s169 = scalar_lea.vmem %s0, %s168
      %s170 = smul.u32 64, %s14
      %s171 = smul.u32 64, %s14
      %p172 = scmp.lt.s32.totalorder %s171, 2943
      %s173 = scalar_select %p172, %s171, 2943
      %s174 = smul.addr %s173, 8
      %s175 = scalar_lea.vmem %s3, %s174
      %s176 = smul.u32 64, %s14
      %v178 = vld [vmem:[%s169] sm:$0xff]
      %v179 = vld [vmem:[%s169 + $0x8] sm:$0xff]
      %v180 = vld [vmem:[%s169 + $0x10] sm:$0xff]
      %v181 = vld [vmem:[%s169 + $0x18] sm:$0xff]
      %v182 = vld [vmem:[%s169 + $0x20] sm:$0xff]
      %v183 = vld [vmem:[%s169 + $0x28] sm:$0xff]
      %v184 = vld [vmem:[%s169 + $0x30] sm:$0xff]
      %v185 = vld [vmem:[%s169 + $0x38] sm:$0xff]
      %v186 = vld [vmem:[%s169 + $0x40] sm:$0xff]
      %v187 = vld [vmem:[%s169 + $0x48] sm:$0xff]
      %v188 = vld [vmem:[%s169 + $0x50] sm:$0xff]
      %v189 = vld [vmem:[%s169 + $0x58] sm:$0xff]
      %v190 = vld [vmem:[%s169 + $0x60] sm:$0xff]
      %v191 = vld [vmem:[%s169 + $0x68] sm:$0xff]
      %v192 = vld [vmem:[%s169 + $0x70] sm:$0xff]
      %v193 = vld [vmem:[%s169 + $0x78] sm:$0xff]
      %v194 = vld [vmem:[%s169 + $0x80] sm:$0xff]
      %v195 = vld [vmem:[%s169 + $0x88] sm:$0xff]
      %v196 = vld [vmem:[%s169 + $0x90] sm:$0xff]
      %v197 = vld [vmem:[%s169 + $0x98] sm:$0xff]
      %v198 = vld [vmem:[%s169 + $0xa0] sm:$0xff]
      %v199 = vld [vmem:[%s169 + $0xa8] sm:$0xff]
      %v200 = vld [vmem:[%s169 + $0xb0] sm:$0xff]
      %v201 = vld [vmem:[%s169 + $0xb8] sm:$0xff]
      %v202 = vld [vmem:[%s169 + $0xc0] sm:$0xff]
      %v203 = vld [vmem:[%s169 + $0xc8] sm:$0xff]
      %v204 = vld [vmem:[%s169 + $0xd0] sm:$0xff]
      %v205 = vld [vmem:[%s169 + $0xd8] sm:$0xff]
      %v206 = vld [vmem:[%s169 + $0xe0] sm:$0xff]
      %v207 = vld [vmem:[%s169 + $0xe8] sm:$0xff]
      %v208 = vld [vmem:[%s169 + $0xf0] sm:$0xff]
      %v209 = vld [vmem:[%s169 + $0xf8] sm:$0xff]
      %v210 = vld [vmem:[%s169 + $0x100] sm:$0xff]
      %v211 = vld [vmem:[%s169 + $0x108] sm:$0xff]
      %v212 = vld [vmem:[%s169 + $0x110] sm:$0xff]
      %v213 = vld [vmem:[%s169 + $0x118] sm:$0xff]
      %v214 = vld [vmem:[%s169 + $0x120] sm:$0xff]
      %v215 = vld [vmem:[%s169 + $0x128] sm:$0xff]
      %v216 = vld [vmem:[%s169 + $0x130] sm:$0xff]
      %v217 = vld [vmem:[%s169 + $0x138] sm:$0xff]
      %v218 = vld [vmem:[%s169 + $0x140] sm:$0xff]
      %v219 = vld [vmem:[%s169 + $0x148] sm:$0xff]
      %v220 = vld [vmem:[%s169 + $0x150] sm:$0xff]
      %v221 = vld [vmem:[%s169 + $0x158] sm:$0xff]
      %v222 = vld [vmem:[%s169 + $0x160] sm:$0xff]
      %v223 = vld [vmem:[%s169 + $0x168] sm:$0xff]
      %v224 = vld [vmem:[%s169 + $0x170] sm:$0xff]
      %v225 = vld [vmem:[%s169 + $0x178] sm:$0xff]
      %v226 = vld [vmem:[%s169 + $0x180] sm:$0xff]
      %v227 = vld [vmem:[%s169 + $0x188] sm:$0xff]
      %v228 = vld [vmem:[%s169 + $0x190] sm:$0xff]
      %v229 = vld [vmem:[%s169 + $0x198] sm:$0xff]
      %v230 = vld [vmem:[%s169 + $0x1a0] sm:$0xff]
      %v231 = vld [vmem:[%s169 + $0x1a8] sm:$0xff]
      %v232 = vld [vmem:[%s169 + $0x1b0] sm:$0xff]
      %v233 = vld [vmem:[%s169 + $0x1b8] sm:$0xff]
      %v234 = vld [vmem:[%s169 + $0x1c0] sm:$0xff]
      %v235 = vld [vmem:[%s169 + $0x1c8] sm:$0xff]
      %v236 = vld [vmem:[%s169 + $0x1d0] sm:$0xff]
      %v237 = vld [vmem:[%s169 + $0x1d8] sm:$0xff]
      %v238 = vld [vmem:[%s169 + $0x1e0] sm:$0xff]
      %v239 = vld [vmem:[%s169 + $0x1e8] sm:$0xff]
      %v240 = vld [vmem:[%s169 + $0x1f0] sm:$0xff]
      %v241 = vld [vmem:[%s169 + $0x1f8] sm:$0xff]
      %v242 = vld [vmem:[%s1] sm:$0xf]
      %v243 = vld [vmem:[%s1 + $0x4] sm:$0xf]
      %v244 = vld [vmem:[%s1 + $0x8] sm:$0xf]
      %v245 = vld [vmem:[%s1 + $0xc] sm:$0xf]
      %v246 = vld [vmem:[%s1 + $0x10] sm:$0xf]
      %v247 = vld [vmem:[%s1 + $0x14] sm:$0xf]
      %v248 = vld [vmem:[%s1 + $0x18] sm:$0xf]
      %v249 = vld [vmem:[%s1 + $0x1c] sm:$0xf]
      %v250 = vld [vmem:[%s1 + $0x20] sm:$0xf]
      %v251 = vld [vmem:[%s1 + $0x24] sm:$0xf]
      %v252 = vld [vmem:[%s1 + $0x28] sm:$0xf]
      %v253 = vld [vmem:[%s1 + $0x2c] sm:$0xf]
      %v254 = vld [vmem:[%s1 + $0x30] sm:$0xf]
      %v255 = vld [vmem:[%s1 + $0x34] sm:$0xf]
      %v256 = vld [vmem:[%s1 + $0x38] sm:$0xf]
      %v257 = vld [vmem:[%s1 + $0x3c] sm:$0xf]
      %v258 = vld [vmem:[%s1 + $0x40] sm:$0xf]
      %v259 = vld [vmem:[%s1 + $0x44] sm:$0xf]
      %v260 = vld [vmem:[%s1 + $0x48] sm:$0xf]
      %v261 = vld [vmem:[%s1 + $0x4c] sm:$0xf]
      %v262 = vld [vmem:[%s1 + $0x50] sm:$0xf]
      %v263 = vld [vmem:[%s1 + $0x54] sm:$0xf]
      %v264 = vld [vmem:[%s1 + $0x58] sm:$0xf]
      %v265 = vld [vmem:[%s1 + $0x5c] sm:$0xf]
      %v266 = vld [vmem:[%s1 + $0x60] sm:$0xf]
      %v267 = vld [vmem:[%s1 + $0x64] sm:$0xf]
      %v268 = vld [vmem:[%s1 + $0x68] sm:$0xf]
      %v269 = vld [vmem:[%s2] sm:$0x1]
      %v271 = vlaneseq
      %v272 = vshrl.u32 %v271, 7
      %v273 = vsub.s32 0, %v272
      %v274 = vrot.slane %v269, %v273
      %v340 = vunpack.c.l.b16 %v178
      %v341 = vunpack.c.h.b16 %v178
      %v342 = vunpack.c.l.b16 %v179
      %v343 = vunpack.c.h.b16 %v179
      %v344 = vunpack.c.l.b16 %v180
      %v345 = vunpack.c.h.b16 %v180
      %v346 = vunpack.c.l.b16 %v181
      %v347 = vunpack.c.h.b16 %v181
      %v348 = vunpack.c.l.b16 %v182
      %v349 = vunpack.c.h.b16 %v182
      %v350 = vunpack.c.l.b16 %v183
      %v351 = vunpack.c.h.b16 %v183
      %v352 = vunpack.c.l.b16 %v184
      %v353 = vunpack.c.h.b16 %v184
      %v354 = vunpack.c.l.b16 %v185
      %v355 = vunpack.c.h.b16 %v185
      %v356 = vunpack.c.l.b16 %v186
      %v357 = vunpack.c.h.b16 %v186
      %v358 = vunpack.c.l.b16 %v187
      %v359 = vunpack.c.h.b16 %v187
      %v360 = vunpack.c.l.b16 %v188
      %v361 = vunpack.c.h.b16 %v188
      %v362 = vunpack.c.l.b16 %v189
      %v363 = vunpack.c.h.b16 %v189
      %v364 = vunpack.c.l.b16 %v190
      %v365 = vunpack.c.h.b16 %v190
      %v366 = vunpack.c.l.b16 %v191
      %v367 = vunpack.c.h.b16 %v191
      %v368 = vunpack.c.l.b16 %v192
      %v369 = vunpack.c.h.b16 %v192
      %v370 = vunpack.c.l.b16 %v193
      %v371 = vunpack.c.h.b16 %v193
      %v372 = vunpack.c.l.b16 %v194
      %v373 = vunpack.c.h.b16 %v194
      %v374 = vunpack.c.l.b16 %v195
      %v375 = vunpack.c.h.b16 %v195
      %v376 = vunpack.c.l.b16 %v196
      %v377 = vunpack.c.h.b16 %v196
      %v378 = vunpack.c.l.b16 %v197
      %v379 = vunpack.c.h.b16 %v197
      %v380 = vunpack.c.l.b16 %v198
      %v381 = vunpack.c.h.b16 %v198
      %v382 = vunpack.c.l.b16 %v199
      %v383 = vunpack.c.h.b16 %v199
      %v384 = vunpack.c.l.b16 %v200
      %v385 = vunpack.c.h.b16 %v200
      %v386 = vunpack.c.l.b16 %v201
      %v387 = vunpack.c.h.b16 %v201
      %v388 = vunpack.c.l.b16 %v202
      %v389 = vunpack.c.h.b16 %v202
      %v390 = vunpack.c.l.b16 %v203
      %v391 = vunpack.c.h.b16 %v203
      %v392 = vunpack.c.l.b16 %v204
      %v393 = vunpack.c.h.b16 %v204
      %v394 = vunpack.c.l.b16 %v205
      %v395 = vunpack.c.h.b16 %v205
      %v396 = vunpack.c.l.b16 %v206
      %v397 = vunpack.c.h.b16 %v206
      %v398 = vunpack.c.l.b16 %v207
      %v399 = vunpack.c.h.b16 %v207
      %v400 = vunpack.c.l.b16 %v208
      %v401 = vunpack.c.h.b16 %v208
      %v402 = vunpack.c.l.b16 %v209
      %v403 = vunpack.c.h.b16 %v209
      %v404 = vunpack.c.l.b16 %v210
      %v405 = vunpack.c.h.b16 %v210
      %v406 = vunpack.c.l.b16 %v211
      %v407 = vunpack.c.h.b16 %v211
      %v408 = vunpack.c.l.b16 %v212
      %v409 = vunpack.c.h.b16 %v212
      %v410 = vunpack.c.l.b16 %v213
      %v411 = vunpack.c.h.b16 %v213
      %v412 = vunpack.c.l.b16 %v214
      %v413 = vunpack.c.h.b16 %v214
      %v414 = vunpack.c.l.b16 %v215
      %v415 = vunpack.c.h.b16 %v215
      %v416 = vunpack.c.l.b16 %v216
      %v417 = vunpack.c.h.b16 %v216
      %v418 = vunpack.c.l.b16 %v217
      %v419 = vunpack.c.h.b16 %v217
      %v420 = vunpack.c.l.b16 %v218
      %v421 = vunpack.c.h.b16 %v218
      %v422 = vunpack.c.l.b16 %v219
      %v423 = vunpack.c.h.b16 %v219
      %v424 = vunpack.c.l.b16 %v220
      %v425 = vunpack.c.h.b16 %v220
      %v426 = vunpack.c.l.b16 %v221
      %v427 = vunpack.c.h.b16 %v221
      %v428 = vunpack.c.l.b16 %v222
      %v429 = vunpack.c.h.b16 %v222
      %v430 = vunpack.c.l.b16 %v223
      %v431 = vunpack.c.h.b16 %v223
      %v432 = vunpack.c.l.b16 %v224
      %v433 = vunpack.c.h.b16 %v224
      %v434 = vunpack.c.l.b16 %v225
      %v435 = vunpack.c.h.b16 %v225
      %v436 = vunpack.c.l.b16 %v226
      %v437 = vunpack.c.h.b16 %v226
      %v438 = vunpack.c.l.b16 %v227
      %v439 = vunpack.c.h.b16 %v227
      %v440 = vunpack.c.l.b16 %v228
      %v441 = vunpack.c.h.b16 %v228
      %v442 = vunpack.c.l.b16 %v229
      %v443 = vunpack.c.h.b16 %v229
      %v444 = vunpack.c.l.b16 %v230
      %v445 = vunpack.c.h.b16 %v230
      %v446 = vunpack.c.l.b16 %v231
      %v447 = vunpack.c.h.b16 %v231
      %v448 = vunpack.c.l.b16 %v232
      %v449 = vunpack.c.h.b16 %v232
      %v450 = vunpack.c.l.b16 %v233
      %v451 = vunpack.c.h.b16 %v233
      %v452 = vunpack.c.l.b16 %v234
      %v453 = vunpack.c.h.b16 %v234
      %v454 = vunpack.c.l.b16 %v235
      %v455 = vunpack.c.h.b16 %v235
      %v456 = vunpack.c.l.b16 %v236
      %v457 = vunpack.c.h.b16 %v236
      %v458 = vunpack.c.l.b16 %v237
      %v459 = vunpack.c.h.b16 %v237
      %v460 = vunpack.c.l.b16 %v238
      %v461 = vunpack.c.h.b16 %v238
      %v462 = vunpack.c.l.b16 %v239
      %v463 = vunpack.c.h.b16 %v239
      %v464 = vunpack.c.l.b16 %v240
      %v465 = vunpack.c.h.b16 %v240
      %v466 = vunpack.c.l.b16 %v241
      %v467 = vunpack.c.h.b16 %v241
      %v468 = vpack.c.b16 %v342, %v340
      %v469 = vpack.c.b16 %v343, %v341
      %v470 = vpack.c.b16 %v346, %v344
      %v471 = vpack.c.b16 %v347, %v345
      %v472 = vpack.c.b16 %v350, %v348
      %v473 = vpack.c.b16 %v351, %v349
      %v474 = vpack.c.b16 %v354, %v352
      %v475 = vpack.c.b16 %v355, %v353
      %v476 = vpack.c.b16 %v358, %v356
      %v477 = vpack.c.b16 %v359, %v357
      %v478 = vpack.c.b16 %v362, %v360
      %v479 = vpack.c.b16 %v363, %v361
      %v480 = vpack.c.b16 %v366, %v364
      %v481 = vpack.c.b16 %v367, %v365
      %v482 = vpack.c.b16 %v370, %v368
      %v483 = vpack.c.b16 %v371, %v369
      %v484 = vpack.c.b16 %v374, %v372
      %v485 = vpack.c.b16 %v375, %v373
      %v486 = vpack.c.b16 %v378, %v376
      %v487 = vpack.c.b16 %v379, %v377
      %v488 = vpack.c.b16 %v382, %v380
      %v489 = vpack.c.b16 %v383, %v381
      %v490 = vpack.c.b16 %v386, %v384
      %v491 = vpack.c.b16 %v387, %v385
      %v492 = vpack.c.b16 %v390, %v388
      %v493 = vpack.c.b16 %v391, %v389
      %v494 = vpack.c.b16 %v394, %v392
      %v495 = vpack.c.b16 %v395, %v393
      %v496 = vpack.c.b16 %v398, %v396
      %v497 = vpack.c.b16 %v399, %v397
      %v498 = vpack.c.b16 %v402, %v400
      %v499 = vpack.c.b16 %v403, %v401
      %v500 = vpack.c.b16 %v406, %v404
      %v501 = vpack.c.b16 %v407, %v405
      %v502 = vpack.c.b16 %v410, %v408
      %v503 = vpack.c.b16 %v411, %v409
      %v504 = vpack.c.b16 %v414, %v412
      %v505 = vpack.c.b16 %v415, %v413
      %v506 = vpack.c.b16 %v418, %v416
      %v507 = vpack.c.b16 %v419, %v417
      %v508 = vpack.c.b16 %v422, %v420
      %v509 = vpack.c.b16 %v423, %v421
      %v510 = vpack.c.b16 %v426, %v424
      %v511 = vpack.c.b16 %v427, %v425
      %v512 = vpack.c.b16 %v430, %v428
      %v513 = vpack.c.b16 %v431, %v429
      %v514 = vpack.c.b16 %v434, %v432
      %v515 = vpack.c.b16 %v435, %v433
      %v516 = vpack.c.b16 %v438, %v436
      %v517 = vpack.c.b16 %v439, %v437
      %v518 = vpack.c.b16 %v442, %v440
      %v519 = vpack.c.b16 %v443, %v441
      %v520 = vpack.c.b16 %v446, %v444
      %v521 = vpack.c.b16 %v447, %v445
      %v522 = vpack.c.b16 %v450, %v448
      %v523 = vpack.c.b16 %v451, %v449
      %v524 = vpack.c.b16 %v454, %v452
      %v525 = vpack.c.b16 %v455, %v453
      %v526 = vpack.c.b16 %v458, %v456
      %v527 = vpack.c.b16 %v459, %v457
      %v528 = vpack.c.b16 %v462, %v460
      %v529 = vpack.c.b16 %v463, %v461
      %v530 = vpack.c.b16 %v466, %v464
      %v531 = vpack.c.b16 %v467, %v465
      %v591 = vunpack.c.l.b16 %v242
      %v592 = vunpack.c.l.b16 %v243
      %v593 = vunpack.c.l.b16 %v244
      %v594 = vunpack.c.l.b16 %v245
      %v595 = vunpack.c.l.b16 %v246
      %v596 = vunpack.c.l.b16 %v247
      %v597 = vunpack.c.l.b16 %v248
      %v598 = vunpack.c.l.b16 %v249
      %v599 = vunpack.c.l.b16 %v250
      %v600 = vunpack.c.l.b16 %v251
      %v601 = vunpack.c.l.b16 %v252
      %v602 = vunpack.c.l.b16 %v253
      %v603 = vunpack.c.l.b16 %v254
      %v604 = vunpack.c.l.b16 %v255
      %v605 = vunpack.c.l.b16 %v256
      %v606 = vunpack.c.l.b16 %v257
      %v607 = vunpack.c.l.b16 %v258
      %v608 = vunpack.c.l.b16 %v259
      %v609 = vunpack.c.l.b16 %v260
      %v610 = vunpack.c.l.b16 %v261
      %v611 = vunpack.c.l.b16 %v262
      %v612 = vunpack.c.l.b16 %v263
      %v613 = vunpack.c.l.b16 %v264
      %v614 = vunpack.c.l.b16 %v265
      %v615 = vunpack.c.l.b16 %v266
      %v616 = vunpack.c.l.b16 %v267
      %v617 = vunpack.c.l.b16 %v268
      %v618 = vpack.c.b16 %v592, %v591
      %v619 = vpack.c.b16 %v594, %v593
      %v620 = vpack.c.b16 %v596, %v595
      %v621 = vpack.c.b16 %v598, %v597
      %v622 = vpack.c.b16 %v600, %v599
      %v623 = vpack.c.b16 %v602, %v601
      %v624 = vpack.c.b16 %v604, %v603
      %v625 = vpack.c.b16 %v606, %v605
      %v626 = vpack.c.b16 %v608, %v607
      %v627 = vpack.c.b16 %v610, %v609
      %v628 = vpack.c.b16 %v612, %v611
      %v629 = vpack.c.b16 %v614, %v613
      %v630 = vpack.c.b16 %v616, %v615
      %v631 = vpack.c.b16 %v617, %v617
      %vm645 = vcmask 719872
      %v647 = vsel %vm645, %v469, 0
      %v650 = vsel %vm645, %v471, 0
      %v653 = vsel %vm645, %v473, 0
      %v656 = vsel %vm645, %v475, 0
      %v659 = vsel %vm645, %v477, 0
      %v662 = vsel %vm645, %v479, 0
      %v665 = vsel %vm645, %v481, 0
      %v668 = vsel %vm645, %v483, 0
      %v671 = vsel %vm645, %v485, 0
      %v674 = vsel %vm645, %v487, 0
      %v677 = vsel %vm645, %v489, 0
      %v680 = vsel %vm645, %v491, 0
      %v683 = vsel %vm645, %v493, 0
      %v686 = vsel %vm645, %v495, 0
      %v689 = vsel %vm645, %v497, 0
      %v692 = vsel %vm645, %v499, 0
      %v695 = vsel %vm645, %v501, 0
      %v698 = vsel %vm645, %v503, 0
      %v701 = vsel %vm645, %v505, 0
      %v704 = vsel %vm645, %v507, 0
      %v707 = vsel %vm645, %v509, 0
      %v710 = vsel %vm645, %v511, 0
      %v713 = vsel %vm645, %v513, 0
      %v716 = vsel %vm645, %v515, 0
      %v719 = vsel %vm645, %v517, 0
      %v722 = vsel %vm645, %v519, 0
      %v725 = vsel %vm645, %v521, 0
      %v728 = vsel %vm645, %v523, 0
      %v731 = vsel %vm645, %v525, 0
      %v734 = vsel %vm645, %v527, 0
      %v737 = vsel %vm645, %v529, 0
      %v740 = vsel %vm645, %v531, 0
      %vm742 = vcmask 1043456
      %v744 = vsel %vm742, %v631, 0
      %746 = vmatprep.subr.bf16.mxu0 0
      %747 = vmatpush1.bf16.msra.mxu0 %v618
      %748 = vmatprep.subr.bf16.mxu0 0
      %749 = vmatpush1.bf16.msra.mxu0 %v619
      %750 = vmatprep.subr.bf16.mxu0 0
      %751 = vmatpush1.bf16.msra.mxu0 %v620
      %752 = vmatprep.subr.bf16.mxu0 0
      %753 = vmatpush1.bf16.msra.mxu0 %v621
      %754 = vmatprep.subr.bf16.mxu0 0
      %755 = vmatpush1.bf16.msra.mxu0 %v622
      %756 = vmatprep.subr.bf16.mxu0 0
      %757 = vmatpush1.bf16.msra.mxu0 %v623
      %758 = vmatprep.subr.bf16.mxu0 0
      %759 = vmatpush1.bf16.msra.mxu0 %v624
      %760 = vmatprep.subr.bf16.mxu0 0
      %761 = vmatpush1.bf16.msra.mxu0 %v625
      %762 = vmatprep.subr.bf16.mxu0 0
      %763 = vmatpush1.bf16.msra.mxu0 %v626
      %764 = vmatprep.subr.bf16.mxu0 0
      %765 = vmatpush1.bf16.msra.mxu0 %v627
      %766 = vmatprep.subr.bf16.mxu0 0
      %767 = vmatpush1.bf16.msra.mxu0 %v628
      %768 = vmatprep.subr.bf16.mxu0 0
      %769 = vmatpush1.bf16.msra.mxu0 %v629
      %770 = vmatprep.subr.bf16.mxu0 0
      %771 = vmatpush1.bf16.msra.mxu0 %v630
      %772 = vmatprep.subr.bf16.mxu0 0
      %773 = vmatpush1.bf16.msra.mxu0 %v744
      %774 = vmatprep.subr.bf16.mxu0 0
      %775 = vmatpush1.bf16.msra.mxu0 0
      %776 = vmatprep.subr.bf16.mxu0 0
      %777 = vmatpush1.bf16.msra.mxu0 0
      %778 = vmatprep.mubr.bf16.mxu0 %v647
      %779 = vmatmul.mubr.bf16.gmra.mrb[0].mxu0 %v468
      %v780 = vpop.f32.mrb[0].mxu0
      %v781 = vadd.f32 %v274, %v780
      %v782 = vpop.f32.mrb[0].mxu0
      %v783 = vpop.f32.mrb[0].mxu0
      %v784 = vadd.f32 %v274, %v783
      %v785 = vpop.f32.mrb[0].mxu0
      %786 = vmatprep.mubr.bf16.mxu0 %v650
      %787 = vmatmul.mubr.bf16.gmra.mrb[0].mxu0 %v470
      %v788 = vpop.f32.mrb[0].mxu0
      %v789 = vadd.f32 %v274, %v788
      %v790 = vpop.f32.mrb[0].mxu0
      %v791 = vpop.f32.mrb[0].mxu0
      %v792 = vadd.f32 %v274, %v791
      %v793 = vpop.f32.mrb[0].mxu0
      %794 = vmatprep.mubr.bf16.mxu0 %v653
      %795 = vmatmul.mubr.bf16.gmra.mrb[0].mxu0 %v472
      %v796 = vpop.f32.mrb[0].mxu0
      %v797 = vadd.f32 %v274, %v796
      %v798 = vpop.f32.mrb[0].mxu0
      %v799 = vpop.f32.mrb[0].mxu0
      %v800 = vadd.f32 %v274, %v799
      %v801 = vpop.f32.mrb[0].mxu0
      %802 = vmatprep.mubr.bf16.mxu0 %v656
      %803 = vmatmul.mubr.bf16.gmra.mrb[0].mxu0 %v474
      %v804 = vpop.f32.mrb[0].mxu0
      %v805 = vadd.f32 %v274, %v804
      %v806 = vpop.f32.mrb[0].mxu0
      %v807 = vpop.f32.mrb[0].mxu0
      %v808 = vadd.f32 %v274, %v807
      %v809 = vpop.f32.mrb[0].mxu0
      %810 = vmatprep.mubr.bf16.mxu0 %v659
      %811 = vmatmul.mubr.bf16.gmra.mrb[0].mxu0 %v476
      %v812 = vpop.f32.mrb[0].mxu0
      %v813 = vadd.f32 %v274, %v812
      %v814 = vpop.f32.mrb[0].mxu0
      %v815 = vpop.f32.mrb[0].mxu0
      %v816 = vadd.f32 %v274, %v815
      %v817 = vpop.f32.mrb[0].mxu0
      %818 = vmatprep.mubr.bf16.mxu0 %v662
      %819 = vmatmul.mubr.bf16.gmra.mrb[0].mxu0 %v478
      %v820 = vpop.f32.mrb[0].mxu0
      %v821 = vadd.f32 %v274, %v820
      %v822 = vpop.f32.mrb[0].mxu0
      %v823 = vpop.f32.mrb[0].mxu0
      %v824 = vadd.f32 %v274, %v823
      %v825 = vpop.f32.mrb[0].mxu0
      %826 = vmatprep.mubr.bf16.mxu0 %v665
      %827 = vmatmul.mubr.bf16.gmra.mrb[0].mxu0 %v480
      %v828 = vpop.f32.mrb[0].mxu0
      %v829 = vadd.f32 %v274, %v828
      %v830 = vpop.f32.mrb[0].mxu0
      %v831 = vpop.f32.mrb[0].mxu0
      %v832 = vadd.f32 %v274, %v831
      %v833 = vpop.f32.mrb[0].mxu0
      %834 = vmatprep.mubr.bf16.mxu0 %v668
      %835 = vmatmul.mubr.bf16.gmra.mrb[0].mxu0 %v482
      %v836 = vpop.f32.mrb[0].mxu0
      %v837 = vadd.f32 %v274, %v836
      %v838 = vpop.f32.mrb[0].mxu0
      %v839 = vpop.f32.mrb[0].mxu0
      %v840 = vadd.f32 %v274, %v839
      %v841 = vpop.f32.mrb[0].mxu0
      %842 = vmatprep.mubr.bf16.mxu0 %v671
      %843 = vmatmul.mubr.bf16.gmra.mrb[0].mxu0 %v484
      %v844 = vpop.f32.mrb[0].mxu0
      %v845 = vadd.f32 %v274, %v844
      %v846 = vpop.f32.mrb[0].mxu0
      %v847 = vpop.f32.mrb[0].mxu0
      %v848 = vadd.f32 %v274, %v847
      %v849 = vpop.f32.mrb[0].mxu0
      %850 = vmatprep.mubr.bf16.mxu0 %v674
      %851 = vmatmul.mubr.bf16.gmra.mrb[0].mxu0 %v486
      %v852 = vpop.f32.mrb[0].mxu0
      %v853 = vadd.f32 %v274, %v852
      %v854 = vpop.f32.mrb[0].mxu0
      %v855 = vpop.f32.mrb[0].mxu0
      %v856 = vadd.f32 %v274, %v855
      %v857 = vpop.f32.mrb[0].mxu0
      %858 = vmatprep.mubr.bf16.mxu0 %v677
      %859 = vmatmul.mubr.bf16.gmra.mrb[0].mxu0 %v488
      %v860 = vpop.f32.mrb[0].mxu0
      %v861 = vadd.f32 %v274, %v860
      %v862 = vpop.f32.mrb[0].mxu0
      %v863 = vpop.f32.mrb[0].mxu0
      %v864 = vadd.f32 %v274, %v863
      %v865 = vpop.f32.mrb[0].mxu0
      %866 = vmatprep.mubr.bf16.mxu0 %v680
      %867 = vmatmul.mubr.bf16.gmra.mrb[0].mxu0 %v490
      %v868 = vpop.f32.mrb[0].mxu0
      %v869 = vadd.f32 %v274, %v868
      %v870 = vpop.f32.mrb[0].mxu0
      %v871 = vpop.f32.mrb[0].mxu0
      %v872 = vadd.f32 %v274, %v871
      %v873 = vpop.f32.mrb[0].mxu0
      %874 = vmatprep.mubr.bf16.mxu0 %v683
      %875 = vmatmul.mubr.bf16.gmra.mrb[0].mxu0 %v492
      %v876 = vpop.f32.mrb[0].mxu0
      %v877 = vadd.f32 %v274, %v876
      %v878 = vpop.f32.mrb[0].mxu0
      %v879 = vpop.f32.mrb[0].mxu0
      %v880 = vadd.f32 %v274, %v879
      %v881 = vpop.f32.mrb[0].mxu0
      %882 = vmatprep.mubr.bf16.mxu0 %v686
      %883 = vmatmul.mubr.bf16.gmra.mrb[0].mxu0 %v494
      %v884 = vpop.f32.mrb[0].mxu0
      %v885 = vadd.f32 %v274, %v884
      %v886 = vpop.f32.mrb[0].mxu0
      %v887 = vpop.f32.mrb[0].mxu0
      %v888 = vadd.f32 %v274, %v887
      %v889 = vpop.f32.mrb[0].mxu0
      %890 = vmatprep.mubr.bf16.mxu0 %v689
      %891 = vmatmul.mubr.bf16.gmra.mrb[0].mxu0 %v496
      %v892 = vpop.f32.mrb[0].mxu0
      %v893 = vadd.f32 %v274, %v892
      %v894 = vpop.f32.mrb[0].mxu0
      %v895 = vpop.f32.mrb[0].mxu0
      %v896 = vadd.f32 %v274, %v895
      %v897 = vpop.f32.mrb[0].mxu0
      %898 = vmatprep.mubr.bf16.mxu0 %v692
      %899 = vmatmul.mubr.bf16.gmra.mrb[0].mxu0 %v498
      %v900 = vpop.f32.mrb[0].mxu0
      %v901 = vadd.f32 %v274, %v900
      %v902 = vpop.f32.mrb[0].mxu0
      %v903 = vpop.f32.mrb[0].mxu0
      %v904 = vadd.f32 %v274, %v903
      %v905 = vpop.f32.mrb[0].mxu0
      %906 = vmatprep.mubr.bf16.mxu0 %v695
      %907 = vmatmul.mubr.bf16.gmra.mrb[0].mxu0 %v500
      %v908 = vpop.f32.mrb[0].mxu0
      %v909 = vadd.f32 %v274, %v908
      %v910 = vpop.f32.mrb[0].mxu0
      %v911 = vpop.f32.mrb[0].mxu0
      %v912 = vadd.f32 %v274, %v911
      %v913 = vpop.f32.mrb[0].mxu0
      %914 = vmatprep.mubr.bf16.mxu0 %v698
      %915 = vmatmul.mubr.bf16.gmra.mrb[0].mxu0 %v502
      %v916 = vpop.f32.mrb[0].mxu0
      %v917 = vadd.f32 %v274, %v916
      %v918 = vpop.f32.mrb[0].mxu0
      %v919 = vpop.f32.mrb[0].mxu0
      %v920 = vadd.f32 %v274, %v919
      %v921 = vpop.f32.mrb[0].mxu0
      %922 = vmatprep.mubr.bf16.mxu0 %v701
      %923 = vmatmul.mubr.bf16.gmra.mrb[0].mxu0 %v504
      %v924 = vpop.f32.mrb[0].mxu0
      %v925 = vadd.f32 %v274, %v924
      %v926 = vpop.f32.mrb[0].mxu0
      %v927 = vpop.f32.mrb[0].mxu0
      %v928 = vadd.f32 %v274, %v927
      %v929 = vpop.f32.mrb[0].mxu0
      %930 = vmatprep.mubr.bf16.mxu0 %v704
      %931 = vmatmul.mubr.bf16.gmra.mrb[0].mxu0 %v506
      %v932 = vpop.f32.mrb[0].mxu0
      %v933 = vadd.f32 %v274, %v932
      %v934 = vpop.f32.mrb[0].mxu0
      %v935 = vpop.f32.mrb[0].mxu0
      %v936 = vadd.f32 %v274, %v935
      %v937 = vpop.f32.mrb[0].mxu0
      %938 = vmatprep.mubr.bf16.mxu0 %v707
      %939 = vmatmul.mubr.bf16.gmra.mrb[0].mxu0 %v508
      %v940 = vpop.f32.mrb[0].mxu0
      %v941 = vadd.f32 %v274, %v940
      %v942 = vpop.f32.mrb[0].mxu0
      %v943 = vpop.f32.mrb[0].mxu0
      %v944 = vadd.f32 %v274, %v943
      %v945 = vpop.f32.mrb[0].mxu0
      %946 = vmatprep.mubr.bf16.mxu0 %v710
      %947 = vmatmul.mubr.bf16.gmra.mrb[0].mxu0 %v510
      %v948 = vpop.f32.mrb[0].mxu0
      %v949 = vadd.f32 %v274, %v948
      %v950 = vpop.f32.mrb[0].mxu0
      %v951 = vpop.f32.mrb[0].mxu0
      %v952 = vadd.f32 %v274, %v951
      %v953 = vpop.f32.mrb[0].mxu0
      %954 = vmatprep.mubr.bf16.mxu0 %v713
      %955 = vmatmul.mubr.bf16.gmra.mrb[0].mxu0 %v512
      %v956 = vpop.f32.mrb[0].mxu0
      %v957 = vadd.f32 %v274, %v956
      %v958 = vpop.f32.mrb[0].mxu0
      %v959 = vpop.f32.mrb[0].mxu0
      %v960 = vadd.f32 %v274, %v959
      %v961 = vpop.f32.mrb[0].mxu0
      %962 = vmatprep.mubr.bf16.mxu0 %v716
      %963 = vmatmul.mubr.bf16.gmra.mrb[0].mxu0 %v514
      %v964 = vpop.f32.mrb[0].mxu0
      %v965 = vadd.f32 %v274, %v964
      %v966 = vpop.f32.mrb[0].mxu0
      %v967 = vpop.f32.mrb[0].mxu0
      %v968 = vadd.f32 %v274, %v967
      %v969 = vpop.f32.mrb[0].mxu0
      %970 = vmatprep.mubr.bf16.mxu0 %v719
      %971 = vmatmul.mubr.bf16.gmra.mrb[0].mxu0 %v516
      %v972 = vpop.f32.mrb[0].mxu0
      %v973 = vadd.f32 %v274, %v972
      %v974 = vpop.f32.mrb[0].mxu0
      %v975 = vpop.f32.mrb[0].mxu0
      %v976 = vadd.f32 %v274, %v975
      %v977 = vpop.f32.mrb[0].mxu0
      %978 = vmatprep.mubr.bf16.mxu0 %v722
      %979 = vmatmul.mubr.bf16.gmra.mrb[0].mxu0 %v518
      %v980 = vpop.f32.mrb[0].mxu0
      %v981 = vadd.f32 %v274, %v980
      %v982 = vpop.f32.mrb[0].mxu0
      %v983 = vpop.f32.mrb[0].mxu0
      %v984 = vadd.f32 %v274, %v983
      %v985 = vpop.f32.mrb[0].mxu0
      %986 = vmatprep.mubr.bf16.mxu0 %v725
      %987 = vmatmul.mubr.bf16.gmra.mrb[0].mxu0 %v520
      %v988 = vpop.f32.mrb[0].mxu0
      %v989 = vadd.f32 %v274, %v988
      %v990 = vpop.f32.mrb[0].mxu0
      %v991 = vpop.f32.mrb[0].mxu0
      %v992 = vadd.f32 %v274, %v991
      %v993 = vpop.f32.mrb[0].mxu0
      %994 = vmatprep.mubr.bf16.mxu0 %v728
      %995 = vmatmul.mubr.bf16.gmra.mrb[0].mxu0 %v522
      %v996 = vpop.f32.mrb[0].mxu0
      %v997 = vadd.f32 %v274, %v996
      %v998 = vpop.f32.mrb[0].mxu0
      %v999 = vpop.f32.mrb[0].mxu0
      %v1000 = vadd.f32 %v274, %v999
      %v1001 = vpop.f32.mrb[0].mxu0
      %1002 = vmatprep.mubr.bf16.mxu0 %v731
      %1003 = vmatmul.mubr.bf16.gmra.mrb[0].mxu0 %v524
      %v1004 = vpop.f32.mrb[0].mxu0
      %v1005 = vadd.f32 %v274, %v1004
      %v1006 = vpop.f32.mrb[0].mxu0
      %v1007 = vpop.f32.mrb[0].mxu0
      %v1008 = vadd.f32 %v274, %v1007
      %v1009 = vpop.f32.mrb[0].mxu0
      %1010 = vmatprep.mubr.bf16.mxu0 %v734
      %1011 = vmatmul.mubr.bf16.gmra.mrb[0].mxu0 %v526
      %v1012 = vpop.f32.mrb[0].mxu0
      %v1013 = vadd.f32 %v274, %v1012
      %v1014 = vpop.f32.mrb[0].mxu0
      %v1015 = vpop.f32.mrb[0].mxu0
      %v1016 = vadd.f32 %v274, %v1015
      %v1017 = vpop.f32.mrb[0].mxu0
      %1018 = vmatprep.mubr.bf16.mxu0 %v737
      %1019 = vmatmul.mubr.bf16.gmra.mrb[0].mxu0 %v528
      %v1020 = vpop.f32.mrb[0].mxu0
      %v1021 = vadd.f32 %v274, %v1020
      %v1022 = vpop.f32.mrb[0].mxu0
      %v1023 = vpop.f32.mrb[0].mxu0
      %v1024 = vadd.f32 %v274, %v1023
      %v1025 = vpop.f32.mrb[0].mxu0
      %1026 = vmatprep.mubr.bf16.mxu0 %v740
      %1027 = vmatmul.mubr.bf16.gmra.mrb[0].mxu0 %v530
      %v1028 = vpop.f32.mrb[0].mxu0
      %v1029 = vadd.f32 %v274, %v1028
      %v1030 = vpop.f32.mrb[0].mxu0
      %v1031 = vpop.f32.mrb[0].mxu0
      %v1032 = vadd.f32 %v274, %v1031
      %v1033 = vpop.f32.mrb[0].mxu0
      %1034 = vdwg.mxu0
      %vm1035 = vcmask 64512
      %1036 = vst.msk [vmem:[%s175] sm:$0xff] %vm1035, %v781
      %1037 = vst.msk [vmem:[%s175 + $0x8] sm:$0xff] %vm1035, %v784
      %1038 = vst.msk [vmem:[%s175 + $0x10] sm:$0xff] %vm1035, %v789
      %1039 = vst.msk [vmem:[%s175 + $0x18] sm:$0xff] %vm1035, %v792
      %1040 = vst.msk [vmem:[%s175 + $0x20] sm:$0xff] %vm1035, %v797
      %1041 = vst.msk [vmem:[%s175 + $0x28] sm:$0xff] %vm1035, %v800
      %1042 = vst.msk [vmem:[%s175 + $0x30] sm:$0xff] %vm1035, %v805
      %1043 = vst.msk [vmem:[%s175 + $0x38] sm:$0xff] %vm1035, %v808
      %1044 = vst.msk [vmem:[%s175 + $0x40] sm:$0xff] %vm1035, %v813
      %1045 = vst.msk [vmem:[%s175 + $0x48] sm:$0xff] %vm1035, %v816
      %1046 = vst.msk [vmem:[%s175 + $0x50] sm:$0xff] %vm1035, %v821
      %1047 = vst.msk [vmem:[%s175 + $0x58] sm:$0xff] %vm1035, %v824
      %1048 = vst.msk [vmem:[%s175 + $0x60] sm:$0xff] %vm1035, %v829
      %1049 = vst.msk [vmem:[%s175 + $0x68] sm:$0xff] %vm1035, %v832
      %1050 = vst.msk [vmem:[%s175 + $0x70] sm:$0xff] %vm1035, %v837
      %1051 = vst.msk [vmem:[%s175 + $0x78] sm:$0xff] %vm1035, %v840
      %1052 = vst.msk [vmem:[%s175 + $0x80] sm:$0xff] %vm1035, %v845
      %1053 = vst.msk [vmem:[%s175 + $0x88] sm:$0xff] %vm1035, %v848
      %1054 = vst.msk [vmem:[%s175 + $0x90] sm:$0xff] %vm1035, %v853
      %1055 = vst.msk [vmem:[%s175 + $0x98] sm:$0xff] %vm1035, %v856
      %1056 = vst.msk [vmem:[%s175 + $0xa0] sm:$0xff] %vm1035, %v861
      %1057 = vst.msk [vmem:[%s175 + $0xa8] sm:$0xff] %vm1035, %v864
      %1058 = vst.msk [vmem:[%s175 + $0xb0] sm:$0xff] %vm1035, %v869
      %1059 = vst.msk [vmem:[%s175 + $0xb8] sm:$0xff] %vm1035, %v872
      %1060 = vst.msk [vmem:[%s175 + $0xc0] sm:$0xff] %vm1035, %v877
      %1061 = vst.msk [vmem:[%s175 + $0xc8] sm:$0xff] %vm1035, %v880
      %1062 = vst.msk [vmem:[%s175 + $0xd0] sm:$0xff] %vm1035, %v885
      %1063 = vst.msk [vmem:[%s175 + $0xd8] sm:$0xff] %vm1035, %v888
      %1064 = vst.msk [vmem:[%s175 + $0xe0] sm:$0xff] %vm1035, %v893
      %1065 = vst.msk [vmem:[%s175 + $0xe8] sm:$0xff] %vm1035, %v896
      %1066 = vst.msk [vmem:[%s175 + $0xf0] sm:$0xff] %vm1035, %v901
      %1067 = vst.msk [vmem:[%s175 + $0xf8] sm:$0xff] %vm1035, %v904
      %1068 = vst.msk [vmem:[%s175 + $0x100] sm:$0xff] %vm1035, %v909
      %1069 = vst.msk [vmem:[%s175 + $0x108] sm:$0xff] %vm1035, %v912
      %1070 = vst.msk [vmem:[%s175 + $0x110] sm:$0xff] %vm1035, %v917
      %1071 = vst.msk [vmem:[%s175 + $0x118] sm:$0xff] %vm1035, %v920
      %1072 = vst.msk [vmem:[%s175 + $0x120] sm:$0xff] %vm1035, %v925
      %1073 = vst.msk [vmem:[%s175 + $0x128] sm:$0xff] %vm1035, %v928
      %1074 = vst.msk [vmem:[%s175 + $0x130] sm:$0xff] %vm1035, %v933
      %1075 = vst.msk [vmem:[%s175 + $0x138] sm:$0xff] %vm1035, %v936
      %1076 = vst.msk [vmem:[%s175 + $0x140] sm:$0xff] %vm1035, %v941
      %1077 = vst.msk [vmem:[%s175 + $0x148] sm:$0xff] %vm1035, %v944
      %1078 = vst.msk [vmem:[%s175 + $0x150] sm:$0xff] %vm1035, %v949
      %1079 = vst.msk [vmem:[%s175 + $0x158] sm:$0xff] %vm1035, %v952
      %1080 = vst.msk [vmem:[%s175 + $0x160] sm:$0xff] %vm1035, %v957
      %1081 = vst.msk [vmem:[%s175 + $0x168] sm:$0xff] %vm1035, %v960
      %1082 = vst.msk [vmem:[%s175 + $0x170] sm:$0xff] %vm1035, %v965
      %1083 = vst.msk [vmem:[%s175 + $0x178] sm:$0xff] %vm1035, %v968
      %1084 = vst.msk [vmem:[%s175 + $0x180] sm:$0xff] %vm1035, %v973
      %1085 = vst.msk [vmem:[%s175 + $0x188] sm:$0xff] %vm1035, %v976
      %1086 = vst.msk [vmem:[%s175 + $0x190] sm:$0xff] %vm1035, %v981
      %1087 = vst.msk [vmem:[%s175 + $0x198] sm:$0xff] %vm1035, %v984
      %1088 = vst.msk [vmem:[%s175 + $0x1a0] sm:$0xff] %vm1035, %v989
      %1089 = vst.msk [vmem:[%s175 + $0x1a8] sm:$0xff] %vm1035, %v992
      %1090 = vst.msk [vmem:[%s175 + $0x1b0] sm:$0xff] %vm1035, %v997
      %1091 = vst.msk [vmem:[%s175 + $0x1b8] sm:$0xff] %vm1035, %v1000
      %1092 = vst.msk [vmem:[%s175 + $0x1c0] sm:$0xff] %vm1035, %v1005
      %1093 = vst.msk [vmem:[%s175 + $0x1c8] sm:$0xff] %vm1035, %v1008
      %1094 = vst.msk [vmem:[%s175 + $0x1d0] sm:$0xff] %vm1035, %v1013
      %1095 = vst.msk [vmem:[%s175 + $0x1d8] sm:$0xff] %vm1035, %v1016
      %1096 = vst.msk [vmem:[%s175 + $0x1e0] sm:$0xff] %vm1035, %v1021
      %1097 = vst.msk [vmem:[%s175 + $0x1e8] sm:$0xff] %vm1035, %v1024
      %1098 = vst.msk [vmem:[%s175 + $0x1f0] sm:$0xff] %vm1035, %v1029
      %1099 = vst.msk [vmem:[%s175 + $0x1f8] sm:$0xff] %vm1035, %v1032
      %s1100 = smul.u32 64, %s14
      %p1101 = scmp.lt.s32.totalorder %s1100, 2943
      %s1102 = scalar_select %p1101, %s1100, 2943
      %s1103 = smul.addr %s1102, 8
      %s1104 = scalar_lea.vmem %s3, %s1103
      // Predicated region
      $region33: #{forward.18} parent=31 // pred_check
        %p1105 = pneg %p100
      $region34: #{forward.18} parent=31 // pred_check_branch
        %1107 = sbr.rel (%p1105) target = $region36
      $region35: #{forward.18} parent=31 // pred_region
        %s1108 = smul.u32 64, %s14
      $region36: #{forward.18} parent=31 // pred_fallthru
        _
    $region32: #{forward.18} parent=5 // pred_fallthru
      _
    %p1109 = scmp.le.s32.totalorder 2, %s9
    // Predicated region
    $region37: #{forward.18} parent=5 // pred_check
      %p1110 = pneg %p1109
    $region38: #{forward.18} parent=5 // pred_check_branch
      %1112 = sbr.rel (%p1110) target = $region40
    $region39: #{forward.18} parent=5 // pred_region
      %s1113 = ssub.s32 %s9, 2
      // Predicated region
      $region41: #{forward.18} parent=39 // pred_check
        %p1114 = pneg %p106
      $region42: #{forward.18} parent=39 // pred_check_branch
        %1116 = sbr.rel (%p1114) target = $region44
      $region43: #{forward.18} parent=39 // pred_region
        %s1117 = smul.u32 64, %s15
        %p1118 = scmp.lt.s32.totalorder %s1117, 2943
        %s1119 = scalar_select %p1118, %s1117, 2943
        %s1120 = smul.addr %s1119, 8
        %s1121 = scalar_lea.vmem %s3, %s1120
      $region44: #{forward.18} parent=39 // pred_fallthru
        _
    $region40: #{forward.18} parent=5 // pred_fallthru
      _
  $region6: #{forward.18} parent=0 // loop_footer
    %s13 = sadd.s32 1, %s9
  $region7: #{forward.18} parent=0 // loop_footer_branch
    %8 = sbr.rel target = $region3
  $region8: #{forward.18} parent=0 // loop_exit
    _

// kernel: forward.20
$region0: #{forward.20}
  #allocation0 [shape = 'u32[]', space=smem, size = 0x4, offset = 0x4, fixed_abs, tag = 'smem constant byte address 0x4 - core index']
  #allocation1 [shape = 'u32[144,128]{1,0:T(1,128)}', space=vmem, size = 0x12000, scoped, tag = 'internal scratch']
  %s0 = inlined_call_operand.vmem [shape: bf16[11264,24], index: 0, kind: input, shape index: {}]
  %s1 = inlined_call_operand.vmem [shape: bf16[24,16], index: 1, kind: input, shape index: {}]
  %s2 = inlined_call_operand.vmem [shape: f32[1,16], index: 2, kind: input, shape index: {}]
  %s3 = inlined_call_operand.vmem [shape: f32[11264,16], index: 3, kind: output, shape index: {}]
  %s4 = sld [smem:[#allocation0]]
  $region45: #{forward.20} parent=0
    _
  %s6 = ssub.s32 1, %s4
  %s7 = scalar_select 0, %s6, %s4
  loop: start=0, step=1, limit=24
  $region2: #{forward.20} parent=0 // loop_pre_header
    _
  $region3: #{forward.20} parent=0 // loop_header
    %s9 = sphi 0, %s13
    %p10 = scmp.ge.s32.totalorder %s9, 24
    %s19 = sphi 0, %s21
    %s22 = sphi 0, %s19
    %s23 = sphi 0, %s22
    %s39 = sphi 0, %s23
    %s43 = sphi 0, %s43
    %s45 = sphi 0, %s43
    %s46 = sphi 0, %s45
    %s60 = sphi 0, %s46
    %s64 = sphi 0, %s64
    %s66 = sphi 0, %s64
    %s67 = sphi 0, %s66
    %s81 = sphi 0, %s67
    %s87 = sphi 0, %s89
    %s90 = sphi 0, %s87
    %s91 = sphi 0, %s90
    %s107 = sphi 0, %s91
  $region4: #{forward.20} parent=0 // loop_header_branch
    %12 = sbr.rel (%p10) target = $region8
  $region5: #{forward.20} parent=0 // loop_body
    %s14 = ssub.s32 %s9, 1
    %s15 = ssub.s32 %s9, 2
    %s16 = sadd.s32 %s9, 1
    %s17 = ssub.s32 %s9, %s16
    %p18 = scmp.eq.s32.totalorder %s17, 0
    %s20 = sadd.s32 %s19, 1
    %s21 = scalar_select %p18, %s19, %s20
    %p24 = pneg %p18
    %p25 = scmp.eq.s32.totalorder %s9, 21
    %p26 = por %p24, %p25
    %p27 = scmp.ne.s32.totalorder %s19, %s22
    %p28 = scmp.eq.s32.totalorder %s9, 0
    %p29 = por %p27, %p28
    %p30 = scmp.ne.s32.totalorder %s19, %s22
    %p31 = scmp.eq.s32.totalorder %s14, 21
    %p32 = por %p30, %p31
    %p33 = scmp.ne.s32.totalorder %s22, %s23
    %p34 = scmp.eq.s32.totalorder %s14, 0
    %p35 = por %p33, %p34
    %p36 = scmp.ne.s32.totalorder %s22, %s23
    %p37 = scmp.eq.s32.totalorder %s15, 21
    %p38 = por %p36, %p37
    %p40 = scmp.ne.s32.totalorder %s23, %s39
    %p41 = scmp.eq.s32.totalorder %s15, 0
    %p42 = por %p40, %p41
    %s44 = sadd.s32 %s43, 1
    %p47 = scmp.eq.s32.totalorder %s9, 21
    %p48 = scmp.ne.s32.totalorder %s43, %s45
    %p49 = scmp.eq.s32.totalorder %s9, 0
    %p50 = por %p48, %p49
    %p51 = scmp.ne.s32.totalorder %s43, %s45
    %p52 = scmp.eq.s32.totalorder %s14, 21
    %p53 = por %p51, %p52
    %p54 = scmp.ne.s32.totalorder %s45, %s46
    %p55 = scmp.eq.s32.totalorder %s14, 0
    %p56 = por %p54, %p55
    %p57 = scmp.ne.s32.totalorder %s45, %s46
    %p58 = scmp.eq.s32.totalorder %s15, 21
    %p59 = por %p57, %p58
    %p61 = scmp.ne.s32.totalorder %s46, %s60
    %p62 = scmp.eq.s32.totalorder %s15, 0
    %p63 = por %p61, %p62
    %s65 = sadd.s32 %s64, 1
    %p68 = scmp.eq.s32.totalorder %s9, 21
    %p69 = scmp.ne.s32.totalorder %s64, %s66
    %p70 = scmp.eq.s32.totalorder %s9, 0
    %p71 = por %p69, %p70
    %p72 = scmp.ne.s32.totalorder %s64, %s66
    %p73 = scmp.eq.s32.totalorder %s14, 21
    %p74 = por %p72, %p73
    %p75 = scmp.ne.s32.totalorder %s66, %s67
    %p76 = scmp.eq.s32.totalorder %s14, 0
    %p77 = por %p75, %p76
    %p78 = scmp.ne.s32.totalorder %s66, %s67
    %p79 = scmp.eq.s32.totalorder %s15, 21
    %p80 = por %p78, %p79
    %p82 = scmp.ne.s32.totalorder %s67, %s81
    %p83 = scmp.eq.s32.totalorder %s15, 0
    %p84 = por %p82, %p83
    %s85 = ssub.s32 %s9, %s16
    %p86 = scmp.eq.s32.totalorder %s85, 0
    %s88 = sadd.s32 %s87, 1
    %s89 = scalar_select %p86, %s87, %s88
    %p92 = pneg %p86
    %p93 = scmp.eq.s32.totalorder %s9, 21
    %p94 = por %p92, %p93
    %p95 = scmp.ne.s32.totalorder %s87, %s90
    %p96 = scmp.eq.s32.totalorder %s9, 0
    %p97 = por %p95, %p96
    %p98 = scmp.ne.s32.totalorder %s87, %s90
    %p99 = scmp.eq.s32.totalorder %s14, 21
    %p100 = por %p98, %p99
    %p101 = scmp.ne.s32.totalorder %s90, %s91
    %p102 = scmp.eq.s32.totalorder %s14, 0
    %p103 = por %p101, %p102
    %p104 = scmp.ne.s32.totalorder %s90, %s91
    %p105 = scmp.eq.s32.totalorder %s15, 21
    %p106 = por %p104, %p105
    %p108 = scmp.ne.s32.totalorder %s91, %s107
    %p109 = scmp.eq.s32.totalorder %s15, 0
    %p110 = por %p108, %p109
    %p111 = scmp.le.s32.totalorder 1, %s9
    %p112 = scmp.lt.s32.totalorder %s9, 23
    %p113 = pnand %p111, %p112
    %p114 = pneg %p113
    // Predicated region
    $region9: #{forward.20} parent=5 // pred_check
      _
    $region10: #{forward.20} parent=5 // pred_check_branch
      %116 = sbr.rel (%p113) target = $region12
    $region11: #{forward.20} parent=5 // pred_region
      %s117 = ssub.s32 %s9, 1
      // Predicated region
      $region13: #{forward.20} parent=11 // pred_check
        %p118 = pneg %p56
      $region14: #{forward.20} parent=11 // pred_check_branch
        %120 = sbr.rel (%p118) target = $region16
      $region15: #{forward.20} parent=11 // pred_region
        _
      $region16: #{forward.20} parent=11 // pred_fallthru
        _
      // Predicated region
      $region17: #{forward.20} parent=11 // pred_check
        %p121 = pneg %p77
      $region18: #{forward.20} parent=11 // pred_check_branch
        %123 = sbr.rel (%p121) target = $region20
      $region19: #{forward.20} parent=11 // pred_region
        _
      $region20: #{forward.20} parent=11 // pred_fallthru
        _
    $region12: #{forward.20} parent=5 // pred_fallthru
      _
    %p124 = scmp.lt.s32.totalorder %s9, 22
    // Predicated region
    $region21: #{forward.20} parent=5 // pred_check
      %p125 = pneg %p124
    $region22: #{forward.20} parent=5 // pred_check_branch
      %127 = sbr.rel (%p125) target = $region24
    $region23: #{forward.20} parent=5 // pred_region
      // Predicated region
      $region25: #{forward.20} parent=23 // pred_check
        %p128 = pneg %p29
      $region26: #{forward.20} parent=23 // pred_check_branch
        %130 = sbr.rel (%p128) target = $region28
      $region27: #{forward.20} parent=23 // pred_region
        %s131 = smul.u32 64, %s9
        %p132 = scmp.lt.s32.totalorder %s131, 1407
        %s133 = scalar_select %p132, %s131, 1407
        %s134 = smul.addr %s133, 4
        %s135 = scalar_lea.vmem %s0, %s134
        %s136 = smul.u32 64, %s9
      $region28: #{forward.20} parent=23 // pred_fallthru
        _
    $region24: #{forward.20} parent=5 // pred_fallthru
      _
    %p137 = scmp.le.s32.totalorder 1, %s9
    %p138 = scmp.lt.s32.totalorder %s9, 23
    %p139 = pnand %p137, %p138
    %p140 = pneg %p139
    // Predicated region
    $region29: #{forward.20} parent=5 // pred_check
      _
    $region30: #{forward.20} parent=5 // pred_check_branch
      %142 = sbr.rel (%p139) target = $region32
    $region31: #{forward.20} parent=5 // pred_region
      %s143 = ssub.s32 %s9, 1
      %s144 = smul.u32 64, %s14
      %p145 = scmp.lt.s32.totalorder %s144, 1407
      %s146 = scalar_select %p145, %s144, 1407
      %s147 = smul.addr %s146, 4
      %s148 = scalar_lea.vmem %s0, %s147
      %p149 = pneg %p35
      %p150 = pneg %p32
      %p151 = pneg %p56
      %p152 = pneg %p53
      %p153 = pneg %p77
      %p154 = pneg %p74
      %p155 = pneg %p103
      %p156 = pneg %p100
      %s157 = smul.u32 64, %s14
      %p158 = scmp.lt.s32.totalorder %s157, 1407
      %s159 = scalar_select %p158, %s157, 1407
      %s160 = smul.addr %s159, 8
      %s161 = scalar_lea.vmem %s3, %s160
      %s162 = smul.u32 64, %s14
      %p163 = scmp.lt.s32.totalorder %s162, 1407
      %s164 = scalar_select %p163, %s162, 1407
      %s165 = smul.addr %s164, 4
      %s166 = scalar_lea.vmem %s0, %s165
      %s167 = smul.u32 64, %s14
      %s168 = smul.u32 64, %s14
      %p169 = scmp.lt.s32.totalorder %s168, 1407
      %s170 = scalar_select %p169, %s168, 1407
      %s171 = smul.addr %s170, 8
      %s172 = scalar_lea.vmem %s3, %s171
      %s173 = smul.u32 64, %s14
      %v175 = vld [vmem:[%s166] sm:$0xf]
      %v176 = vld [vmem:[%s166 + $0x4] sm:$0xf]
      %v177 = vld [vmem:[%s166 + $0x8] sm:$0xf]
      %v178 = vld [vmem:[%s166 + $0xc] sm:$0xf]
      %v179 = vld [vmem:[%s166 + $0x10] sm:$0xf]
      %v180 = vld [vmem:[%s166 + $0x14] sm:$0xf]
      %v181 = vld [vmem:[%s166 + $0x18] sm:$0xf]
      %v182 = vld [vmem:[%s166 + $0x1c] sm:$0xf]
      %v183 = vld [vmem:[%s166 + $0x20] sm:$0xf]
      %v184 = vld [vmem:[%s166 + $0x24] sm:$0xf]
      %v185 = vld [vmem:[%s166 + $0x28] sm:$0xf]
      %v186 = vld [vmem:[%s166 + $0x2c] sm:$0xf]
      %v187 = vld [vmem:[%s166 + $0x30] sm:$0xf]
      %v188 = vld [vmem:[%s166 + $0x34] sm:$0xf]
      %v189 = vld [vmem:[%s166 + $0x38] sm:$0xf]
      %v190 = vld [vmem:[%s166 + $0x3c] sm:$0xf]
      %v191 = vld [vmem:[%s166 + $0x40] sm:$0xf]
      %v192 = vld [vmem:[%s166 + $0x44] sm:$0xf]
      %v193 = vld [vmem:[%s166 + $0x48] sm:$0xf]
      %v194 = vld [vmem:[%s166 + $0x4c] sm:$0xf]
      %v195 = vld [vmem:[%s166 + $0x50] sm:$0xf]
      %v196 = vld [vmem:[%s166 + $0x54] sm:$0xf]
      %v197 = vld [vmem:[%s166 + $0x58] sm:$0xf]
      %v198 = vld [vmem:[%s166 + $0x5c] sm:$0xf]
      %v199 = vld [vmem:[%s166 + $0x60] sm:$0xf]
      %v200 = vld [vmem:[%s166 + $0x64] sm:$0xf]
      %v201 = vld [vmem:[%s166 + $0x68] sm:$0xf]
      %v202 = vld [vmem:[%s166 + $0x6c] sm:$0xf]
      %v203 = vld [vmem:[%s166 + $0x70] sm:$0xf]
      %v204 = vld [vmem:[%s166 + $0x74] sm:$0xf]
      %v205 = vld [vmem:[%s166 + $0x78] sm:$0xf]
      %v206 = vld [vmem:[%s166 + $0x7c] sm:$0xf]
      %v207 = vld [vmem:[%s166 + $0x80] sm:$0xf]
      %v208 = vld [vmem:[%s166 + $0x84] sm:$0xf]
      %v209 = vld [vmem:[%s166 + $0x88] sm:$0xf]
      %v210 = vld [vmem:[%s166 + $0x8c] sm:$0xf]
      %v211 = vld [vmem:[%s166 + $0x90] sm:$0xf]
      %v212 = vld [vmem:[%s166 + $0x94] sm:$0xf]
      %v213 = vld [vmem:[%s166 + $0x98] sm:$0xf]
      %v214 = vld [vmem:[%s166 + $0x9c] sm:$0xf]
      %v215 = vld [vmem:[%s166 + $0xa0] sm:$0xf]
      %v216 = vld [vmem:[%s166 + $0xa4] sm:$0xf]
      %v217 = vld [vmem:[%s166 + $0xa8] sm:$0xf]
      %v218 = vld [vmem:[%s166 + $0xac] sm:$0xf]
      %v219 = vld [vmem:[%s166 + $0xb0] sm:$0xf]
      %v220 = vld [vmem:[%s166 + $0xb4] sm:$0xf]
      %v221 = vld [vmem:[%s166 + $0xb8] sm:$0xf]
      %v222 = vld [vmem:[%s166 + $0xbc] sm:$0xf]
      %v223 = vld [vmem:[%s166 + $0xc0] sm:$0xf]
      %v224 = vld [vmem:[%s166 + $0xc4] sm:$0xf]
      %v225 = vld [vmem:[%s166 + $0xc8] sm:$0xf]
      %v226 = vld [vmem:[%s166 + $0xcc] sm:$0xf]
      %v227 = vld [vmem:[%s166 + $0xd0] sm:$0xf]
      %v228 = vld [vmem:[%s166 + $0xd4] sm:$0xf]
      %v229 = vld [vmem:[%s166 + $0xd8] sm:$0xf]
      %v230 = vld [vmem:[%s166 + $0xdc] sm:$0xf]
      %v231 = vld [vmem:[%s166 + $0xe0] sm:$0xf]
      %v232 = vld [vmem:[%s166 + $0xe4] sm:$0xf]
      %v233 = vld [vmem:[%s166 + $0xe8] sm:$0xf]
      %v234 = vld [vmem:[%s166 + $0xec] sm:$0xf]
      %v235 = vld [vmem:[%s166 + $0xf0] sm:$0xf]
      %v236 = vld [vmem:[%s166 + $0xf4] sm:$0xf]
      %v237 = vld [vmem:[%s166 + $0xf8] sm:$0xf]
      %v238 = vld [vmem:[%s166 + $0xfc] sm:$0xf]
      %v239 = vld [vmem:[%s1] sm:$0xf]
      %v240 = vld [vmem:[%s1 + $0x4] sm:$0xf]
      %v241 = vld [vmem:[%s1 + $0x8] sm:$0xf]
      %v242 = vld [vmem:[%s2] sm:$0x1]
      %v244 = vlaneseq
      %v245 = vshrl.u32 %v244, 7
      %v246 = vsub.s32 0, %v245
      %v247 = vrot.slane %v242, %v246
      %v313 = vunpack.c.l.b16 %v175
      %v314 = vunpack.c.l.b16 %v176
      %v315 = vunpack.c.l.b16 %v177
      %v316 = vunpack.c.l.b16 %v178
      %v317 = vunpack.c.l.b16 %v179
      %v318 = vunpack.c.l.b16 %v180
      %v319 = vunpack.c.l.b16 %v181
      %v320 = vunpack.c.l.b16 %v182
      %v321 = vunpack.c.l.b16 %v183
      %v322 = vunpack.c.l.b16 %v184
      %v323 = vunpack.c.l.b16 %v185
      %v324 = vunpack.c.l.b16 %v186
      %v325 = vunpack.c.l.b16 %v187
      %v326 = vunpack.c.l.b16 %v188
      %v327 = vunpack.c.l.b16 %v189
      %v328 = vunpack.c.l.b16 %v190
      %v329 = vunpack.c.l.b16 %v191
      %v330 = vunpack.c.l.b16 %v192
      %v331 = vunpack.c.l.b16 %v193
      %v332 = vunpack.c.l.b16 %v194
      %v333 = vunpack.c.l.b16 %v195
      %v334 = vunpack.c.l.b16 %v196
      %v335 = vunpack.c.l.b16 %v197
      %v336 = vunpack.c.l.b16 %v198
      %v337 = vunpack.c.l.b16 %v199
      %v338 = vunpack.c.l.b16 %v200
      %v339 = vunpack.c.l.b16 %v201
      %v340 = vunpack.c.l.b16 %v202
      %v341 = vunpack.c.l.b16 %v203
      %v342 = vunpack.c.l.b16 %v204
      %v343 = vunpack.c.l.b16 %v205
      %v344 = vunpack.c.l.b16 %v206
      %v345 = vunpack.c.l.b16 %v207
      %v346 = vunpack.c.l.b16 %v208
      %v347 = vunpack.c.l.b16 %v209
      %v348 = vunpack.c.l.b16 %v210
      %v349 = vunpack.c.l.b16 %v211
      %v350 = vunpack.c.l.b16 %v212
      %v351 = vunpack.c.l.b16 %v213
      %v352 = vunpack.c.l.b16 %v214
      %v353 = vunpack.c.l.b16 %v215
      %v354 = vunpack.c.l.b16 %v216
      %v355 = vunpack.c.l.b16 %v217
      %v356 = vunpack.c.l.b16 %v218
      %v357 = vunpack.c.l.b16 %v219
      %v358 = vunpack.c.l.b16 %v220
      %v359 = vunpack.c.l.b16 %v221
      %v360 = vunpack.c.l.b16 %v222
      %v361 = vunpack.c.l.b16 %v223
      %v362 = vunpack.c.l.b16 %v224
      %v363 = vunpack.c.l.b16 %v225
      %v364 = vunpack.c.l.b16 %v226
      %v365 = vunpack.c.l.b16 %v227
      %v366 = vunpack.c.l.b16 %v228
      %v367 = vunpack.c.l.b16 %v229
      %v368 = vunpack.c.l.b16 %v230
      %v369 = vunpack.c.l.b16 %v231
      %v370 = vunpack.c.l.b16 %v232
      %v371 = vunpack.c.l.b16 %v233
      %v372 = vunpack.c.l.b16 %v234
      %v373 = vunpack.c.l.b16 %v235
      %v374 = vunpack.c.l.b16 %v236
      %v375 = vunpack.c.l.b16 %v237
      %v376 = vunpack.c.l.b16 %v238
      %v377 = vpack.c.b16 %v314, %v313
      %v378 = vpack.c.b16 %v316, %v315
      %v379 = vpack.c.b16 %v318, %v317
      %v380 = vpack.c.b16 %v320, %v319
      %v381 = vpack.c.b16 %v322, %v321
      %v382 = vpack.c.b16 %v324, %v323
      %v383 = vpack.c.b16 %v326, %v325
      %v384 = vpack.c.b16 %v328, %v327
      %v385 = vpack.c.b16 %v330, %v329
      %v386 = vpack.c.b16 %v332, %v331
      %v387 = vpack.c.b16 %v334, %v333
      %v388 = vpack.c.b16 %v336, %v335
      %v389 = vpack.c.b16 %v338, %v337
      %v390 = vpack.c.b16 %v340, %v339
      %v391 = vpack.c.b16 %v342, %v341
      %v392 = vpack.c.b16 %v344, %v343
      %v393 = vpack.c.b16 %v346, %v345
      %v394 = vpack.c.b16 %v348, %v347
      %v395 = vpack.c.b16 %v350, %v349
      %v396 = vpack.c.b16 %v352, %v351
      %v397 = vpack.c.b16 %v354, %v353
      %v398 = vpack.c.b16 %v356, %v355
      %v399 = vpack.c.b16 %v358, %v357
      %v400 = vpack.c.b16 %v360, %v359
      %v401 = vpack.c.b16 %v362, %v361
      %v402 = vpack.c.b16 %v364, %v363
      %v403 = vpack.c.b16 %v366, %v365
      %v404 = vpack.c.b16 %v368, %v367
      %v405 = vpack.c.b16 %v370, %v369
      %v406 = vpack.c.b16 %v372, %v371
      %v407 = vpack.c.b16 %v374, %v373
      %v408 = vpack.c.b16 %v376, %v375
      %v412 = vunpack.c.l.b16 %v239
      %v413 = vunpack.c.l.b16 %v240
      %v414 = vunpack.c.l.b16 %v241
      %v415 = vpack.c.b16 %v413, %v412
      %v416 = vpack.c.b16 %v414, %v414
      %vm418 = vcmask 195584
      %v420 = vsel %vm418, %v377, 0
      %v423 = vsel %vm418, %v378, 0
      %v426 = vsel %vm418, %v379, 0
      %v429 = vsel %vm418, %v380, 0
      %v432 = vsel %vm418, %v381, 0
      %v435 = vsel %vm418, %v382, 0
      %v438 = vsel %vm418, %v383, 0
      %v441 = vsel %vm418, %v384, 0
      %v444 = vsel %vm418, %v385, 0
      %v447 = vsel %vm418, %v386, 0
      %v450 = vsel %vm418, %v387, 0
      %v453 = vsel %vm418, %v388, 0
      %v456 = vsel %vm418, %v389, 0
      %v459 = vsel %vm418, %v390, 0
      %v462 = vsel %vm418, %v391, 0
      %v465 = vsel %vm418, %v392, 0
      %v468 = vsel %vm418, %v393, 0
      %v471 = vsel %vm418, %v394, 0
      %v474 = vsel %vm418, %v395, 0
      %v477 = vsel %vm418, %v396, 0
      %v480 = vsel %vm418, %v397, 0
      %v483 = vsel %vm418, %v398, 0
      %v486 = vsel %vm418, %v399, 0
      %v489 = vsel %vm418, %v400, 0
      %v492 = vsel %vm418, %v401, 0
      %v495 = vsel %vm418, %v402, 0
      %v498 = vsel %vm418, %v403, 0
      %v501 = vsel %vm418, %v404, 0
      %v504 = vsel %vm418, %v405, 0
      %v507 = vsel %vm418, %v406, 0
      %v510 = vsel %vm418, %v407, 0
      %v513 = vsel %vm418, %v408, 0
      %vm515 = vcmask 1043456
      %v517 = vsel %vm515, %v416, 0
      %519 = vmatprep.subr.bf16.mxu0 0
      %520 = vmatpush1.bf16.msra.mxu0 %v415
      %521 = vmatprep.subr.bf16.mxu0 0
      %522 = vmatpush1.bf16.msra.mxu0 %v517
      %523 = vmatprep.subr.bf16.mxu0 0
      %524 = vmatpush1.bf16.msra.mxu0 0
      %525 = vmatprep.subr.bf16.mxu0 0
      %526 = vmatpush1.bf16.msra.mxu0 0
      %527 = vmatprep.subr.bf16.mxu0 0
      %528 = vmatpush1.bf16.msra.mxu0 0
      %529 = vmatprep.subr.bf16.mxu0 0
      %530 = vmatpush1.bf16.msra.mxu0 0
      %531 = vmatprep.subr.bf16.mxu0 0
      %532 = vmatpush1.bf16.msra.mxu0 0
      %533 = vmatprep.subr.bf16.mxu0 0
      %534 = vmatpush1.bf16.msra.mxu0 0
      %535 = vmatprep.subr.bf16.mxu0 0
      %536 = vmatpush1.bf16.msra.mxu0 0
      %537 = vmatprep.subr.bf16.mxu0 0
      %538 = vmatpush1.bf16.msra.mxu0 0
      %539 = vmatprep.subr.bf16.mxu0 0
      %540 = vmatpush1.bf16.msra.mxu0 0
      %541 = vmatprep.subr.bf16.mxu0 0
      %542 = vmatpush1.bf16.msra.mxu0 0
      %543 = vmatprep.subr.bf16.mxu0 0
      %544 = vmatpush1.bf16.msra.mxu0 0
      %545 = vmatprep.subr.bf16.mxu0 0
      %546 = vmatpush1.bf16.msra.mxu0 0
      %547 = vmatprep.subr.bf16.mxu0 0
      %548 = vmatpush1.bf16.msra.mxu0 0
      %549 = vmatprep.subr.bf16.mxu0 0
      %550 = vmatpush1.bf16.msra.mxu0 0
      %551 = vmatprep.mubr.bf16.mxu0 0
      %552 = vmatmul.mubr.bf16.gmra.mrb[0].mxu0 %v420
      %v553 = vpop.f32.mrb[0].mxu0
      %v554 = vadd.f32 %v247, %v553
      %v555 = vpop.f32.mrb[0].mxu0
      %v556 = vpop.f32.mrb[0].mxu0
      %v557 = vadd.f32 %v247, %v556
      %v558 = vpop.f32.mrb[0].mxu0
      %559 = vmatprep.mubr.bf16.mxu0 0
      %560 = vmatmul.mubr.bf16.gmra.mrb[0].mxu0 %v423
      %v561 = vpop.f32.mrb[0].mxu0
      %v562 = vadd.f32 %v247, %v561
      %v563 = vpop.f32.mrb[0].mxu0
      %v564 = vpop.f32.mrb[0].mxu0
      %v565 = vadd.f32 %v247, %v564
      %v566 = vpop.f32.mrb[0].mxu0
      %567 = vmatprep.mubr.bf16.mxu0 0
      %568 = vmatmul.mubr.bf16.gmra.mrb[0].mxu0 %v426
      %v569 = vpop.f32.mrb[0].mxu0
      %v570 = vadd.f32 %v247, %v569
      %v571 = vpop.f32.mrb[0].mxu0
      %v572 = vpop.f32.mrb[0].mxu0
      %v573 = vadd.f32 %v247, %v572
      %v574 = vpop.f32.mrb[0].mxu0
      %575 = vmatprep.mubr.bf16.mxu0 0
      %576 = vmatmul.mubr.bf16.gmra.mrb[0].mxu0 %v429
      %v577 = vpop.f32.mrb[0].mxu0
      %v578 = vadd.f32 %v247, %v577
      %v579 = vpop.f32.mrb[0].mxu0
      %v580 = vpop.f32.mrb[0].mxu0
      %v581 = vadd.f32 %v247, %v580
      %v582 = vpop.f32.mrb[0].mxu0
      %583 = vmatprep.mubr.bf16.mxu0 0
      %584 = vmatmul.mubr.bf16.gmra.mrb[0].mxu0 %v432
      %v585 = vpop.f32.mrb[0].mxu0
      %v586 = vadd.f32 %v247, %v585
      %v587 = vpop.f32.mrb[0].mxu0
      %v588 = vpop.f32.mrb[0].mxu0
      %v589 = vadd.f32 %v247, %v588
      %v590 = vpop.f32.mrb[0].mxu0
      %591 = vmatprep.mubr.bf16.mxu0 0
      %592 = vmatmul.mubr.bf16.gmra.mrb[0].mxu0 %v435
      %v593 = vpop.f32.mrb[0].mxu0
      %v594 = vadd.f32 %v247, %v593
      %v595 = vpop.f32.mrb[0].mxu0
      %v596 = vpop.f32.mrb[0].mxu0
      %v597 = vadd.f32 %v247, %v596
      %v598 = vpop.f32.mrb[0].mxu0
      %599 = vmatprep.mubr.bf16.mxu0 0
      %600 = vmatmul.mubr.bf16.gmra.mrb[0].mxu0 %v438
      %v601 = vpop.f32.mrb[0].mxu0
      %v602 = vadd.f32 %v247, %v601
      %v603 = vpop.f32.mrb[0].mxu0
      %v604 = vpop.f32.mrb[0].mxu0
      %v605 = vadd.f32 %v247, %v604
      %v606 = vpop.f32.mrb[0].mxu0
      %607 = vmatprep.mubr.bf16.mxu0 0
      %608 = vmatmul.mubr.bf16.gmra.mrb[0].mxu0 %v441
      %v609 = vpop.f32.mrb[0].mxu0
      %v610 = vadd.f32 %v247, %v609
      %v611 = vpop.f32.mrb[0].mxu0
      %v612 = vpop.f32.mrb[0].mxu0
      %v613 = vadd.f32 %v247, %v612
      %v614 = vpop.f32.mrb[0].mxu0
      %615 = vmatprep.mubr.bf16.mxu0 0
      %616 = vmatmul.mubr.bf16.gmra.mrb[0].mxu0 %v444
      %v617 = vpop.f32.mrb[0].mxu0
      %v618 = vadd.f32 %v247, %v617
      %v619 = vpop.f32.mrb[0].mxu0
      %v620 = vpop.f32.mrb[0].mxu0
      %v621 = vadd.f32 %v247, %v620
      %v622 = vpop.f32.mrb[0].mxu0
      %623 = vmatprep.mubr.bf16.mxu0 0
      %624 = vmatmul.mubr.bf16.gmra.mrb[0].mxu0 %v447
      %v625 = vpop.f32.mrb[0].mxu0
      %v626 = vadd.f32 %v247, %v625
      %v627 = vpop.f32.mrb[0].mxu0
      %v628 = vpop.f32.mrb[0].mxu0
      %v629 = vadd.f32 %v247, %v628
      %v630 = vpop.f32.mrb[0].mxu0
      %631 = vmatprep.mubr.bf16.mxu0 0
      %632 = vmatmul.mubr.bf16.gmra.mrb[0].mxu0 %v450
      %v633 = vpop.f32.mrb[0].mxu0
      %v634 = vadd.f32 %v247, %v633
      %v635 = vpop.f32.mrb[0].mxu0
      %v636 = vpop.f32.mrb[0].mxu0
      %v637 = vadd.f32 %v247, %v636
      %v638 = vpop.f32.mrb[0].mxu0
      %639 = vmatprep.mubr.bf16.mxu0 0
      %640 = vmatmul.mubr.bf16.gmra.mrb[0].mxu0 %v453
      %v641 = vpop.f32.mrb[0].mxu0
      %v642 = vadd.f32 %v247, %v641
      %v643 = vpop.f32.mrb[0].mxu0
      %v644 = vpop.f32.mrb[0].mxu0
      %v645 = vadd.f32 %v247, %v644
      %v646 = vpop.f32.mrb[0].mxu0
      %647 = vmatprep.mubr.bf16.mxu0 0
      %648 = vmatmul.mubr.bf16.gmra.mrb[0].mxu0 %v456
      %v649 = vpop.f32.mrb[0].mxu0
      %v650 = vadd.f32 %v247, %v649
      %v651 = vpop.f32.mrb[0].mxu0
      %v652 = vpop.f32.mrb[0].mxu0
      %v653 = vadd.f32 %v247, %v652
      %v654 = vpop.f32.mrb[0].mxu0
      %655 = vmatprep.mubr.bf16.mxu0 0
      %656 = vmatmul.mubr.bf16.gmra.mrb[0].mxu0 %v459
      %v657 = vpop.f32.mrb[0].mxu0
      %v658 = vadd.f32 %v247, %v657
      %v659 = vpop.f32.mrb[0].mxu0
      %v660 = vpop.f32.mrb[0].mxu0
      %v661 = vadd.f32 %v247, %v660
      %v662 = vpop.f32.mrb[0].mxu0
      %663 = vmatprep.mubr.bf16.mxu0 0
      %664 = vmatmul.mubr.bf16.gmra.mrb[0].mxu0 %v462
      %v665 = vpop.f32.mrb[0].mxu0
      %v666 = vadd.f32 %v247, %v665
      %v667 = vpop.f32.mrb[0].mxu0
      %v668 = vpop.f32.mrb[0].mxu0
      %v669 = vadd.f32 %v247, %v668
      %v670 = vpop.f32.mrb[0].mxu0
      %671 = vmatprep.mubr.bf16.mxu0 0
      %672 = vmatmul.mubr.bf16.gmra.mrb[0].mxu0 %v465
      %v673 = vpop.f32.mrb[0].mxu0
      %v674 = vadd.f32 %v247, %v673
      %v675 = vpop.f32.mrb[0].mxu0
      %v676 = vpop.f32.mrb[0].mxu0
      %v677 = vadd.f32 %v247, %v676
      %v678 = vpop.f32.mrb[0].mxu0
      %679 = vmatprep.mubr.bf16.mxu0 0
      %680 = vmatmul.mubr.bf16.gmra.mrb[0].mxu0 %v468
      %v681 = vpop.f32.mrb[0].mxu0
      %v682 = vadd.f32 %v247, %v681
      %v683 = vpop.f32.mrb[0].mxu0
      %v684 = vpop.f32.mrb[0].mxu0
      %v685 = vadd.f32 %v247, %v684
      %v686 = vpop.f32.mrb[0].mxu0
      %687 = vmatprep.mubr.bf16.mxu0 0
      %688 = vmatmul.mubr.bf16.gmra.mrb[0].mxu0 %v471
      %v689 = vpop.f32.mrb[0].mxu0
      %v690 = vadd.f32 %v247, %v689
      %v691 = vpop.f32.mrb[0].mxu0
      %v692 = vpop.f32.mrb[0].mxu0
      %v693 = vadd.f32 %v247, %v692
      %v694 = vpop.f32.mrb[0].mxu0
      %695 = vmatprep.mubr.bf16.mxu0 0
      %696 = vmatmul.mubr.bf16.gmra.mrb[0].mxu0 %v474
      %v697 = vpop.f32.mrb[0].mxu0
      %v698 = vadd.f32 %v247, %v697
      %v699 = vpop.f32.mrb[0].mxu0
      %v700 = vpop.f32.mrb[0].mxu0
      %v701 = vadd.f32 %v247, %v700
      %v702 = vpop.f32.mrb[0].mxu0
      %703 = vmatprep.mubr.bf16.mxu0 0
      %704 = vmatmul.mubr.bf16.gmra.mrb[0].mxu0 %v477
      %v705 = vpop.f32.mrb[0].mxu0
      %v706 = vadd.f32 %v247, %v705
      %v707 = vpop.f32.mrb[0].mxu0
      %v708 = vpop.f32.mrb[0].mxu0
      %v709 = vadd.f32 %v247, %v708
      %v710 = vpop.f32.mrb[0].mxu0
      %711 = vmatprep.mubr.bf16.mxu0 0
      %712 = vmatmul.mubr.bf16.gmra.mrb[0].mxu0 %v480
      %v713 = vpop.f32.mrb[0].mxu0
      %v714 = vadd.f32 %v247, %v713
      %v715 = vpop.f32.mrb[0].mxu0
      %v716 = vpop.f32.mrb[0].mxu0
      %v717 = vadd.f32 %v247, %v716
      %v718 = vpop.f32.mrb[0].mxu0
      %719 = vmatprep.mubr.bf16.mxu0 0
      %720 = vmatmul.mubr.bf16.gmra.mrb[0].mxu0 %v483
      %v721 = vpop.f32.mrb[0].mxu0
      %v722 = vadd.f32 %v247, %v721
      %v723 = vpop.f32.mrb[0].mxu0
      %v724 = vpop.f32.mrb[0].mxu0
      %v725 = vadd.f32 %v247, %v724
      %v726 = vpop.f32.mrb[0].mxu0
      %727 = vmatprep.mubr.bf16.mxu0 0
      %728 = vmatmul.mubr.bf16.gmra.mrb[0].mxu0 %v486
      %v729 = vpop.f32.mrb[0].mxu0
      %v730 = vadd.f32 %v247, %v729
      %v731 = vpop.f32.mrb[0].mxu0
      %v732 = vpop.f32.mrb[0].mxu0
      %v733 = vadd.f32 %v247, %v732
      %v734 = vpop.f32.mrb[0].mxu0
      %735 = vmatprep.mubr.bf16.mxu0 0
      %736 = vmatmul.mubr.bf16.gmra.mrb[0].mxu0 %v489
      %v737 = vpop.f32.mrb[0].mxu0
      %v738 = vadd.f32 %v247, %v737
      %v739 = vpop.f32.mrb[0].mxu0
      %v740 = vpop.f32.mrb[0].mxu0
      %v741 = vadd.f32 %v247, %v740
      %v742 = vpop.f32.mrb[0].mxu0
      %743 = vmatprep.mubr.bf16.mxu0 0
      %744 = vmatmul.mubr.bf16.gmra.mrb[0].mxu0 %v492
      %v745 = vpop.f32.mrb[0].mxu0
      %v746 = vadd.f32 %v247, %v745
      %v747 = vpop.f32.mrb[0].mxu0
      %v748 = vpop.f32.mrb[0].mxu0
      %v749 = vadd.f32 %v247, %v748
      %v750 = vpop.f32.mrb[0].mxu0
      %751 = vmatprep.mubr.bf16.mxu0 0
      %752 = vmatmul.mubr.bf16.gmra.mrb[0].mxu0 %v495
      %v753 = vpop.f32.mrb[0].mxu0
      %v754 = vadd.f32 %v247, %v753
      %v755 = vpop.f32.mrb[0].mxu0
      %v756 = vpop.f32.mrb[0].mxu0
      %v757 = vadd.f32 %v247, %v756
      %v758 = vpop.f32.mrb[0].mxu0
      %759 = vmatprep.mubr.bf16.mxu0 0
      %760 = vmatmul.mubr.bf16.gmra.mrb[0].mxu0 %v498
      %v761 = vpop.f32.mrb[0].mxu0
      %v762 = vadd.f32 %v247, %v761
      %v763 = vpop.f32.mrb[0].mxu0
      %v764 = vpop.f32.mrb[0].mxu0
      %v765 = vadd.f32 %v247, %v764
      %v766 = vpop.f32.mrb[0].mxu0
      %767 = vmatprep.mubr.bf16.mxu0 0
      %768 = vmatmul.mubr.bf16.gmra.mrb[0].mxu0 %v501
      %v769 = vpop.f32.mrb[0].mxu0
      %v770 = vadd.f32 %v247, %v769
      %v771 = vpop.f32.mrb[0].mxu0
      %v772 = vpop.f32.mrb[0].mxu0
      %v773 = vadd.f32 %v247, %v772
      %v774 = vpop.f32.mrb[0].mxu0
      %775 = vmatprep.mubr.bf16.mxu0 0
      %776 = vmatmul.mubr.bf16.gmra.mrb[0].mxu0 %v504
      %v777 = vpop.f32.mrb[0].mxu0
      %v778 = vadd.f32 %v247, %v777
      %v779 = vpop.f32.mrb[0].mxu0
      %v780 = vpop.f32.mrb[0].mxu0
      %v781 = vadd.f32 %v247, %v780
      %v782 = vpop.f32.mrb[0].mxu0
      %783 = vmatprep.mubr.bf16.mxu0 0
      %784 = vmatmul.mubr.bf16.gmra.mrb[0].mxu0 %v507
      %v785 = vpop.f32.mrb[0].mxu0
      %v786 = vadd.f32 %v247, %v785
      %v787 = vpop.f32.mrb[0].mxu0
      %v788 = vpop.f32.mrb[0].mxu0
      %v789 = vadd.f32 %v247, %v788
      %v790 = vpop.f32.mrb[0].mxu0
      %791 = vmatprep.mubr.bf16.mxu0 0
      %792 = vmatmul.mubr.bf16.gmra.mrb[0].mxu0 %v510
      %v793 = vpop.f32.mrb[0].mxu0
      %v794 = vadd.f32 %v247, %v793
      %v795 = vpop.f32.mrb[0].mxu0
      %v796 = vpop.f32.mrb[0].mxu0
      %v797 = vadd.f32 %v247, %v796
      %v798 = vpop.f32.mrb[0].mxu0
      %799 = vmatprep.mubr.bf16.mxu0 0
      %800 = vmatmul.mubr.bf16.gmra.mrb[0].mxu0 %v513
      %v801 = vpop.f32.mrb[0].mxu0
      %v802 = vadd.f32 %v247, %v801
      %v803 = vpop.f32.mrb[0].mxu0
      %v804 = vpop.f32.mrb[0].mxu0
      %v805 = vadd.f32 %v247, %v804
      %v806 = vpop.f32.mrb[0].mxu0
      %807 = vdwg.mxu0
      %vm808 = vcmask 130048
      %809 = vst.msk [vmem:[%s172] sm:$0xff] %vm808, %v554
      %810 = vst.msk [vmem:[%s172 + $0x8] sm:$0xff] %vm808, %v557
      %811 = vst.msk [vmem:[%s172 + $0x10] sm:$0xff] %vm808, %v562
      %812 = vst.msk [vmem:[%s172 + $0x18] sm:$0xff] %vm808, %v565
      %813 = vst.msk [vmem:[%s172 + $0x20] sm:$0xff] %vm808, %v570
      %814 = vst.msk [vmem:[%s172 + $0x28] sm:$0xff] %vm808, %v573
      %815 = vst.msk [vmem:[%s172 + $0x30] sm:$0xff] %vm808, %v578
      %816 = vst.msk [vmem:[%s172 + $0x38] sm:$0xff] %vm808, %v581
      %817 = vst.msk [vmem:[%s172 + $0x40] sm:$0xff] %vm808, %v586
      %818 = vst.msk [vmem:[%s172 + $0x48] sm:$0xff] %vm808, %v589
      %819 = vst.msk [vmem:[%s172 + $0x50] sm:$0xff] %vm808, %v594
      %820 = vst.msk [vmem:[%s172 + $0x58] sm:$0xff] %vm808, %v597
      %821 = vst.msk [vmem:[%s172 + $0x60] sm:$0xff] %vm808, %v602
      %822 = vst.msk [vmem:[%s172 + $0x68] sm:$0xff] %vm808, %v605
      %823 = vst.msk [vmem:[%s172 + $0x70] sm:$0xff] %vm808, %v610
      %824 = vst.msk [vmem:[%s172 + $0x78] sm:$0xff] %vm808, %v613
      %825 = vst.msk [vmem:[%s172 + $0x80] sm:$0xff] %vm808, %v618
      %826 = vst.msk [vmem:[%s172 + $0x88] sm:$0xff] %vm808, %v621
      %827 = vst.msk [vmem:[%s172 + $0x90] sm:$0xff] %vm808, %v626
      %828 = vst.msk [vmem:[%s172 + $0x98] sm:$0xff] %vm808, %v629
      %829 = vst.msk [vmem:[%s172 + $0xa0] sm:$0xff] %vm808, %v634
      %830 = vst.msk [vmem:[%s172 + $0xa8] sm:$0xff] %vm808, %v637
      %831 = vst.msk [vmem:[%s172 + $0xb0] sm:$0xff] %vm808, %v642
      %832 = vst.msk [vmem:[%s172 + $0xb8] sm:$0xff] %vm808, %v645
      %833 = vst.msk [vmem:[%s172 + $0xc0] sm:$0xff] %vm808, %v650
      %834 = vst.msk [vmem:[%s172 + $0xc8] sm:$0xff] %vm808, %v653
      %835 = vst.msk [vmem:[%s172 + $0xd0] sm:$0xff] %vm808, %v658
      %836 = vst.msk [vmem:[%s172 + $0xd8] sm:$0xff] %vm808, %v661
      %837 = vst.msk [vmem:[%s172 + $0xe0] sm:$0xff] %vm808, %v666
      %838 = vst.msk [vmem:[%s172 + $0xe8] sm:$0xff] %vm808, %v669
      %839 = vst.msk [vmem:[%s172 + $0xf0] sm:$0xff] %vm808, %v674
      %840 = vst.msk [vmem:[%s172 + $0xf8] sm:$0xff] %vm808, %v677
      %841 = vst.msk [vmem:[%s172 + $0x100] sm:$0xff] %vm808, %v682
      %842 = vst.msk [vmem:[%s172 + $0x108] sm:$0xff] %vm808, %v685
      %843 = vst.msk [vmem:[%s172 + $0x110] sm:$0xff] %vm808, %v690
      %844 = vst.msk [vmem:[%s172 + $0x118] sm:$0xff] %vm808, %v693
      %845 = vst.msk [vmem:[%s172 + $0x120] sm:$0xff] %vm808, %v698
      %846 = vst.msk [vmem:[%s172 + $0x128] sm:$0xff] %vm808, %v701
      %847 = vst.msk [vmem:[%s172 + $0x130] sm:$0xff] %vm808, %v706
      %848 = vst.msk [vmem:[%s172 + $0x138] sm:$0xff] %vm808, %v709
      %849 = vst.msk [vmem:[%s172 + $0x140] sm:$0xff] %vm808, %v714
      %850 = vst.msk [vmem:[%s172 + $0x148] sm:$0xff] %vm808, %v717
      %851 = vst.msk [vmem:[%s172 + $0x150] sm:$0xff] %vm808, %v722
      %852 = vst.msk [vmem:[%s172 + $0x158] sm:$0xff] %vm808, %v725
      %853 = vst.msk [vmem:[%s172 + $0x160] sm:$0xff] %vm808, %v730
      %854 = vst.msk [vmem:[%s172 + $0x168] sm:$0xff] %vm808, %v733
      %855 = vst.msk [vmem:[%s172 + $0x170] sm:$0xff] %vm808, %v738
      %856 = vst.msk [vmem:[%s172 + $0x178] sm:$0xff] %vm808, %v741
      %857 = vst.msk [vmem:[%s172 + $0x180] sm:$0xff] %vm808, %v746
      %858 = vst.msk [vmem:[%s172 + $0x188] sm:$0xff] %vm808, %v749
      %859 = vst.msk [vmem:[%s172 + $0x190] sm:$0xff] %vm808, %v754
      %860 = vst.msk [vmem:[%s172 + $0x198] sm:$0xff] %vm808, %v757
      %861 = vst.msk [vmem:[%s172 + $0x1a0] sm:$0xff] %vm808, %v762
      %862 = vst.msk [vmem:[%s172 + $0x1a8] sm:$0xff] %vm808, %v765
      %863 = vst.msk [vmem:[%s172 + $0x1b0] sm:$0xff] %vm808, %v770
      %864 = vst.msk [vmem:[%s172 + $0x1b8] sm:$0xff] %vm808, %v773
      %865 = vst.msk [vmem:[%s172 + $0x1c0] sm:$0xff] %vm808, %v778
      %866 = vst.msk [vmem:[%s172 + $0x1c8] sm:$0xff] %vm808, %v781
      %867 = vst.msk [vmem:[%s172 + $0x1d0] sm:$0xff] %vm808, %v786
      %868 = vst.msk [vmem:[%s172 + $0x1d8] sm:$0xff] %vm808, %v789
      %869 = vst.msk [vmem:[%s172 + $0x1e0] sm:$0xff] %vm808, %v794
      %870 = vst.msk [vmem:[%s172 + $0x1e8] sm:$0xff] %vm808, %v797
      %871 = vst.msk [vmem:[%s172 + $0x1f0] sm:$0xff] %vm808, %v802
      %872 = vst.msk [vmem:[%s172 + $0x1f8] sm:$0xff] %vm808, %v805
      %s873 = smul.u32 64, %s14
      %p874 = scmp.lt.s32.totalorder %s873, 1407
      %s875 = scalar_select %p874, %s873, 1407
      %s876 = smul.addr %s875, 8
      %s877 = scalar_lea.vmem %s3, %s876
      // Predicated region
      $region33: #{forward.20} parent=31 // pred_check
        %p878 = pneg %p100
      $region34: #{forward.20} parent=31 // pred_check_branch
        %880 = sbr.rel (%p878) target = $region36
      $region35: #{forward.20} parent=31 // pred_region
        %s881 = smul.u32 64, %s14
      $region36: #{forward.20} parent=31 // pred_fallthru
        _
    $region32: #{forward.20} parent=5 // pred_fallthru
      _
    %p882 = scmp.le.s32.totalorder 2, %s9
    // Predicated region
    $region37: #{forward.20} parent=5 // pred_check
      %p883 = pneg %p882
    $region38: #{forward.20} parent=5 // pred_check_branch
      %885 = sbr.rel (%p883) target = $region40
    $region39: #{forward.20} parent=5 // pred_region
      %s886 = ssub.s32 %s9, 2
      // Predicated region
      $region41: #{forward.20} parent=39 // pred_check
        %p887 = pneg %p106
      $region42: #{forward.20} parent=39 // pred_check_branch
        %889 = sbr.rel (%p887) target = $region44
      $region43: #{forward.20} parent=39 // pred_region
        %s890 = smul.u32 64, %s15
        %p891 = scmp.lt.s32.totalorder %s890, 1407
        %s892 = scalar_select %p891, %s890, 1407
        %s893 = smul.addr %s892, 8
        %s894 = scalar_lea.vmem %s3, %s893
      $region44: #{forward.20} parent=39 // pred_fallthru
        _
    $region40: #{forward.20} parent=5 // pred_fallthru
      _
  $region6: #{forward.20} parent=0 // loop_footer
    %s13 = sadd.s32 1, %s9
  $region7: #{forward.20} parent=0 // loop_footer_branch
    %8 = sbr.rel target = $region3
  $region8: #{forward.20} parent=0 // loop_exit
    _

// kernel: forward.21
$region0: #{forward.21}
  #allocation0 [shape = 'u32[]', space=smem, size = 0x4, offset = 0x4, fixed_abs, tag = 'smem constant byte address 0x4 - core index']
  #allocation1 [shape = 'u32[144,128]{1,0:T(1,128)}', space=vmem, size = 0x12000, scoped, tag = 'internal scratch']
  %s0 = inlined_call_operand.vmem [shape: bf16[11264,432], index: 0, kind: input, shape index: {}]
  %s1 = inlined_call_operand.vmem [shape: bf16[432,16], index: 1, kind: input, shape index: {}]
  %s2 = inlined_call_operand.vmem [shape: f32[1,16], index: 2, kind: input, shape index: {}]
  %s3 = inlined_call_operand.vmem [shape: f32[11264,16], index: 3, kind: output, shape index: {}]
  %s4 = sld [smem:[#allocation0]]
  $region45: #{forward.21} parent=0
    _
  %s6 = ssub.s32 1, %s4
  %s7 = scalar_select 0, %s6, %s4
  loop: start=0, step=1, limit=24
  $region2: #{forward.21} parent=0 // loop_pre_header
    _
  $region3: #{forward.21} parent=0 // loop_header
    %s9 = sphi 0, %s13
    %p10 = scmp.ge.s32.totalorder %s9, 24
    %s19 = sphi 0, %s21
    %s22 = sphi 0, %s19
    %s23 = sphi 0, %s22
    %s39 = sphi 0, %s23
    %s43 = sphi 0, %s43
    %s45 = sphi 0, %s43
    %s46 = sphi 0, %s45
    %s60 = sphi 0, %s46
    %s64 = sphi 0, %s64
    %s66 = sphi 0, %s64
    %s67 = sphi 0, %s66
    %s81 = sphi 0, %s67
    %s87 = sphi 0, %s89
    %s90 = sphi 0, %s87
    %s91 = sphi 0, %s90
    %s107 = sphi 0, %s91
  $region4: #{forward.21} parent=0 // loop_header_branch
    %12 = sbr.rel (%p10) target = $region8
  $region5: #{forward.21} parent=0 // loop_body
    %s14 = ssub.s32 %s9, 1
    %s15 = ssub.s32 %s9, 2
    %s16 = sadd.s32 %s9, 1
    %s17 = ssub.s32 %s9, %s16
    %p18 = scmp.eq.s32.totalorder %s17, 0
    %s20 = sadd.s32 %s19, 1
    %s21 = scalar_select %p18, %s19, %s20
    %p24 = pneg %p18
    %p25 = scmp.eq.s32.totalorder %s9, 21
    %p26 = por %p24, %p25
    %p27 = scmp.ne.s32.totalorder %s19, %s22
    %p28 = scmp.eq.s32.totalorder %s9, 0
    %p29 = por %p27, %p28
    %p30 = scmp.ne.s32.totalorder %s19, %s22
    %p31 = scmp.eq.s32.totalorder %s14, 21
    %p32 = por %p30, %p31
    %p33 = scmp.ne.s32.totalorder %s22, %s23
    %p34 = scmp.eq.s32.totalorder %s14, 0
    %p35 = por %p33, %p34
    %p36 = scmp.ne.s32.totalorder %s22, %s23
    %p37 = scmp.eq.s32.totalorder %s15, 21
    %p38 = por %p36, %p37
    %p40 = scmp.ne.s32.totalorder %s23, %s39
    %p41 = scmp.eq.s32.totalorder %s15, 0
    %p42 = por %p40, %p41
    %s44 = sadd.s32 %s43, 1
    %p47 = scmp.eq.s32.totalorder %s9, 21
    %p48 = scmp.ne.s32.totalorder %s43, %s45
    %p49 = scmp.eq.s32.totalorder %s9, 0
    %p50 = por %p48, %p49
    %p51 = scmp.ne.s32.totalorder %s43, %s45
    %p52 = scmp.eq.s32.totalorder %s14, 21
    %p53 = por %p51, %p52
    %p54 = scmp.ne.s32.totalorder %s45, %s46
    %p55 = scmp.eq.s32.totalorder %s14, 0
    %p56 = por %p54, %p55
    %p57 = scmp.ne.s32.totalorder %s45, %s46
    %p58 = scmp.eq.s32.totalorder %s15, 21
    %p59 = por %p57, %p58
    %p61 = scmp.ne.s32.totalorder %s46, %s60
    %p62 = scmp.eq.s32.totalorder %s15, 0
    %p63 = por %p61, %p62
    %s65 = sadd.s32 %s64, 1
    %p68 = scmp.eq.s32.totalorder %s9, 21
    %p69 = scmp.ne.s32.totalorder %s64, %s66
    %p70 = scmp.eq.s32.totalorder %s9, 0
    %p71 = por %p69, %p70
    %p72 = scmp.ne.s32.totalorder %s64, %s66
    %p73 = scmp.eq.s32.totalorder %s14, 21
    %p74 = por %p72, %p73
    %p75 = scmp.ne.s32.totalorder %s66, %s67
    %p76 = scmp.eq.s32.totalorder %s14, 0
    %p77 = por %p75, %p76
    %p78 = scmp.ne.s32.totalorder %s66, %s67
    %p79 = scmp.eq.s32.totalorder %s15, 21
    %p80 = por %p78, %p79
    %p82 = scmp.ne.s32.totalorder %s67, %s81
    %p83 = scmp.eq.s32.totalorder %s15, 0
    %p84 = por %p82, %p83
    %s85 = ssub.s32 %s9, %s16
    %p86 = scmp.eq.s32.totalorder %s85, 0
    %s88 = sadd.s32 %s87, 1
    %s89 = scalar_select %p86, %s87, %s88
    %p92 = pneg %p86
    %p93 = scmp.eq.s32.totalorder %s9, 21
    %p94 = por %p92, %p93
    %p95 = scmp.ne.s32.totalorder %s87, %s90
    %p96 = scmp.eq.s32.totalorder %s9, 0
    %p97 = por %p95, %p96
    %p98 = scmp.ne.s32.totalorder %s87, %s90
    %p99 = scmp.eq.s32.totalorder %s14, 21
    %p100 = por %p98, %p99
    %p101 = scmp.ne.s32.totalorder %s90, %s91
    %p102 = scmp.eq.s32.totalorder %s14, 0
    %p103 = por %p101, %p102
    %p104 = scmp.ne.s32.totalorder %s90, %s91
    %p105 = scmp.eq.s32.totalorder %s15, 21
    %p106 = por %p104, %p105
    %p108 = scmp.ne.s32.totalorder %s91, %s107
    %p109 = scmp.eq.s32.totalorder %s15, 0
    %p110 = por %p108, %p109
    %p111 = scmp.le.s32.totalorder 1, %s9
    %p112 = scmp.lt.s32.totalorder %s9, 23
    %p113 = pnand %p111, %p112
    %p114 = pneg %p113
    // Predicated region
    $region9: #{forward.21} parent=5 // pred_check
      _
    $region10: #{forward.21} parent=5 // pred_check_branch
      %116 = sbr.rel (%p113) target = $region12
    $region11: #{forward.21} parent=5 // pred_region
      %s117 = ssub.s32 %s9, 1
      // Predicated region
      $region13: #{forward.21} parent=11 // pred_check
        %p118 = pneg %p56
      $region14: #{forward.21} parent=11 // pred_check_branch
        %120 = sbr.rel (%p118) target = $region16
      $region15: #{forward.21} parent=11 // pred_region
        _
      $region16: #{forward.21} parent=11 // pred_fallthru
        _
      // Predicated region
      $region17: #{forward.21} parent=11 // pred_check
        %p121 = pneg %p77
      $region18: #{forward.21} parent=11 // pred_check_branch
        %123 = sbr.rel (%p121) target = $region20
      $region19: #{forward.21} parent=11 // pred_region
        _
      $region20: #{forward.21} parent=11 // pred_fallthru
        _
    $region12: #{forward.21} parent=5 // pred_fallthru
      _
    %p124 = scmp.lt.s32.totalorder %s9, 22
    // Predicated region
    $region21: #{forward.21} parent=5 // pred_check
      %p125 = pneg %p124
    $region22: #{forward.21} parent=5 // pred_check_branch
      %127 = sbr.rel (%p125) target = $region24
    $region23: #{forward.21} parent=5 // pred_region
      // Predicated region
      $region25: #{forward.21} parent=23 // pred_check
        %p128 = pneg %p29
      $region26: #{forward.21} parent=23 // pred_check_branch
        %130 = sbr.rel (%p128) target = $region28
      $region27: #{forward.21} parent=23 // pred_region
        %s131 = smul.u32 64, %s9
        %p132 = scmp.lt.s32.totalorder %s131, 1407
        %s133 = scalar_select %p132, %s131, 1407
        %s134 = smul.addr %s133, 4
        %s135 = smul.addr %s134, 4
        %s136 = scalar_lea.vmem %s0, %s135
        %s137 = smul.u32 64, %s9
      $region28: #{forward.21} parent=23 // pred_fallthru
        _
    $region24: #{forward.21} parent=5 // pred_fallthru
      _
    %p138 = scmp.le.s32.totalorder 1, %s9
    %p139 = scmp.lt.s32.totalorder %s9, 23
    %p140 = pnand %p138, %p139
    %p141 = pneg %p140
    // Predicated region
    $region29: #{forward.21} parent=5 // pred_check
      _
    $region30: #{forward.21} parent=5 // pred_check_branch
      %143 = sbr.rel (%p140) target = $region32
    $region31: #{forward.21} parent=5 // pred_region
      %s144 = ssub.s32 %s9, 1
      %s145 = smul.u32 64, %s14
      %p146 = scmp.lt.s32.totalorder %s145, 1407
      %s147 = scalar_select %p146, %s145, 1407
      %s148 = smul.addr %s147, 4
      %s149 = smul.addr %s148, 4
      %s150 = scalar_lea.vmem %s0, %s149
      %p151 = pneg %p35
      %p152 = pneg %p32
      %p153 = pneg %p56
      %p154 = pneg %p53
      %p155 = pneg %p77
      %p156 = pneg %p74
      %p157 = pneg %p103
      %p158 = pneg %p100
      %s159 = smul.u32 64, %s14
      %p160 = scmp.lt.s32.totalorder %s159, 1407
      %s161 = scalar_select %p160, %s159, 1407
      %s162 = smul.addr %s161, 8
      %s163 = scalar_lea.vmem %s3, %s162
      %s164 = smul.u32 64, %s14
      %p165 = scmp.lt.s32.totalorder %s164, 1407
      %s166 = scalar_select %p165, %s164, 1407
      %s167 = smul.addr %s166, 4
      %s168 = smul.addr %s167, 4
      %s169 = scalar_lea.vmem %s0, %s168
      %s170 = smul.u32 64, %s14
      %s171 = smul.u32 64, %s14
      %p172 = scmp.lt.s32.totalorder %s171, 1407
      %s173 = scalar_select %p172, %s171, 1407
      %s174 = smul.addr %s173, 8
      %s175 = scalar_lea.vmem %s3, %s174
      %s176 = smul.u32 64, %s14
      %v178 = vld [vmem:[%s169] sm:$0xff]
      %v179 = vld [vmem:[%s169 + $0x8] sm:$0xff]
      %v180 = vld [vmem:[%s169 + $0x10] sm:$0xff]
      %v181 = vld [vmem:[%s169 + $0x18] sm:$0xff]
      %v182 = vld [vmem:[%s169 + $0x20] sm:$0xff]
      %v183 = vld [vmem:[%s169 + $0x28] sm:$0xff]
      %v184 = vld [vmem:[%s169 + $0x30] sm:$0xff]
      %v185 = vld [vmem:[%s169 + $0x38] sm:$0xff]
      %v186 = vld [vmem:[%s169 + $0x40] sm:$0xff]
      %v187 = vld [vmem:[%s169 + $0x48] sm:$0xff]
      %v188 = vld [vmem:[%s169 + $0x50] sm:$0xff]
      %v189 = vld [vmem:[%s169 + $0x58] sm:$0xff]
      %v190 = vld [vmem:[%s169 + $0x60] sm:$0xff]
      %v191 = vld [vmem:[%s169 + $0x68] sm:$0xff]
      %v192 = vld [vmem:[%s169 + $0x70] sm:$0xff]
      %v193 = vld [vmem:[%s169 + $0x78] sm:$0xff]
      %v194 = vld [vmem:[%s169 + $0x80] sm:$0xff]
      %v195 = vld [vmem:[%s169 + $0x88] sm:$0xff]
      %v196 = vld [vmem:[%s169 + $0x90] sm:$0xff]
      %v197 = vld [vmem:[%s169 + $0x98] sm:$0xff]
      %v198 = vld [vmem:[%s169 + $0xa0] sm:$0xff]
      %v199 = vld [vmem:[%s169 + $0xa8] sm:$0xff]
      %v200 = vld [vmem:[%s169 + $0xb0] sm:$0xff]
      %v201 = vld [vmem:[%s169 + $0xb8] sm:$0xff]
      %v202 = vld [vmem:[%s169 + $0xc0] sm:$0xff]
      %v203 = vld [vmem:[%s169 + $0xc8] sm:$0xff]
      %v204 = vld [vmem:[%s169 + $0xd0] sm:$0xff]
      %v205 = vld [vmem:[%s169 + $0xd8] sm:$0xff]
      %v206 = vld [vmem:[%s169 + $0xe0] sm:$0xff]
      %v207 = vld [vmem:[%s169 + $0xe8] sm:$0xff]
      %v208 = vld [vmem:[%s169 + $0xf0] sm:$0xff]
      %v209 = vld [vmem:[%s169 + $0xf8] sm:$0xff]
      %v210 = vld [vmem:[%s169 + $0x100] sm:$0xff]
      %v211 = vld [vmem:[%s169 + $0x108] sm:$0xff]
      %v212 = vld [vmem:[%s169 + $0x110] sm:$0xff]
      %v213 = vld [vmem:[%s169 + $0x118] sm:$0xff]
      %v214 = vld [vmem:[%s169 + $0x120] sm:$0xff]
      %v215 = vld [vmem:[%s169 + $0x128] sm:$0xff]
      %v216 = vld [vmem:[%s169 + $0x130] sm:$0xff]
      %v217 = vld [vmem:[%s169 + $0x138] sm:$0xff]
      %v218 = vld [vmem:[%s169 + $0x140] sm:$0xff]
      %v219 = vld [vmem:[%s169 + $0x148] sm:$0xff]
      %v220 = vld [vmem:[%s169 + $0x150] sm:$0xff]
      %v221 = vld [vmem:[%s169 + $0x158] sm:$0xff]
      %v222 = vld [vmem:[%s169 + $0x160] sm:$0xff]
      %v223 = vld [vmem:[%s169 + $0x168] sm:$0xff]
      %v224 = vld [vmem:[%s169 + $0x170] sm:$0xff]
      %v225 = vld [vmem:[%s169 + $0x178] sm:$0xff]
      %v226 = vld [vmem:[%s169 + $0x180] sm:$0xff]
      %v227 = vld [vmem:[%s169 + $0x188] sm:$0xff]
      %v228 = vld [vmem:[%s169 + $0x190] sm:$0xff]
      %v229 = vld [vmem:[%s169 + $0x198] sm:$0xff]
      %v230 = vld [vmem:[%s169 + $0x1a0] sm:$0xff]
      %v231 = vld [vmem:[%s169 + $0x1a8] sm:$0xff]
      %v232 = vld [vmem:[%s169 + $0x1b0] sm:$0xff]
      %v233 = vld [vmem:[%s169 + $0x1b8] sm:$0xff]
      %v234 = vld [vmem:[%s169 + $0x1c0] sm:$0xff]
      %v235 = vld [vmem:[%s169 + $0x1c8] sm:$0xff]
      %v236 = vld [vmem:[%s169 + $0x1d0] sm:$0xff]
      %v237 = vld [vmem:[%s169 + $0x1d8] sm:$0xff]
      %v238 = vld [vmem:[%s169 + $0x1e0] sm:$0xff]
      %v239 = vld [vmem:[%s169 + $0x1e8] sm:$0xff]
      %v240 = vld [vmem:[%s169 + $0x1f0] sm:$0xff]
      %v241 = vld [vmem:[%s169 + $0x1f8] sm:$0xff]
      %v242 = vld [vmem:[%s169 + $0x200] sm:$0xff]
      %v243 = vld [vmem:[%s169 + $0x208] sm:$0xff]
      %v244 = vld [vmem:[%s169 + $0x210] sm:$0xff]
      %v245 = vld [vmem:[%s169 + $0x218] sm:$0xff]
      %v246 = vld [vmem:[%s169 + $0x220] sm:$0xff]
      %v247 = vld [vmem:[%s169 + $0x228] sm:$0xff]
      %v248 = vld [vmem:[%s169 + $0x230] sm:$0xff]
      %v249 = vld [vmem:[%s169 + $0x238] sm:$0xff]
      %v250 = vld [vmem:[%s169 + $0x240] sm:$0xff]
      %v251 = vld [vmem:[%s169 + $0x248] sm:$0xff]
      %v252 = vld [vmem:[%s169 + $0x250] sm:$0xff]
      %v253 = vld [vmem:[%s169 + $0x258] sm:$0xff]
      %v254 = vld [vmem:[%s169 + $0x260] sm:$0xff]
      %v255 = vld [vmem:[%s169 + $0x268] sm:$0xff]
      %v256 = vld [vmem:[%s169 + $0x270] sm:$0xff]
      %v257 = vld [vmem:[%s169 + $0x278] sm:$0xff]
      %v258 = vld [vmem:[%s169 + $0x280] sm:$0xff]
      %v259 = vld [vmem:[%s169 + $0x288] sm:$0xff]
      %v260 = vld [vmem:[%s169 + $0x290] sm:$0xff]
      %v261 = vld [vmem:[%s169 + $0x298] sm:$0xff]
      %v262 = vld [vmem:[%s169 + $0x2a0] sm:$0xff]
      %v263 = vld [vmem:[%s169 + $0x2a8] sm:$0xff]
      %v264 = vld [vmem:[%s169 + $0x2b0] sm:$0xff]
      %v265 = vld [vmem:[%s169 + $0x2b8] sm:$0xff]
      %v266 = vld [vmem:[%s169 + $0x2c0] sm:$0xff]
      %v267 = vld [vmem:[%s169 + $0x2c8] sm:$0xff]
      %v268 = vld [vmem:[%s169 + $0x2d0] sm:$0xff]
      %v269 = vld [vmem:[%s169 + $0x2d8] sm:$0xff]
      %v270 = vld [vmem:[%s169 + $0x2e0] sm:$0xff]
      %v271 = vld [vmem:[%s169 + $0x2e8] sm:$0xff]
      %v272 = vld [vmem:[%s169 + $0x2f0] sm:$0xff]
      %v273 = vld [vmem:[%s169 + $0x2f8] sm:$0xff]
      %v274 = vld [vmem:[%s169 + $0x300] sm:$0xff]
      %v275 = vld [vmem:[%s169 + $0x308] sm:$0xff]
      %v276 = vld [vmem:[%s169 + $0x310] sm:$0xff]
      %v277 = vld [vmem:[%s169 + $0x318] sm:$0xff]
      %v278 = vld [vmem:[%s169 + $0x320] sm:$0xff]
      %v279 = vld [vmem:[%s169 + $0x328] sm:$0xff]
      %v280 = vld [vmem:[%s169 + $0x330] sm:$0xff]
      %v281 = vld [vmem:[%s169 + $0x338] sm:$0xff]
      %v282 = vld [vmem:[%s169 + $0x340] sm:$0xff]
      %v283 = vld [vmem:[%s169 + $0x348] sm:$0xff]
      %v284 = vld [vmem:[%s169 + $0x350] sm:$0xff]
      %v285 = vld [vmem:[%s169 + $0x358] sm:$0xff]
      %v286 = vld [vmem:[%s169 + $0x360] sm:$0xff]
      %v287 = vld [vmem:[%s169 + $0x368] sm:$0xff]
      %v288 = vld [vmem:[%s169 + $0x370] sm:$0xff]
      %v289 = vld [vmem:[%s169 + $0x378] sm:$0xff]
      %v290 = vld [vmem:[%s169 + $0x380] sm:$0xff]
      %v291 = vld [vmem:[%s169 + $0x388] sm:$0xff]
      %v292 = vld [vmem:[%s169 + $0x390] sm:$0xff]
      %v293 = vld [vmem:[%s169 + $0x398] sm:$0xff]
      %v294 = vld [vmem:[%s169 + $0x3a0] sm:$0xff]
      %v295 = vld [vmem:[%s169 + $0x3a8] sm:$0xff]
      %v296 = vld [vmem:[%s169 + $0x3b0] sm:$0xff]
      %v297 = vld [vmem:[%s169 + $0x3b8] sm:$0xff]
      %v298 = vld [vmem:[%s169 + $0x3c0] sm:$0xff]
      %v299 = vld [vmem:[%s169 + $0x3c8] sm:$0xff]
      %v300 = vld [vmem:[%s169 + $0x3d0] sm:$0xff]
      %v301 = vld [vmem:[%s169 + $0x3d8] sm:$0xff]
      %v302 = vld [vmem:[%s169 + $0x3e0] sm:$0xff]
      %v303 = vld [vmem:[%s169 + $0x3e8] sm:$0xff]
      %v304 = vld [vmem:[%s169 + $0x3f0] sm:$0xff]
      %v305 = vld [vmem:[%s169 + $0x3f8] sm:$0xff]
      %v306 = vld [vmem:[%s1] sm:$0xf]
      %v307 = vld [vmem:[%s1 + $0x4] sm:$0xf]
      %v308 = vld [vmem:[%s1 + $0x8] sm:$0xf]
      %v309 = vld [vmem:[%s1 + $0xc] sm:$0xf]
      %v310 = vld [vmem:[%s1 + $0x10] sm:$0xf]
      %v311 = vld [vmem:[%s1 + $0x14] sm:$0xf]
      %v312 = vld [vmem:[%s1 + $0x18] sm:$0xf]
      %v313 = vld [vmem:[%s1 + $0x1c] sm:$0xf]
      %v314 = vld [vmem:[%s1 + $0x20] sm:$0xf]
      %v315 = vld [vmem:[%s1 + $0x24] sm:$0xf]
      %v316 = vld [vmem:[%s1 + $0x28] sm:$0xf]
      %v317 = vld [vmem:[%s1 + $0x2c] sm:$0xf]
      %v318 = vld [vmem:[%s1 + $0x30] sm:$0xf]
      %v319 = vld [vmem:[%s1 + $0x34] sm:$0xf]
      %v320 = vld [vmem:[%s1 + $0x38] sm:$0xf]
      %v321 = vld [vmem:[%s1 + $0x3c] sm:$0xf]
      %v322 = vld [vmem:[%s1 + $0x40] sm:$0xf]
      %v323 = vld [vmem:[%s1 + $0x44] sm:$0xf]
      %v324 = vld [vmem:[%s1 + $0x48] sm:$0xf]
      %v325 = vld [vmem:[%s1 + $0x4c] sm:$0xf]
      %v326 = vld [vmem:[%s1 + $0x50] sm:$0xf]
      %v327 = vld [vmem:[%s1 + $0x54] sm:$0xf]
      %v328 = vld [vmem:[%s1 + $0x58] sm:$0xf]
      %v329 = vld [vmem:[%s1 + $0x5c] sm:$0xf]
      %v330 = vld [vmem:[%s1 + $0x60] sm:$0xf]
      %v331 = vld [vmem:[%s1 + $0x64] sm:$0xf]
      %v332 = vld [vmem:[%s1 + $0x68] sm:$0xf]
      %v333 = vld [vmem:[%s1 + $0x6c] sm:$0xf]
      %v334 = vld [vmem:[%s1 + $0x70] sm:$0xf]
      %v335 = vld [vmem:[%s1 + $0x74] sm:$0xf]
      %v336 = vld [vmem:[%s1 + $0x78] sm:$0xf]
      %v337 = vld [vmem:[%s1 + $0x7c] sm:$0xf]
      %v338 = vld [vmem:[%s1 + $0x80] sm:$0xf]
      %v339 = vld [vmem:[%s1 + $0x84] sm:$0xf]
      %v340 = vld [vmem:[%s1 + $0x88] sm:$0xf]
      %v341 = vld [vmem:[%s1 + $0x8c] sm:$0xf]
      %v342 = vld [vmem:[%s1 + $0x90] sm:$0xf]
      %v343 = vld [vmem:[%s1 + $0x94] sm:$0xf]
      %v344 = vld [vmem:[%s1 + $0x98] sm:$0xf]
      %v345 = vld [vmem:[%s1 + $0x9c] sm:$0xf]
      %v346 = vld [vmem:[%s1 + $0xa0] sm:$0xf]
      %v347 = vld [vmem:[%s1 + $0xa4] sm:$0xf]
      %v348 = vld [vmem:[%s1 + $0xa8] sm:$0xf]
      %v349 = vld [vmem:[%s1 + $0xac] sm:$0xf]
      %v350 = vld [vmem:[%s1 + $0xb0] sm:$0xf]
      %v351 = vld [vmem:[%s1 + $0xb4] sm:$0xf]
      %v352 = vld [vmem:[%s1 + $0xb8] sm:$0xf]
      %v353 = vld [vmem:[%s1 + $0xbc] sm:$0xf]
      %v354 = vld [vmem:[%s1 + $0xc0] sm:$0xf]
      %v355 = vld [vmem:[%s1 + $0xc4] sm:$0xf]
      %v356 = vld [vmem:[%s1 + $0xc8] sm:$0xf]
      %v357 = vld [vmem:[%s1 + $0xcc] sm:$0xf]
      %v358 = vld [vmem:[%s1 + $0xd0] sm:$0xf]
      %v359 = vld [vmem:[%s1 + $0xd4] sm:$0xf]
      %v360 = vld [vmem:[%s2] sm:$0x1]
      %v362 = vlaneseq
      %v363 = vshrl.u32 %v362, 7
      %v364 = vsub.s32 0, %v363
      %v365 = vrot.slane %v360, %v364
      %v495 = vunpack.c.l.b16 %v178
      %v496 = vunpack.c.h.b16 %v178
      %v497 = vunpack.c.l.b16 %v179
      %v498 = vunpack.c.h.b16 %v179
      %v499 = vunpack.c.l.b16 %v180
      %v500 = vunpack.c.h.b16 %v180
      %v501 = vunpack.c.l.b16 %v181
      %v502 = vunpack.c.h.b16 %v181
      %v503 = vunpack.c.l.b16 %v182
      %v504 = vunpack.c.h.b16 %v182
      %v505 = vunpack.c.l.b16 %v183
      %v506 = vunpack.c.h.b16 %v183
      %v507 = vunpack.c.l.b16 %v184
      %v508 = vunpack.c.h.b16 %v184
      %v509 = vunpack.c.l.b16 %v185
      %v510 = vunpack.c.h.b16 %v185
      %v511 = vunpack.c.l.b16 %v186
      %v512 = vunpack.c.h.b16 %v186
      %v513 = vunpack.c.l.b16 %v187
      %v514 = vunpack.c.h.b16 %v187
      %v515 = vunpack.c.l.b16 %v188
      %v516 = vunpack.c.h.b16 %v188
      %v517 = vunpack.c.l.b16 %v189
      %v518 = vunpack.c.h.b16 %v189
      %v519 = vunpack.c.l.b16 %v190
      %v520 = vunpack.c.h.b16 %v190
      %v521 = vunpack.c.l.b16 %v191
      %v522 = vunpack.c.h.b16 %v191
      %v523 = vunpack.c.l.b16 %v192
      %v524 = vunpack.c.h.b16 %v192
      %v525 = vunpack.c.l.b16 %v193
      %v526 = vunpack.c.h.b16 %v193
      %v527 = vunpack.c.l.b16 %v194
      %v528 = vunpack.c.h.b16 %v194
      %v529 = vunpack.c.l.b16 %v195
      %v530 = vunpack.c.h.b16 %v195
      %v531 = vunpack.c.l.b16 %v196
      %v532 = vunpack.c.h.b16 %v196
      %v533 = vunpack.c.l.b16 %v197
      %v534 = vunpack.c.h.b16 %v197
      %v535 = vunpack.c.l.b16 %v198
      %v536 = vunpack.c.h.b16 %v198
      %v537 = vunpack.c.l.b16 %v199
      %v538 = vunpack.c.h.b16 %v199
      %v539 = vunpack.c.l.b16 %v200
      %v540 = vunpack.c.h.b16 %v200
      %v541 = vunpack.c.l.b16 %v201
      %v542 = vunpack.c.h.b16 %v201
      %v543 = vunpack.c.l.b16 %v202
      %v544 = vunpack.c.h.b16 %v202
      %v545 = vunpack.c.l.b16 %v203
      %v546 = vunpack.c.h.b16 %v203
      %v547 = vunpack.c.l.b16 %v204
      %v548 = vunpack.c.h.b16 %v204
      %v549 = vunpack.c.l.b16 %v205
      %v550 = vunpack.c.h.b16 %v205
      %v551 = vunpack.c.l.b16 %v206
      %v552 = vunpack.c.h.b16 %v206
      %v553 = vunpack.c.l.b16 %v207
      %v554 = vunpack.c.h.b16 %v207
      %v555 = vunpack.c.l.b16 %v208
      %v556 = vunpack.c.h.b16 %v208
      %v557 = vunpack.c.l.b16 %v209
      %v558 = vunpack.c.h.b16 %v209
      %v559 = vunpack.c.l.b16 %v210
      %v560 = vunpack.c.h.b16 %v210
      %v561 = vunpack.c.l.b16 %v211
      %v562 = vunpack.c.h.b16 %v211
      %v563 = vunpack.c.l.b16 %v212
      %v564 = vunpack.c.h.b16 %v212
      %v565 = vunpack.c.l.b16 %v213
      %v566 = vunpack.c.h.b16 %v213
      %v567 = vunpack.c.l.b16 %v214
      %v568 = vunpack.c.h.b16 %v214
      %v569 = vunpack.c.l.b16 %v215
      %v570 = vunpack.c.h.b16 %v215
      %v571 = vunpack.c.l.b16 %v216
      %v572 = vunpack.c.h.b16 %v216
      %v573 = vunpack.c.l.b16 %v217
      %v574 = vunpack.c.h.b16 %v217
      %v575 = vunpack.c.l.b16 %v218
      %v576 = vunpack.c.h.b16 %v218
      %v577 = vunpack.c.l.b16 %v219
      %v578 = vunpack.c.h.b16 %v219
      %v579 = vunpack.c.l.b16 %v220
      %v580 = vunpack.c.h.b16 %v220
      %v581 = vunpack.c.l.b16 %v221
      %v582 = vunpack.c.h.b16 %v221
      %v583 = vunpack.c.l.b16 %v222
      %v584 = vunpack.c.h.b16 %v222
      %v585 = vunpack.c.l.b16 %v223
      %v586 = vunpack.c.h.b16 %v223
      %v587 = vunpack.c.l.b16 %v224
      %v588 = vunpack.c.h.b16 %v224
      %v589 = vunpack.c.l.b16 %v225
      %v590 = vunpack.c.h.b16 %v225
      %v591 = vunpack.c.l.b16 %v226
      %v592 = vunpack.c.h.b16 %v226
      %v593 = vunpack.c.l.b16 %v227
      %v594 = vunpack.c.h.b16 %v227
      %v595 = vunpack.c.l.b16 %v228
      %v596 = vunpack.c.h.b16 %v228
      %v597 = vunpack.c.l.b16 %v229
      %v598 = vunpack.c.h.b16 %v229
      %v599 = vunpack.c.l.b16 %v230
      %v600 = vunpack.c.h.b16 %v230
      %v601 = vunpack.c.l.b16 %v231
      %v602 = vunpack.c.h.b16 %v231
      %v603 = vunpack.c.l.b16 %v232
      %v604 = vunpack.c.h.b16 %v232
      %v605 = vunpack.c.l.b16 %v233
      %v606 = vunpack.c.h.b16 %v233
      %v607 = vunpack.c.l.b16 %v234
      %v608 = vunpack.c.h.b16 %v234
      %v609 = vunpack.c.l.b16 %v235
      %v610 = vunpack.c.h.b16 %v235
      %v611 = vunpack.c.l.b16 %v236
      %v612 = vunpack.c.h.b16 %v236
      %v613 = vunpack.c.l.b16 %v237
      %v614 = vunpack.c.h.b16 %v237
      %v615 = vunpack.c.l.b16 %v238
      %v616 = vunpack.c.h.b16 %v238
      %v617 = vunpack.c.l.b16 %v239
      %v618 = vunpack.c.h.b16 %v239
      %v619 = vunpack.c.l.b16 %v240
      %v620 = vunpack.c.h.b16 %v240
      %v621 = vunpack.c.l.b16 %v241
      %v622 = vunpack.c.h.b16 %v241
      %v623 = vunpack.c.l.b16 %v242
      %v624 = vunpack.c.h.b16 %v242
      %v625 = vunpack.c.l.b16 %v243
      %v626 = vunpack.c.h.b16 %v243
      %v627 = vunpack.c.l.b16 %v244
      %v628 = vunpack.c.h.b16 %v244
      %v629 = vunpack.c.l.b16 %v245
      %v630 = vunpack.c.h.b16 %v245
      %v631 = vunpack.c.l.b16 %v246
      %v632 = vunpack.c.h.b16 %v246
      %v633 = vunpack.c.l.b16 %v247
      %v634 = vunpack.c.h.b16 %v247
      %v635 = vunpack.c.l.b16 %v248
      %v636 = vunpack.c.h.b16 %v248
      %v637 = vunpack.c.l.b16 %v249
      %v638 = vunpack.c.h.b16 %v249
      %v639 = vunpack.c.l.b16 %v250
      %v640 = vunpack.c.h.b16 %v250
      %v641 = vunpack.c.l.b16 %v251
      %v642 = vunpack.c.h.b16 %v251
      %v643 = vunpack.c.l.b16 %v252
      %v644 = vunpack.c.h.b16 %v252
      %v645 = vunpack.c.l.b16 %v253
      %v646 = vunpack.c.h.b16 %v253
      %v647 = vunpack.c.l.b16 %v254
      %v648 = vunpack.c.h.b16 %v254
      %v649 = vunpack.c.l.b16 %v255
      %v650 = vunpack.c.h.b16 %v255
      %v651 = vunpack.c.l.b16 %v256
      %v652 = vunpack.c.h.b16 %v256
      %v653 = vunpack.c.l.b16 %v257
      %v654 = vunpack.c.h.b16 %v257
      %v655 = vunpack.c.l.b16 %v258
      %v656 = vunpack.c.h.b16 %v258
      %v657 = vunpack.c.l.b16 %v259
      %v658 = vunpack.c.h.b16 %v259
      %v659 = vunpack.c.l.b16 %v260
      %v660 = vunpack.c.h.b16 %v260
      %v661 = vunpack.c.l.b16 %v261
      %v662 = vunpack.c.h.b16 %v261
      %v663 = vunpack.c.l.b16 %v262
      %v664 = vunpack.c.h.b16 %v262
      %v665 = vunpack.c.l.b16 %v263
      %v666 = vunpack.c.h.b16 %v263
      %v667 = vunpack.c.l.b16 %v264
      %v668 = vunpack.c.h.b16 %v264
      %v669 = vunpack.c.l.b16 %v265
      %v670 = vunpack.c.h.b16 %v265
      %v671 = vunpack.c.l.b16 %v266
      %v672 = vunpack.c.h.b16 %v266
      %v673 = vunpack.c.l.b16 %v267
      %v674 = vunpack.c.h.b16 %v267
      %v675 = vunpack.c.l.b16 %v268
      %v676 = vunpack.c.h.b16 %v268
      %v677 = vunpack.c.l.b16 %v269
      %v678 = vunpack.c.h.b16 %v269
      %v679 = vunpack.c.l.b16 %v270
      %v680 = vunpack.c.h.b16 %v270
      %v681 = vunpack.c.l.b16 %v271
      %v682 = vunpack.c.h.b16 %v271
      %v683 = vunpack.c.l.b16 %v272
      %v684 = vunpack.c.h.b16 %v272
      %v685 = vunpack.c.l.b16 %v273
      %v686 = vunpack.c.h.b16 %v273
      %v687 = vunpack.c.l.b16 %v274
      %v688 = vunpack.c.h.b16 %v274
      %v689 = vunpack.c.l.b16 %v275
      %v690 = vunpack.c.h.b16 %v275
      %v691 = vunpack.c.l.b16 %v276
      %v692 = vunpack.c.h.b16 %v276
      %v693 = vunpack.c.l.b16 %v277
      %v694 = vunpack.c.h.b16 %v277
      %v695 = vunpack.c.l.b16 %v278
      %v696 = vunpack.c.h.b16 %v278
      %v697 = vunpack.c.l.b16 %v279
      %v698 = vunpack.c.h.b16 %v279
      %v699 = vunpack.c.l.b16 %v280
      %v700 = vunpack.c.h.b16 %v280
      %v701 = vunpack.c.l.b16 %v281
      %v702 = vunpack.c.h.b16 %v281
      %v703 = vunpack.c.l.b16 %v282
      %v704 = vunpack.c.h.b16 %v282
      %v705 = vunpack.c.l.b16 %v283
      %v706 = vunpack.c.h.b16 %v283
      %v707 = vunpack.c.l.b16 %v284
      %v708 = vunpack.c.h.b16 %v284
      %v709 = vunpack.c.l.b16 %v285
      %v710 = vunpack.c.h.b16 %v285
      %v711 = vunpack.c.l.b16 %v286
      %v712 = vunpack.c.h.b16 %v286
      %v713 = vunpack.c.l.b16 %v287
      %v714 = vunpack.c.h.b16 %v287
      %v715 = vunpack.c.l.b16 %v288
      %v716 = vunpack.c.h.b16 %v288
      %v717 = vunpack.c.l.b16 %v289
      %v718 = vunpack.c.h.b16 %v289
      %v719 = vunpack.c.l.b16 %v290
      %v720 = vunpack.c.h.b16 %v290
      %v721 = vunpack.c.l.b16 %v291
      %v722 = vunpack.c.h.b16 %v291
      %v723 = vunpack.c.l.b16 %v292
      %v724 = vunpack.c.h.b16 %v292
      %v725 = vunpack.c.l.b16 %v293
      %v726 = vunpack.c.h.b16 %v293
      %v727 = vunpack.c.l.b16 %v294
      %v728 = vunpack.c.h.b16 %v294
      %v729 = vunpack.c.l.b16 %v295
      %v730 = vunpack.c.h.b16 %v295
      %v731 = vunpack.c.l.b16 %v296
      %v732 = vunpack.c.h.b16 %v296
      %v733 = vunpack.c.l.b16 %v297
      %v734 = vunpack.c.h.b16 %v297
      %v735 = vunpack.c.l.b16 %v298
      %v736 = vunpack.c.h.b16 %v298
      %v737 = vunpack.c.l.b16 %v299
      %v738 = vunpack.c.h.b16 %v299
      %v739 = vunpack.c.l.b16 %v300
      %v740 = vunpack.c.h.b16 %v300
      %v741 = vunpack.c.l.b16 %v301
      %v742 = vunpack.c.h.b16 %v301
      %v743 = vunpack.c.l.b16 %v302
      %v744 = vunpack.c.h.b16 %v302
      %v745 = vunpack.c.l.b16 %v303
      %v746 = vunpack.c.h.b16 %v303
      %v747 = vunpack.c.l.b16 %v304
      %v748 = vunpack.c.h.b16 %v304
      %v749 = vunpack.c.l.b16 %v305
      %v750 = vunpack.c.h.b16 %v305
      %v751 = vpack.c.b16 %v499, %v495
      %v752 = vpack.c.b16 %v500, %v496
      %v753 = vpack.c.b16 %v501, %v497
      %v754 = vpack.c.b16 %v502, %v498
      %v755 = vpack.c.b16 %v507, %v503
      %v756 = vpack.c.b16 %v508, %v504
      %v757 = vpack.c.b16 %v509, %v505
      %v758 = vpack.c.b16 %v510, %v506
      %v759 = vpack.c.b16 %v515, %v511
      %v760 = vpack.c.b16 %v516, %v512
      %v761 = vpack.c.b16 %v517, %v513
      %v762 = vpack.c.b16 %v518, %v514
      %v763 = vpack.c.b16 %v523, %v519
      %v764 = vpack.c.b16 %v524, %v520
      %v765 = vpack.c.b16 %v525, %v521
      %v766 = vpack.c.b16 %v526, %v522
      %v767 = vpack.c.b16 %v531, %v527
      %v768 = vpack.c.b16 %v532, %v528
      %v769 = vpack.c.b16 %v533, %v529
      %v770 = vpack.c.b16 %v534, %v530
      %v771 = vpack.c.b16 %v539, %v535
      %v772 = vpack.c.b16 %v540, %v536
      %v773 = vpack.c.b16 %v541, %v537
      %v774 = vpack.c.b16 %v542, %v538
      %v775 = vpack.c.b16 %v547, %v543
      %v776 = vpack.c.b16 %v548, %v544
      %v777 = vpack.c.b16 %v549, %v545
      %v778 = vpack.c.b16 %v550, %v546
      %v779 = vpack.c.b16 %v555, %v551
      %v780 = vpack.c.b16 %v556, %v552
      %v781 = vpack.c.b16 %v557, %v553
      %v782 = vpack.c.b16 %v558, %v554
      %v783 = vpack.c.b16 %v563, %v559
      %v784 = vpack.c.b16 %v564, %v560
      %v785 = vpack.c.b16 %v565, %v561
      %v786 = vpack.c.b16 %v566, %v562
      %v787 = vpack.c.b16 %v571, %v567
      %v788 = vpack.c.b16 %v572, %v568
      %v789 = vpack.c.b16 %v573, %v569
      %v790 = vpack.c.b16 %v574, %v570
      %v791 = vpack.c.b16 %v579, %v575
      %v792 = vpack.c.b16 %v580, %v576
      %v793 = vpack.c.b16 %v581, %v577
      %v794 = vpack.c.b16 %v582, %v578
      %v795 = vpack.c.b16 %v587, %v583
      %v796 = vpack.c.b16 %v588, %v584
      %v797 = vpack.c.b16 %v589, %v585
      %v798 = vpack.c.b16 %v590, %v586
      %v799 = vpack.c.b16 %v595, %v591
      %v800 = vpack.c.b16 %v596, %v592
      %v801 = vpack.c.b16 %v597, %v593
      %v802 = vpack.c.b16 %v598, %v594
      %v803 = vpack.c.b16 %v603, %v599
      %v804 = vpack.c.b16 %v604, %v600
      %v805 = vpack.c.b16 %v605, %v601
      %v806 = vpack.c.b16 %v606, %v602
      %v807 = vpack.c.b16 %v611, %v607
      %v808 = vpack.c.b16 %v612, %v608
      %v809 = vpack.c.b16 %v613, %v609
      %v810 = vpack.c.b16 %v614, %v610
      %v811 = vpack.c.b16 %v619, %v615
      %v812 = vpack.c.b16 %v620, %v616
      %v813 = vpack.c.b16 %v621, %v617
      %v814 = vpack.c.b16 %v622, %v618
      %v815 = vpack.c.b16 %v627, %v623
      %v816 = vpack.c.b16 %v628, %v624
      %v817 = vpack.c.b16 %v629, %v625
      %v818 = vpack.c.b16 %v630, %v626
      %v819 = vpack.c.b16 %v635, %v631
      %v820 = vpack.c.b16 %v636, %v632
      %v821 = vpack.c.b16 %v637, %v633
      %v822 = vpack.c.b16 %v638, %v634
      %v823 = vpack.c.b16 %v643, %v639
      %v824 = vpack.c.b16 %v644, %v640
      %v825 = vpack.c.b16 %v645, %v641
      %v826 = vpack.c.b16 %v646, %v642
      %v827 = vpack.c.b16 %v651, %v647
      %v828 = vpack.c.b16 %v652, %v648
      %v829 = vpack.c.b16 %v653, %v649
      %v830 = vpack.c.b16 %v654, %v650
      %v831 = vpack.c.b16 %v659, %v655
      %v832 = vpack.c.b16 %v660, %v656
      %v833 = vpack.c.b16 %v661, %v657
      %v834 = vpack.c.b16 %v662, %v658
      %v835 = vpack.c.b16 %v667, %v663
      %v836 = vpack.c.b16 %v668, %v664
      %v837 = vpack.c.b16 %v669, %v665
      %v838 = vpack.c.b16 %v670, %v666
      %v839 = vpack.c.b16 %v675, %v671
      %v840 = vpack.c.b16 %v676, %v672
      %v841 = vpack.c.b16 %v677, %v673
      %v842 = vpack.c.b16 %v678, %v674
      %v843 = vpack.c.b16 %v683, %v679
      %v844 = vpack.c.b16 %v684, %v680
      %v845 = vpack.c.b16 %v685, %v681
      %v846 = vpack.c.b16 %v686, %v682
      %v847 = vpack.c.b16 %v691, %v687
      %v848 = vpack.c.b16 %v692, %v688
      %v849 = vpack.c.b16 %v693, %v689
      %v850 = vpack.c.b16 %v694, %v690
      %v851 = vpack.c.b16 %v699, %v695
      %v852 = vpack.c.b16 %v700, %v696
      %v853 = vpack.c.b16 %v701, %v697
      %v854 = vpack.c.b16 %v702, %v698
      %v855 = vpack.c.b16 %v707, %v703
      %v856 = vpack.c.b16 %v708, %v704
      %v857 = vpack.c.b16 %v709, %v705
      %v858 = vpack.c.b16 %v710, %v706
      %v859 = vpack.c.b16 %v715, %v711
      %v860 = vpack.c.b16 %v716, %v712
      %v861 = vpack.c.b16 %v717, %v713
      %v862 = vpack.c.b16 %v718, %v714
      %v863 = vpack.c.b16 %v723, %v719
      %v864 = vpack.c.b16 %v724, %v720
      %v865 = vpack.c.b16 %v725, %v721
      %v866 = vpack.c.b16 %v726, %v722
      %v867 = vpack.c.b16 %v731, %v727
      %v868 = vpack.c.b16 %v732, %v728
      %v869 = vpack.c.b16 %v733, %v729
      %v870 = vpack.c.b16 %v734, %v730
      %v871 = vpack.c.b16 %v739, %v735
      %v872 = vpack.c.b16 %v740, %v736
      %v873 = vpack.c.b16 %v741, %v737
      %v874 = vpack.c.b16 %v742, %v738
      %v875 = vpack.c.b16 %v747, %v743
      %v876 = vpack.c.b16 %v748, %v744
      %v877 = vpack.c.b16 %v749, %v745
      %v878 = vpack.c.b16 %v750, %v746
      %v1029 = vunpack.c.l.b16 %v306
      %v1030 = vunpack.c.l.b16 %v307
      %v1031 = vunpack.c.l.b16 %v308
      %v1032 = vunpack.c.l.b16 %v309
      %v1033 = vunpack.c.l.b16 %v310
      %v1034 = vunpack.c.l.b16 %v311
      %v1035 = vunpack.c.l.b16 %v312
      %v1036 = vunpack.c.l.b16 %v313
      %v1037 = vunpack.c.l.b16 %v314
      %v1038 = vunpack.c.l.b16 %v315
      %v1039 = vunpack.c.l.b16 %v316
      %v1040 = vunpack.c.l.b16 %v317
      %v1041 = vunpack.c.l.b16 %v318
      %v1042 = vunpack.c.l.b16 %v319
      %v1043 = vunpack.c.l.b16 %v320
      %v1044 = vunpack.c.l.b16 %v321
      %v1045 = vunpack.c.l.b16 %v322
      %v1046 = vunpack.c.l.b16 %v323
      %v1047 = vunpack.c.l.b16 %v324
      %v1048 = vunpack.c.l.b16 %v325
      %v1049 = vunpack.c.l.b16 %v326
      %v1050 = vunpack.c.l.b16 %v327
      %v1051 = vunpack.c.l.b16 %v328
      %v1052 = vunpack.c.l.b16 %v329
      %v1053 = vunpack.c.l.b16 %v330
      %v1054 = vunpack.c.l.b16 %v331
      %v1055 = vunpack.c.l.b16 %v332
      %v1056 = vunpack.c.l.b16 %v333
      %v1057 = vunpack.c.l.b16 %v334
      %v1058 = vunpack.c.l.b16 %v335
      %v1059 = vunpack.c.l.b16 %v336
      %v1060 = vunpack.c.l.b16 %v337
      %v1061 = vunpack.c.l.b16 %v338
      %v1062 = vunpack.c.l.b16 %v339
      %v1063 = vunpack.c.l.b16 %v340
      %v1064 = vunpack.c.l.b16 %v341
      %v1065 = vunpack.c.l.b16 %v342
      %v1066 = vunpack.c.l.b16 %v343
      %v1067 = vunpack.c.l.b16 %v344
      %v1068 = vunpack.c.l.b16 %v345
      %v1069 = vunpack.c.l.b16 %v346
      %v1070 = vunpack.c.l.b16 %v347
      %v1071 = vunpack.c.l.b16 %v348
      %v1072 = vunpack.c.l.b16 %v349
      %v1073 = vunpack.c.l.b16 %v350
      %v1074 = vunpack.c.l.b16 %v351
      %v1075 = vunpack.c.l.b16 %v352
      %v1076 = vunpack.c.l.b16 %v353
      %v1077 = vunpack.c.l.b16 %v354
      %v1078 = vunpack.c.l.b16 %v355
      %v1079 = vunpack.c.l.b16 %v356
      %v1080 = vunpack.c.l.b16 %v357
      %v1081 = vunpack.c.l.b16 %v358
      %v1082 = vunpack.c.l.b16 %v359
      %v1083 = vpack.c.b16 %v1030, %v1029
      %v1084 = vpack.c.b16 %v1032, %v1031
      %v1085 = vpack.c.b16 %v1034, %v1033
      %v1086 = vpack.c.b16 %v1036, %v1035
      %v1087 = vpack.c.b16 %v1038, %v1037
      %v1088 = vpack.c.b16 %v1040, %v1039
      %v1089 = vpack.c.b16 %v1042, %v1041
      %v1090 = vpack.c.b16 %v1044, %v1043
      %v1091 = vpack.c.b16 %v1046, %v1045
      %v1092 = vpack.c.b16 %v1048, %v1047
      %v1093 = vpack.c.b16 %v1050, %v1049
      %v1094 = vpack.c.b16 %v1052, %v1051
      %v1095 = vpack.c.b16 %v1054, %v1053
      %v1096 = vpack.c.b16 %v1056, %v1055
      %v1097 = vpack.c.b16 %v1058, %v1057
      %v1098 = vpack.c.b16 %v1060, %v1059
      %v1099 = vpack.c.b16 %v1062, %v1061
      %v1100 = vpack.c.b16 %v1064, %v1063
      %v1101 = vpack.c.b16 %v1066, %v1065
      %v1102 = vpack.c.b16 %v1068, %v1067
      %v1103 = vpack.c.b16 %v1070, %v1069
      %v1104 = vpack.c.b16 %v1072, %v1071
      %v1105 = vpack.c.b16 %v1074, %v1073
      %v1106 = vpack.c.b16 %v1076, %v1075
      %v1107 = vpack.c.b16 %v1078, %v1077
      %v1108 = vpack.c.b16 %v1080, %v1079
      %v1109 = vpack.c.b16 %v1082, %v1081
      %vm1137 = vcmask 392192
      %v1139 = vsel %vm1137, %v754, 0
      %v1142 = vsel %vm1137, %v758, 0
      %v1145 = vsel %vm1137, %v762, 0
      %v1148 = vsel %vm1137, %v766, 0
      %v1151 = vsel %vm1137, %v770, 0
      %v1154 = vsel %vm1137, %v774, 0
      %v1157 = vsel %vm1137, %v778, 0
      %v1160 = vsel %vm1137, %v782, 0
      %v1163 = vsel %vm1137, %v786, 0
      %v1166 = vsel %vm1137, %v790, 0
      %v1169 = vsel %vm1137, %v794, 0
      %v1172 = vsel %vm1137, %v798, 0
      %v1175 = vsel %vm1137, %v802, 0
      %v1178 = vsel %vm1137, %v806, 0
      %v1181 = vsel %vm1137, %v810, 0
      %v1184 = vsel %vm1137, %v814, 0
      %v1187 = vsel %vm1137, %v818, 0
      %v1190 = vsel %vm1137, %v822, 0
      %v1193 = vsel %vm1137, %v826, 0
      %v1196 = vsel %vm1137, %v830, 0
      %v1199 = vsel %vm1137, %v834, 0
      %v1202 = vsel %vm1137, %v838, 0
      %v1205 = vsel %vm1137, %v842, 0
      %v1208 = vsel %vm1137, %v846, 0
      %v1211 = vsel %vm1137, %v850, 0
      %v1214 = vsel %vm1137, %v854, 0
      %v1217 = vsel %vm1137, %v858, 0
      %v1220 = vsel %vm1137, %v862, 0
      %v1223 = vsel %vm1137, %v866, 0
      %v1226 = vsel %vm1137, %v870, 0
      %v1229 = vsel %vm1137, %v874, 0
      %v1232 = vsel %vm1137, %v878, 0
      %1234 = vmatprep.subr.bf16.mxu0 0
      %1235 = vmatpush1.bf16.msra.mxu0 %v1083
      %1236 = vmatprep.subr.bf16.mxu0 0
      %1237 = vmatpush1.bf16.msra.mxu0 %v1084
      %1238 = vmatprep.subr.bf16.mxu0 0
      %1239 = vmatpush1.bf16.msra.mxu0 %v1085
      %1240 = vmatprep.subr.bf16.mxu0 0
      %1241 = vmatpush1.bf16.msra.mxu0 %v1086
      %1242 = vmatprep.subr.bf16.mxu0 0
      %1243 = vmatpush1.bf16.msra.mxu0 %v1087
      %1244 = vmatprep.subr.bf16.mxu0 0
      %1245 = vmatpush1.bf16.msra.mxu0 %v1088
      %1246 = vmatprep.subr.bf16.mxu0 0
      %1247 = vmatpush1.bf16.msra.mxu0 %v1089
      %1248 = vmatprep.subr.bf16.mxu0 0
      %1249 = vmatpush1.bf16.msra.mxu0 %v1090
      %1250 = vmatprep.subr.bf16.mxu0 0
      %1251 = vmatpush1.bf16.msra.mxu0 %v1091
      %1252 = vmatprep.subr.bf16.mxu0 0
      %1253 = vmatpush1.bf16.msra.mxu0 %v1092
      %1254 = vmatprep.subr.bf16.mxu0 0
      %1255 = vmatpush1.bf16.msra.mxu0 %v1093
      %1256 = vmatprep.subr.bf16.mxu0 0
      %1257 = vmatpush1.bf16.msra.mxu0 %v1094
      %1258 = vmatprep.subr.bf16.mxu0 0
      %1259 = vmatpush1.bf16.msra.mxu0 %v1095
      %1260 = vmatprep.subr.bf16.mxu0 0
      %1261 = vmatpush1.bf16.msra.mxu0 %v1096
      %1262 = vmatprep.subr.bf16.mxu0 0
      %1263 = vmatpush1.bf16.msra.mxu0 %v1097
      %1264 = vmatprep.subr.bf16.mxu0 0
      %1265 = vmatpush1.bf16.msra.mxu0 %v1098
      %1266 = vmatprep.mubr.bf16.mxu0 %v752
      %1267 = vmatmul.mubr.bf16.gmra.mrb[0].mxu0 %v751
      %v1268 = vpop.f32.mrb[0].mxu0
      %v1269 = vadd.f32 %v365, %v1268
      %v1270 = vpop.f32.mrb[0].mxu0
      %v1271 = vpop.f32.mrb[0].mxu0
      %v1272 = vadd.f32 %v365, %v1271
      %v1273 = vpop.f32.mrb[0].mxu0
      %1274 = vmatprep.mubr.bf16.mxu0 %v756
      %1275 = vmatmul.mubr.bf16.gmra.mrb[0].mxu0 %v755
      %v1276 = vpop.f32.mrb[0].mxu0
      %v1277 = vadd.f32 %v365, %v1276
      %v1278 = vpop.f32.mrb[0].mxu0
      %v1279 = vpop.f32.mrb[0].mxu0
      %v1280 = vadd.f32 %v365, %v1279
      %v1281 = vpop.f32.mrb[0].mxu0
      %1282 = vmatprep.mubr.bf16.mxu0 %v760
      %1283 = vmatmul.mubr.bf16.gmra.mrb[0].mxu0 %v759
      %v1284 = vpop.f32.mrb[0].mxu0
      %v1285 = vadd.f32 %v365, %v1284
      %v1286 = vpop.f32.mrb[0].mxu0
      %v1287 = vpop.f32.mrb[0].mxu0
      %v1288 = vadd.f32 %v365, %v1287
      %v1289 = vpop.f32.mrb[0].mxu0
      %1290 = vmatprep.mubr.bf16.mxu0 %v764
      %1291 = vmatmul.mubr.bf16.gmra.mrb[0].mxu0 %v763
      %v1292 = vpop.f32.mrb[0].mxu0
      %v1293 = vadd.f32 %v365, %v1292
      %v1294 = vpop.f32.mrb[0].mxu0
      %v1295 = vpop.f32.mrb[0].mxu0
      %v1296 = vadd.f32 %v365, %v1295
      %v1297 = vpop.f32.mrb[0].mxu0
      %1298 = vmatprep.mubr.bf16.mxu0 %v768
      %1299 = vmatmul.mubr.bf16.gmra.mrb[0].mxu0 %v767
      %v1300 = vpop.f32.mrb[0].mxu0
      %v1301 = vadd.f32 %v365, %v1300
      %v1302 = vpop.f32.mrb[0].mxu0
      %v1303 = vpop.f32.mrb[0].mxu0
      %v1304 = vadd.f32 %v365, %v1303
      %v1305 = vpop.f32.mrb[0].mxu0
      %1306 = vmatprep.mubr.bf16.mxu0 %v772
      %1307 = vmatmul.mubr.bf16.gmra.mrb[0].mxu0 %v771
      %v1308 = vpop.f32.mrb[0].mxu0
      %v1309 = vadd.f32 %v365, %v1308
      %v1310 = vpop.f32.mrb[0].mxu0
      %v1311 = vpop.f32.mrb[0].mxu0
      %v1312 = vadd.f32 %v365, %v1311
      %v1313 = vpop.f32.mrb[0].mxu0
      %1314 = vmatprep.mubr.bf16.mxu0 %v776
      %1315 = vmatmul.mubr.bf16.gmra.mrb[0].mxu0 %v775
      %v1316 = vpop.f32.mrb[0].mxu0
      %v1317 = vadd.f32 %v365, %v1316
      %v1318 = vpop.f32.mrb[0].mxu0
      %v1319 = vpop.f32.mrb[0].mxu0
      %v1320 = vadd.f32 %v365, %v1319
      %v1321 = vpop.f32.mrb[0].mxu0
      %1322 = vmatprep.mubr.bf16.mxu0 %v780
      %1323 = vmatmul.mubr.bf16.gmra.mrb[0].mxu0 %v779
      %v1324 = vpop.f32.mrb[0].mxu0
      %v1325 = vadd.f32 %v365, %v1324
      %v1326 = vpop.f32.mrb[0].mxu0
      %v1327 = vpop.f32.mrb[0].mxu0
      %v1328 = vadd.f32 %v365, %v1327
      %v1329 = vpop.f32.mrb[0].mxu0
      %1330 = vmatprep.mubr.bf16.mxu0 %v784
      %1331 = vmatmul.mubr.bf16.gmra.mrb[0].mxu0 %v783
      %v1332 = vpop.f32.mrb[0].mxu0
      %v1333 = vadd.f32 %v365, %v1332
      %v1334 = vpop.f32.mrb[0].mxu0
      %v1335 = vpop.f32.mrb[0].mxu0
      %v1336 = vadd.f32 %v365, %v1335
      %v1337 = vpop.f32.mrb[0].mxu0
      %1338 = vmatprep.mubr.bf16.mxu0 %v788
      %1339 = vmatmul.mubr.bf16.gmra.mrb[0].mxu0 %v787
      %v1340 = vpop.f32.mrb[0].mxu0
      %v1341 = vadd.f32 %v365, %v1340
      %v1342 = vpop.f32.mrb[0].mxu0
      %v1343 = vpop.f32.mrb[0].mxu0
      %v1344 = vadd.f32 %v365, %v1343
      %v1345 = vpop.f32.mrb[0].mxu0
      %1346 = vmatprep.mubr.bf16.mxu0 %v792
      %1347 = vmatmul.mubr.bf16.gmra.mrb[0].mxu0 %v791
      %v1348 = vpop.f32.mrb[0].mxu0
      %v1349 = vadd.f32 %v365, %v1348
      %v1350 = vpop.f32.mrb[0].mxu0
      %v1351 = vpop.f32.mrb[0].mxu0
      %v1352 = vadd.f32 %v365, %v1351
      %v1353 = vpop.f32.mrb[0].mxu0
      %1354 = vmatprep.mubr.bf16.mxu0 %v796
      %1355 = vmatmul.mubr.bf16.gmra.mrb[0].mxu0 %v795
      %v1356 = vpop.f32.mrb[0].mxu0
      %v1357 = vadd.f32 %v365, %v1356
      %v1358 = vpop.f32.mrb[0].mxu0
      %v1359 = vpop.f32.mrb[0].mxu0
      %v1360 = vadd.f32 %v365, %v1359
      %v1361 = vpop.f32.mrb[0].mxu0
      %1362 = vmatprep.mubr.bf16.mxu0 %v800
      %1363 = vmatmul.mubr.bf16.gmra.mrb[0].mxu0 %v799
      %v1364 = vpop.f32.mrb[0].mxu0
      %v1365 = vadd.f32 %v365, %v1364
      %v1366 = vpop.f32.mrb[0].mxu0
      %v1367 = vpop.f32.mrb[0].mxu0
      %v1368 = vadd.f32 %v365, %v1367
      %v1369 = vpop.f32.mrb[0].mxu0
      %1370 = vmatprep.mubr.bf16.mxu0 %v804
      %1371 = vmatmul.mubr.bf16.gmra.mrb[0].mxu0 %v803
      %v1372 = vpop.f32.mrb[0].mxu0
      %v1373 = vadd.f32 %v365, %v1372
      %v1374 = vpop.f32.mrb[0].mxu0
      %v1375 = vpop.f32.mrb[0].mxu0
      %v1376 = vadd.f32 %v365, %v1375
      %v1377 = vpop.f32.mrb[0].mxu0
      %1378 = vmatprep.mubr.bf16.mxu0 %v808
      %1379 = vmatmul.mubr.bf16.gmra.mrb[0].mxu0 %v807
      %v1380 = vpop.f32.mrb[0].mxu0
      %v1381 = vadd.f32 %v365, %v1380
      %v1382 = vpop.f32.mrb[0].mxu0
      %v1383 = vpop.f32.mrb[0].mxu0
      %v1384 = vadd.f32 %v365, %v1383
      %v1385 = vpop.f32.mrb[0].mxu0
      %1386 = vmatprep.mubr.bf16.mxu0 %v812
      %1387 = vmatmul.mubr.bf16.gmra.mrb[0].mxu0 %v811
      %v1388 = vpop.f32.mrb[0].mxu0
      %v1389 = vadd.f32 %v365, %v1388
      %v1390 = vpop.f32.mrb[0].mxu0
      %v1391 = vpop.f32.mrb[0].mxu0
      %v1392 = vadd.f32 %v365, %v1391
      %v1393 = vpop.f32.mrb[0].mxu0
      %1394 = vmatprep.mubr.bf16.mxu0 %v816
      %1395 = vmatmul.mubr.bf16.gmra.mrb[0].mxu0 %v815
      %v1396 = vpop.f32.mrb[0].mxu0
      %v1397 = vadd.f32 %v365, %v1396
      %v1398 = vpop.f32.mrb[0].mxu0
      %v1399 = vpop.f32.mrb[0].mxu0
      %v1400 = vadd.f32 %v365, %v1399
      %v1401 = vpop.f32.mrb[0].mxu0
      %1402 = vmatprep.mubr.bf16.mxu0 %v820
      %1403 = vmatmul.mubr.bf16.gmra.mrb[0].mxu0 %v819
      %v1404 = vpop.f32.mrb[0].mxu0
      %v1405 = vadd.f32 %v365, %v1404
      %v1406 = vpop.f32.mrb[0].mxu0
      %v1407 = vpop.f32.mrb[0].mxu0
      %v1408 = vadd.f32 %v365, %v1407
      %v1409 = vpop.f32.mrb[0].mxu0
      %1410 = vmatprep.mubr.bf16.mxu0 %v824
      %1411 = vmatmul.mubr.bf16.gmra.mrb[0].mxu0 %v823
      %v1412 = vpop.f32.mrb[0].mxu0
      %v1413 = vadd.f32 %v365, %v1412
      %v1414 = vpop.f32.mrb[0].mxu0
      %v1415 = vpop.f32.mrb[0].mxu0
      %v1416 = vadd.f32 %v365, %v1415
      %v1417 = vpop.f32.mrb[0].mxu0
      %1418 = vmatprep.mubr.bf16.mxu0 %v828
      %1419 = vmatmul.mubr.bf16.gmra.mrb[0].mxu0 %v827
      %v1420 = vpop.f32.mrb[0].mxu0
      %v1421 = vadd.f32 %v365, %v1420
      %v1422 = vpop.f32.mrb[0].mxu0
      %v1423 = vpop.f32.mrb[0].mxu0
      %v1424 = vadd.f32 %v365, %v1423
      %v1425 = vpop.f32.mrb[0].mxu0
      %1426 = vmatprep.mubr.bf16.mxu0 %v832
      %1427 = vmatmul.mubr.bf16.gmra.mrb[0].mxu0 %v831
      %v1428 = vpop.f32.mrb[0].mxu0
      %v1429 = vadd.f32 %v365, %v1428
      %v1430 = vpop.f32.mrb[0].mxu0
      %v1431 = vpop.f32.mrb[0].mxu0
      %v1432 = vadd.f32 %v365, %v1431
      %v1433 = vpop.f32.mrb[0].mxu0
      %1434 = vmatprep.mubr.bf16.mxu0 %v836
      %1435 = vmatmul.mubr.bf16.gmra.mrb[0].mxu0 %v835
      %v1436 = vpop.f32.mrb[0].mxu0
      %v1437 = vadd.f32 %v365, %v1436
      %v1438 = vpop.f32.mrb[0].mxu0
      %v1439 = vpop.f32.mrb[0].mxu0
      %v1440 = vadd.f32 %v365, %v1439
      %v1441 = vpop.f32.mrb[0].mxu0
      %1442 = vmatprep.mubr.bf16.mxu0 %v840
      %1443 = vmatmul.mubr.bf16.gmra.mrb[0].mxu0 %v839
      %v1444 = vpop.f32.mrb[0].mxu0
      %v1445 = vadd.f32 %v365, %v1444
      %v1446 = vpop.f32.mrb[0].mxu0
      %v1447 = vpop.f32.mrb[0].mxu0
      %v1448 = vadd.f32 %v365, %v1447
      %v1449 = vpop.f32.mrb[0].mxu0
      %1450 = vmatprep.mubr.bf16.mxu0 %v844
      %1451 = vmatmul.mubr.bf16.gmra.mrb[0].mxu0 %v843
      %v1452 = vpop.f32.mrb[0].mxu0
      %v1453 = vadd.f32 %v365, %v1452
      %v1454 = vpop.f32.mrb[0].mxu0
      %v1455 = vpop.f32.mrb[0].mxu0
      %v1456 = vadd.f32 %v365, %v1455
      %v1457 = vpop.f32.mrb[0].mxu0
      %1458 = vmatprep.mubr.bf16.mxu0 %v848
      %1459 = vmatmul.mubr.bf16.gmra.mrb[0].mxu0 %v847
      %v1460 = vpop.f32.mrb[0].mxu0
      %v1461 = vadd.f32 %v365, %v1460
      %v1462 = vpop.f32.mrb[0].mxu0
      %v1463 = vpop.f32.mrb[0].mxu0
      %v1464 = vadd.f32 %v365, %v1463
      %v1465 = vpop.f32.mrb[0].mxu0
      %1466 = vmatprep.mubr.bf16.mxu0 %v852
      %1467 = vmatmul.mubr.bf16.gmra.mrb[0].mxu0 %v851
      %v1468 = vpop.f32.mrb[0].mxu0
      %v1469 = vadd.f32 %v365, %v1468
      %v1470 = vpop.f32.mrb[0].mxu0
      %v1471 = vpop.f32.mrb[0].mxu0
      %v1472 = vadd.f32 %v365, %v1471
      %v1473 = vpop.f32.mrb[0].mxu0
      %1474 = vmatprep.mubr.bf16.mxu0 %v856
      %1475 = vmatmul.mubr.bf16.gmra.mrb[0].mxu0 %v855
      %v1476 = vpop.f32.mrb[0].mxu0
      %v1477 = vadd.f32 %v365, %v1476
      %v1478 = vpop.f32.mrb[0].mxu0
      %v1479 = vpop.f32.mrb[0].mxu0
      %v1480 = vadd.f32 %v365, %v1479
      %v1481 = vpop.f32.mrb[0].mxu0
      %1482 = vmatprep.mubr.bf16.mxu0 %v860
      %1483 = vmatmul.mubr.bf16.gmra.mrb[0].mxu0 %v859
      %v1484 = vpop.f32.mrb[0].mxu0
      %v1485 = vadd.f32 %v365, %v1484
      %v1486 = vpop.f32.mrb[0].mxu0
      %v1487 = vpop.f32.mrb[0].mxu0
      %v1488 = vadd.f32 %v365, %v1487
      %v1489 = vpop.f32.mrb[0].mxu0
      %1490 = vmatprep.mubr.bf16.mxu0 %v864
      %1491 = vmatmul.mubr.bf16.gmra.mrb[0].mxu0 %v863
      %v1492 = vpop.f32.mrb[0].mxu0
      %v1493 = vadd.f32 %v365, %v1492
      %v1494 = vpop.f32.mrb[0].mxu0
      %v1495 = vpop.f32.mrb[0].mxu0
      %v1496 = vadd.f32 %v365, %v1495
      %v1497 = vpop.f32.mrb[0].mxu0
      %1498 = vmatprep.mubr.bf16.mxu0 %v868
      %1499 = vmatmul.mubr.bf16.gmra.mrb[0].mxu0 %v867
      %v1500 = vpop.f32.mrb[0].mxu0
      %v1501 = vadd.f32 %v365, %v1500
      %v1502 = vpop.f32.mrb[0].mxu0
      %v1503 = vpop.f32.mrb[0].mxu0
      %v1504 = vadd.f32 %v365, %v1503
      %v1505 = vpop.f32.mrb[0].mxu0
      %1506 = vmatprep.mubr.bf16.mxu0 %v872
      %1507 = vmatmul.mubr.bf16.gmra.mrb[0].mxu0 %v871
      %v1508 = vpop.f32.mrb[0].mxu0
      %v1509 = vadd.f32 %v365, %v1508
      %v1510 = vpop.f32.mrb[0].mxu0
      %v1511 = vpop.f32.mrb[0].mxu0
      %v1512 = vadd.f32 %v365, %v1511
      %v1513 = vpop.f32.mrb[0].mxu0
      %1514 = vmatprep.mubr.bf16.mxu0 %v876
      %1515 = vmatmul.mubr.bf16.gmra.mrb[0].mxu0 %v875
      %v1516 = vpop.f32.mrb[0].mxu0
      %v1517 = vadd.f32 %v365, %v1516
      %v1518 = vpop.f32.mrb[0].mxu0
      %v1519 = vpop.f32.mrb[0].mxu0
      %v1520 = vadd.f32 %v365, %v1519
      %v1521 = vpop.f32.mrb[0].mxu0
      %1522 = vdwg.mxu0
      %1523 = vmatprep.subr.bf16.mxu0 0
      %1524 = vmatpush1.bf16.msra.mxu0 %v1099
      %1525 = vmatprep.subr.bf16.mxu0 0
      %1526 = vmatpush1.bf16.msra.mxu0 %v1100
      %1527 = vmatprep.subr.bf16.mxu0 0
      %1528 = vmatpush1.bf16.msra.mxu0 %v1101
      %1529 = vmatprep.subr.bf16.mxu0 0
      %1530 = vmatpush1.bf16.msra.mxu0 %v1102
      %1531 = vmatprep.subr.bf16.mxu0 0
      %1532 = vmatpush1.bf16.msra.mxu0 %v1103
      %1533 = vmatprep.subr.bf16.mxu0 0
      %1534 = vmatpush1.bf16.msra.mxu0 %v1104
      %1535 = vmatprep.subr.bf16.mxu0 0
      %1536 = vmatpush1.bf16.msra.mxu0 %v1105
      %1537 = vmatprep.subr.bf16.mxu0 0
      %1538 = vmatpush1.bf16.msra.mxu0 %v1106
      %1539 = vmatprep.subr.bf16.mxu0 0
      %1540 = vmatpush1.bf16.msra.mxu0 %v1107
      %1541 = vmatprep.subr.bf16.mxu0 0
      %1542 = vmatpush1.bf16.msra.mxu0 %v1108
      %1543 = vmatprep.subr.bf16.mxu0 0
      %1544 = vmatpush1.bf16.msra.mxu0 %v1109
      %1545 = vmatprep.subr.bf16.mxu0 0
      %1546 = vmatpush1.bf16.msra.mxu0 0
      %1547 = vmatprep.subr.bf16.mxu0 0
      %1548 = vmatpush1.bf16.msra.mxu0 0
      %1549 = vmatprep.subr.bf16.mxu0 0
      %1550 = vmatpush1.bf16.msra.mxu0 0
      %1551 = vmatprep.subr.bf16.mxu0 0
      %1552 = vmatpush1.bf16.msra.mxu0 0
      %1553 = vmatprep.subr.bf16.mxu0 0
      %1554 = vmatpush1.bf16.msra.mxu0 0
      %1555 = vmatprep.mubr.bf16.mxu0 %v1139
      %1556 = vmatmul.mubr.bf16.gmra.mrb[0].mxu0 %v753
      %v1557 = vpop.f32.mrb[0].mxu0
      %v1558 = vadd.f32 %v1269, %v1557
      %v1559 = vpop.f32.mrb[0].mxu0
      %v1560 = vpop.f32.mrb[0].mxu0
      %v1561 = vadd.f32 %v1272, %v1560
      %v1562 = vpop.f32.mrb[0].mxu0
      %1563 = vmatprep.mubr.bf16.mxu0 %v1142
      %1564 = vmatmul.mubr.bf16.gmra.mrb[0].mxu0 %v757
      %v1565 = vpop.f32.mrb[0].mxu0
      %v1566 = vadd.f32 %v1277, %v1565
      %v1567 = vpop.f32.mrb[0].mxu0
      %v1568 = vpop.f32.mrb[0].mxu0
      %v1569 = vadd.f32 %v1280, %v1568
      %v1570 = vpop.f32.mrb[0].mxu0
      %1571 = vmatprep.mubr.bf16.mxu0 %v1145
      %1572 = vmatmul.mubr.bf16.gmra.mrb[0].mxu0 %v761
      %v1573 = vpop.f32.mrb[0].mxu0
      %v1574 = vadd.f32 %v1285, %v1573
      %v1575 = vpop.f32.mrb[0].mxu0
      %v1576 = vpop.f32.mrb[0].mxu0
      %v1577 = vadd.f32 %v1288, %v1576
      %v1578 = vpop.f32.mrb[0].mxu0
      %1579 = vmatprep.mubr.bf16.mxu0 %v1148
      %1580 = vmatmul.mubr.bf16.gmra.mrb[0].mxu0 %v765
      %v1581 = vpop.f32.mrb[0].mxu0
      %v1582 = vadd.f32 %v1293, %v1581
      %v1583 = vpop.f32.mrb[0].mxu0
      %v1584 = vpop.f32.mrb[0].mxu0
      %v1585 = vadd.f32 %v1296, %v1584
      %v1586 = vpop.f32.mrb[0].mxu0
      %1587 = vmatprep.mubr.bf16.mxu0 %v1151
      %1588 = vmatmul.mubr.bf16.gmra.mrb[0].mxu0 %v769
      %v1589 = vpop.f32.mrb[0].mxu0
      %v1590 = vadd.f32 %v1301, %v1589
      %v1591 = vpop.f32.mrb[0].mxu0
      %v1592 = vpop.f32.mrb[0].mxu0
      %v1593 = vadd.f32 %v1304, %v1592
      %v1594 = vpop.f32.mrb[0].mxu0
      %1595 = vmatprep.mubr.bf16.mxu0 %v1154
      %1596 = vmatmul.mubr.bf16.gmra.mrb[0].mxu0 %v773
      %v1597 = vpop.f32.mrb[0].mxu0
      %v1598 = vadd.f32 %v1309, %v1597
      %v1599 = vpop.f32.mrb[0].mxu0
      %v1600 = vpop.f32.mrb[0].mxu0
      %v1601 = vadd.f32 %v1312, %v1600
      %v1602 = vpop.f32.mrb[0].mxu0
      %1603 = vmatprep.mubr.bf16.mxu0 %v1157
      %1604 = vmatmul.mubr.bf16.gmra.mrb[0].mxu0 %v777
      %v1605 = vpop.f32.mrb[0].mxu0
      %v1606 = vadd.f32 %v1317, %v1605
      %v1607 = vpop.f32.mrb[0].mxu0
      %v1608 = vpop.f32.mrb[0].mxu0
      %v1609 = vadd.f32 %v1320, %v1608
      %v1610 = vpop.f32.mrb[0].mxu0
      %1611 = vmatprep.mubr.bf16.mxu0 %v1160
      %1612 = vmatmul.mubr.bf16.gmra.mrb[0].mxu0 %v781
      %v1613 = vpop.f32.mrb[0].mxu0
      %v1614 = vadd.f32 %v1325, %v1613
      %v1615 = vpop.f32.mrb[0].mxu0
      %v1616 = vpop.f32.mrb[0].mxu0
      %v1617 = vadd.f32 %v1328, %v1616
      %v1618 = vpop.f32.mrb[0].mxu0
      %1619 = vmatprep.mubr.bf16.mxu0 %v1163
      %1620 = vmatmul.mubr.bf16.gmra.mrb[0].mxu0 %v785
      %v1621 = vpop.f32.mrb[0].mxu0
      %v1622 = vadd.f32 %v1333, %v1621
      %v1623 = vpop.f32.mrb[0].mxu0
      %v1624 = vpop.f32.mrb[0].mxu0
      %v1625 = vadd.f32 %v1336, %v1624
      %v1626 = vpop.f32.mrb[0].mxu0
      %1627 = vmatprep.mubr.bf16.mxu0 %v1166
      %1628 = vmatmul.mubr.bf16.gmra.mrb[0].mxu0 %v789
      %v1629 = vpop.f32.mrb[0].mxu0
      %v1630 = vadd.f32 %v1341, %v1629
      %v1631 = vpop.f32.mrb[0].mxu0
      %v1632 = vpop.f32.mrb[0].mxu0
      %v1633 = vadd.f32 %v1344, %v1632
      %v1634 = vpop.f32.mrb[0].mxu0
      %1635 = vmatprep.mubr.bf16.mxu0 %v1169
      %1636 = vmatmul.mubr.bf16.gmra.mrb[0].mxu0 %v793
      %v1637 = vpop.f32.mrb[0].mxu0
      %v1638 = vadd.f32 %v1349, %v1637
      %v1639 = vpop.f32.mrb[0].mxu0
      %v1640 = vpop.f32.mrb[0].mxu0
      %v1641 = vadd.f32 %v1352, %v1640
      %v1642 = vpop.f32.mrb[0].mxu0
      %1643 = vmatprep.mubr.bf16.mxu0 %v1172
      %1644 = vmatmul.mubr.bf16.gmra.mrb[0].mxu0 %v797
      %v1645 = vpop.f32.mrb[0].mxu0
      %v1646 = vadd.f32 %v1357, %v1645
      %v1647 = vpop.f32.mrb[0].mxu0
      %v1648 = vpop.f32.mrb[0].mxu0
      %v1649 = vadd.f32 %v1360, %v1648
      %v1650 = vpop.f32.mrb[0].mxu0
      %1651 = vmatprep.mubr.bf16.mxu0 %v1175
      %1652 = vmatmul.mubr.bf16.gmra.mrb[0].mxu0 %v801
      %v1653 = vpop.f32.mrb[0].mxu0
      %v1654 = vadd.f32 %v1365, %v1653
      %v1655 = vpop.f32.mrb[0].mxu0
      %v1656 = vpop.f32.mrb[0].mxu0
      %v1657 = vadd.f32 %v1368, %v1656
      %v1658 = vpop.f32.mrb[0].mxu0
      %1659 = vmatprep.mubr.bf16.mxu0 %v1178
      %1660 = vmatmul.mubr.bf16.gmra.mrb[0].mxu0 %v805
      %v1661 = vpop.f32.mrb[0].mxu0
      %v1662 = vadd.f32 %v1373, %v1661
      %v1663 = vpop.f32.mrb[0].mxu0
      %v1664 = vpop.f32.mrb[0].mxu0
      %v1665 = vadd.f32 %v1376, %v1664
      %v1666 = vpop.f32.mrb[0].mxu0
      %1667 = vmatprep.mubr.bf16.mxu0 %v1181
      %1668 = vmatmul.mubr.bf16.gmra.mrb[0].mxu0 %v809
      %v1669 = vpop.f32.mrb[0].mxu0
      %v1670 = vadd.f32 %v1381, %v1669
      %v1671 = vpop.f32.mrb[0].mxu0
      %v1672 = vpop.f32.mrb[0].mxu0
      %v1673 = vadd.f32 %v1384, %v1672
      %v1674 = vpop.f32.mrb[0].mxu0
      %1675 = vmatprep.mubr.bf16.mxu0 %v1184
      %1676 = vmatmul.mubr.bf16.gmra.mrb[0].mxu0 %v813
      %v1677 = vpop.f32.mrb[0].mxu0
      %v1678 = vadd.f32 %v1389, %v1677
      %v1679 = vpop.f32.mrb[0].mxu0
      %v1680 = vpop.f32.mrb[0].mxu0
      %v1681 = vadd.f32 %v1392, %v1680
      %v1682 = vpop.f32.mrb[0].mxu0
      %1683 = vmatprep.mubr.bf16.mxu0 %v1187
      %1684 = vmatmul.mubr.bf16.gmra.mrb[0].mxu0 %v817
      %v1685 = vpop.f32.mrb[0].mxu0
      %v1686 = vadd.f32 %v1397, %v1685
      %v1687 = vpop.f32.mrb[0].mxu0
      %v1688 = vpop.f32.mrb[0].mxu0
      %v1689 = vadd.f32 %v1400, %v1688
      %v1690 = vpop.f32.mrb[0].mxu0
      %1691 = vmatprep.mubr.bf16.mxu0 %v1190
      %1692 = vmatmul.mubr.bf16.gmra.mrb[0].mxu0 %v821
      %v1693 = vpop.f32.mrb[0].mxu0
      %v1694 = vadd.f32 %v1405, %v1693
      %v1695 = vpop.f32.mrb[0].mxu0
      %v1696 = vpop.f32.mrb[0].mxu0
      %v1697 = vadd.f32 %v1408, %v1696
      %v1698 = vpop.f32.mrb[0].mxu0
      %1699 = vmatprep.mubr.bf16.mxu0 %v1193
      %1700 = vmatmul.mubr.bf16.gmra.mrb[0].mxu0 %v825
      %v1701 = vpop.f32.mrb[0].mxu0
      %v1702 = vadd.f32 %v1413, %v1701
      %v1703 = vpop.f32.mrb[0].mxu0
      %v1704 = vpop.f32.mrb[0].mxu0
      %v1705 = vadd.f32 %v1416, %v1704
      %v1706 = vpop.f32.mrb[0].mxu0
      %1707 = vmatprep.mubr.bf16.mxu0 %v1196
      %1708 = vmatmul.mubr.bf16.gmra.mrb[0].mxu0 %v829
      %v1709 = vpop.f32.mrb[0].mxu0
      %v1710 = vadd.f32 %v1421, %v1709
      %v1711 = vpop.f32.mrb[0].mxu0
      %v1712 = vpop.f32.mrb[0].mxu0
      %v1713 = vadd.f32 %v1424, %v1712
      %v1714 = vpop.f32.mrb[0].mxu0
      %1715 = vmatprep.mubr.bf16.mxu0 %v1199
      %1716 = vmatmul.mubr.bf16.gmra.mrb[0].mxu0 %v833
      %v1717 = vpop.f32.mrb[0].mxu0
      %v1718 = vadd.f32 %v1429, %v1717
      %v1719 = vpop.f32.mrb[0].mxu0
      %v1720 = vpop.f32.mrb[0].mxu0
      %v1721 = vadd.f32 %v1432, %v1720
      %v1722 = vpop.f32.mrb[0].mxu0
      %1723 = vmatprep.mubr.bf16.mxu0 %v1202
      %1724 = vmatmul.mubr.bf16.gmra.mrb[0].mxu0 %v837
      %v1725 = vpop.f32.mrb[0].mxu0
      %v1726 = vadd.f32 %v1437, %v1725
      %v1727 = vpop.f32.mrb[0].mxu0
      %v1728 = vpop.f32.mrb[0].mxu0
      %v1729 = vadd.f32 %v1440, %v1728
      %v1730 = vpop.f32.mrb[0].mxu0
      %1731 = vmatprep.mubr.bf16.mxu0 %v1205
      %1732 = vmatmul.mubr.bf16.gmra.mrb[0].mxu0 %v841
      %v1733 = vpop.f32.mrb[0].mxu0
      %v1734 = vadd.f32 %v1445, %v1733
      %v1735 = vpop.f32.mrb[0].mxu0
      %v1736 = vpop.f32.mrb[0].mxu0
      %v1737 = vadd.f32 %v1448, %v1736
      %v1738 = vpop.f32.mrb[0].mxu0
      %1739 = vmatprep.mubr.bf16.mxu0 %v1208
      %1740 = vmatmul.mubr.bf16.gmra.mrb[0].mxu0 %v845
      %v1741 = vpop.f32.mrb[0].mxu0
      %v1742 = vadd.f32 %v1453, %v1741
      %v1743 = vpop.f32.mrb[0].mxu0
      %v1744 = vpop.f32.mrb[0].mxu0
      %v1745 = vadd.f32 %v1456, %v1744
      %v1746 = vpop.f32.mrb[0].mxu0
      %1747 = vmatprep.mubr.bf16.mxu0 %v1211
      %1748 = vmatmul.mubr.bf16.gmra.mrb[0].mxu0 %v849
      %v1749 = vpop.f32.mrb[0].mxu0
      %v1750 = vadd.f32 %v1461, %v1749
      %v1751 = vpop.f32.mrb[0].mxu0
      %v1752 = vpop.f32.mrb[0].mxu0
      %v1753 = vadd.f32 %v1464, %v1752
      %v1754 = vpop.f32.mrb[0].mxu0
      %1755 = vmatprep.mubr.bf16.mxu0 %v1214
      %1756 = vmatmul.mubr.bf16.gmra.mrb[0].mxu0 %v853
      %v1757 = vpop.f32.mrb[0].mxu0
      %v1758 = vadd.f32 %v1469, %v1757
      %v1759 = vpop.f32.mrb[0].mxu0
      %v1760 = vpop.f32.mrb[0].mxu0
      %v1761 = vadd.f32 %v1472, %v1760
      %v1762 = vpop.f32.mrb[0].mxu0
      %1763 = vmatprep.mubr.bf16.mxu0 %v1217
      %1764 = vmatmul.mubr.bf16.gmra.mrb[0].mxu0 %v857
      %v1765 = vpop.f32.mrb[0].mxu0
      %v1766 = vadd.f32 %v1477, %v1765
      %v1767 = vpop.f32.mrb[0].mxu0
      %v1768 = vpop.f32.mrb[0].mxu0
      %v1769 = vadd.f32 %v1480, %v1768
      %v1770 = vpop.f32.mrb[0].mxu0
      %1771 = vmatprep.mubr.bf16.mxu0 %v1220
      %1772 = vmatmul.mubr.bf16.gmra.mrb[0].mxu0 %v861
      %v1773 = vpop.f32.mrb[0].mxu0
      %v1774 = vadd.f32 %v1485, %v1773
      %v1775 = vpop.f32.mrb[0].mxu0
      %v1776 = vpop.f32.mrb[0].mxu0
      %v1777 = vadd.f32 %v1488, %v1776
      %v1778 = vpop.f32.mrb[0].mxu0
      %1779 = vmatprep.mubr.bf16.mxu0 %v1223
      %1780 = vmatmul.mubr.bf16.gmra.mrb[0].mxu0 %v865
      %v1781 = vpop.f32.mrb[0].mxu0
      %v1782 = vadd.f32 %v1493, %v1781
      %v1783 = vpop.f32.mrb[0].mxu0
      %v1784 = vpop.f32.mrb[0].mxu0
      %v1785 = vadd.f32 %v1496, %v1784
      %v1786 = vpop.f32.mrb[0].mxu0
      %1787 = vmatprep.mubr.bf16.mxu0 %v1226
      %1788 = vmatmul.mubr.bf16.gmra.mrb[0].mxu0 %v869
      %v1789 = vpop.f32.mrb[0].mxu0
      %v1790 = vadd.f32 %v1501, %v1789
      %v1791 = vpop.f32.mrb[0].mxu0
      %v1792 = vpop.f32.mrb[0].mxu0
      %v1793 = vadd.f32 %v1504, %v1792
      %v1794 = vpop.f32.mrb[0].mxu0
      %1795 = vmatprep.mubr.bf16.mxu0 %v1229
      %1796 = vmatmul.mubr.bf16.gmra.mrb[0].mxu0 %v873
      %v1797 = vpop.f32.mrb[0].mxu0
      %v1798 = vadd.f32 %v1509, %v1797
      %v1799 = vpop.f32.mrb[0].mxu0
      %v1800 = vpop.f32.mrb[0].mxu0
      %v1801 = vadd.f32 %v1512, %v1800
      %v1802 = vpop.f32.mrb[0].mxu0
      %1803 = vmatprep.mubr.bf16.mxu0 %v1232
      %1804 = vmatmul.mubr.bf16.gmra.mrb[0].mxu0 %v877
      %v1805 = vpop.f32.mrb[0].mxu0
      %v1806 = vadd.f32 %v1517, %v1805
      %v1807 = vpop.f32.mrb[0].mxu0
      %v1808 = vpop.f32.mrb[0].mxu0
      %v1809 = vadd.f32 %v1520, %v1808
      %v1810 = vpop.f32.mrb[0].mxu0
      %1811 = vdwg.mxu0
      %vm1812 = vcmask 130048
      %1813 = vst.msk [vmem:[%s175] sm:$0xff] %vm1812, %v1558
      %1814 = vst.msk [vmem:[%s175 + $0x8] sm:$0xff] %vm1812, %v1561
      %1815 = vst.msk [vmem:[%s175 + $0x10] sm:$0xff] %vm1812, %v1566
      %1816 = vst.msk [vmem:[%s175 + $0x18] sm:$0xff] %vm1812, %v1569
      %1817 = vst.msk [vmem:[%s175 + $0x20] sm:$0xff] %vm1812, %v1574
      %1818 = vst.msk [vmem:[%s175 + $0x28] sm:$0xff] %vm1812, %v1577
      %1819 = vst.msk [vmem:[%s175 + $0x30] sm:$0xff] %vm1812, %v1582
      %1820 = vst.msk [vmem:[%s175 + $0x38] sm:$0xff] %vm1812, %v1585
      %1821 = vst.msk [vmem:[%s175 + $0x40] sm:$0xff] %vm1812, %v1590
      %1822 = vst.msk [vmem:[%s175 + $0x48] sm:$0xff] %vm1812, %v1593
      %1823 = vst.msk [vmem:[%s175 + $0x50] sm:$0xff] %vm1812, %v1598
      %1824 = vst.msk [vmem:[%s175 + $0x58] sm:$0xff] %vm1812, %v1601
      %1825 = vst.msk [vmem:[%s175 + $0x60] sm:$0xff] %vm1812, %v1606
      %1826 = vst.msk [vmem:[%s175 + $0x68] sm:$0xff] %vm1812, %v1609
      %1827 = vst.msk [vmem:[%s175 + $0x70] sm:$0xff] %vm1812, %v1614
      %1828 = vst.msk [vmem:[%s175 + $0x78] sm:$0xff] %vm1812, %v1617
      %1829 = vst.msk [vmem:[%s175 + $0x80] sm:$0xff] %vm1812, %v1622
      %1830 = vst.msk [vmem:[%s175 + $0x88] sm:$0xff] %vm1812, %v1625
      %1831 = vst.msk [vmem:[%s175 + $0x90] sm:$0xff] %vm1812, %v1630
      %1832 = vst.msk [vmem:[%s175 + $0x98] sm:$0xff] %vm1812, %v1633
      %1833 = vst.msk [vmem:[%s175 + $0xa0] sm:$0xff] %vm1812, %v1638
      %1834 = vst.msk [vmem:[%s175 + $0xa8] sm:$0xff] %vm1812, %v1641
      %1835 = vst.msk [vmem:[%s175 + $0xb0] sm:$0xff] %vm1812, %v1646
      %1836 = vst.msk [vmem:[%s175 + $0xb8] sm:$0xff] %vm1812, %v1649
      %1837 = vst.msk [vmem:[%s175 + $0xc0] sm:$0xff] %vm1812, %v1654
      %1838 = vst.msk [vmem:[%s175 + $0xc8] sm:$0xff] %vm1812, %v1657
      %1839 = vst.msk [vmem:[%s175 + $0xd0] sm:$0xff] %vm1812, %v1662
      %1840 = vst.msk [vmem:[%s175 + $0xd8] sm:$0xff] %vm1812, %v1665
      %1841 = vst.msk [vmem:[%s175 + $0xe0] sm:$0xff] %vm1812, %v1670
      %1842 = vst.msk [vmem:[%s175 + $0xe8] sm:$0xff] %vm1812, %v1673
      %1843 = vst.msk [vmem:[%s175 + $0xf0] sm:$0xff] %vm1812, %v1678
      %1844 = vst.msk [vmem:[%s175 + $0xf8] sm:$0xff] %vm1812, %v1681
      %1845 = vst.msk [vmem:[%s175 + $0x100] sm:$0xff] %vm1812, %v1686
      %1846 = vst.msk [vmem:[%s175 + $0x108] sm:$0xff] %vm1812, %v1689
      %1847 = vst.msk [vmem:[%s175 + $0x110] sm:$0xff] %vm1812, %v1694
      %1848 = vst.msk [vmem:[%s175 + $0x118] sm:$0xff] %vm1812, %v1697
      %1849 = vst.msk [vmem:[%s175 + $0x120] sm:$0xff] %vm1812, %v1702
      %1850 = vst.msk [vmem:[%s175 + $0x128] sm:$0xff] %vm1812, %v1705
      %1851 = vst.msk [vmem:[%s175 + $0x130] sm:$0xff] %vm1812, %v1710
      %1852 = vst.msk [vmem:[%s175 + $0x138] sm:$0xff] %vm1812, %v1713
      %1853 = vst.msk [vmem:[%s175 + $0x140] sm:$0xff] %vm1812, %v1718
      %1854 = vst.msk [vmem:[%s175 + $0x148] sm:$0xff] %vm1812, %v1721
      %1855 = vst.msk [vmem:[%s175 + $0x150] sm:$0xff] %vm1812, %v1726
      %1856 = vst.msk [vmem:[%s175 + $0x158] sm:$0xff] %vm1812, %v1729
      %1857 = vst.msk [vmem:[%s175 + $0x160] sm:$0xff] %vm1812, %v1734
      %1858 = vst.msk [vmem:[%s175 + $0x168] sm:$0xff] %vm1812, %v1737
      %1859 = vst.msk [vmem:[%s175 + $0x170] sm:$0xff] %vm1812, %v1742
      %1860 = vst.msk [vmem:[%s175 + $0x178] sm:$0xff] %vm1812, %v1745
      %1861 = vst.msk [vmem:[%s175 + $0x180] sm:$0xff] %vm1812, %v1750
      %1862 = vst.msk [vmem:[%s175 + $0x188] sm:$0xff] %vm1812, %v1753
      %1863 = vst.msk [vmem:[%s175 + $0x190] sm:$0xff] %vm1812, %v1758
      %1864 = vst.msk [vmem:[%s175 + $0x198] sm:$0xff] %vm1812, %v1761
      %1865 = vst.msk [vmem:[%s175 + $0x1a0] sm:$0xff] %vm1812, %v1766
      %1866 = vst.msk [vmem:[%s175 + $0x1a8] sm:$0xff] %vm1812, %v1769
      %1867 = vst.msk [vmem:[%s175 + $0x1b0] sm:$0xff] %vm1812, %v1774
      %1868 = vst.msk [vmem:[%s175 + $0x1b8] sm:$0xff] %vm1812, %v1777
      %1869 = vst.msk [vmem:[%s175 + $0x1c0] sm:$0xff] %vm1812, %v1782
      %1870 = vst.msk [vmem:[%s175 + $0x1c8] sm:$0xff] %vm1812, %v1785
      %1871 = vst.msk [vmem:[%s175 + $0x1d0] sm:$0xff] %vm1812, %v1790
      %1872 = vst.msk [vmem:[%s175 + $0x1d8] sm:$0xff] %vm1812, %v1793
      %1873 = vst.msk [vmem:[%s175 + $0x1e0] sm:$0xff] %vm1812, %v1798
      %1874 = vst.msk [vmem:[%s175 + $0x1e8] sm:$0xff] %vm1812, %v1801
      %1875 = vst.msk [vmem:[%s175 + $0x1f0] sm:$0xff] %vm1812, %v1806
      %1876 = vst.msk [vmem:[%s175 + $0x1f8] sm:$0xff] %vm1812, %v1809
      %s1877 = smul.u32 64, %s14
      %p1878 = scmp.lt.s32.totalorder %s1877, 1407
      %s1879 = scalar_select %p1878, %s1877, 1407
      %s1880 = smul.addr %s1879, 8
      %s1881 = scalar_lea.vmem %s3, %s1880
      // Predicated region
      $region33: #{forward.21} parent=31 // pred_check
        %p1882 = pneg %p100
      $region34: #{forward.21} parent=31 // pred_check_branch
        %1884 = sbr.rel (%p1882) target = $region36
      $region35: #{forward.21} parent=31 // pred_region
        %s1885 = smul.u32 64, %s14
      $region36: #{forward.21} parent=31 // pred_fallthru
        _
    $region32: #{forward.21} parent=5 // pred_fallthru
      _
    %p1886 = scmp.le.s32.totalorder 2, %s9
    // Predicated region
    $region37: #{forward.21} parent=5 // pred_check
      %p1887 = pneg %p1886
    $region38: #{forward.21} parent=5 // pred_check_branch
      %1889 = sbr.rel (%p1887) target = $region40
    $region39: #{forward.21} parent=5 // pred_region
      %s1890 = ssub.s32 %s9, 2
      // Predicated region
      $region41: #{forward.21} parent=39 // pred_check
        %p1891 = pneg %p106
      $region42: #{forward.21} parent=39 // pred_check_branch
        %1893 = sbr.rel (%p1891) target = $region44
      $region43: #{forward.21} parent=39 // pred_region
        %s1894 = smul.u32 64, %s15
        %p1895 = scmp.lt.s32.totalorder %s1894, 1407
        %s1896 = scalar_select %p1895, %s1894, 1407
        %s1897 = smul.addr %s1896, 8
        %s1898 = scalar_lea.vmem %s3, %s1897
      $region44: #{forward.21} parent=39 // pred_fallthru
        _
    $region40: #{forward.21} parent=5 // pred_fallthru
      _
  $region6: #{forward.21} parent=0 // loop_footer
    %s13 = sadd.s32 1, %s9
  $region7: #{forward.21} parent=0 // loop_footer_branch
    %8 = sbr.rel target = $region3
  $region8: #{forward.21} parent=0 // loop_exit
    _

// kernel: forward.23
$region0: #{forward.23}
  #allocation0 [shape = 'u32[]', space=smem, size = 0x4, offset = 0x4, fixed_abs, tag = 'smem constant byte address 0x4 - core index']
  #allocation1 [shape = 'u32[144,128]{1,0:T(1,128)}', space=vmem, size = 0x12000, scoped, tag = 'internal scratch']
  %s0 = inlined_call_operand.vmem [shape: bf16[5120,48], index: 0, kind: input, shape index: {}]
  %s1 = inlined_call_operand.vmem [shape: bf16[48,32], index: 1, kind: input, shape index: {}]
  %s2 = inlined_call_operand.vmem [shape: f32[1,32], index: 2, kind: input, shape index: {}]
  %s3 = inlined_call_operand.vmem [shape: f32[5120,32], index: 3, kind: output, shape index: {}]
  %s4 = sld [smem:[#allocation0]]
  $region45: #{forward.23} parent=0
    _
  %s6 = ssub.s32 1, %s4
  %s7 = scalar_select 0, %s6, %s4
  loop: start=0, step=1, limit=12
  $region2: #{forward.23} parent=0 // loop_pre_header
    _
  $region3: #{forward.23} parent=0 // loop_header
    %s9 = sphi 0, %s13
    %p10 = scmp.ge.s32.totalorder %s9, 12
    %s19 = sphi 0, %s21
    %s22 = sphi 0, %s19
    %s23 = sphi 0, %s22
    %s39 = sphi 0, %s23
    %s43 = sphi 0, %s43
    %s45 = sphi 0, %s43
    %s46 = sphi 0, %s45
    %s60 = sphi 0, %s46
    %s64 = sphi 0, %s64
    %s66 = sphi 0, %s64
    %s67 = sphi 0, %s66
    %s81 = sphi 0, %s67
    %s87 = sphi 0, %s89
    %s90 = sphi 0, %s87
    %s91 = sphi 0, %s90
    %s107 = sphi 0, %s91
  $region4: #{forward.23} parent=0 // loop_header_branch
    %12 = sbr.rel (%p10) target = $region8
  $region5: #{forward.23} parent=0 // loop_body
    %s14 = ssub.s32 %s9, 1
    %s15 = ssub.s32 %s9, 2
    %s16 = sadd.s32 %s9, 1
    %s17 = ssub.s32 %s9, %s16
    %p18 = scmp.eq.s32.totalorder %s17, 0
    %s20 = sadd.s32 %s19, 1
    %s21 = scalar_select %p18, %s19, %s20
    %p24 = pneg %p18
    %p25 = scmp.eq.s32.totalorder %s9, 9
    %p26 = por %p24, %p25
    %p27 = scmp.ne.s32.totalorder %s19, %s22
    %p28 = scmp.eq.s32.totalorder %s9, 0
    %p29 = por %p27, %p28
    %p30 = scmp.ne.s32.totalorder %s19, %s22
    %p31 = scmp.eq.s32.totalorder %s14, 9
    %p32 = por %p30, %p31
    %p33 = scmp.ne.s32.totalorder %s22, %s23
    %p34 = scmp.eq.s32.totalorder %s14, 0
    %p35 = por %p33, %p34
    %p36 = scmp.ne.s32.totalorder %s22, %s23
    %p37 = scmp.eq.s32.totalorder %s15, 9
    %p38 = por %p36, %p37
    %p40 = scmp.ne.s32.totalorder %s23, %s39
    %p41 = scmp.eq.s32.totalorder %s15, 0
    %p42 = por %p40, %p41
    %s44 = sadd.s32 %s43, 1
    %p47 = scmp.eq.s32.totalorder %s9, 9
    %p48 = scmp.ne.s32.totalorder %s43, %s45
    %p49 = scmp.eq.s32.totalorder %s9, 0
    %p50 = por %p48, %p49
    %p51 = scmp.ne.s32.totalorder %s43, %s45
    %p52 = scmp.eq.s32.totalorder %s14, 9
    %p53 = por %p51, %p52
    %p54 = scmp.ne.s32.totalorder %s45, %s46
    %p55 = scmp.eq.s32.totalorder %s14, 0
    %p56 = por %p54, %p55
    %p57 = scmp.ne.s32.totalorder %s45, %s46
    %p58 = scmp.eq.s32.totalorder %s15, 9
    %p59 = por %p57, %p58
    %p61 = scmp.ne.s32.totalorder %s46, %s60
    %p62 = scmp.eq.s32.totalorder %s15, 0
    %p63 = por %p61, %p62
    %s65 = sadd.s32 %s64, 1
    %p68 = scmp.eq.s32.totalorder %s9, 9
    %p69 = scmp.ne.s32.totalorder %s64, %s66
    %p70 = scmp.eq.s32.totalorder %s9, 0
    %p71 = por %p69, %p70
    %p72 = scmp.ne.s32.totalorder %s64, %s66
    %p73 = scmp.eq.s32.totalorder %s14, 9
    %p74 = por %p72, %p73
    %p75 = scmp.ne.s32.totalorder %s66, %s67
    %p76 = scmp.eq.s32.totalorder %s14, 0
    %p77 = por %p75, %p76
    %p78 = scmp.ne.s32.totalorder %s66, %s67
    %p79 = scmp.eq.s32.totalorder %s15, 9
    %p80 = por %p78, %p79
    %p82 = scmp.ne.s32.totalorder %s67, %s81
    %p83 = scmp.eq.s32.totalorder %s15, 0
    %p84 = por %p82, %p83
    %s85 = ssub.s32 %s9, %s16
    %p86 = scmp.eq.s32.totalorder %s85, 0
    %s88 = sadd.s32 %s87, 1
    %s89 = scalar_select %p86, %s87, %s88
    %p92 = pneg %p86
    %p93 = scmp.eq.s32.totalorder %s9, 9
    %p94 = por %p92, %p93
    %p95 = scmp.ne.s32.totalorder %s87, %s90
    %p96 = scmp.eq.s32.totalorder %s9, 0
    %p97 = por %p95, %p96
    %p98 = scmp.ne.s32.totalorder %s87, %s90
    %p99 = scmp.eq.s32.totalorder %s14, 9
    %p100 = por %p98, %p99
    %p101 = scmp.ne.s32.totalorder %s90, %s91
    %p102 = scmp.eq.s32.totalorder %s14, 0
    %p103 = por %p101, %p102
    %p104 = scmp.ne.s32.totalorder %s90, %s91
    %p105 = scmp.eq.s32.totalorder %s15, 9
    %p106 = por %p104, %p105
    %p108 = scmp.ne.s32.totalorder %s91, %s107
    %p109 = scmp.eq.s32.totalorder %s15, 0
    %p110 = por %p108, %p109
    %p111 = scmp.le.s32.totalorder 1, %s9
    %p112 = scmp.lt.s32.totalorder %s9, 11
    %p113 = pnand %p111, %p112
    %p114 = pneg %p113
    // Predicated region
    $region9: #{forward.23} parent=5 // pred_check
      _
    $region10: #{forward.23} parent=5 // pred_check_branch
      %116 = sbr.rel (%p113) target = $region12
    $region11: #{forward.23} parent=5 // pred_region
      %s117 = ssub.s32 %s9, 1
      // Predicated region
      $region13: #{forward.23} parent=11 // pred_check
        %p118 = pneg %p56
      $region14: #{forward.23} parent=11 // pred_check_branch
        %120 = sbr.rel (%p118) target = $region16
      $region15: #{forward.23} parent=11 // pred_region
        _
      $region16: #{forward.23} parent=11 // pred_fallthru
        _
      // Predicated region
      $region17: #{forward.23} parent=11 // pred_check
        %p121 = pneg %p77
      $region18: #{forward.23} parent=11 // pred_check_branch
        %123 = sbr.rel (%p121) target = $region20
      $region19: #{forward.23} parent=11 // pred_region
        _
      $region20: #{forward.23} parent=11 // pred_fallthru
        _
    $region12: #{forward.23} parent=5 // pred_fallthru
      _
    %p124 = scmp.lt.s32.totalorder %s9, 10
    // Predicated region
    $region21: #{forward.23} parent=5 // pred_check
      %p125 = pneg %p124
    $region22: #{forward.23} parent=5 // pred_check_branch
      %127 = sbr.rel (%p125) target = $region24
    $region23: #{forward.23} parent=5 // pred_region
      // Predicated region
      $region25: #{forward.23} parent=23 // pred_check
        %p128 = pneg %p29
      $region26: #{forward.23} parent=23 // pred_check_branch
        %130 = sbr.rel (%p128) target = $region28
      $region27: #{forward.23} parent=23 // pred_region
        %s131 = smul.u32 64, %s9
        %p132 = scmp.lt.s32.totalorder %s131, 639
        %s133 = scalar_select %p132, %s131, 639
        %s134 = smul.addr %s133, 4
        %s135 = scalar_lea.vmem %s0, %s134
        %s136 = smul.u32 64, %s9
      $region28: #{forward.23} parent=23 // pred_fallthru
        _
    $region24: #{forward.23} parent=5 // pred_fallthru
      _
    %p137 = scmp.le.s32.totalorder 1, %s9
    %p138 = scmp.lt.s32.totalorder %s9, 11
    %p139 = pnand %p137, %p138
    %p140 = pneg %p139
    // Predicated region
    $region29: #{forward.23} parent=5 // pred_check
      _
    $region30: #{forward.23} parent=5 // pred_check_branch
      %142 = sbr.rel (%p139) target = $region32
    $region31: #{forward.23} parent=5 // pred_region
      %s143 = ssub.s32 %s9, 1
      %s144 = smul.u32 64, %s14
      %p145 = scmp.lt.s32.totalorder %s144, 639
      %s146 = scalar_select %p145, %s144, 639
      %s147 = smul.addr %s146, 4
      %s148 = scalar_lea.vmem %s0, %s147
      %p149 = pneg %p35
      %p150 = pneg %p32
      %p151 = pneg %p56
      %p152 = pneg %p53
      %p153 = pneg %p77
      %p154 = pneg %p74
      %p155 = pneg %p103
      %p156 = pneg %p100
      %s157 = smul.u32 64, %s14
      %p158 = scmp.lt.s32.totalorder %s157, 639
      %s159 = scalar_select %p158, %s157, 639
      %s160 = smul.addr %s159, 8
      %s161 = scalar_lea.vmem %s3, %s160
      %s162 = smul.u32 64, %s14
      %p163 = scmp.lt.s32.totalorder %s162, 639
      %s164 = scalar_select %p163, %s162, 639
      %s165 = smul.addr %s164, 4
      %s166 = scalar_lea.vmem %s0, %s165
      %s167 = smul.u32 64, %s14
      %s168 = smul.u32 64, %s14
      %p169 = scmp.lt.s32.totalorder %s168, 639
      %s170 = scalar_select %p169, %s168, 639
      %s171 = smul.addr %s170, 8
      %s172 = scalar_lea.vmem %s3, %s171
      %s173 = smul.u32 64, %s14
      %v175 = vld [vmem:[%s166] sm:$0xf]
      %v176 = vld [vmem:[%s166 + $0x4] sm:$0xf]
      %v177 = vld [vmem:[%s166 + $0x8] sm:$0xf]
      %v178 = vld [vmem:[%s166 + $0xc] sm:$0xf]
      %v179 = vld [vmem:[%s166 + $0x10] sm:$0xf]
      %v180 = vld [vmem:[%s166 + $0x14] sm:$0xf]
      %v181 = vld [vmem:[%s166 + $0x18] sm:$0xf]
      %v182 = vld [vmem:[%s166 + $0x1c] sm:$0xf]
      %v183 = vld [vmem:[%s166 + $0x20] sm:$0xf]
      %v184 = vld [vmem:[%s166 + $0x24] sm:$0xf]
      %v185 = vld [vmem:[%s166 + $0x28] sm:$0xf]
      %v186 = vld [vmem:[%s166 + $0x2c] sm:$0xf]
      %v187 = vld [vmem:[%s166 + $0x30] sm:$0xf]
      %v188 = vld [vmem:[%s166 + $0x34] sm:$0xf]
      %v189 = vld [vmem:[%s166 + $0x38] sm:$0xf]
      %v190 = vld [vmem:[%s166 + $0x3c] sm:$0xf]
      %v191 = vld [vmem:[%s166 + $0x40] sm:$0xf]
      %v192 = vld [vmem:[%s166 + $0x44] sm:$0xf]
      %v193 = vld [vmem:[%s166 + $0x48] sm:$0xf]
      %v194 = vld [vmem:[%s166 + $0x4c] sm:$0xf]
      %v195 = vld [vmem:[%s166 + $0x50] sm:$0xf]
      %v196 = vld [vmem:[%s166 + $0x54] sm:$0xf]
      %v197 = vld [vmem:[%s166 + $0x58] sm:$0xf]
      %v198 = vld [vmem:[%s166 + $0x5c] sm:$0xf]
      %v199 = vld [vmem:[%s166 + $0x60] sm:$0xf]
      %v200 = vld [vmem:[%s166 + $0x64] sm:$0xf]
      %v201 = vld [vmem:[%s166 + $0x68] sm:$0xf]
      %v202 = vld [vmem:[%s166 + $0x6c] sm:$0xf]
      %v203 = vld [vmem:[%s166 + $0x70] sm:$0xf]
      %v204 = vld [vmem:[%s166 + $0x74] sm:$0xf]
      %v205 = vld [vmem:[%s166 + $0x78] sm:$0xf]
      %v206 = vld [vmem:[%s166 + $0x7c] sm:$0xf]
      %v207 = vld [vmem:[%s166 + $0x80] sm:$0xf]
      %v208 = vld [vmem:[%s166 + $0x84] sm:$0xf]
      %v209 = vld [vmem:[%s166 + $0x88] sm:$0xf]
      %v210 = vld [vmem:[%s166 + $0x8c] sm:$0xf]
      %v211 = vld [vmem:[%s166 + $0x90] sm:$0xf]
      %v212 = vld [vmem:[%s166 + $0x94] sm:$0xf]
      %v213 = vld [vmem:[%s166 + $0x98] sm:$0xf]
      %v214 = vld [vmem:[%s166 + $0x9c] sm:$0xf]
      %v215 = vld [vmem:[%s166 + $0xa0] sm:$0xf]
      %v216 = vld [vmem:[%s166 + $0xa4] sm:$0xf]
      %v217 = vld [vmem:[%s166 + $0xa8] sm:$0xf]
      %v218 = vld [vmem:[%s166 + $0xac] sm:$0xf]
      %v219 = vld [vmem:[%s166 + $0xb0] sm:$0xf]
      %v220 = vld [vmem:[%s166 + $0xb4] sm:$0xf]
      %v221 = vld [vmem:[%s166 + $0xb8] sm:$0xf]
      %v222 = vld [vmem:[%s166 + $0xbc] sm:$0xf]
      %v223 = vld [vmem:[%s166 + $0xc0] sm:$0xf]
      %v224 = vld [vmem:[%s166 + $0xc4] sm:$0xf]
      %v225 = vld [vmem:[%s166 + $0xc8] sm:$0xf]
      %v226 = vld [vmem:[%s166 + $0xcc] sm:$0xf]
      %v227 = vld [vmem:[%s166 + $0xd0] sm:$0xf]
      %v228 = vld [vmem:[%s166 + $0xd4] sm:$0xf]
      %v229 = vld [vmem:[%s166 + $0xd8] sm:$0xf]
      %v230 = vld [vmem:[%s166 + $0xdc] sm:$0xf]
      %v231 = vld [vmem:[%s166 + $0xe0] sm:$0xf]
      %v232 = vld [vmem:[%s166 + $0xe4] sm:$0xf]
      %v233 = vld [vmem:[%s166 + $0xe8] sm:$0xf]
      %v234 = vld [vmem:[%s166 + $0xec] sm:$0xf]
      %v235 = vld [vmem:[%s166 + $0xf0] sm:$0xf]
      %v236 = vld [vmem:[%s166 + $0xf4] sm:$0xf]
      %v237 = vld [vmem:[%s166 + $0xf8] sm:$0xf]
      %v238 = vld [vmem:[%s166 + $0xfc] sm:$0xf]
      %v239 = vld [vmem:[%s1] sm:$0xf]
      %v240 = vld [vmem:[%s1 + $0x4] sm:$0xf]
      %v241 = vld [vmem:[%s1 + $0x8] sm:$0xf]
      %v242 = vld [vmem:[%s1 + $0xc] sm:$0xf]
      %v243 = vld [vmem:[%s1 + $0x10] sm:$0xf]
      %v244 = vld [vmem:[%s1 + $0x14] sm:$0xf]
      %v245 = vld [vmem:[%s2] sm:$0x1]
      %v247 = vlaneseq
      %v248 = vshrl.u32 %v247, 7
      %v249 = vsub.s32 0, %v248
      %v250 = vrot.slane %v245, %v249
      %v316 = vunpack.c.l.b16 %v175
      %v317 = vunpack.c.l.b16 %v176
      %v318 = vunpack.c.l.b16 %v177
      %v319 = vunpack.c.l.b16 %v178
      %v320 = vunpack.c.l.b16 %v179
      %v321 = vunpack.c.l.b16 %v180
      %v322 = vunpack.c.l.b16 %v181
      %v323 = vunpack.c.l.b16 %v182
      %v324 = vunpack.c.l.b16 %v183
      %v325 = vunpack.c.l.b16 %v184
      %v326 = vunpack.c.l.b16 %v185
      %v327 = vunpack.c.l.b16 %v186
      %v328 = vunpack.c.l.b16 %v187
      %v329 = vunpack.c.l.b16 %v188
      %v330 = vunpack.c.l.b16 %v189
      %v331 = vunpack.c.l.b16 %v190
      %v332 = vunpack.c.l.b16 %v191
      %v333 = vunpack.c.l.b16 %v192
      %v334 = vunpack.c.l.b16 %v193
      %v335 = vunpack.c.l.b16 %v194
      %v336 = vunpack.c.l.b16 %v195
      %v337 = vunpack.c.l.b16 %v196
      %v338 = vunpack.c.l.b16 %v197
      %v339 = vunpack.c.l.b16 %v198
      %v340 = vunpack.c.l.b16 %v199
      %v341 = vunpack.c.l.b16 %v200
      %v342 = vunpack.c.l.b16 %v201
      %v343 = vunpack.c.l.b16 %v202
      %v344 = vunpack.c.l.b16 %v203
      %v345 = vunpack.c.l.b16 %v204
      %v346 = vunpack.c.l.b16 %v205
      %v347 = vunpack.c.l.b16 %v206
      %v348 = vunpack.c.l.b16 %v207
      %v349 = vunpack.c.l.b16 %v208
      %v350 = vunpack.c.l.b16 %v209
      %v351 = vunpack.c.l.b16 %v210
      %v352 = vunpack.c.l.b16 %v211
      %v353 = vunpack.c.l.b16 %v212
      %v354 = vunpack.c.l.b16 %v213
      %v355 = vunpack.c.l.b16 %v214
      %v356 = vunpack.c.l.b16 %v215
      %v357 = vunpack.c.l.b16 %v216
      %v358 = vunpack.c.l.b16 %v217
      %v359 = vunpack.c.l.b16 %v218
      %v360 = vunpack.c.l.b16 %v219
      %v361 = vunpack.c.l.b16 %v220
      %v362 = vunpack.c.l.b16 %v221
      %v363 = vunpack.c.l.b16 %v222
      %v364 = vunpack.c.l.b16 %v223
      %v365 = vunpack.c.l.b16 %v224
      %v366 = vunpack.c.l.b16 %v225
      %v367 = vunpack.c.l.b16 %v226
      %v368 = vunpack.c.l.b16 %v227
      %v369 = vunpack.c.l.b16 %v228
      %v370 = vunpack.c.l.b16 %v229
      %v371 = vunpack.c.l.b16 %v230
      %v372 = vunpack.c.l.b16 %v231
      %v373 = vunpack.c.l.b16 %v232
      %v374 = vunpack.c.l.b16 %v233
      %v375 = vunpack.c.l.b16 %v234
      %v376 = vunpack.c.l.b16 %v235
      %v377 = vunpack.c.l.b16 %v236
      %v378 = vunpack.c.l.b16 %v237
      %v379 = vunpack.c.l.b16 %v238
      %v380 = vpack.c.b16 %v317, %v316
      %v381 = vpack.c.b16 %v319, %v318
      %v382 = vpack.c.b16 %v321, %v320
      %v383 = vpack.c.b16 %v323, %v322
      %v384 = vpack.c.b16 %v325, %v324
      %v385 = vpack.c.b16 %v327, %v326
      %v386 = vpack.c.b16 %v329, %v328
      %v387 = vpack.c.b16 %v331, %v330
      %v388 = vpack.c.b16 %v333, %v332
      %v389 = vpack.c.b16 %v335, %v334
      %v390 = vpack.c.b16 %v337, %v336
      %v391 = vpack.c.b16 %v339, %v338
      %v392 = vpack.c.b16 %v341, %v340
      %v393 = vpack.c.b16 %v343, %v342
      %v394 = vpack.c.b16 %v345, %v344
      %v395 = vpack.c.b16 %v347, %v346
      %v396 = vpack.c.b16 %v349, %v348
      %v397 = vpack.c.b16 %v351, %v350
      %v398 = vpack.c.b16 %v353, %v352
      %v399 = vpack.c.b16 %v355, %v354
      %v400 = vpack.c.b16 %v357, %v356
      %v401 = vpack.c.b16 %v359, %v358
      %v402 = vpack.c.b16 %v361, %v360
      %v403 = vpack.c.b16 %v363, %v362
      %v404 = vpack.c.b16 %v365, %v364
      %v405 = vpack.c.b16 %v367, %v366
      %v406 = vpack.c.b16 %v369, %v368
      %v407 = vpack.c.b16 %v371, %v370
      %v408 = vpack.c.b16 %v373, %v372
      %v409 = vpack.c.b16 %v375, %v374
      %v410 = vpack.c.b16 %v377, %v376
      %v411 = vpack.c.b16 %v379, %v378
      %v418 = vunpack.c.l.b16 %v239
      %v419 = vunpack.c.l.b16 %v240
      %v420 = vunpack.c.l.b16 %v241
      %v421 = vunpack.c.l.b16 %v242
      %v422 = vunpack.c.l.b16 %v243
      %v423 = vunpack.c.l.b16 %v244
      %v424 = vpack.c.b16 %v419, %v418
      %v425 = vpack.c.b16 %v421, %v420
      %v426 = vpack.c.b16 %v423, %v422
      %vm430 = vcmask 392192
      %v432 = vsel %vm430, %v380, 0
      %v435 = vsel %vm430, %v381, 0
      %v438 = vsel %vm430, %v382, 0
      %v441 = vsel %vm430, %v383, 0
      %v444 = vsel %vm430, %v384, 0
      %v447 = vsel %vm430, %v385, 0
      %v450 = vsel %vm430, %v386, 0
      %v453 = vsel %vm430, %v387, 0
      %v456 = vsel %vm430, %v388, 0
      %v459 = vsel %vm430, %v389, 0
      %v462 = vsel %vm430, %v390, 0
      %v465 = vsel %vm430, %v391, 0
      %v468 = vsel %vm430, %v392, 0
      %v471 = vsel %vm430, %v393, 0
      %v474 = vsel %vm430, %v394, 0
      %v477 = vsel %vm430, %v395, 0
      %v480 = vsel %vm430, %v396, 0
      %v483 = vsel %vm430, %v397, 0
      %v486 = vsel %vm430, %v398, 0
      %v489 = vsel %vm430, %v399, 0
      %v492 = vsel %vm430, %v400, 0
      %v495 = vsel %vm430, %v401, 0
      %v498 = vsel %vm430, %v402, 0
      %v501 = vsel %vm430, %v403, 0
      %v504 = vsel %vm430, %v404, 0
      %v507 = vsel %vm430, %v405, 0
      %v510 = vsel %vm430, %v406, 0
      %v513 = vsel %vm430, %v407, 0
      %v516 = vsel %vm430, %v408, 0
      %v519 = vsel %vm430, %v409, 0
      %v522 = vsel %vm430, %v410, 0
      %v525 = vsel %vm430, %v411, 0
      %527 = vmatprep.subr.bf16.mxu0 0
      %528 = vmatpush1.bf16.msra.mxu0 %v424
      %529 = vmatprep.subr.bf16.mxu0 0
      %530 = vmatpush1.bf16.msra.mxu0 %v425
      %531 = vmatprep.subr.bf16.mxu0 0
      %532 = vmatpush1.bf16.msra.mxu0 %v426
      %533 = vmatprep.subr.bf16.mxu0 0
      %534 = vmatpush1.bf16.msra.mxu0 0
      %535 = vmatprep.subr.bf16.mxu0 0
      %536 = vmatpush1.bf16.msra.mxu0 0
      %537 = vmatprep.subr.bf16.mxu0 0
      %538 = vmatpush1.bf16.msra.mxu0 0
      %539 = vmatprep.subr.bf16.mxu0 0
      %540 = vmatpush1.bf16.msra.mxu0 0
      %541 = vmatprep.subr.bf16.mxu0 0
      %542 = vmatpush1.bf16.msra.mxu0 0
      %543 = vmatprep.subr.bf16.mxu0 0
      %544 = vmatpush1.bf16.msra.mxu0 0
      %545 = vmatprep.subr.bf16.mxu0 0
      %546 = vmatpush1.bf16.msra.mxu0 0
      %547 = vmatprep.subr.bf16.mxu0 0
      %548 = vmatpush1.bf16.msra.mxu0 0
      %549 = vmatprep.subr.bf16.mxu0 0
      %550 = vmatpush1.bf16.msra.mxu0 0
      %551 = vmatprep.subr.bf16.mxu0 0
      %552 = vmatpush1.bf16.msra.mxu0 0
      %553 = vmatprep.subr.bf16.mxu0 0
      %554 = vmatpush1.bf16.msra.mxu0 0
      %555 = vmatprep.subr.bf16.mxu0 0
      %556 = vmatpush1.bf16.msra.mxu0 0
      %557 = vmatprep.subr.bf16.mxu0 0
      %558 = vmatpush1.bf16.msra.mxu0 0
      %559 = vmatprep.mubr.bf16.mxu0 0
      %560 = vmatmul.mubr.bf16.gmra.mrb[0].mxu0 %v432
      %v561 = vpop.f32.mrb[0].mxu0
      %v562 = vadd.f32 %v250, %v561
      %v563 = vpop.f32.mrb[0].mxu0
      %v564 = vpop.f32.mrb[0].mxu0
      %v565 = vadd.f32 %v250, %v564
      %v566 = vpop.f32.mrb[0].mxu0
      %567 = vmatprep.mubr.bf16.mxu0 0
      %568 = vmatmul.mubr.bf16.gmra.mrb[0].mxu0 %v435
      %v569 = vpop.f32.mrb[0].mxu0
      %v570 = vadd.f32 %v250, %v569
      %v571 = vpop.f32.mrb[0].mxu0
      %v572 = vpop.f32.mrb[0].mxu0
      %v573 = vadd.f32 %v250, %v572
      %v574 = vpop.f32.mrb[0].mxu0
      %575 = vmatprep.mubr.bf16.mxu0 0
      %576 = vmatmul.mubr.bf16.gmra.mrb[0].mxu0 %v438
      %v577 = vpop.f32.mrb[0].mxu0
      %v578 = vadd.f32 %v250, %v577
      %v579 = vpop.f32.mrb[0].mxu0
      %v580 = vpop.f32.mrb[0].mxu0
      %v581 = vadd.f32 %v250, %v580
      %v582 = vpop.f32.mrb[0].mxu0
      %583 = vmatprep.mubr.bf16.mxu0 0
      %584 = vmatmul.mubr.bf16.gmra.mrb[0].mxu0 %v441
      %v585 = vpop.f32.mrb[0].mxu0
      %v586 = vadd.f32 %v250, %v585
      %v587 = vpop.f32.mrb[0].mxu0
      %v588 = vpop.f32.mrb[0].mxu0
      %v589 = vadd.f32 %v250, %v588
      %v590 = vpop.f32.mrb[0].mxu0
      %591 = vmatprep.mubr.bf16.mxu0 0
      %592 = vmatmul.mubr.bf16.gmra.mrb[0].mxu0 %v444
      %v593 = vpop.f32.mrb[0].mxu0
      %v594 = vadd.f32 %v250, %v593
      %v595 = vpop.f32.mrb[0].mxu0
      %v596 = vpop.f32.mrb[0].mxu0
      %v597 = vadd.f32 %v250, %v596
      %v598 = vpop.f32.mrb[0].mxu0
      %599 = vmatprep.mubr.bf16.mxu0 0
      %600 = vmatmul.mubr.bf16.gmra.mrb[0].mxu0 %v447
      %v601 = vpop.f32.mrb[0].mxu0
      %v602 = vadd.f32 %v250, %v601
      %v603 = vpop.f32.mrb[0].mxu0
      %v604 = vpop.f32.mrb[0].mxu0
      %v605 = vadd.f32 %v250, %v604
      %v606 = vpop.f32.mrb[0].mxu0
      %607 = vmatprep.mubr.bf16.mxu0 0
      %608 = vmatmul.mubr.bf16.gmra.mrb[0].mxu0 %v450
      %v609 = vpop.f32.mrb[0].mxu0
      %v610 = vadd.f32 %v250, %v609
      %v611 = vpop.f32.mrb[0].mxu0
      %v612 = vpop.f32.mrb[0].mxu0
      %v613 = vadd.f32 %v250, %v612
      %v614 = vpop.f32.mrb[0].mxu0
      %615 = vmatprep.mubr.bf16.mxu0 0
      %616 = vmatmul.mubr.bf16.gmra.mrb[0].mxu0 %v453
      %v617 = vpop.f32.mrb[0].mxu0
      %v618 = vadd.f32 %v250, %v617
      %v619 = vpop.f32.mrb[0].mxu0
      %v620 = vpop.f32.mrb[0].mxu0
      %v621 = vadd.f32 %v250, %v620
      %v622 = vpop.f32.mrb[0].mxu0
      %623 = vmatprep.mubr.bf16.mxu0 0
      %624 = vmatmul.mubr.bf16.gmra.mrb[0].mxu0 %v456
      %v625 = vpop.f32.mrb[0].mxu0
      %v626 = vadd.f32 %v250, %v625
      %v627 = vpop.f32.mrb[0].mxu0
      %v628 = vpop.f32.mrb[0].mxu0
      %v629 = vadd.f32 %v250, %v628
      %v630 = vpop.f32.mrb[0].mxu0
      %631 = vmatprep.mubr.bf16.mxu0 0
      %632 = vmatmul.mubr.bf16.gmra.mrb[0].mxu0 %v459
      %v633 = vpop.f32.mrb[0].mxu0
      %v634 = vadd.f32 %v250, %v633
      %v635 = vpop.f32.mrb[0].mxu0
      %v636 = vpop.f32.mrb[0].mxu0
      %v637 = vadd.f32 %v250, %v636
      %v638 = vpop.f32.mrb[0].mxu0
      %639 = vmatprep.mubr.bf16.mxu0 0
      %640 = vmatmul.mubr.bf16.gmra.mrb[0].mxu0 %v462
      %v641 = vpop.f32.mrb[0].mxu0
      %v642 = vadd.f32 %v250, %v641
      %v643 = vpop.f32.mrb[0].mxu0
      %v644 = vpop.f32.mrb[0].mxu0
      %v645 = vadd.f32 %v250, %v644
      %v646 = vpop.f32.mrb[0].mxu0
      %647 = vmatprep.mubr.bf16.mxu0 0
      %648 = vmatmul.mubr.bf16.gmra.mrb[0].mxu0 %v465
      %v649 = vpop.f32.mrb[0].mxu0
      %v650 = vadd.f32 %v250, %v649
      %v651 = vpop.f32.mrb[0].mxu0
      %v652 = vpop.f32.mrb[0].mxu0
      %v653 = vadd.f32 %v250, %v652
      %v654 = vpop.f32.mrb[0].mxu0
      %655 = vmatprep.mubr.bf16.mxu0 0
      %656 = vmatmul.mubr.bf16.gmra.mrb[0].mxu0 %v468
      %v657 = vpop.f32.mrb[0].mxu0
      %v658 = vadd.f32 %v250, %v657
      %v659 = vpop.f32.mrb[0].mxu0
      %v660 = vpop.f32.mrb[0].mxu0
      %v661 = vadd.f32 %v250, %v660
      %v662 = vpop.f32.mrb[0].mxu0
      %663 = vmatprep.mubr.bf16.mxu0 0
      %664 = vmatmul.mubr.bf16.gmra.mrb[0].mxu0 %v471
      %v665 = vpop.f32.mrb[0].mxu0
      %v666 = vadd.f32 %v250, %v665
      %v667 = vpop.f32.mrb[0].mxu0
      %v668 = vpop.f32.mrb[0].mxu0
      %v669 = vadd.f32 %v250, %v668
      %v670 = vpop.f32.mrb[0].mxu0
      %671 = vmatprep.mubr.bf16.mxu0 0
      %672 = vmatmul.mubr.bf16.gmra.mrb[0].mxu0 %v474
      %v673 = vpop.f32.mrb[0].mxu0
      %v674 = vadd.f32 %v250, %v673
      %v675 = vpop.f32.mrb[0].mxu0
      %v676 = vpop.f32.mrb[0].mxu0
      %v677 = vadd.f32 %v250, %v676
      %v678 = vpop.f32.mrb[0].mxu0
      %679 = vmatprep.mubr.bf16.mxu0 0
      %680 = vmatmul.mubr.bf16.gmra.mrb[0].mxu0 %v477
      %v681 = vpop.f32.mrb[0].mxu0
      %v682 = vadd.f32 %v250, %v681
      %v683 = vpop.f32.mrb[0].mxu0
      %v684 = vpop.f32.mrb[0].mxu0
      %v685 = vadd.f32 %v250, %v684
      %v686 = vpop.f32.mrb[0].mxu0
      %687 = vmatprep.mubr.bf16.mxu0 0
      %688 = vmatmul.mubr.bf16.gmra.mrb[0].mxu0 %v480
      %v689 = vpop.f32.mrb[0].mxu0
      %v690 = vadd.f32 %v250, %v689
      %v691 = vpop.f32.mrb[0].mxu0
      %v692 = vpop.f32.mrb[0].mxu0
      %v693 = vadd.f32 %v250, %v692
      %v694 = vpop.f32.mrb[0].mxu0
      %695 = vmatprep.mubr.bf16.mxu0 0
      %696 = vmatmul.mubr.bf16.gmra.mrb[0].mxu0 %v483
      %v697 = vpop.f32.mrb[0].mxu0
      %v698 = vadd.f32 %v250, %v697
      %v699 = vpop.f32.mrb[0].mxu0
      %v700 = vpop.f32.mrb[0].mxu0
      %v701 = vadd.f32 %v250, %v700
      %v702 = vpop.f32.mrb[0].mxu0
      %703 = vmatprep.mubr.bf16.mxu0 0
      %704 = vmatmul.mubr.bf16.gmra.mrb[0].mxu0 %v486
      %v705 = vpop.f32.mrb[0].mxu0
      %v706 = vadd.f32 %v250, %v705
      %v707 = vpop.f32.mrb[0].mxu0
      %v708 = vpop.f32.mrb[0].mxu0
      %v709 = vadd.f32 %v250, %v708
      %v710 = vpop.f32.mrb[0].mxu0
      %711 = vmatprep.mubr.bf16.mxu0 0
      %712 = vmatmul.mubr.bf16.gmra.mrb[0].mxu0 %v489
      %v713 = vpop.f32.mrb[0].mxu0
      %v714 = vadd.f32 %v250, %v713
      %v715 = vpop.f32.mrb[0].mxu0
      %v716 = vpop.f32.mrb[0].mxu0
      %v717 = vadd.f32 %v250, %v716
      %v718 = vpop.f32.mrb[0].mxu0
      %719 = vmatprep.mubr.bf16.mxu0 0
      %720 = vmatmul.mubr.bf16.gmra.mrb[0].mxu0 %v492
      %v721 = vpop.f32.mrb[0].mxu0
      %v722 = vadd.f32 %v250, %v721
      %v723 = vpop.f32.mrb[0].mxu0
      %v724 = vpop.f32.mrb[0].mxu0
      %v725 = vadd.f32 %v250, %v724
      %v726 = vpop.f32.mrb[0].mxu0
      %727 = vmatprep.mubr.bf16.mxu0 0
      %728 = vmatmul.mubr.bf16.gmra.mrb[0].mxu0 %v495
      %v729 = vpop.f32.mrb[0].mxu0
      %v730 = vadd.f32 %v250, %v729
      %v731 = vpop.f32.mrb[0].mxu0
      %v732 = vpop.f32.mrb[0].mxu0
      %v733 = vadd.f32 %v250, %v732
      %v734 = vpop.f32.mrb[0].mxu0
      %735 = vmatprep.mubr.bf16.mxu0 0
      %736 = vmatmul.mubr.bf16.gmra.mrb[0].mxu0 %v498
      %v737 = vpop.f32.mrb[0].mxu0
      %v738 = vadd.f32 %v250, %v737
      %v739 = vpop.f32.mrb[0].mxu0
      %v740 = vpop.f32.mrb[0].mxu0
      %v741 = vadd.f32 %v250, %v740
      %v742 = vpop.f32.mrb[0].mxu0
      %743 = vmatprep.mubr.bf16.mxu0 0
      %744 = vmatmul.mubr.bf16.gmra.mrb[0].mxu0 %v501
      %v745 = vpop.f32.mrb[0].mxu0
      %v746 = vadd.f32 %v250, %v745
      %v747 = vpop.f32.mrb[0].mxu0
      %v748 = vpop.f32.mrb[0].mxu0
      %v749 = vadd.f32 %v250, %v748
      %v750 = vpop.f32.mrb[0].mxu0
      %751 = vmatprep.mubr.bf16.mxu0 0
      %752 = vmatmul.mubr.bf16.gmra.mrb[0].mxu0 %v504
      %v753 = vpop.f32.mrb[0].mxu0
      %v754 = vadd.f32 %v250, %v753
      %v755 = vpop.f32.mrb[0].mxu0
      %v756 = vpop.f32.mrb[0].mxu0
      %v757 = vadd.f32 %v250, %v756
      %v758 = vpop.f32.mrb[0].mxu0
      %759 = vmatprep.mubr.bf16.mxu0 0
      %760 = vmatmul.mubr.bf16.gmra.mrb[0].mxu0 %v507
      %v761 = vpop.f32.mrb[0].mxu0
      %v762 = vadd.f32 %v250, %v761
      %v763 = vpop.f32.mrb[0].mxu0
      %v764 = vpop.f32.mrb[0].mxu0
      %v765 = vadd.f32 %v250, %v764
      %v766 = vpop.f32.mrb[0].mxu0
      %767 = vmatprep.mubr.bf16.mxu0 0
      %768 = vmatmul.mubr.bf16.gmra.mrb[0].mxu0 %v510
      %v769 = vpop.f32.mrb[0].mxu0
      %v770 = vadd.f32 %v250, %v769
      %v771 = vpop.f32.mrb[0].mxu0
      %v772 = vpop.f32.mrb[0].mxu0
      %v773 = vadd.f32 %v250, %v772
      %v774 = vpop.f32.mrb[0].mxu0
      %775 = vmatprep.mubr.bf16.mxu0 0
      %776 = vmatmul.mubr.bf16.gmra.mrb[0].mxu0 %v513
      %v777 = vpop.f32.mrb[0].mxu0
      %v778 = vadd.f32 %v250, %v777
      %v779 = vpop.f32.mrb[0].mxu0
      %v780 = vpop.f32.mrb[0].mxu0
      %v781 = vadd.f32 %v250, %v780
      %v782 = vpop.f32.mrb[0].mxu0
      %783 = vmatprep.mubr.bf16.mxu0 0
      %784 = vmatmul.mubr.bf16.gmra.mrb[0].mxu0 %v516
      %v785 = vpop.f32.mrb[0].mxu0
      %v786 = vadd.f32 %v250, %v785
      %v787 = vpop.f32.mrb[0].mxu0
      %v788 = vpop.f32.mrb[0].mxu0
      %v789 = vadd.f32 %v250, %v788
      %v790 = vpop.f32.mrb[0].mxu0
      %791 = vmatprep.mubr.bf16.mxu0 0
      %792 = vmatmul.mubr.bf16.gmra.mrb[0].mxu0 %v519
      %v793 = vpop.f32.mrb[0].mxu0
      %v794 = vadd.f32 %v250, %v793
      %v795 = vpop.f32.mrb[0].mxu0
      %v796 = vpop.f32.mrb[0].mxu0
      %v797 = vadd.f32 %v250, %v796
      %v798 = vpop.f32.mrb[0].mxu0
      %799 = vmatprep.mubr.bf16.mxu0 0
      %800 = vmatmul.mubr.bf16.gmra.mrb[0].mxu0 %v522
      %v801 = vpop.f32.mrb[0].mxu0
      %v802 = vadd.f32 %v250, %v801
      %v803 = vpop.f32.mrb[0].mxu0
      %v804 = vpop.f32.mrb[0].mxu0
      %v805 = vadd.f32 %v250, %v804
      %v806 = vpop.f32.mrb[0].mxu0
      %807 = vmatprep.mubr.bf16.mxu0 0
      %808 = vmatmul.mubr.bf16.gmra.mrb[0].mxu0 %v525
      %v809 = vpop.f32.mrb[0].mxu0
      %v810 = vadd.f32 %v250, %v809
      %v811 = vpop.f32.mrb[0].mxu0
      %v812 = vpop.f32.mrb[0].mxu0
      %v813 = vadd.f32 %v250, %v812
      %v814 = vpop.f32.mrb[0].mxu0
      %815 = vdwg.mxu0
      %vm816 = vcmask 261120
      %817 = vst.msk [vmem:[%s172] sm:$0xff] %vm816, %v562
      %818 = vst.msk [vmem:[%s172 + $0x8] sm:$0xff] %vm816, %v565
      %819 = vst.msk [vmem:[%s172 + $0x10] sm:$0xff] %vm816, %v570
      %820 = vst.msk [vmem:[%s172 + $0x18] sm:$0xff] %vm816, %v573
      %821 = vst.msk [vmem:[%s172 + $0x20] sm:$0xff] %vm816, %v578
      %822 = vst.msk [vmem:[%s172 + $0x28] sm:$0xff] %vm816, %v581
      %823 = vst.msk [vmem:[%s172 + $0x30] sm:$0xff] %vm816, %v586
      %824 = vst.msk [vmem:[%s172 + $0x38] sm:$0xff] %vm816, %v589
      %825 = vst.msk [vmem:[%s172 + $0x40] sm:$0xff] %vm816, %v594
      %826 = vst.msk [vmem:[%s172 + $0x48] sm:$0xff] %vm816, %v597
      %827 = vst.msk [vmem:[%s172 + $0x50] sm:$0xff] %vm816, %v602
      %828 = vst.msk [vmem:[%s172 + $0x58] sm:$0xff] %vm816, %v605
      %829 = vst.msk [vmem:[%s172 + $0x60] sm:$0xff] %vm816, %v610
      %830 = vst.msk [vmem:[%s172 + $0x68] sm:$0xff] %vm816, %v613
      %831 = vst.msk [vmem:[%s172 + $0x70] sm:$0xff] %vm816, %v618
      %832 = vst.msk [vmem:[%s172 + $0x78] sm:$0xff] %vm816, %v621
      %833 = vst.msk [vmem:[%s172 + $0x80] sm:$0xff] %vm816, %v626
      %834 = vst.msk [vmem:[%s172 + $0x88] sm:$0xff] %vm816, %v629
      %835 = vst.msk [vmem:[%s172 + $0x90] sm:$0xff] %vm816, %v634
      %836 = vst.msk [vmem:[%s172 + $0x98] sm:$0xff] %vm816, %v637
      %837 = vst.msk [vmem:[%s172 + $0xa0] sm:$0xff] %vm816, %v642
      %838 = vst.msk [vmem:[%s172 + $0xa8] sm:$0xff] %vm816, %v645
      %839 = vst.msk [vmem:[%s172 + $0xb0] sm:$0xff] %vm816, %v650
      %840 = vst.msk [vmem:[%s172 + $0xb8] sm:$0xff] %vm816, %v653
      %841 = vst.msk [vmem:[%s172 + $0xc0] sm:$0xff] %vm816, %v658
      %842 = vst.msk [vmem:[%s172 + $0xc8] sm:$0xff] %vm816, %v661
      %843 = vst.msk [vmem:[%s172 + $0xd0] sm:$0xff] %vm816, %v666
      %844 = vst.msk [vmem:[%s172 + $0xd8] sm:$0xff] %vm816, %v669
      %845 = vst.msk [vmem:[%s172 + $0xe0] sm:$0xff] %vm816, %v674
      %846 = vst.msk [vmem:[%s172 + $0xe8] sm:$0xff] %vm816, %v677
      %847 = vst.msk [vmem:[%s172 + $0xf0] sm:$0xff] %vm816, %v682
      %848 = vst.msk [vmem:[%s172 + $0xf8] sm:$0xff] %vm816, %v685
      %849 = vst.msk [vmem:[%s172 + $0x100] sm:$0xff] %vm816, %v690
      %850 = vst.msk [vmem:[%s172 + $0x108] sm:$0xff] %vm816, %v693
      %851 = vst.msk [vmem:[%s172 + $0x110] sm:$0xff] %vm816, %v698
      %852 = vst.msk [vmem:[%s172 + $0x118] sm:$0xff] %vm816, %v701
      %853 = vst.msk [vmem:[%s172 + $0x120] sm:$0xff] %vm816, %v706
      %854 = vst.msk [vmem:[%s172 + $0x128] sm:$0xff] %vm816, %v709
      %855 = vst.msk [vmem:[%s172 + $0x130] sm:$0xff] %vm816, %v714
      %856 = vst.msk [vmem:[%s172 + $0x138] sm:$0xff] %vm816, %v717
      %857 = vst.msk [vmem:[%s172 + $0x140] sm:$0xff] %vm816, %v722
      %858 = vst.msk [vmem:[%s172 + $0x148] sm:$0xff] %vm816, %v725
      %859 = vst.msk [vmem:[%s172 + $0x150] sm:$0xff] %vm816, %v730
      %860 = vst.msk [vmem:[%s172 + $0x158] sm:$0xff] %vm816, %v733
      %861 = vst.msk [vmem:[%s172 + $0x160] sm:$0xff] %vm816, %v738
      %862 = vst.msk [vmem:[%s172 + $0x168] sm:$0xff] %vm816, %v741
      %863 = vst.msk [vmem:[%s172 + $0x170] sm:$0xff] %vm816, %v746
      %864 = vst.msk [vmem:[%s172 + $0x178] sm:$0xff] %vm816, %v749
      %865 = vst.msk [vmem:[%s172 + $0x180] sm:$0xff] %vm816, %v754
      %866 = vst.msk [vmem:[%s172 + $0x188] sm:$0xff] %vm816, %v757
      %867 = vst.msk [vmem:[%s172 + $0x190] sm:$0xff] %vm816, %v762
      %868 = vst.msk [vmem:[%s172 + $0x198] sm:$0xff] %vm816, %v765
      %869 = vst.msk [vmem:[%s172 + $0x1a0] sm:$0xff] %vm816, %v770
      %870 = vst.msk [vmem:[%s172 + $0x1a8] sm:$0xff] %vm816, %v773
      %871 = vst.msk [vmem:[%s172 + $0x1b0] sm:$0xff] %vm816, %v778
      %872 = vst.msk [vmem:[%s172 + $0x1b8] sm:$0xff] %vm816, %v781
      %873 = vst.msk [vmem:[%s172 + $0x1c0] sm:$0xff] %vm816, %v786
      %874 = vst.msk [vmem:[%s172 + $0x1c8] sm:$0xff] %vm816, %v789
      %875 = vst.msk [vmem:[%s172 + $0x1d0] sm:$0xff] %vm816, %v794
      %876 = vst.msk [vmem:[%s172 + $0x1d8] sm:$0xff] %vm816, %v797
      %877 = vst.msk [vmem:[%s172 + $0x1e0] sm:$0xff] %vm816, %v802
      %878 = vst.msk [vmem:[%s172 + $0x1e8] sm:$0xff] %vm816, %v805
      %879 = vst.msk [vmem:[%s172 + $0x1f0] sm:$0xff] %vm816, %v810
      %880 = vst.msk [vmem:[%s172 + $0x1f8] sm:$0xff] %vm816, %v813
      %s881 = smul.u32 64, %s14
      %p882 = scmp.lt.s32.totalorder %s881, 639
      %s883 = scalar_select %p882, %s881, 639
      %s884 = smul.addr %s883, 8
      %s885 = scalar_lea.vmem %s3, %s884
      // Predicated region
      $region33: #{forward.23} parent=31 // pred_check
        %p886 = pneg %p100
      $region34: #{forward.23} parent=31 // pred_check_branch
        %888 = sbr.rel (%p886) target = $region36
      $region35: #{forward.23} parent=31 // pred_region
        %s889 = smul.u32 64, %s14
      $region36: #{forward.23} parent=31 // pred_fallthru
        _
    $region32: #{forward.23} parent=5 // pred_fallthru
      _
    %p890 = scmp.le.s32.totalorder 2, %s9
    // Predicated region
    $region37: #{forward.23} parent=5 // pred_check
      %p891 = pneg %p890
    $region38: #{forward.23} parent=5 // pred_check_branch
      %893 = sbr.rel (%p891) target = $region40
    $region39: #{forward.23} parent=5 // pred_region
      %s894 = ssub.s32 %s9, 2
      // Predicated region
      $region41: #{forward.23} parent=39 // pred_check
        %p895 = pneg %p106
      $region42: #{forward.23} parent=39 // pred_check_branch
        %897 = sbr.rel (%p895) target = $region44
      $region43: #{forward.23} parent=39 // pred_region
        %s898 = smul.u32 64, %s15
        %p899 = scmp.lt.s32.totalorder %s898, 639
        %s900 = scalar_select %p899, %s898, 639
        %s901 = smul.addr %s900, 8
        %s902 = scalar_lea.vmem %s3, %s901
      $region44: #{forward.23} parent=39 // pred_fallthru
        _
    $region40: #{forward.23} parent=5 // pred_fallthru
      _
  $region6: #{forward.23} parent=0 // loop_footer
    %s13 = sadd.s32 1, %s9
  $region7: #{forward.23} parent=0 // loop_footer_branch
    %8 = sbr.rel target = $region3
  $region8: #{forward.23} parent=0 // loop_exit
    _

// kernel: forward.24
$region0: #{forward.24}
  #allocation0 [shape = 'u32[]', space=smem, size = 0x4, offset = 0x4, fixed_abs, tag = 'smem constant byte address 0x4 - core index']
  #allocation1 [shape = 'u32[144,128]{1,0:T(1,128)}', space=vmem, size = 0x12000, scoped, tag = 'internal scratch']
  %s0 = inlined_call_operand.vmem [shape: bf16[5120,864], index: 0, kind: input, shape index: {}]
  %s1 = inlined_call_operand.vmem [shape: bf16[864,32], index: 1, kind: input, shape index: {}]
  %s2 = inlined_call_operand.vmem [shape: f32[1,32], index: 2, kind: input, shape index: {}]
  %s3 = inlined_call_operand.vmem [shape: f32[5120,32], index: 3, kind: output, shape index: {}]
  %s4 = sld [smem:[#allocation0]]
  $region45: #{forward.24} parent=0
    _
  %s6 = ssub.s32 1, %s4
  %s7 = scalar_select 0, %s6, %s4
  loop: start=0, step=1, limit=12
  $region2: #{forward.24} parent=0 // loop_pre_header
    _
  $region3: #{forward.24} parent=0 // loop_header
    %s9 = sphi 0, %s13
    %p10 = scmp.ge.s32.totalorder %s9, 12
    %s19 = sphi 0, %s21
    %s22 = sphi 0, %s19
    %s23 = sphi 0, %s22
    %s39 = sphi 0, %s23
    %s43 = sphi 0, %s43
    %s45 = sphi 0, %s43
    %s46 = sphi 0, %s45
    %s60 = sphi 0, %s46
    %s64 = sphi 0, %s64
    %s66 = sphi 0, %s64
    %s67 = sphi 0, %s66
    %s81 = sphi 0, %s67
    %s87 = sphi 0, %s89
    %s90 = sphi 0, %s87
    %s91 = sphi 0, %s90
    %s107 = sphi 0, %s91
  $region4: #{forward.24} parent=0 // loop_header_branch
    %12 = sbr.rel (%p10) target = $region8
  $region5: #{forward.24} parent=0 // loop_body
    %s14 = ssub.s32 %s9, 1
    %s15 = ssub.s32 %s9, 2
    %s16 = sadd.s32 %s9, 1
    %s17 = ssub.s32 %s9, %s16
    %p18 = scmp.eq.s32.totalorder %s17, 0
    %s20 = sadd.s32 %s19, 1
    %s21 = scalar_select %p18, %s19, %s20
    %p24 = pneg %p18
    %p25 = scmp.eq.s32.totalorder %s9, 9
    %p26 = por %p24, %p25
    %p27 = scmp.ne.s32.totalorder %s19, %s22
    %p28 = scmp.eq.s32.totalorder %s9, 0
    %p29 = por %p27, %p28
    %p30 = scmp.ne.s32.totalorder %s19, %s22
    %p31 = scmp.eq.s32.totalorder %s14, 9
    %p32 = por %p30, %p31
    %p33 = scmp.ne.s32.totalorder %s22, %s23
    %p34 = scmp.eq.s32.totalorder %s14, 0
    %p35 = por %p33, %p34
    %p36 = scmp.ne.s32.totalorder %s22, %s23
    %p37 = scmp.eq.s32.totalorder %s15, 9
    %p38 = por %p36, %p37
    %p40 = scmp.ne.s32.totalorder %s23, %s39
    %p41 = scmp.eq.s32.totalorder %s15, 0
    %p42 = por %p40, %p41
    %s44 = sadd.s32 %s43, 1
    %p47 = scmp.eq.s32.totalorder %s9, 9
    %p48 = scmp.ne.s32.totalorder %s43, %s45
    %p49 = scmp.eq.s32.totalorder %s9, 0
    %p50 = por %p48, %p49
    %p51 = scmp.ne.s32.totalorder %s43, %s45
    %p52 = scmp.eq.s32.totalorder %s14, 9
    %p53 = por %p51, %p52
    %p54 = scmp.ne.s32.totalorder %s45, %s46
    %p55 = scmp.eq.s32.totalorder %s14, 0
    %p56 = por %p54, %p55
    %p57 = scmp.ne.s32.totalorder %s45, %s46
    %p58 = scmp.eq.s32.totalorder %s15, 9
    %p59 = por %p57, %p58
    %p61 = scmp.ne.s32.totalorder %s46, %s60
    %p62 = scmp.eq.s32.totalorder %s15, 0
    %p63 = por %p61, %p62
    %s65 = sadd.s32 %s64, 1
    %p68 = scmp.eq.s32.totalorder %s9, 9
    %p69 = scmp.ne.s32.totalorder %s64, %s66
    %p70 = scmp.eq.s32.totalorder %s9, 0
    %p71 = por %p69, %p70
    %p72 = scmp.ne.s32.totalorder %s64, %s66
    %p73 = scmp.eq.s32.totalorder %s14, 9
    %p74 = por %p72, %p73
    %p75 = scmp.ne.s32.totalorder %s66, %s67
    %p76 = scmp.eq.s32.totalorder %s14, 0
    %p77 = por %p75, %p76
    %p78 = scmp.ne.s32.totalorder %s66, %s67
    %p79 = scmp.eq.s32.totalorder %s15, 9
    %p80 = por %p78, %p79
    %p82 = scmp.ne.s32.totalorder %s67, %s81
    %p83 = scmp.eq.s32.totalorder %s15, 0
    %p84 = por %p82, %p83
    %s85 = ssub.s32 %s9, %s16
    %p86 = scmp.eq.s32.totalorder %s85, 0
    %s88 = sadd.s32 %s87, 1
    %s89 = scalar_select %p86, %s87, %s88
    %p92 = pneg %p86
    %p93 = scmp.eq.s32.totalorder %s9, 9
    %p94 = por %p92, %p93
    %p95 = scmp.ne.s32.totalorder %s87, %s90
    %p96 = scmp.eq.s32.totalorder %s9, 0
    %p97 = por %p95, %p96
    %p98 = scmp.ne.s32.totalorder %s87, %s90
    %p99 = scmp.eq.s32.totalorder %s14, 9
    %p100 = por %p98, %p99
    %p101 = scmp.ne.s32.totalorder %s90, %s91
    %p102 = scmp.eq.s32.totalorder %s14, 0
    %p103 = por %p101, %p102
    %p104 = scmp.ne.s32.totalorder %s90, %s91
    %p105 = scmp.eq.s32.totalorder %s15, 9
    %p106 = por %p104, %p105
    %p108 = scmp.ne.s32.totalorder %s91, %s107
    %p109 = scmp.eq.s32.totalorder %s15, 0
    %p110 = por %p108, %p109
    %p111 = scmp.le.s32.totalorder 1, %s9
    %p112 = scmp.lt.s32.totalorder %s9, 11
    %p113 = pnand %p111, %p112
    %p114 = pneg %p113
    // Predicated region
    $region9: #{forward.24} parent=5 // pred_check
      _
    $region10: #{forward.24} parent=5 // pred_check_branch
      %116 = sbr.rel (%p113) target = $region12
    $region11: #{forward.24} parent=5 // pred_region
      %s117 = ssub.s32 %s9, 1
      // Predicated region
      $region13: #{forward.24} parent=11 // pred_check
        %p118 = pneg %p56
      $region14: #{forward.24} parent=11 // pred_check_branch
        %120 = sbr.rel (%p118) target = $region16
      $region15: #{forward.24} parent=11 // pred_region
        _
      $region16: #{forward.24} parent=11 // pred_fallthru
        _
      // Predicated region
      $region17: #{forward.24} parent=11 // pred_check
        %p121 = pneg %p77
      $region18: #{forward.24} parent=11 // pred_check_branch
        %123 = sbr.rel (%p121) target = $region20
      $region19: #{forward.24} parent=11 // pred_region
        _
      $region20: #{forward.24} parent=11 // pred_fallthru
        _
    $region12: #{forward.24} parent=5 // pred_fallthru
      _
    %p124 = scmp.lt.s32.totalorder %s9, 10
    // Predicated region
    $region21: #{forward.24} parent=5 // pred_check
      %p125 = pneg %p124
    $region22: #{forward.24} parent=5 // pred_check_branch
      %127 = sbr.rel (%p125) target = $region24
    $region23: #{forward.24} parent=5 // pred_region
      // Predicated region
      $region25: #{forward.24} parent=23 // pred_check
        %p128 = pneg %p29
      $region26: #{forward.24} parent=23 // pred_check_branch
        %130 = sbr.rel (%p128) target = $region28
      $region27: #{forward.24} parent=23 // pred_region
        %s131 = smul.u32 64, %s9
        %p132 = scmp.lt.s32.totalorder %s131, 639
        %s133 = scalar_select %p132, %s131, 639
        %s134 = smul.addr %s133, 7
        %s135 = smul.addr %s134, 4
        %s136 = scalar_lea.vmem %s0, %s135
        %s137 = smul.u32 64, %s9
      $region28: #{forward.24} parent=23 // pred_fallthru
        _
    $region24: #{forward.24} parent=5 // pred_fallthru
      _
    %p138 = scmp.le.s32.totalorder 1, %s9
    %p139 = scmp.lt.s32.totalorder %s9, 11
    %p140 = pnand %p138, %p139
    %p141 = pneg %p140
    // Predicated region
    $region29: #{forward.24} parent=5 // pred_check
      _
    $region30: #{forward.24} parent=5 // pred_check_branch
      %143 = sbr.rel (%p140) target = $region32
    $region31: #{forward.24} parent=5 // pred_region
      %s144 = ssub.s32 %s9, 1
      %s145 = smul.u32 64, %s14
      %p146 = scmp.lt.s32.totalorder %s145, 639
      %s147 = scalar_select %p146, %s145, 639
      %s148 = smul.addr %s147, 7
      %s149 = smul.addr %s148, 4
      %s150 = scalar_lea.vmem %s0, %s149
      %p151 = pneg %p35
      %p152 = pneg %p32
      %p153 = pneg %p56
      %p154 = pneg %p53
      %p155 = pneg %p77
      %p156 = pneg %p74
      %p157 = pneg %p103
      %p158 = pneg %p100
      %s159 = smul.u32 64, %s14
      %p160 = scmp.lt.s32.totalorder %s159, 639
      %s161 = scalar_select %p160, %s159, 639
      %s162 = smul.addr %s161, 8
      %s163 = scalar_lea.vmem %s3, %s162
      %s164 = smul.u32 64, %s14
      %p165 = scmp.lt.s32.totalorder %s164, 639
      %s166 = scalar_select %p165, %s164, 639
      %s167 = smul.addr %s166, 7
      %s168 = smul.addr %s167, 4
      %s169 = scalar_lea.vmem %s0, %s168
      %s170 = smul.u32 64, %s14
      %s171 = smul.u32 64, %s14
      %p172 = scmp.lt.s32.totalorder %s171, 639
      %s173 = scalar_select %p172, %s171, 639
      %s174 = smul.addr %s173, 8
      %s175 = scalar_lea.vmem %s3, %s174
      %s176 = smul.u32 64, %s14
      %v178 = vld [vmem:[%s169] sm:$0xff]
      %v179 = vld [vmem:[%s169 + $0x8] sm:$0xff]
      %v180 = vld [vmem:[%s169 + $0x10] sm:$0xff]
      %v181 = vld [vmem:[%s169 + $0x18] sm:$0xf]
      %v182 = vld [vmem:[%s169 + $0x1c] sm:$0xff]
      %v183 = vld [vmem:[%s169 + $0x24] sm:$0xff]
      %v184 = vld [vmem:[%s169 + $0x2c] sm:$0xff]
      %v185 = vld [vmem:[%s169 + $0x34] sm:$0xf]
      %v186 = vld [vmem:[%s169 + $0x38] sm:$0xff]
      %v187 = vld [vmem:[%s169 + $0x40] sm:$0xff]
      %v188 = vld [vmem:[%s169 + $0x48] sm:$0xff]
      %v189 = vld [vmem:[%s169 + $0x50] sm:$0xf]
      %v190 = vld [vmem:[%s169 + $0x54] sm:$0xff]
      %v191 = vld [vmem:[%s169 + $0x5c] sm:$0xff]
      %v192 = vld [vmem:[%s169 + $0x64] sm:$0xff]
      %v193 = vld [vmem:[%s169 + $0x6c] sm:$0xf]
      %v194 = vld [vmem:[%s169 + $0x70] sm:$0xff]
      %v195 = vld [vmem:[%s169 + $0x78] sm:$0xff]
      %v196 = vld [vmem:[%s169 + $0x80] sm:$0xff]
      %v197 = vld [vmem:[%s169 + $0x88] sm:$0xf]
      %v198 = vld [vmem:[%s169 + $0x8c] sm:$0xff]
      %v199 = vld [vmem:[%s169 + $0x94] sm:$0xff]
      %v200 = vld [vmem:[%s169 + $0x9c] sm:$0xff]
      %v201 = vld [vmem:[%s169 + $0xa4] sm:$0xf]
      %v202 = vld [vmem:[%s169 + $0xa8] sm:$0xff]
      %v203 = vld [vmem:[%s169 + $0xb0] sm:$0xff]
      %v204 = vld [vmem:[%s169 + $0xb8] sm:$0xff]
      %v205 = vld [vmem:[%s169 + $0xc0] sm:$0xf]
      %v206 = vld [vmem:[%s169 + $0xc4] sm:$0xff]
      %v207 = vld [vmem:[%s169 + $0xcc] sm:$0xff]
      %v208 = vld [vmem:[%s169 + $0xd4] sm:$0xff]
      %v209 = vld [vmem:[%s169 + $0xdc] sm:$0xf]
      %v210 = vld [vmem:[%s169 + $0xe0] sm:$0xff]
      %v211 = vld [vmem:[%s169 + $0xe8] sm:$0xff]
      %v212 = vld [vmem:[%s169 + $0xf0] sm:$0xff]
      %v213 = vld [vmem:[%s169 + $0xf8] sm:$0xf]
      %v214 = vld [vmem:[%s169 + $0xfc] sm:$0xff]
      %v215 = vld [vmem:[%s169 + $0x104] sm:$0xff]
      %v216 = vld [vmem:[%s169 + $0x10c] sm:$0xff]
      %v217 = vld [vmem:[%s169 + $0x114] sm:$0xf]
      %v218 = vld [vmem:[%s169 + $0x118] sm:$0xff]
      %v219 = vld [vmem:[%s169 + $0x120] sm:$0xff]
      %v220 = vld [vmem:[%s169 + $0x128] sm:$0xff]
      %v221 = vld [vmem:[%s169 + $0x130] sm:$0xf]
      %v222 = vld [vmem:[%s169 + $0x134] sm:$0xff]
      %v223 = vld [vmem:[%s169 + $0x13c] sm:$0xff]
      %v224 = vld [vmem:[%s169 + $0x144] sm:$0xff]
      %v225 = vld [vmem:[%s169 + $0x14c] sm:$0xf]
      %v226 = vld [vmem:[%s169 + $0x150] sm:$0xff]
      %v227 = vld [vmem:[%s169 + $0x158] sm:$0xff]
      %v228 = vld [vmem:[%s169 + $0x160] sm:$0xff]
      %v229 = vld [vmem:[%s169 + $0x168] sm:$0xf]
      %v230 = vld [vmem:[%s169 + $0x16c] sm:$0xff]
      %v231 = vld [vmem:[%s169 + $0x174] sm:$0xff]
      %v232 = vld [vmem:[%s169 + $0x17c] sm:$0xff]
      %v233 = vld [vmem:[%s169 + $0x184] sm:$0xf]
      %v234 = vld [vmem:[%s169 + $0x188] sm:$0xff]
      %v235 = vld [vmem:[%s169 + $0x190] sm:$0xff]
      %v236 = vld [vmem:[%s169 + $0x198] sm:$0xff]
      %v237 = vld [vmem:[%s169 + $0x1a0] sm:$0xf]
      %v238 = vld [vmem:[%s169 + $0x1a4] sm:$0xff]
      %v239 = vld [vmem:[%s169 + $0x1ac] sm:$0xff]
      %v240 = vld [vmem:[%s169 + $0x1b4] sm:$0xff]
      %v241 = vld [vmem:[%s169 + $0x1bc] sm:$0xf]
      %v242 = vld [vmem:[%s169 + $0x1c0] sm:$0xff]
      %v243 = vld [vmem:[%s169 + $0x1c8] sm:$0xff]
      %v244 = vld [vmem:[%s169 + $0x1d0] sm:$0xff]
      %v245 = vld [vmem:[%s169 + $0x1d8] sm:$0xf]
      %v246 = vld [vmem:[%s169 + $0x1dc] sm:$0xff]
      %v247 = vld [vmem:[%s169 + $0x1e4] sm:$0xff]
      %v248 = vld [vmem:[%s169 + $0x1ec] sm:$0xff]
      %v249 = vld [vmem:[%s169 + $0x1f4] sm:$0xf]
      %v250 = vld [vmem:[%s169 + $0x1f8] sm:$0xff]
      %v251 = vld [vmem:[%s169 + $0x200] sm:$0xff]
      %v252 = vld [vmem:[%s169 + $0x208] sm:$0xff]
      %v253 = vld [vmem:[%s169 + $0x210] sm:$0xf]
      %v254 = vld [vmem:[%s169 + $0x214] sm:$0xff]
      %v255 = vld [vmem:[%s169 + $0x21c] sm:$0xff]
      %v256 = vld [vmem:[%s169 + $0x224] sm:$0xff]
      %v257 = vld [vmem:[%s169 + $0x22c] sm:$0xf]
      %v258 = vld [vmem:[%s169 + $0x230] sm:$0xff]
      %v259 = vld [vmem:[%s169 + $0x238] sm:$0xff]
      %v260 = vld [vmem:[%s169 + $0x240] sm:$0xff]
      %v261 = vld [vmem:[%s169 + $0x248] sm:$0xf]
      %v262 = vld [vmem:[%s169 + $0x24c] sm:$0xff]
      %v263 = vld [vmem:[%s169 + $0x254] sm:$0xff]
      %v264 = vld [vmem:[%s169 + $0x25c] sm:$0xff]
      %v265 = vld [vmem:[%s169 + $0x264] sm:$0xf]
      %v266 = vld [vmem:[%s169 + $0x268] sm:$0xff]
      %v267 = vld [vmem:[%s169 + $0x270] sm:$0xff]
      %v268 = vld [vmem:[%s169 + $0x278] sm:$0xff]
      %v269 = vld [vmem:[%s169 + $0x280] sm:$0xf]
      %v270 = vld [vmem:[%s169 + $0x284] sm:$0xff]
      %v271 = vld [vmem:[%s169 + $0x28c] sm:$0xff]
      %v272 = vld [vmem:[%s169 + $0x294] sm:$0xff]
      %v273 = vld [vmem:[%s169 + $0x29c] sm:$0xf]
      %v274 = vld [vmem:[%s169 + $0x2a0] sm:$0xff]
      %v275 = vld [vmem:[%s169 + $0x2a8] sm:$0xff]
      %v276 = vld [vmem:[%s169 + $0x2b0] sm:$0xff]
      %v277 = vld [vmem:[%s169 + $0x2b8] sm:$0xf]
      %v278 = vld [vmem:[%s169 + $0x2bc] sm:$0xff]
      %v279 = vld [vmem:[%s169 + $0x2c4] sm:$0xff]
      %v280 = vld [vmem:[%s169 + $0x2cc] sm:$0xff]
      %v281 = vld [vmem:[%s169 + $0x2d4] sm:$0xf]
      %v282 = vld [vmem:[%s169 + $0x2d8] sm:$0xff]
      %v283 = vld [vmem:[%s169 + $0x2e0] sm:$0xff]
      %v284 = vld [vmem:[%s169 + $0x2e8] sm:$0xff]
      %v285 = vld [vmem:[%s169 + $0x2f0] sm:$0xf]
      %v286 = vld [vmem:[%s169 + $0x2f4] sm:$0xff]
      %v287 = vld [vmem:[%s169 + $0x2fc] sm:$0xff]
      %v288 = vld [vmem:[%s169 + $0x304] sm:$0xff]
      %v289 = vld [vmem:[%s169 + $0x30c] sm:$0xf]
      %v290 = vld [vmem:[%s169 + $0x310] sm:$0xff]
      %v291 = vld [vmem:[%s169 + $0x318] sm:$0xff]
      %v292 = vld [vmem:[%s169 + $0x320] sm:$0xff]
      %v293 = vld [vmem:[%s169 + $0x328] sm:$0xf]
      %v294 = vld [vmem:[%s169 + $0x32c] sm:$0xff]
      %v295 = vld [vmem:[%s169 + $0x334] sm:$0xff]
      %v296 = vld [vmem:[%s169 + $0x33c] sm:$0xff]
      %v297 = vld [vmem:[%s169 + $0x344] sm:$0xf]
      %v298 = vld [vmem:[%s169 + $0x348] sm:$0xff]
      %v299 = vld [vmem:[%s169 + $0x350] sm:$0xff]
      %v300 = vld [vmem:[%s169 + $0x358] sm:$0xff]
      %v301 = vld [vmem:[%s169 + $0x360] sm:$0xf]
      %v302 = vld [vmem:[%s169 + $0x364] sm:$0xff]
      %v303 = vld [vmem:[%s169 + $0x36c] sm:$0xff]
      %v304 = vld [vmem:[%s169 + $0x374] sm:$0xff]
      %v305 = vld [vmem:[%s169 + $0x37c] sm:$0xf]
      %v306 = vld [vmem:[%s169 + $0x380] sm:$0xff]
      %v307 = vld [vmem:[%s169 + $0x388] sm:$0xff]
      %v308 = vld [vmem:[%s169 + $0x390] sm:$0xff]
      %v309 = vld [vmem:[%s169 + $0x398] sm:$0xf]
      %v310 = vld [vmem:[%s169 + $0x39c] sm:$0xff]
      %v311 = vld [vmem:[%s169 + $0x3a4] sm:$0xff]
      %v312 = vld [vmem:[%s169 + $0x3ac] sm:$0xff]
      %v313 = vld [vmem:[%s169 + $0x3b4] sm:$0xf]
      %v314 = vld [vmem:[%s169 + $0x3b8] sm:$0xff]
      %v315 = vld [vmem:[%s169 + $0x3c0] sm:$0xff]
      %v316 = vld [vmem:[%s169 + $0x3c8] sm:$0xff]
      %v317 = vld [vmem:[%s169 + $0x3d0] sm:$0xf]
      %v318 = vld [vmem:[%s169 + $0x3d4] sm:$0xff]
      %v319 = vld [vmem:[%s169 + $0x3dc] sm:$0xff]
      %v320 = vld [vmem:[%s169 + $0x3e4] sm:$0xff]
      %v321 = vld [vmem:[%s169 + $0x3ec] sm:$0xf]
      %v322 = vld [vmem:[%s169 + $0x3f0] sm:$0xff]
      %v323 = vld [vmem:[%s169 + $0x3f8] sm:$0xff]
      %v324 = vld [vmem:[%s169 + $0x400] sm:$0xff]
      %v325 = vld [vmem:[%s169 + $0x408] sm:$0xf]
      %v326 = vld [vmem:[%s169 + $0x40c] sm:$0xff]
      %v327 = vld [vmem:[%s169 + $0x414] sm:$0xff]
      %v328 = vld [vmem:[%s169 + $0x41c] sm:$0xff]
      %v329 = vld [vmem:[%s169 + $0x424] sm:$0xf]
      %v330 = vld [vmem:[%s169 + $0x428] sm:$0xff]
      %v331 = vld [vmem:[%s169 + $0x430] sm:$0xff]
      %v332 = vld [vmem:[%s169 + $0x438] sm:$0xff]
      %v333 = vld [vmem:[%s169 + $0x440] sm:$0xf]
      %v334 = vld [vmem:[%s169 + $0x444] sm:$0xff]
      %v335 = vld [vmem:[%s169 + $0x44c] sm:$0xff]
      %v336 = vld [vmem:[%s169 + $0x454] sm:$0xff]
      %v337 = vld [vmem:[%s169 + $0x45c] sm:$0xf]
      %v338 = vld [vmem:[%s169 + $0x460] sm:$0xff]
      %v339 = vld [vmem:[%s169 + $0x468] sm:$0xff]
      %v340 = vld [vmem:[%s169 + $0x470] sm:$0xff]
      %v341 = vld [vmem:[%s169 + $0x478] sm:$0xf]
      %v342 = vld [vmem:[%s169 + $0x47c] sm:$0xff]
      %v343 = vld [vmem:[%s169 + $0x484] sm:$0xff]
      %v344 = vld [vmem:[%s169 + $0x48c] sm:$0xff]
      %v345 = vld [vmem:[%s169 + $0x494] sm:$0xf]
      %v346 = vld [vmem:[%s169 + $0x498] sm:$0xff]
      %v347 = vld [vmem:[%s169 + $0x4a0] sm:$0xff]
      %v348 = vld [vmem:[%s169 + $0x4a8] sm:$0xff]
      %v349 = vld [vmem:[%s169 + $0x4b0] sm:$0xf]
      %v350 = vld [vmem:[%s169 + $0x4b4] sm:$0xff]
      %v351 = vld [vmem:[%s169 + $0x4bc] sm:$0xff]
      %v352 = vld [vmem:[%s169 + $0x4c4] sm:$0xff]
      %v353 = vld [vmem:[%s169 + $0x4cc] sm:$0xf]
      %v354 = vld [vmem:[%s169 + $0x4d0] sm:$0xff]
      %v355 = vld [vmem:[%s169 + $0x4d8] sm:$0xff]
      %v356 = vld [vmem:[%s169 + $0x4e0] sm:$0xff]
      %v357 = vld [vmem:[%s169 + $0x4e8] sm:$0xf]
      %v358 = vld [vmem:[%s169 + $0x4ec] sm:$0xff]
      %v359 = vld [vmem:[%s169 + $0x4f4] sm:$0xff]
      %v360 = vld [vmem:[%s169 + $0x4fc] sm:$0xff]
      %v361 = vld [vmem:[%s169 + $0x504] sm:$0xf]
      %v362 = vld [vmem:[%s169 + $0x508] sm:$0xff]
      %v363 = vld [vmem:[%s169 + $0x510] sm:$0xff]
      %v364 = vld [vmem:[%s169 + $0x518] sm:$0xff]
      %v365 = vld [vmem:[%s169 + $0x520] sm:$0xf]
      %v366 = vld [vmem:[%s169 + $0x524] sm:$0xff]
      %v367 = vld [vmem:[%s169 + $0x52c] sm:$0xff]
      %v368 = vld [vmem:[%s169 + $0x534] sm:$0xff]
      %v369 = vld [vmem:[%s169 + $0x53c] sm:$0xf]
      %v370 = vld [vmem:[%s169 + $0x540] sm:$0xff]
      %v371 = vld [vmem:[%s169 + $0x548] sm:$0xff]
      %v372 = vld [vmem:[%s169 + $0x550] sm:$0xff]
      %v373 = vld [vmem:[%s169 + $0x558] sm:$0xf]
      %v374 = vld [vmem:[%s169 + $0x55c] sm:$0xff]
      %v375 = vld [vmem:[%s169 + $0x564] sm:$0xff]
      %v376 = vld [vmem:[%s169 + $0x56c] sm:$0xff]
      %v377 = vld [vmem:[%s169 + $0x574] sm:$0xf]
      %v378 = vld [vmem:[%s169 + $0x578] sm:$0xff]
      %v379 = vld [vmem:[%s169 + $0x580] sm:$0xff]
      %v380 = vld [vmem:[%s169 + $0x588] sm:$0xff]
      %v381 = vld [vmem:[%s169 + $0x590] sm:$0xf]
      %v382 = vld [vmem:[%s169 + $0x594] sm:$0xff]
      %v383 = vld [vmem:[%s169 + $0x59c] sm:$0xff]
      %v384 = vld [vmem:[%s169 + $0x5a4] sm:$0xff]
      %v385 = vld [vmem:[%s169 + $0x5ac] sm:$0xf]
      %v386 = vld [vmem:[%s169 + $0x5b0] sm:$0xff]
      %v387 = vld [vmem:[%s169 + $0x5b8] sm:$0xff]
      %v388 = vld [vmem:[%s169 + $0x5c0] sm:$0xff]
      %v389 = vld [vmem:[%s169 + $0x5c8] sm:$0xf]
      %v390 = vld [vmem:[%s169 + $0x5cc] sm:$0xff]
      %v391 = vld [vmem:[%s169 + $0x5d4] sm:$0xff]
      %v392 = vld [vmem:[%s169 + $0x5dc] sm:$0xff]
      %v393 = vld [vmem:[%s169 + $0x5e4] sm:$0xf]
      %v394 = vld [vmem:[%s169 + $0x5e8] sm:$0xff]
      %v395 = vld [vmem:[%s169 + $0x5f0] sm:$0xff]
      %v396 = vld [vmem:[%s169 + $0x5f8] sm:$0xff]
      %v397 = vld [vmem:[%s169 + $0x600] sm:$0xf]
      %v398 = vld [vmem:[%s169 + $0x604] sm:$0xff]
      %v399 = vld [vmem:[%s169 + $0x60c] sm:$0xff]
      %v400 = vld [vmem:[%s169 + $0x614] sm:$0xff]
      %v401 = vld [vmem:[%s169 + $0x61c] sm:$0xf]
      %v402 = vld [vmem:[%s169 + $0x620] sm:$0xff]
      %v403 = vld [vmem:[%s169 + $0x628] sm:$0xff]
      %v404 = vld [vmem:[%s169 + $0x630] sm:$0xff]
      %v405 = vld [vmem:[%s169 + $0x638] sm:$0xf]
      %v406 = vld [vmem:[%s169 + $0x63c] sm:$0xff]
      %v407 = vld [vmem:[%s169 + $0x644] sm:$0xff]
      %v408 = vld [vmem:[%s169 + $0x64c] sm:$0xff]
      %v409 = vld [vmem:[%s169 + $0x654] sm:$0xf]
      %v410 = vld [vmem:[%s169 + $0x658] sm:$0xff]
      %v411 = vld [vmem:[%s169 + $0x660] sm:$0xff]
      %v412 = vld [vmem:[%s169 + $0x668] sm:$0xff]
      %v413 = vld [vmem:[%s169 + $0x670] sm:$0xf]
      %v414 = vld [vmem:[%s169 + $0x674] sm:$0xff]
      %v415 = vld [vmem:[%s169 + $0x67c] sm:$0xff]
      %v416 = vld [vmem:[%s169 + $0x684] sm:$0xff]
      %v417 = vld [vmem:[%s169 + $0x68c] sm:$0xf]
      %v418 = vld [vmem:[%s169 + $0x690] sm:$0xff]
      %v419 = vld [vmem:[%s169 + $0x698] sm:$0xff]
      %v420 = vld [vmem:[%s169 + $0x6a0] sm:$0xff]
      %v421 = vld [vmem:[%s169 + $0x6a8] sm:$0xf]
      %v422 = vld [vmem:[%s169 + $0x6ac] sm:$0xff]
      %v423 = vld [vmem:[%s169 + $0x6b4] sm:$0xff]
      %v424 = vld [vmem:[%s169 + $0x6bc] sm:$0xff]
      %v425 = vld [vmem:[%s169 + $0x6c4] sm:$0xf]
      %v426 = vld [vmem:[%s169 + $0x6c8] sm:$0xff]
      %v427 = vld [vmem:[%s169 + $0x6d0] sm:$0xff]
      %v428 = vld [vmem:[%s169 + $0x6d8] sm:$0xff]
      %v429 = vld [vmem:[%s169 + $0x6e0] sm:$0xf]
      %v430 = vld [vmem:[%s169 + $0x6e4] sm:$0xff]
      %v431 = vld [vmem:[%s169 + $0x6ec] sm:$0xff]
      %v432 = vld [vmem:[%s169 + $0x6f4] sm:$0xff]
      %v433 = vld [vmem:[%s169 + $0x6fc] sm:$0xf]
      %v434 = vld [vmem:[%s1] sm:$0xf]
      %v435 = vld [vmem:[%s1 + $0x4] sm:$0xf]
      %v436 = vld [vmem:[%s1 + $0x8] sm:$0xf]
      %v437 = vld [vmem:[%s1 + $0xc] sm:$0xf]
      %v438 = vld [vmem:[%s1 + $0x10] sm:$0xf]
      %v439 = vld [vmem:[%s1 + $0x14] sm:$0xf]
      %v440 = vld [vmem:[%s1 + $0x18] sm:$0xf]
      %v441 = vld [vmem:[%s1 + $0x1c] sm:$0xf]
      %v442 = vld [vmem:[%s1 + $0x20] sm:$0xf]
      %v443 = vld [vmem:[%s1 + $0x24] sm:$0xf]
      %v444 = vld [vmem:[%s1 + $0x28] sm:$0xf]
      %v445 = vld [vmem:[%s1 + $0x2c] sm:$0xf]
      %v446 = vld [vmem:[%s1 + $0x30] sm:$0xf]
      %v447 = vld [vmem:[%s1 + $0x34] sm:$0xf]
      %v448 = vld [vmem:[%s1 + $0x38] sm:$0xf]
      %v449 = vld [vmem:[%s1 + $0x3c] sm:$0xf]
      %v450 = vld [vmem:[%s1 + $0x40] sm:$0xf]
      %v451 = vld [vmem:[%s1 + $0x44] sm:$0xf]
      %v452 = vld [vmem:[%s1 + $0x48] sm:$0xf]
      %v453 = vld [vmem:[%s1 + $0x4c] sm:$0xf]
      %v454 = vld [vmem:[%s1 + $0x50] sm:$0xf]
      %v455 = vld [vmem:[%s1 + $0x54] sm:$0xf]
      %v456 = vld [vmem:[%s1 + $0x58] sm:$0xf]
      %v457 = vld [vmem:[%s1 + $0x5c] sm:$0xf]
      %v458 = vld [vmem:[%s1 + $0x60] sm:$0xf]
      %v459 = vld [vmem:[%s1 + $0x64] sm:$0xf]
      %v460 = vld [vmem:[%s1 + $0x68] sm:$0xf]
      %v461 = vld [vmem:[%s1 + $0x6c] sm:$0xf]
      %v462 = vld [vmem:[%s1 + $0x70] sm:$0xf]
      %v463 = vld [vmem:[%s1 + $0x74] sm:$0xf]
      %v464 = vld [vmem:[%s1 + $0x78] sm:$0xf]
      %v465 = vld [vmem:[%s1 + $0x7c] sm:$0xf]
      %v466 = vld [vmem:[%s1 + $0x80] sm:$0xf]
      %v467 = vld [vmem:[%s1 + $0x84] sm:$0xf]
      %v468 = vld [vmem:[%s1 + $0x88] sm:$0xf]
      %v469 = vld [vmem:[%s1 + $0x8c] sm:$0xf]
      %v470 = vld [vmem:[%s1 + $0x90] sm:$0xf]
      %v471 = vld [vmem:[%s1 + $0x94] sm:$0xf]
      %v472 = vld [vmem:[%s1 + $0x98] sm:$0xf]
      %v473 = vld [vmem:[%s1 + $0x9c] sm:$0xf]
      %v474 = vld [vmem:[%s1 + $0xa0] sm:$0xf]
      %v475 = vld [vmem:[%s1 + $0xa4] sm:$0xf]
      %v476 = vld [vmem:[%s1 + $0xa8] sm:$0xf]
      %v477 = vld [vmem:[%s1 + $0xac] sm:$0xf]
      %v478 = vld [vmem:[%s1 + $0xb0] sm:$0xf]
      %v479 = vld [vmem:[%s1 + $0xb4] sm:$0xf]
      %v480 = vld [vmem:[%s1 + $0xb8] sm:$0xf]
      %v481 = vld [vmem:[%s1 + $0xbc] sm:$0xf]
      %v482 = vld [vmem:[%s1 + $0xc0] sm:$0xf]
      %v483 = vld [vmem:[%s1 + $0xc4] sm:$0xf]
      %v484 = vld [vmem:[%s1 + $0xc8] sm:$0xf]
      %v485 = vld [vmem:[%s1 + $0xcc] sm:$0xf]
      %v486 = vld [vmem:[%s1 + $0xd0] sm:$0xf]
      %v487 = vld [vmem:[%s1 + $0xd4] sm:$0xf]
      %v488 = vld [vmem:[%s1 + $0xd8] sm:$0xf]
      %v489 = vld [vmem:[%s1 + $0xdc] sm:$0xf]
      %v490 = vld [vmem:[%s1 + $0xe0] sm:$0xf]
      %v491 = vld [vmem:[%s1 + $0xe4] sm:$0xf]
      %v492 = vld [vmem:[%s1 + $0xe8] sm:$0xf]
      %v493 = vld [vmem:[%s1 + $0xec] sm:$0xf]
      %v494 = vld [vmem:[%s1 + $0xf0] sm:$0xf]
      %v495 = vld [vmem:[%s1 + $0xf4] sm:$0xf]
      %v496 = vld [vmem:[%s1 + $0xf8] sm:$0xf]
      %v497 = vld [vmem:[%s1 + $0xfc] sm:$0xf]
      %v498 = vld [vmem:[%s1 + $0x100] sm:$0xf]
      %v499 = vld [vmem:[%s1 + $0x104] sm:$0xf]
      %v500 = vld [vmem:[%s1 + $0x108] sm:$0xf]
      %v501 = vld [vmem:[%s1 + $0x10c] sm:$0xf]
      %v502 = vld [vmem:[%s1 + $0x110] sm:$0xf]
      %v503 = vld [vmem:[%s1 + $0x114] sm:$0xf]
      %v504 = vld [vmem:[%s1 + $0x118] sm:$0xf]
      %v505 = vld [vmem:[%s1 + $0x11c] sm:$0xf]
      %v506 = vld [vmem:[%s1 + $0x120] sm:$0xf]
      %v507 = vld [vmem:[%s1 + $0x124] sm:$0xf]
      %v508 = vld [vmem:[%s1 + $0x128] sm:$0xf]
      %v509 = vld [vmem:[%s1 + $0x12c] sm:$0xf]
      %v510 = vld [vmem:[%s1 + $0x130] sm:$0xf]
      %v511 = vld [vmem:[%s1 + $0x134] sm:$0xf]
      %v512 = vld [vmem:[%s1 + $0x138] sm:$0xf]
      %v513 = vld [vmem:[%s1 + $0x13c] sm:$0xf]
      %v514 = vld [vmem:[%s1 + $0x140] sm:$0xf]
      %v515 = vld [vmem:[%s1 + $0x144] sm:$0xf]
      %v516 = vld [vmem:[%s1 + $0x148] sm:$0xf]
      %v517 = vld [vmem:[%s1 + $0x14c] sm:$0xf]
      %v518 = vld [vmem:[%s1 + $0x150] sm:$0xf]
      %v519 = vld [vmem:[%s1 + $0x154] sm:$0xf]
      %v520 = vld [vmem:[%s1 + $0x158] sm:$0xf]
      %v521 = vld [vmem:[%s1 + $0x15c] sm:$0xf]
      %v522 = vld [vmem:[%s1 + $0x160] sm:$0xf]
      %v523 = vld [vmem:[%s1 + $0x164] sm:$0xf]
      %v524 = vld [vmem:[%s1 + $0x168] sm:$0xf]
      %v525 = vld [vmem:[%s1 + $0x16c] sm:$0xf]
      %v526 = vld [vmem:[%s1 + $0x170] sm:$0xf]
      %v527 = vld [vmem:[%s1 + $0x174] sm:$0xf]
      %v528 = vld [vmem:[%s1 + $0x178] sm:$0xf]
      %v529 = vld [vmem:[%s1 + $0x17c] sm:$0xf]
      %v530 = vld [vmem:[%s1 + $0x180] sm:$0xf]
      %v531 = vld [vmem:[%s1 + $0x184] sm:$0xf]
      %v532 = vld [vmem:[%s1 + $0x188] sm:$0xf]
      %v533 = vld [vmem:[%s1 + $0x18c] sm:$0xf]
      %v534 = vld [vmem:[%s1 + $0x190] sm:$0xf]
      %v535 = vld [vmem:[%s1 + $0x194] sm:$0xf]
      %v536 = vld [vmem:[%s1 + $0x198] sm:$0xf]
      %v537 = vld [vmem:[%s1 + $0x19c] sm:$0xf]
      %v538 = vld [vmem:[%s1 + $0x1a0] sm:$0xf]
      %v539 = vld [vmem:[%s1 + $0x1a4] sm:$0xf]
      %v540 = vld [vmem:[%s1 + $0x1a8] sm:$0xf]
      %v541 = vld [vmem:[%s1 + $0x1ac] sm:$0xf]
      %v542 = vld [vmem:[%s2] sm:$0x1]
      %v544 = vlaneseq
      %v545 = vshrl.u32 %v544, 7
      %v546 = vsub.s32 0, %v545
      %v547 = vrot.slane %v542, %v546
      %v805 = vunpack.c.l.b16 %v178
      %v806 = vunpack.c.h.b16 %v178
      %v807 = vunpack.c.l.b16 %v179
      %v808 = vunpack.c.h.b16 %v179
      %v809 = vunpack.c.l.b16 %v180
      %v810 = vunpack.c.h.b16 %v180
      %v811 = vunpack.c.l.b16 %v181
      %v812 = vunpack.c.l.b16 %v182
      %v813 = vunpack.c.h.b16 %v182
      %v814 = vunpack.c.l.b16 %v183
      %v815 = vunpack.c.h.b16 %v183
      %v816 = vunpack.c.l.b16 %v184
      %v817 = vunpack.c.h.b16 %v184
      %v818 = vunpack.c.l.b16 %v185
      %v819 = vunpack.c.l.b16 %v186
      %v820 = vunpack.c.h.b16 %v186
      %v821 = vunpack.c.l.b16 %v187
      %v822 = vunpack.c.h.b16 %v187
      %v823 = vunpack.c.l.b16 %v188
      %v824 = vunpack.c.h.b16 %v188
      %v825 = vunpack.c.l.b16 %v189
      %v826 = vunpack.c.l.b16 %v190
      %v827 = vunpack.c.h.b16 %v190
      %v828 = vunpack.c.l.b16 %v191
      %v829 = vunpack.c.h.b16 %v191
      %v830 = vunpack.c.l.b16 %v192
      %v831 = vunpack.c.h.b16 %v192
      %v832 = vunpack.c.l.b16 %v193
      %v833 = vunpack.c.l.b16 %v194
      %v834 = vunpack.c.h.b16 %v194
      %v835 = vunpack.c.l.b16 %v195
      %v836 = vunpack.c.h.b16 %v195
      %v837 = vunpack.c.l.b16 %v196
      %v838 = vunpack.c.h.b16 %v196
      %v839 = vunpack.c.l.b16 %v197
      %v840 = vunpack.c.l.b16 %v198
      %v841 = vunpack.c.h.b16 %v198
      %v842 = vunpack.c.l.b16 %v199
      %v843 = vunpack.c.h.b16 %v199
      %v844 = vunpack.c.l.b16 %v200
      %v845 = vunpack.c.h.b16 %v200
      %v846 = vunpack.c.l.b16 %v201
      %v847 = vunpack.c.l.b16 %v202
      %v848 = vunpack.c.h.b16 %v202
      %v849 = vunpack.c.l.b16 %v203
      %v850 = vunpack.c.h.b16 %v203
      %v851 = vunpack.c.l.b16 %v204
      %v852 = vunpack.c.h.b16 %v204
      %v853 = vunpack.c.l.b16 %v205
      %v854 = vunpack.c.l.b16 %v206
      %v855 = vunpack.c.h.b16 %v206
      %v856 = vunpack.c.l.b16 %v207
      %v857 = vunpack.c.h.b16 %v207
      %v858 = vunpack.c.l.b16 %v208
      %v859 = vunpack.c.h.b16 %v208
      %v860 = vunpack.c.l.b16 %v209
      %v861 = vunpack.c.l.b16 %v210
      %v862 = vunpack.c.h.b16 %v210
      %v863 = vunpack.c.l.b16 %v211
      %v864 = vunpack.c.h.b16 %v211
      %v865 = vunpack.c.l.b16 %v212
      %v866 = vunpack.c.h.b16 %v212
      %v867 = vunpack.c.l.b16 %v213
      %v868 = vunpack.c.l.b16 %v214
      %v869 = vunpack.c.h.b16 %v214
      %v870 = vunpack.c.l.b16 %v215
      %v871 = vunpack.c.h.b16 %v215
      %v872 = vunpack.c.l.b16 %v216
      %v873 = vunpack.c.h.b16 %v216
      %v874 = vunpack.c.l.b16 %v217
      %v875 = vunpack.c.l.b16 %v218
      %v876 = vunpack.c.h.b16 %v218
      %v877 = vunpack.c.l.b16 %v219
      %v878 = vunpack.c.h.b16 %v219
      %v879 = vunpack.c.l.b16 %v220
      %v880 = vunpack.c.h.b16 %v220
      %v881 = vunpack.c.l.b16 %v221
      %v882 = vunpack.c.l.b16 %v222
      %v883 = vunpack.c.h.b16 %v222
      %v884 = vunpack.c.l.b16 %v223
      %v885 = vunpack.c.h.b16 %v223
      %v886 = vunpack.c.l.b16 %v224
      %v887 = vunpack.c.h.b16 %v224
      %v888 = vunpack.c.l.b16 %v225
      %v889 = vunpack.c.l.b16 %v226
      %v890 = vunpack.c.h.b16 %v226
      %v891 = vunpack.c.l.b16 %v227
      %v892 = vunpack.c.h.b16 %v227
      %v893 = vunpack.c.l.b16 %v228
      %v894 = vunpack.c.h.b16 %v228
      %v895 = vunpack.c.l.b16 %v229
      %v896 = vunpack.c.l.b16 %v230
      %v897 = vunpack.c.h.b16 %v230
      %v898 = vunpack.c.l.b16 %v231
      %v899 = vunpack.c.h.b16 %v231
      %v900 = vunpack.c.l.b16 %v232
      %v901 = vunpack.c.h.b16 %v232
      %v902 = vunpack.c.l.b16 %v233
      %v903 = vunpack.c.l.b16 %v234
      %v904 = vunpack.c.h.b16 %v234
      %v905 = vunpack.c.l.b16 %v235
      %v906 = vunpack.c.h.b16 %v235
      %v907 = vunpack.c.l.b16 %v236
      %v908 = vunpack.c.h.b16 %v236
      %v909 = vunpack.c.l.b16 %v237
      %v910 = vunpack.c.l.b16 %v238
      %v911 = vunpack.c.h.b16 %v238
      %v912 = vunpack.c.l.b16 %v239
      %v913 = vunpack.c.h.b16 %v239
      %v914 = vunpack.c.l.b16 %v240
      %v915 = vunpack.c.h.b16 %v240
      %v916 = vunpack.c.l.b16 %v241
      %v917 = vunpack.c.l.b16 %v242
      %v918 = vunpack.c.h.b16 %v242
      %v919 = vunpack.c.l.b16 %v243
      %v920 = vunpack.c.h.b16 %v243
      %v921 = vunpack.c.l.b16 %v244
      %v922 = vunpack.c.h.b16 %v244
      %v923 = vunpack.c.l.b16 %v245
      %v924 = vunpack.c.l.b16 %v246
      %v925 = vunpack.c.h.b16 %v246
      %v926 = vunpack.c.l.b16 %v247
      %v927 = vunpack.c.h.b16 %v247
      %v928 = vunpack.c.l.b16 %v248
      %v929 = vunpack.c.h.b16 %v248
      %v930 = vunpack.c.l.b16 %v249
      %v931 = vunpack.c.l.b16 %v250
      %v932 = vunpack.c.h.b16 %v250
      %v933 = vunpack.c.l.b16 %v251
      %v934 = vunpack.c.h.b16 %v251
      %v935 = vunpack.c.l.b16 %v252
      %v936 = vunpack.c.h.b16 %v252
      %v937 = vunpack.c.l.b16 %v253
      %v938 = vunpack.c.l.b16 %v254
      %v939 = vunpack.c.h.b16 %v254
      %v940 = vunpack.c.l.b16 %v255
      %v941 = vunpack.c.h.b16 %v255
      %v942 = vunpack.c.l.b16 %v256
      %v943 = vunpack.c.h.b16 %v256
      %v944 = vunpack.c.l.b16 %v257
      %v945 = vunpack.c.l.b16 %v258
      %v946 = vunpack.c.h.b16 %v258
      %v947 = vunpack.c.l.b16 %v259
      %v948 = vunpack.c.h.b16 %v259
      %v949 = vunpack.c.l.b16 %v260
      %v950 = vunpack.c.h.b16 %v260
      %v951 = vunpack.c.l.b16 %v261
      %v952 = vunpack.c.l.b16 %v262
      %v953 = vunpack.c.h.b16 %v262
      %v954 = vunpack.c.l.b16 %v263
      %v955 = vunpack.c.h.b16 %v263
      %v956 = vunpack.c.l.b16 %v264
      %v957 = vunpack.c.h.b16 %v264
      %v958 = vunpack.c.l.b16 %v265
      %v959 = vunpack.c.l.b16 %v266
      %v960 = vunpack.c.h.b16 %v266
      %v961 = vunpack.c.l.b16 %v267
      %v962 = vunpack.c.h.b16 %v267
      %v963 = vunpack.c.l.b16 %v268
      %v964 = vunpack.c.h.b16 %v268
      %v965 = vunpack.c.l.b16 %v269
      %v966 = vunpack.c.l.b16 %v270
      %v967 = vunpack.c.h.b16 %v270
      %v968 = vunpack.c.l.b16 %v271
      %v969 = vunpack.c.h.b16 %v271
      %v970 = vunpack.c.l.b16 %v272
      %v971 = vunpack.c.h.b16 %v272
      %v972 = vunpack.c.l.b16 %v273
      %v973 = vunpack.c.l.b16 %v274
      %v974 = vunpack.c.h.b16 %v274
      %v975 = vunpack.c.l.b16 %v275
      %v976 = vunpack.c.h.b16 %v275
      %v977 = vunpack.c.l.b16 %v276
      %v978 = vunpack.c.h.b16 %v276
      %v979 = vunpack.c.l.b16 %v277
      %v980 = vunpack.c.l.b16 %v278
      %v981 = vunpack.c.h.b16 %v278
      %v982 = vunpack.c.l.b16 %v279
      %v983 = vunpack.c.h.b16 %v279
      %v984 = vunpack.c.l.b16 %v280
      %v985 = vunpack.c.h.b16 %v280
      %v986 = vunpack.c.l.b16 %v281
      %v987 = vunpack.c.l.b16 %v282
      %v988 = vunpack.c.h.b16 %v282
      %v989 = vunpack.c.l.b16 %v283
      %v990 = vunpack.c.h.b16 %v283
      %v991 = vunpack.c.l.b16 %v284
      %v992 = vunpack.c.h.b16 %v284
      %v993 = vunpack.c.l.b16 %v285
      %v994 = vunpack.c.l.b16 %v286
      %v995 = vunpack.c.h.b16 %v286
      %v996 = vunpack.c.l.b16 %v287
      %v997 = vunpack.c.h.b16 %v287
      %v998 = vunpack.c.l.b16 %v288
      %v999 = vunpack.c.h.b16 %v288
      %v1000 = vunpack.c.l.b16 %v289
      %v1001 = vunpack.c.l.b16 %v290
      %v1002 = vunpack.c.h.b16 %v290
      %v1003 = vunpack.c.l.b16 %v291
      %v1004 = vunpack.c.h.b16 %v291
      %v1005 = vunpack.c.l.b16 %v292
      %v1006 = vunpack.c.h.b16 %v292
      %v1007 = vunpack.c.l.b16 %v293
      %v1008 = vunpack.c.l.b16 %v294
      %v1009 = vunpack.c.h.b16 %v294
      %v1010 = vunpack.c.l.b16 %v295
      %v1011 = vunpack.c.h.b16 %v295
      %v1012 = vunpack.c.l.b16 %v296
      %v1013 = vunpack.c.h.b16 %v296
      %v1014 = vunpack.c.l.b16 %v297
      %v1015 = vunpack.c.l.b16 %v298
      %v1016 = vunpack.c.h.b16 %v298
      %v1017 = vunpack.c.l.b16 %v299
      %v1018 = vunpack.c.h.b16 %v299
      %v1019 = vunpack.c.l.b16 %v300
      %v1020 = vunpack.c.h.b16 %v300
      %v1021 = vunpack.c.l.b16 %v301
      %v1022 = vunpack.c.l.b16 %v302
      %v1023 = vunpack.c.h.b16 %v302
      %v1024 = vunpack.c.l.b16 %v303
      %v1025 = vunpack.c.h.b16 %v303
      %v1026 = vunpack.c.l.b16 %v304
      %v1027 = vunpack.c.h.b16 %v304
      %v1028 = vunpack.c.l.b16 %v305
      %v1029 = vunpack.c.l.b16 %v306
      %v1030 = vunpack.c.h.b16 %v306
      %v1031 = vunpack.c.l.b16 %v307
      %v1032 = vunpack.c.h.b16 %v307
      %v1033 = vunpack.c.l.b16 %v308
      %v1034 = vunpack.c.h.b16 %v308
      %v1035 = vunpack.c.l.b16 %v309
      %v1036 = vunpack.c.l.b16 %v310
      %v1037 = vunpack.c.h.b16 %v310
      %v1038 = vunpack.c.l.b16 %v311
      %v1039 = vunpack.c.h.b16 %v311
      %v1040 = vunpack.c.l.b16 %v312
      %v1041 = vunpack.c.h.b16 %v312
      %v1042 = vunpack.c.l.b16 %v313
      %v1043 = vunpack.c.l.b16 %v314
      %v1044 = vunpack.c.h.b16 %v314
      %v1045 = vunpack.c.l.b16 %v315
      %v1046 = vunpack.c.h.b16 %v315
      %v1047 = vunpack.c.l.b16 %v316
      %v1048 = vunpack.c.h.b16 %v316
      %v1049 = vunpack.c.l.b16 %v317
      %v1050 = vunpack.c.l.b16 %v318
      %v1051 = vunpack.c.h.b16 %v318
      %v1052 = vunpack.c.l.b16 %v319
      %v1053 = vunpack.c.h.b16 %v319
      %v1054 = vunpack.c.l.b16 %v320
      %v1055 = vunpack.c.h.b16 %v320
      %v1056 = vunpack.c.l.b16 %v321
      %v1057 = vunpack.c.l.b16 %v322
      %v1058 = vunpack.c.h.b16 %v322
      %v1059 = vunpack.c.l.b16 %v323
      %v1060 = vunpack.c.h.b16 %v323
      %v1061 = vunpack.c.l.b16 %v324
      %v1062 = vunpack.c.h.b16 %v324
      %v1063 = vunpack.c.l.b16 %v325
      %v1064 = vunpack.c.l.b16 %v326
      %v1065 = vunpack.c.h.b16 %v326
      %v1066 = vunpack.c.l.b16 %v327
      %v1067 = vunpack.c.h.b16 %v327
      %v1068 = vunpack.c.l.b16 %v328
      %v1069 = vunpack.c.h.b16 %v328
      %v1070 = vunpack.c.l.b16 %v329
      %v1071 = vunpack.c.l.b16 %v330
      %v1072 = vunpack.c.h.b16 %v330
      %v1073 = vunpack.c.l.b16 %v331
      %v1074 = vunpack.c.h.b16 %v331
      %v1075 = vunpack.c.l.b16 %v332
      %v1076 = vunpack.c.h.b16 %v332
      %v1077 = vunpack.c.l.b16 %v333
      %v1078 = vunpack.c.l.b16 %v334
      %v1079 = vunpack.c.h.b16 %v334
      %v1080 = vunpack.c.l.b16 %v335
      %v1081 = vunpack.c.h.b16 %v335
      %v1082 = vunpack.c.l.b16 %v336
      %v1083 = vunpack.c.h.b16 %v336
      %v1084 = vunpack.c.l.b16 %v337
      %v1085 = vunpack.c.l.b16 %v338
      %v1086 = vunpack.c.h.b16 %v338
      %v1087 = vunpack.c.l.b16 %v339
      %v1088 = vunpack.c.h.b16 %v339
      %v1089 = vunpack.c.l.b16 %v340
      %v1090 = vunpack.c.h.b16 %v340
      %v1091 = vunpack.c.l.b16 %v341
      %v1092 = vunpack.c.l.b16 %v342
      %v1093 = vunpack.c.h.b16 %v342
      %v1094 = vunpack.c.l.b16 %v343
      %v1095 = vunpack.c.h.b16 %v343
      %v1096 = vunpack.c.l.b16 %v344
      %v1097 = vunpack.c.h.b16 %v344
      %v1098 = vunpack.c.l.b16 %v345
      %v1099 = vunpack.c.l.b16 %v346
      %v1100 = vunpack.c.h.b16 %v346
      %v1101 = vunpack.c.l.b16 %v347
      %v1102 = vunpack.c.h.b16 %v347
      %v1103 = vunpack.c.l.b16 %v348
      %v1104 = vunpack.c.h.b16 %v348
      %v1105 = vunpack.c.l.b16 %v349
      %v1106 = vunpack.c.l.b16 %v350
      %v1107 = vunpack.c.h.b16 %v350
      %v1108 = vunpack.c.l.b16 %v351
      %v1109 = vunpack.c.h.b16 %v351
      %v1110 = vunpack.c.l.b16 %v352
      %v1111 = vunpack.c.h.b16 %v352
      %v1112 = vunpack.c.l.b16 %v353
      %v1113 = vunpack.c.l.b16 %v354
      %v1114 = vunpack.c.h.b16 %v354
      %v1115 = vunpack.c.l.b16 %v355
      %v1116 = vunpack.c.h.b16 %v355
      %v1117 = vunpack.c.l.b16 %v356
      %v1118 = vunpack.c.h.b16 %v356
      %v1119 = vunpack.c.l.b16 %v357
      %v1120 = vunpack.c.l.b16 %v358
      %v1121 = vunpack.c.h.b16 %v358
      %v1122 = vunpack.c.l.b16 %v359
      %v1123 = vunpack.c.h.b16 %v359
      %v1124 = vunpack.c.l.b16 %v360
      %v1125 = vunpack.c.h.b16 %v360
      %v1126 = vunpack.c.l.b16 %v361
      %v1127 = vunpack.c.l.b16 %v362
      %v1128 = vunpack.c.h.b16 %v362
      %v1129 = vunpack.c.l.b16 %v363
      %v1130 = vunpack.c.h.b16 %v363
      %v1131 = vunpack.c.l.b16 %v364
      %v1132 = vunpack.c.h.b16 %v364
      %v1133 = vunpack.c.l.b16 %v365
      %v1134 = vunpack.c.l.b16 %v366
      %v1135 = vunpack.c.h.b16 %v366
      %v1136 = vunpack.c.l.b16 %v367
      %v1137 = vunpack.c.h.b16 %v367
      %v1138 = vunpack.c.l.b16 %v368
      %v1139 = vunpack.c.h.b16 %v368
      %v1140 = vunpack.c.l.b16 %v369
      %v1141 = vunpack.c.l.b16 %v370
      %v1142 = vunpack.c.h.b16 %v370
      %v1143 = vunpack.c.l.b16 %v371
      %v1144 = vunpack.c.h.b16 %v371
      %v1145 = vunpack.c.l.b16 %v372
      %v1146 = vunpack.c.h.b16 %v372
      %v1147 = vunpack.c.l.b16 %v373
      %v1148 = vunpack.c.l.b16 %v374
      %v1149 = vunpack.c.h.b16 %v374
      %v1150 = vunpack.c.l.b16 %v375
      %v1151 = vunpack.c.h.b16 %v375
      %v1152 = vunpack.c.l.b16 %v376
      %v1153 = vunpack.c.h.b16 %v376
      %v1154 = vunpack.c.l.b16 %v377
      %v1155 = vunpack.c.l.b16 %v378
      %v1156 = vunpack.c.h.b16 %v378
      %v1157 = vunpack.c.l.b16 %v379
      %v1158 = vunpack.c.h.b16 %v379
      %v1159 = vunpack.c.l.b16 %v380
      %v1160 = vunpack.c.h.b16 %v380
      %v1161 = vunpack.c.l.b16 %v381
      %v1162 = vunpack.c.l.b16 %v382
      %v1163 = vunpack.c.h.b16 %v382
      %v1164 = vunpack.c.l.b16 %v383
      %v1165 = vunpack.c.h.b16 %v383
      %v1166 = vunpack.c.l.b16 %v384
      %v1167 = vunpack.c.h.b16 %v384
      %v1168 = vunpack.c.l.b16 %v385
      %v1169 = vunpack.c.l.b16 %v386
      %v1170 = vunpack.c.h.b16 %v386
      %v1171 = vunpack.c.l.b16 %v387
      %v1172 = vunpack.c.h.b16 %v387
      %v1173 = vunpack.c.l.b16 %v388
      %v1174 = vunpack.c.h.b16 %v388
      %v1175 = vunpack.c.l.b16 %v389
      %v1176 = vunpack.c.l.b16 %v390
      %v1177 = vunpack.c.h.b16 %v390
      %v1178 = vunpack.c.l.b16 %v391
      %v1179 = vunpack.c.h.b16 %v391
      %v1180 = vunpack.c.l.b16 %v392
      %v1181 = vunpack.c.h.b16 %v392
      %v1182 = vunpack.c.l.b16 %v393
      %v1183 = vunpack.c.l.b16 %v394
      %v1184 = vunpack.c.h.b16 %v394
      %v1185 = vunpack.c.l.b16 %v395
      %v1186 = vunpack.c.h.b16 %v395
      %v1187 = vunpack.c.l.b16 %v396
      %v1188 = vunpack.c.h.b16 %v396
      %v1189 = vunpack.c.l.b16 %v397
      %v1190 = vunpack.c.l.b16 %v398
      %v1191 = vunpack.c.h.b16 %v398
      %v1192 = vunpack.c.l.b16 %v399
      %v1193 = vunpack.c.h.b16 %v399
      %v1194 = vunpack.c.l.b16 %v400
      %v1195 = vunpack.c.h.b16 %v400
      %v1196 = vunpack.c.l.b16 %v401
      %v1197 = vunpack.c.l.b16 %v402
      %v1198 = vunpack.c.h.b16 %v402
      %v1199 = vunpack.c.l.b16 %v403
      %v1200 = vunpack.c.h.b16 %v403
      %v1201 = vunpack.c.l.b16 %v404
      %v1202 = vunpack.c.h.b16 %v404
      %v1203 = vunpack.c.l.b16 %v405
      %v1204 = vunpack.c.l.b16 %v406
      %v1205 = vunpack.c.h.b16 %v406
      %v1206 = vunpack.c.l.b16 %v407
      %v1207 = vunpack.c.h.b16 %v407
      %v1208 = vunpack.c.l.b16 %v408
      %v1209 = vunpack.c.h.b16 %v408
      %v1210 = vunpack.c.l.b16 %v409
      %v1211 = vunpack.c.l.b16 %v410
      %v1212 = vunpack.c.h.b16 %v410
      %v1213 = vunpack.c.l.b16 %v411
      %v1214 = vunpack.c.h.b16 %v411
      %v1215 = vunpack.c.l.b16 %v412
      %v1216 = vunpack.c.h.b16 %v412
      %v1217 = vunpack.c.l.b16 %v413
      %v1218 = vunpack.c.l.b16 %v414
      %v1219 = vunpack.c.h.b16 %v414
      %v1220 = vunpack.c.l.b16 %v415
      %v1221 = vunpack.c.h.b16 %v415
      %v1222 = vunpack.c.l.b16 %v416
      %v1223 = vunpack.c.h.b16 %v416
      %v1224 = vunpack.c.l.b16 %v417
      %v1225 = vunpack.c.l.b16 %v418
      %v1226 = vunpack.c.h.b16 %v418
      %v1227 = vunpack.c.l.b16 %v419
      %v1228 = vunpack.c.h.b16 %v419
      %v1229 = vunpack.c.l.b16 %v420
      %v1230 = vunpack.c.h.b16 %v420
      %v1231 = vunpack.c.l.b16 %v421
      %v1232 = vunpack.c.l.b16 %v422
      %v1233 = vunpack.c.h.b16 %v422
      %v1234 = vunpack.c.l.b16 %v423
      %v1235 = vunpack.c.h.b16 %v423
      %v1236 = vunpack.c.l.b16 %v424
      %v1237 = vunpack.c.h.b16 %v424
      %v1238 = vunpack.c.l.b16 %v425
      %v1239 = vunpack.c.l.b16 %v426
      %v1240 = vunpack.c.h.b16 %v426
      %v1241 = vunpack.c.l.b16 %v427
      %v1242 = vunpack.c.h.b16 %v427
      %v1243 = vunpack.c.l.b16 %v428
      %v1244 = vunpack.c.h.b16 %v428
      %v1245 = vunpack.c.l.b16 %v429
      %v1246 = vunpack.c.l.b16 %v430
      %v1247 = vunpack.c.h.b16 %v430
      %v1248 = vunpack.c.l.b16 %v431
      %v1249 = vunpack.c.h.b16 %v431
      %v1250 = vunpack.c.l.b16 %v432
      %v1251 = vunpack.c.h.b16 %v432
      %v1252 = vunpack.c.l.b16 %v433
      %v1253 = vpack.c.b16 %v812, %v805
      %v1254 = vpack.c.b16 %v813, %v806
      %v1255 = vpack.c.b16 %v814, %v807
      %v1256 = vpack.c.b16 %v815, %v808
      %v1257 = vpack.c.b16 %v816, %v809
      %v1258 = vpack.c.b16 %v817, %v810
      %v1259 = vpack.c.b16 %v818, %v811
      %v1260 = vpack.c.b16 %v826, %v819
      %v1261 = vpack.c.b16 %v827, %v820
      %v1262 = vpack.c.b16 %v828, %v821
      %v1263 = vpack.c.b16 %v829, %v822
      %v1264 = vpack.c.b16 %v830, %v823
      %v1265 = vpack.c.b16 %v831, %v824
      %v1266 = vpack.c.b16 %v832, %v825
      %v1267 = vpack.c.b16 %v840, %v833
      %v1268 = vpack.c.b16 %v841, %v834
      %v1269 = vpack.c.b16 %v842, %v835
      %v1270 = vpack.c.b16 %v843, %v836
      %v1271 = vpack.c.b16 %v844, %v837
      %v1272 = vpack.c.b16 %v845, %v838
      %v1273 = vpack.c.b16 %v846, %v839
      %v1274 = vpack.c.b16 %v854, %v847
      %v1275 = vpack.c.b16 %v855, %v848
      %v1276 = vpack.c.b16 %v856, %v849
      %v1277 = vpack.c.b16 %v857, %v850
      %v1278 = vpack.c.b16 %v858, %v851
      %v1279 = vpack.c.b16 %v859, %v852
      %v1280 = vpack.c.b16 %v860, %v853
      %v1281 = vpack.c.b16 %v868, %v861
      %v1282 = vpack.c.b16 %v869, %v862
      %v1283 = vpack.c.b16 %v870, %v863
      %v1284 = vpack.c.b16 %v871, %v864
      %v1285 = vpack.c.b16 %v872, %v865
      %v1286 = vpack.c.b16 %v873, %v866
      %v1287 = vpack.c.b16 %v874, %v867
      %v1288 = vpack.c.b16 %v882, %v875
      %v1289 = vpack.c.b16 %v883, %v876
      %v1290 = vpack.c.b16 %v884, %v877
      %v1291 = vpack.c.b16 %v885, %v878
      %v1292 = vpack.c.b16 %v886, %v879
      %v1293 = vpack.c.b16 %v887, %v880
      %v1294 = vpack.c.b16 %v888, %v881
      %v1295 = vpack.c.b16 %v896, %v889
      %v1296 = vpack.c.b16 %v897, %v890
      %v1297 = vpack.c.b16 %v898, %v891
      %v1298 = vpack.c.b16 %v899, %v892
      %v1299 = vpack.c.b16 %v900, %v893
      %v1300 = vpack.c.b16 %v901, %v894
      %v1301 = vpack.c.b16 %v902, %v895
      %v1302 = vpack.c.b16 %v910, %v903
      %v1303 = vpack.c.b16 %v911, %v904
      %v1304 = vpack.c.b16 %v912, %v905
      %v1305 = vpack.c.b16 %v913, %v906
      %v1306 = vpack.c.b16 %v914, %v907
      %v1307 = vpack.c.b16 %v915, %v908
      %v1308 = vpack.c.b16 %v916, %v909
      %v1309 = vpack.c.b16 %v924, %v917
      %v1310 = vpack.c.b16 %v925, %v918
      %v1311 = vpack.c.b16 %v926, %v919
      %v1312 = vpack.c.b16 %v927, %v920
      %v1313 = vpack.c.b16 %v928, %v921
      %v1314 = vpack.c.b16 %v929, %v922
      %v1315 = vpack.c.b16 %v930, %v923
      %v1316 = vpack.c.b16 %v938, %v931
      %v1317 = vpack.c.b16 %v939, %v932
      %v1318 = vpack.c.b16 %v940, %v933
      %v1319 = vpack.c.b16 %v941, %v934
      %v1320 = vpack.c.b16 %v942, %v935
      %v1321 = vpack.c.b16 %v943, %v936
      %v1322 = vpack.c.b16 %v944, %v937
      %v1323 = vpack.c.b16 %v952, %v945
      %v1324 = vpack.c.b16 %v953, %v946
      %v1325 = vpack.c.b16 %v954, %v947
      %v1326 = vpack.c.b16 %v955, %v948
      %v1327 = vpack.c.b16 %v956, %v949
      %v1328 = vpack.c.b16 %v957, %v950
      %v1329 = vpack.c.b16 %v958, %v951
      %v1330 = vpack.c.b16 %v966, %v959
      %v1331 = vpack.c.b16 %v967, %v960
      %v1332 = vpack.c.b16 %v968, %v961
      %v1333 = vpack.c.b16 %v969, %v962
      %v1334 = vpack.c.b16 %v970, %v963
      %v1335 = vpack.c.b16 %v971, %v964
      %v1336 = vpack.c.b16 %v972, %v965
      %v1337 = vpack.c.b16 %v980, %v973
      %v1338 = vpack.c.b16 %v981, %v974
      %v1339 = vpack.c.b16 %v982, %v975
      %v1340 = vpack.c.b16 %v983, %v976
      %v1341 = vpack.c.b16 %v984, %v977
      %v1342 = vpack.c.b16 %v985, %v978
      %v1343 = vpack.c.b16 %v986, %v979
      %v1344 = vpack.c.b16 %v994, %v987
      %v1345 = vpack.c.b16 %v995, %v988
      %v1346 = vpack.c.b16 %v996, %v989
      %v1347 = vpack.c.b16 %v997, %v990
      %v1348 = vpack.c.b16 %v998, %v991
      %v1349 = vpack.c.b16 %v999, %v992
      %v1350 = vpack.c.b16 %v1000, %v993
      %v1351 = vpack.c.b16 %v1008, %v1001
      %v1352 = vpack.c.b16 %v1009, %v1002
      %v1353 = vpack.c.b16 %v1010, %v1003
      %v1354 = vpack.c.b16 %v1011, %v1004
      %v1355 = vpack.c.b16 %v1012, %v1005
      %v1356 = vpack.c.b16 %v1013, %v1006
      %v1357 = vpack.c.b16 %v1014, %v1007
      %v1358 = vpack.c.b16 %v1022, %v1015
      %v1359 = vpack.c.b16 %v1023, %v1016
      %v1360 = vpack.c.b16 %v1024, %v1017
      %v1361 = vpack.c.b16 %v1025, %v1018
      %v1362 = vpack.c.b16 %v1026, %v1019
      %v1363 = vpack.c.b16 %v1027, %v1020
      %v1364 = vpack.c.b16 %v1028, %v1021
      %v1365 = vpack.c.b16 %v1036, %v1029
      %v1366 = vpack.c.b16 %v1037, %v1030
      %v1367 = vpack.c.b16 %v1038, %v1031
      %v1368 = vpack.c.b16 %v1039, %v1032
      %v1369 = vpack.c.b16 %v1040, %v1033
      %v1370 = vpack.c.b16 %v1041, %v1034
      %v1371 = vpack.c.b16 %v1042, %v1035
      %v1372 = vpack.c.b16 %v1050, %v1043
      %v1373 = vpack.c.b16 %v1051, %v1044
      %v1374 = vpack.c.b16 %v1052, %v1045
      %v1375 = vpack.c.b16 %v1053, %v1046
      %v1376 = vpack.c.b16 %v1054, %v1047
      %v1377 = vpack.c.b16 %v1055, %v1048
      %v1378 = vpack.c.b16 %v1056, %v1049
      %v1379 = vpack.c.b16 %v1064, %v1057
      %v1380 = vpack.c.b16 %v1065, %v1058
      %v1381 = vpack.c.b16 %v1066, %v1059
      %v1382 = vpack.c.b16 %v1067, %v1060
      %v1383 = vpack.c.b16 %v1068, %v1061
      %v1384 = vpack.c.b16 %v1069, %v1062
      %v1385 = vpack.c.b16 %v1070, %v1063
      %v1386 = vpack.c.b16 %v1078, %v1071
      %v1387 = vpack.c.b16 %v1079, %v1072
      %v1388 = vpack.c.b16 %v1080, %v1073
      %v1389 = vpack.c.b16 %v1081, %v1074
      %v1390 = vpack.c.b16 %v1082, %v1075
      %v1391 = vpack.c.b16 %v1083, %v1076
      %v1392 = vpack.c.b16 %v1084, %v1077
      %v1393 = vpack.c.b16 %v1092, %v1085
      %v1394 = vpack.c.b16 %v1093, %v1086
      %v1395 = vpack.c.b16 %v1094, %v1087
      %v1396 = vpack.c.b16 %v1095, %v1088
      %v1397 = vpack.c.b16 %v1096, %v1089
      %v1398 = vpack.c.b16 %v1097, %v1090
      %v1399 = vpack.c.b16 %v1098, %v1091
      %v1400 = vpack.c.b16 %v1106, %v1099
      %v1401 = vpack.c.b16 %v1107, %v1100
      %v1402 = vpack.c.b16 %v1108, %v1101
      %v1403 = vpack.c.b16 %v1109, %v1102
      %v1404 = vpack.c.b16 %v1110, %v1103
      %v1405 = vpack.c.b16 %v1111, %v1104
      %v1406 = vpack.c.b16 %v1112, %v1105
      %v1407 = vpack.c.b16 %v1120, %v1113
      %v1408 = vpack.c.b16 %v1121, %v1114
      %v1409 = vpack.c.b16 %v1122, %v1115
      %v1410 = vpack.c.b16 %v1123, %v1116
      %v1411 = vpack.c.b16 %v1124, %v1117
      %v1412 = vpack.c.b16 %v1125, %v1118
      %v1413 = vpack.c.b16 %v1126, %v1119
      %v1414 = vpack.c.b16 %v1134, %v1127
      %v1415 = vpack.c.b16 %v1135, %v1128
      %v1416 = vpack.c.b16 %v1136, %v1129
      %v1417 = vpack.c.b16 %v1137, %v1130
      %v1418 = vpack.c.b16 %v1138, %v1131
      %v1419 = vpack.c.b16 %v1139, %v1132
      %v1420 = vpack.c.b16 %v1140, %v1133
      %v1421 = vpack.c.b16 %v1148, %v1141
      %v1422 = vpack.c.b16 %v1149, %v1142
      %v1423 = vpack.c.b16 %v1150, %v1143
      %v1424 = vpack.c.b16 %v1151, %v1144
      %v1425 = vpack.c.b16 %v1152, %v1145
      %v1426 = vpack.c.b16 %v1153, %v1146
      %v1427 = vpack.c.b16 %v1154, %v1147
      %v1428 = vpack.c.b16 %v1162, %v1155
      %v1429 = vpack.c.b16 %v1163, %v1156
      %v1430 = vpack.c.b16 %v1164, %v1157
      %v1431 = vpack.c.b16 %v1165, %v1158
      %v1432 = vpack.c.b16 %v1166, %v1159
      %v1433 = vpack.c.b16 %v1167, %v1160
      %v1434 = vpack.c.b16 %v1168, %v1161
      %v1435 = vpack.c.b16 %v1176, %v1169
      %v1436 = vpack.c.b16 %v1177, %v1170
      %v1437 = vpack.c.b16 %v1178, %v1171
      %v1438 = vpack.c.b16 %v1179, %v1172
      %v1439 = vpack.c.b16 %v1180, %v1173
      %v1440 = vpack.c.b16 %v1181, %v1174
      %v1441 = vpack.c.b16 %v1182, %v1175
      %v1442 = vpack.c.b16 %v1190, %v1183
      %v1443 = vpack.c.b16 %v1191, %v1184
      %v1444 = vpack.c.b16 %v1192, %v1185
      %v1445 = vpack.c.b16 %v1193, %v1186
      %v1446 = vpack.c.b16 %v1194, %v1187
      %v1447 = vpack.c.b16 %v1195, %v1188
      %v1448 = vpack.c.b16 %v1196, %v1189
      %v1449 = vpack.c.b16 %v1204, %v1197
      %v1450 = vpack.c.b16 %v1205, %v1198
      %v1451 = vpack.c.b16 %v1206, %v1199
      %v1452 = vpack.c.b16 %v1207, %v1200
      %v1453 = vpack.c.b16 %v1208, %v1201
      %v1454 = vpack.c.b16 %v1209, %v1202
      %v1455 = vpack.c.b16 %v1210, %v1203
      %v1456 = vpack.c.b16 %v1218, %v1211
      %v1457 = vpack.c.b16 %v1219, %v1212
      %v1458 = vpack.c.b16 %v1220, %v1213
      %v1459 = vpack.c.b16 %v1221, %v1214
      %v1460 = vpack.c.b16 %v1222, %v1215
      %v1461 = vpack.c.b16 %v1223, %v1216
      %v1462 = vpack.c.b16 %v1224, %v1217
      %v1463 = vpack.c.b16 %v1232, %v1225
      %v1464 = vpack.c.b16 %v1233, %v1226
      %v1465 = vpack.c.b16 %v1234, %v1227
      %v1466 = vpack.c.b16 %v1235, %v1228
      %v1467 = vpack.c.b16 %v1236, %v1229
      %v1468 = vpack.c.b16 %v1237, %v1230
      %v1469 = vpack.c.b16 %v1238, %v1231
      %v1470 = vpack.c.b16 %v1246, %v1239
      %v1471 = vpack.c.b16 %v1247, %v1240
      %v1472 = vpack.c.b16 %v1248, %v1241
      %v1473 = vpack.c.b16 %v1249, %v1242
      %v1474 = vpack.c.b16 %v1250, %v1243
      %v1475 = vpack.c.b16 %v1251, %v1244
      %v1476 = vpack.c.b16 %v1252, %v1245
      %v1777 = vunpack.c.l.b16 %v434
      %v1778 = vunpack.c.l.b16 %v435
      %v1779 = vunpack.c.l.b16 %v436
      %v1780 = vunpack.c.l.b16 %v437
      %v1781 = vunpack.c.l.b16 %v438
      %v1782 = vunpack.c.l.b16 %v439
      %v1783 = vunpack.c.l.b16 %v440
      %v1784 = vunpack.c.l.b16 %v441
      %v1785 = vunpack.c.l.b16 %v442
      %v1786 = vunpack.c.l.b16 %v443
      %v1787 = vunpack.c.l.b16 %v444
      %v1788 = vunpack.c.l.b16 %v445
      %v1789 = vunpack.c.l.b16 %v446
      %v1790 = vunpack.c.l.b16 %v447
      %v1791 = vunpack.c.l.b16 %v448
      %v1792 = vunpack.c.l.b16 %v449
      %v1793 = vunpack.c.l.b16 %v450
      %v1794 = vunpack.c.l.b16 %v451
      %v1795 = vunpack.c.l.b16 %v452
      %v1796 = vunpack.c.l.b16 %v453
      %v1797 = vunpack.c.l.b16 %v454
      %v1798 = vunpack.c.l.b16 %v455
      %v1799 = vunpack.c.l.b16 %v456
      %v1800 = vunpack.c.l.b16 %v457
      %v1801 = vunpack.c.l.b16 %v458
      %v1802 = vunpack.c.l.b16 %v459
      %v1803 = vunpack.c.l.b16 %v460
      %v1804 = vunpack.c.l.b16 %v461
      %v1805 = vunpack.c.l.b16 %v462
      %v1806 = vunpack.c.l.b16 %v463
      %v1807 = vunpack.c.l.b16 %v464
      %v1808 = vunpack.c.l.b16 %v465
      %v1809 = vunpack.c.l.b16 %v466
      %v1810 = vunpack.c.l.b16 %v467
      %v1811 = vunpack.c.l.b16 %v468
      %v1812 = vunpack.c.l.b16 %v469
      %v1813 = vunpack.c.l.b16 %v470
      %v1814 = vunpack.c.l.b16 %v471
      %v1815 = vunpack.c.l.b16 %v472
      %v1816 = vunpack.c.l.b16 %v473
      %v1817 = vunpack.c.l.b16 %v474
      %v1818 = vunpack.c.l.b16 %v475
      %v1819 = vunpack.c.l.b16 %v476
      %v1820 = vunpack.c.l.b16 %v477
      %v1821 = vunpack.c.l.b16 %v478
      %v1822 = vunpack.c.l.b16 %v479
      %v1823 = vunpack.c.l.b16 %v480
      %v1824 = vunpack.c.l.b16 %v481
      %v1825 = vunpack.c.l.b16 %v482
      %v1826 = vunpack.c.l.b16 %v483
      %v1827 = vunpack.c.l.b16 %v484
      %v1828 = vunpack.c.l.b16 %v485
      %v1829 = vunpack.c.l.b16 %v486
      %v1830 = vunpack.c.l.b16 %v487
      %v1831 = vunpack.c.l.b16 %v488
      %v1832 = vunpack.c.l.b16 %v489
      %v1833 = vunpack.c.l.b16 %v490
      %v1834 = vunpack.c.l.b16 %v491
      %v1835 = vunpack.c.l.b16 %v492
      %v1836 = vunpack.c.l.b16 %v493
      %v1837 = vunpack.c.l.b16 %v494
      %v1838 = vunpack.c.l.b16 %v495
      %v1839 = vunpack.c.l.b16 %v496
      %v1840 = vunpack.c.l.b16 %v497
      %v1841 = vunpack.c.l.b16 %v498
      %v1842 = vunpack.c.l.b16 %v499
      %v1843 = vunpack.c.l.b16 %v500
      %v1844 = vunpack.c.l.b16 %v501
      %v1845 = vunpack.c.l.b16 %v502
      %v1846 = vunpack.c.l.b16 %v503
      %v1847 = vunpack.c.l.b16 %v504
      %v1848 = vunpack.c.l.b16 %v505
      %v1849 = vunpack.c.l.b16 %v506
      %v1850 = vunpack.c.l.b16 %v507
      %v1851 = vunpack.c.l.b16 %v508
      %v1852 = vunpack.c.l.b16 %v509
      %v1853 = vunpack.c.l.b16 %v510
      %v1854 = vunpack.c.l.b16 %v511
      %v1855 = vunpack.c.l.b16 %v512
      %v1856 = vunpack.c.l.b16 %v513
      %v1857 = vunpack.c.l.b16 %v514
      %v1858 = vunpack.c.l.b16 %v515
      %v1859 = vunpack.c.l.b16 %v516
      %v1860 = vunpack.c.l.b16 %v517
      %v1861 = vunpack.c.l.b16 %v518
      %v1862 = vunpack.c.l.b16 %v519
      %v1863 = vunpack.c.l.b16 %v520
      %v1864 = vunpack.c.l.b16 %v521
      %v1865 = vunpack.c.l.b16 %v522
      %v1866 = vunpack.c.l.b16 %v523
      %v1867 = vunpack.c.l.b16 %v524
      %v1868 = vunpack.c.l.b16 %v525
      %v1869 = vunpack.c.l.b16 %v526
      %v1870 = vunpack.c.l.b16 %v527
      %v1871 = vunpack.c.l.b16 %v528
      %v1872 = vunpack.c.l.b16 %v529
      %v1873 = vunpack.c.l.b16 %v530
      %v1874 = vunpack.c.l.b16 %v531
      %v1875 = vunpack.c.l.b16 %v532
      %v1876 = vunpack.c.l.b16 %v533
      %v1877 = vunpack.c.l.b16 %v534
      %v1878 = vunpack.c.l.b16 %v535
      %v1879 = vunpack.c.l.b16 %v536
      %v1880 = vunpack.c.l.b16 %v537
      %v1881 = vunpack.c.l.b16 %v538
      %v1882 = vunpack.c.l.b16 %v539
      %v1883 = vunpack.c.l.b16 %v540
      %v1884 = vunpack.c.l.b16 %v541
      %v1885 = vpack.c.b16 %v1778, %v1777
      %v1886 = vpack.c.b16 %v1780, %v1779
      %v1887 = vpack.c.b16 %v1782, %v1781
      %v1888 = vpack.c.b16 %v1784, %v1783
      %v1889 = vpack.c.b16 %v1786, %v1785
      %v1890 = vpack.c.b16 %v1788, %v1787
      %v1891 = vpack.c.b16 %v1790, %v1789
      %v1892 = vpack.c.b16 %v1792, %v1791
      %v1893 = vpack.c.b16 %v1794, %v1793
      %v1894 = vpack.c.b16 %v1796, %v1795
      %v1895 = vpack.c.b16 %v1798, %v1797
      %v1896 = vpack.c.b16 %v1800, %v1799
      %v1897 = vpack.c.b16 %v1802, %v1801
      %v1898 = vpack.c.b16 %v1804, %v1803
      %v1899 = vpack.c.b16 %v1806, %v1805
      %v1900 = vpack.c.b16 %v1808, %v1807
      %v1901 = vpack.c.b16 %v1810, %v1809
      %v1902 = vpack.c.b16 %v1812, %v1811
      %v1903 = vpack.c.b16 %v1814, %v1813
      %v1904 = vpack.c.b16 %v1816, %v1815
      %v1905 = vpack.c.b16 %v1818, %v1817
      %v1906 = vpack.c.b16 %v1820, %v1819
      %v1907 = vpack.c.b16 %v1822, %v1821
      %v1908 = vpack.c.b16 %v1824, %v1823
      %v1909 = vpack.c.b16 %v1826, %v1825
      %v1910 = vpack.c.b16 %v1828, %v1827
      %v1911 = vpack.c.b16 %v1830, %v1829
      %v1912 = vpack.c.b16 %v1832, %v1831
      %v1913 = vpack.c.b16 %v1834, %v1833
      %v1914 = vpack.c.b16 %v1836, %v1835
      %v1915 = vpack.c.b16 %v1838, %v1837
      %v1916 = vpack.c.b16 %v1840, %v1839
      %v1917 = vpack.c.b16 %v1842, %v1841
      %v1918 = vpack.c.b16 %v1844, %v1843
      %v1919 = vpack.c.b16 %v1846, %v1845
      %v1920 = vpack.c.b16 %v1848, %v1847
      %v1921 = vpack.c.b16 %v1850, %v1849
      %v1922 = vpack.c.b16 %v1852, %v1851
      %v1923 = vpack.c.b16 %v1854, %v1853
      %v1924 = vpack.c.b16 %v1856, %v1855
      %v1925 = vpack.c.b16 %v1858, %v1857
      %v1926 = vpack.c.b16 %v1860, %v1859
      %v1927 = vpack.c.b16 %v1862, %v1861
      %v1928 = vpack.c.b16 %v1864, %v1863
      %v1929 = vpack.c.b16 %v1866, %v1865
      %v1930 = vpack.c.b16 %v1868, %v1867
      %v1931 = vpack.c.b16 %v1870, %v1869
      %v1932 = vpack.c.b16 %v1872, %v1871
      %v1933 = vpack.c.b16 %v1874, %v1873
      %v1934 = vpack.c.b16 %v1876, %v1875
      %v1935 = vpack.c.b16 %v1878, %v1877
      %v1936 = vpack.c.b16 %v1880, %v1879
      %v1937 = vpack.c.b16 %v1882, %v1881
      %v1938 = vpack.c.b16 %v1884, %v1883
      %vm1993 = vcmask 785408
      %v1995 = vsel %vm1993, %v1259, 0
      %v1998 = vsel %vm1993, %v1266, 0
      %v2001 = vsel %vm1993, %v1273, 0
      %v2004 = vsel %vm1993, %v1280, 0
      %v2007 = vsel %vm1993, %v1287, 0
      %v2010 = vsel %vm1993, %v1294, 0
      %v2013 = vsel %vm1993, %v1301, 0
      %v2016 = vsel %vm1993, %v1308, 0
      %v2019 = vsel %vm1993, %v1315, 0
      %v2022 = vsel %vm1993, %v1322, 0
      %v2025 = vsel %vm1993, %v1329, 0
      %v2028 = vsel %vm1993, %v1336, 0
      %v2031 = vsel %vm1993, %v1343, 0
      %v2034 = vsel %vm1993, %v1350, 0
      %v2037 = vsel %vm1993, %v1357, 0
      %v2040 = vsel %vm1993, %v1364, 0
      %v2043 = vsel %vm1993, %v1371, 0
      %v2046 = vsel %vm1993, %v1378, 0
      %v2049 = vsel %vm1993, %v1385, 0
      %v2052 = vsel %vm1993, %v1392, 0
      %v2055 = vsel %vm1993, %v1399, 0
      %v2058 = vsel %vm1993, %v1406, 0
      %v2061 = vsel %vm1993, %v1413, 0
      %v2064 = vsel %vm1993, %v1420, 0
      %v2067 = vsel %vm1993, %v1427, 0
      %v2070 = vsel %vm1993, %v1434, 0
      %v2073 = vsel %vm1993, %v1441, 0
      %v2076 = vsel %vm1993, %v1448, 0
      %v2079 = vsel %vm1993, %v1455, 0
      %v2082 = vsel %vm1993, %v1462, 0
      %v2085 = vsel %vm1993, %v1469, 0
      %v2088 = vsel %vm1993, %v1476, 0
      %2090 = vmatprep.subr.bf16.mxu0 0
      %2091 = vmatpush1.bf16.msra.mxu0 %v1885
      %2092 = vmatprep.subr.bf16.mxu0 0
      %2093 = vmatpush1.bf16.msra.mxu0 %v1886
      %2094 = vmatprep.subr.bf16.mxu0 0
      %2095 = vmatpush1.bf16.msra.mxu0 %v1887
      %2096 = vmatprep.subr.bf16.mxu0 0
      %2097 = vmatpush1.bf16.msra.mxu0 %v1888
      %2098 = vmatprep.subr.bf16.mxu0 0
      %2099 = vmatpush1.bf16.msra.mxu0 %v1889
      %2100 = vmatprep.subr.bf16.mxu0 0
      %2101 = vmatpush1.bf16.msra.mxu0 %v1890
      %2102 = vmatprep.subr.bf16.mxu0 0
      %2103 = vmatpush1.bf16.msra.mxu0 %v1891
      %2104 = vmatprep.subr.bf16.mxu0 0
      %2105 = vmatpush1.bf16.msra.mxu0 %v1892
      %2106 = vmatprep.subr.bf16.mxu0 0
      %2107 = vmatpush1.bf16.msra.mxu0 %v1893
      %2108 = vmatprep.subr.bf16.mxu0 0
      %2109 = vmatpush1.bf16.msra.mxu0 %v1894
      %2110 = vmatprep.subr.bf16.mxu0 0
      %2111 = vmatpush1.bf16.msra.mxu0 %v1895
      %2112 = vmatprep.subr.bf16.mxu0 0
      %2113 = vmatpush1.bf16.msra.mxu0 %v1896
      %2114 = vmatprep.subr.bf16.mxu0 0
      %2115 = vmatpush1.bf16.msra.mxu0 %v1897
      %2116 = vmatprep.subr.bf16.mxu0 0
      %2117 = vmatpush1.bf16.msra.mxu0 %v1898
      %2118 = vmatprep.subr.bf16.mxu0 0
      %2119 = vmatpush1.bf16.msra.mxu0 %v1899
      %2120 = vmatprep.subr.bf16.mxu0 0
      %2121 = vmatpush1.bf16.msra.mxu0 %v1900
      %2122 = vmatprep.mubr.bf16.mxu0 %v1254
      %2123 = vmatmul.mubr.bf16.gmra.mrb[0].mxu0 %v1253
      %v2124 = vpop.f32.mrb[0].mxu0
      %v2125 = vadd.f32 %v547, %v2124
      %v2126 = vpop.f32.mrb[0].mxu0
      %v2127 = vpop.f32.mrb[0].mxu0
      %v2128 = vadd.f32 %v547, %v2127
      %v2129 = vpop.f32.mrb[0].mxu0
      %2130 = vmatprep.mubr.bf16.mxu0 %v1261
      %2131 = vmatmul.mubr.bf16.gmra.mrb[0].mxu0 %v1260
      %v2132 = vpop.f32.mrb[0].mxu0
      %v2133 = vadd.f32 %v547, %v2132
      %v2134 = vpop.f32.mrb[0].mxu0
      %v2135 = vpop.f32.mrb[0].mxu0
      %v2136 = vadd.f32 %v547, %v2135
      %v2137 = vpop.f32.mrb[0].mxu0
      %2138 = vmatprep.mubr.bf16.mxu0 %v1268
      %2139 = vmatmul.mubr.bf16.gmra.mrb[0].mxu0 %v1267
      %v2140 = vpop.f32.mrb[0].mxu0
      %v2141 = vadd.f32 %v547, %v2140
      %v2142 = vpop.f32.mrb[0].mxu0
      %v2143 = vpop.f32.mrb[0].mxu0
      %v2144 = vadd.f32 %v547, %v2143
      %v2145 = vpop.f32.mrb[0].mxu0
      %2146 = vmatprep.mubr.bf16.mxu0 %v1275
      %2147 = vmatmul.mubr.bf16.gmra.mrb[0].mxu0 %v1274
      %v2148 = vpop.f32.mrb[0].mxu0
      %v2149 = vadd.f32 %v547, %v2148
      %v2150 = vpop.f32.mrb[0].mxu0
      %v2151 = vpop.f32.mrb[0].mxu0
      %v2152 = vadd.f32 %v547, %v2151
      %v2153 = vpop.f32.mrb[0].mxu0
      %2154 = vmatprep.mubr.bf16.mxu0 %v1282
      %2155 = vmatmul.mubr.bf16.gmra.mrb[0].mxu0 %v1281
      %v2156 = vpop.f32.mrb[0].mxu0
      %v2157 = vadd.f32 %v547, %v2156
      %v2158 = vpop.f32.mrb[0].mxu0
      %v2159 = vpop.f32.mrb[0].mxu0
      %v2160 = vadd.f32 %v547, %v2159
      %v2161 = vpop.f32.mrb[0].mxu0
      %2162 = vmatprep.mubr.bf16.mxu0 %v1289
      %2163 = vmatmul.mubr.bf16.gmra.mrb[0].mxu0 %v1288
      %v2164 = vpop.f32.mrb[0].mxu0
      %v2165 = vadd.f32 %v547, %v2164
      %v2166 = vpop.f32.mrb[0].mxu0
      %v2167 = vpop.f32.mrb[0].mxu0
      %v2168 = vadd.f32 %v547, %v2167
      %v2169 = vpop.f32.mrb[0].mxu0
      %2170 = vmatprep.mubr.bf16.mxu0 %v1296
      %2171 = vmatmul.mubr.bf16.gmra.mrb[0].mxu0 %v1295
      %v2172 = vpop.f32.mrb[0].mxu0
      %v2173 = vadd.f32 %v547, %v2172
      %v2174 = vpop.f32.mrb[0].mxu0
      %v2175 = vpop.f32.mrb[0].mxu0
      %v2176 = vadd.f32 %v547, %v2175
      %v2177 = vpop.f32.mrb[0].mxu0
      %2178 = vmatprep.mubr.bf16.mxu0 %v1303
      %2179 = vmatmul.mubr.bf16.gmra.mrb[0].mxu0 %v1302
      %v2180 = vpop.f32.mrb[0].mxu0
      %v2181 = vadd.f32 %v547, %v2180
      %v2182 = vpop.f32.mrb[0].mxu0
      %v2183 = vpop.f32.mrb[0].mxu0
      %v2184 = vadd.f32 %v547, %v2183
      %v2185 = vpop.f32.mrb[0].mxu0
      %2186 = vmatprep.mubr.bf16.mxu0 %v1310
      %2187 = vmatmul.mubr.bf16.gmra.mrb[0].mxu0 %v1309
      %v2188 = vpop.f32.mrb[0].mxu0
      %v2189 = vadd.f32 %v547, %v2188
      %v2190 = vpop.f32.mrb[0].mxu0
      %v2191 = vpop.f32.mrb[0].mxu0
      %v2192 = vadd.f32 %v547, %v2191
      %v2193 = vpop.f32.mrb[0].mxu0
      %2194 = vmatprep.mubr.bf16.mxu0 %v1317
      %2195 = vmatmul.mubr.bf16.gmra.mrb[0].mxu0 %v1316
      %v2196 = vpop.f32.mrb[0].mxu0
      %v2197 = vadd.f32 %v547, %v2196
      %v2198 = vpop.f32.mrb[0].mxu0
      %v2199 = vpop.f32.mrb[0].mxu0
      %v2200 = vadd.f32 %v547, %v2199
      %v2201 = vpop.f32.mrb[0].mxu0
      %2202 = vmatprep.mubr.bf16.mxu0 %v1324
      %2203 = vmatmul.mubr.bf16.gmra.mrb[0].mxu0 %v1323
      %v2204 = vpop.f32.mrb[0].mxu0
      %v2205 = vadd.f32 %v547, %v2204
      %v2206 = vpop.f32.mrb[0].mxu0
      %v2207 = vpop.f32.mrb[0].mxu0
      %v2208 = vadd.f32 %v547, %v2207
      %v2209 = vpop.f32.mrb[0].mxu0
      %2210 = vmatprep.mubr.bf16.mxu0 %v1331
      %2211 = vmatmul.mubr.bf16.gmra.mrb[0].mxu0 %v1330
      %v2212 = vpop.f32.mrb[0].mxu0
      %v2213 = vadd.f32 %v547, %v2212
      %v2214 = vpop.f32.mrb[0].mxu0
      %v2215 = vpop.f32.mrb[0].mxu0
      %v2216 = vadd.f32 %v547, %v2215
      %v2217 = vpop.f32.mrb[0].mxu0
      %2218 = vmatprep.mubr.bf16.mxu0 %v1338
      %2219 = vmatmul.mubr.bf16.gmra.mrb[0].mxu0 %v1337
      %v2220 = vpop.f32.mrb[0].mxu0
      %v2221 = vadd.f32 %v547, %v2220
      %v2222 = vpop.f32.mrb[0].mxu0
      %v2223 = vpop.f32.mrb[0].mxu0
      %v2224 = vadd.f32 %v547, %v2223
      %v2225 = vpop.f32.mrb[0].mxu0
      %2226 = vmatprep.mubr.bf16.mxu0 %v1345
      %2227 = vmatmul.mubr.bf16.gmra.mrb[0].mxu0 %v1344
      %v2228 = vpop.f32.mrb[0].mxu0
      %v2229 = vadd.f32 %v547, %v2228
      %v2230 = vpop.f32.mrb[0].mxu0
      %v2231 = vpop.f32.mrb[0].mxu0
      %v2232 = vadd.f32 %v547, %v2231
      %v2233 = vpop.f32.mrb[0].mxu0
      %2234 = vmatprep.mubr.bf16.mxu0 %v1352
      %2235 = vmatmul.mubr.bf16.gmra.mrb[0].mxu0 %v1351
      %v2236 = vpop.f32.mrb[0].mxu0
      %v2237 = vadd.f32 %v547, %v2236
      %v2238 = vpop.f32.mrb[0].mxu0
      %v2239 = vpop.f32.mrb[0].mxu0
      %v2240 = vadd.f32 %v547, %v2239
      %v2241 = vpop.f32.mrb[0].mxu0
      %2242 = vmatprep.mubr.bf16.mxu0 %v1359
      %2243 = vmatmul.mubr.bf16.gmra.mrb[0].mxu0 %v1358
      %v2244 = vpop.f32.mrb[0].mxu0
      %v2245 = vadd.f32 %v547, %v2244
      %v2246 = vpop.f32.mrb[0].mxu0
      %v2247 = vpop.f32.mrb[0].mxu0
      %v2248 = vadd.f32 %v547, %v2247
      %v2249 = vpop.f32.mrb[0].mxu0
      %2250 = vmatprep.mubr.bf16.mxu0 %v1366
      %2251 = vmatmul.mubr.bf16.gmra.mrb[0].mxu0 %v1365
      %v2252 = vpop.f32.mrb[0].mxu0
      %v2253 = vadd.f32 %v547, %v2252
      %v2254 = vpop.f32.mrb[0].mxu0
      %v2255 = vpop.f32.mrb[0].mxu0
      %v2256 = vadd.f32 %v547, %v2255
      %v2257 = vpop.f32.mrb[0].mxu0
      %2258 = vmatprep.mubr.bf16.mxu0 %v1373
      %2259 = vmatmul.mubr.bf16.gmra.mrb[0].mxu0 %v1372
      %v2260 = vpop.f32.mrb[0].mxu0
      %v2261 = vadd.f32 %v547, %v2260
      %v2262 = vpop.f32.mrb[0].mxu0
      %v2263 = vpop.f32.mrb[0].mxu0
      %v2264 = vadd.f32 %v547, %v2263
      %v2265 = vpop.f32.mrb[0].mxu0
      %2266 = vmatprep.mubr.bf16.mxu0 %v1380
      %2267 = vmatmul.mubr.bf16.gmra.mrb[0].mxu0 %v1379
      %v2268 = vpop.f32.mrb[0].mxu0
      %v2269 = vadd.f32 %v547, %v2268
      %v2270 = vpop.f32.mrb[0].mxu0
      %v2271 = vpop.f32.mrb[0].mxu0
      %v2272 = vadd.f32 %v547, %v2271
      %v2273 = vpop.f32.mrb[0].mxu0
      %2274 = vmatprep.mubr.bf16.mxu0 %v1387
      %2275 = vmatmul.mubr.bf16.gmra.mrb[0].mxu0 %v1386
      %v2276 = vpop.f32.mrb[0].mxu0
      %v2277 = vadd.f32 %v547, %v2276
      %v2278 = vpop.f32.mrb[0].mxu0
      %v2279 = vpop.f32.mrb[0].mxu0
      %v2280 = vadd.f32 %v547, %v2279
      %v2281 = vpop.f32.mrb[0].mxu0
      %2282 = vmatprep.mubr.bf16.mxu0 %v1394
      %2283 = vmatmul.mubr.bf16.gmra.mrb[0].mxu0 %v1393
      %v2284 = vpop.f32.mrb[0].mxu0
      %v2285 = vadd.f32 %v547, %v2284
      %v2286 = vpop.f32.mrb[0].mxu0
      %v2287 = vpop.f32.mrb[0].mxu0
      %v2288 = vadd.f32 %v547, %v2287
      %v2289 = vpop.f32.mrb[0].mxu0
      %2290 = vmatprep.mubr.bf16.mxu0 %v1401
      %2291 = vmatmul.mubr.bf16.gmra.mrb[0].mxu0 %v1400
      %v2292 = vpop.f32.mrb[0].mxu0
      %v2293 = vadd.f32 %v547, %v2292
      %v2294 = vpop.f32.mrb[0].mxu0
      %v2295 = vpop.f32.mrb[0].mxu0
      %v2296 = vadd.f32 %v547, %v2295
      %v2297 = vpop.f32.mrb[0].mxu0
      %2298 = vmatprep.mubr.bf16.mxu0 %v1408
      %2299 = vmatmul.mubr.bf16.gmra.mrb[0].mxu0 %v1407
      %v2300 = vpop.f32.mrb[0].mxu0
      %v2301 = vadd.f32 %v547, %v2300
      %v2302 = vpop.f32.mrb[0].mxu0
      %v2303 = vpop.f32.mrb[0].mxu0
      %v2304 = vadd.f32 %v547, %v2303
      %v2305 = vpop.f32.mrb[0].mxu0
      %2306 = vmatprep.mubr.bf16.mxu0 %v1415
      %2307 = vmatmul.mubr.bf16.gmra.mrb[0].mxu0 %v1414
      %v2308 = vpop.f32.mrb[0].mxu0
      %v2309 = vadd.f32 %v547, %v2308
      %v2310 = vpop.f32.mrb[0].mxu0
      %v2311 = vpop.f32.mrb[0].mxu0
      %v2312 = vadd.f32 %v547, %v2311
      %v2313 = vpop.f32.mrb[0].mxu0
      %2314 = vmatprep.mubr.bf16.mxu0 %v1422
      %2315 = vmatmul.mubr.bf16.gmra.mrb[0].mxu0 %v1421
      %v2316 = vpop.f32.mrb[0].mxu0
      %v2317 = vadd.f32 %v547, %v2316
      %v2318 = vpop.f32.mrb[0].mxu0
      %v2319 = vpop.f32.mrb[0].mxu0
      %v2320 = vadd.f32 %v547, %v2319
      %v2321 = vpop.f32.mrb[0].mxu0
      %2322 = vmatprep.mubr.bf16.mxu0 %v1429
      %2323 = vmatmul.mubr.bf16.gmra.mrb[0].mxu0 %v1428
      %v2324 = vpop.f32.mrb[0].mxu0
      %v2325 = vadd.f32 %v547, %v2324
      %v2326 = vpop.f32.mrb[0].mxu0
      %v2327 = vpop.f32.mrb[0].mxu0
      %v2328 = vadd.f32 %v547, %v2327
      %v2329 = vpop.f32.mrb[0].mxu0
      %2330 = vmatprep.mubr.bf16.mxu0 %v1436
      %2331 = vmatmul.mubr.bf16.gmra.mrb[0].mxu0 %v1435
      %v2332 = vpop.f32.mrb[0].mxu0
      %v2333 = vadd.f32 %v547, %v2332
      %v2334 = vpop.f32.mrb[0].mxu0
      %v2335 = vpop.f32.mrb[0].mxu0
      %v2336 = vadd.f32 %v547, %v2335
      %v2337 = vpop.f32.mrb[0].mxu0
      %2338 = vmatprep.mubr.bf16.mxu0 %v1443
      %2339 = vmatmul.mubr.bf16.gmra.mrb[0].mxu0 %v1442
      %v2340 = vpop.f32.mrb[0].mxu0
      %v2341 = vadd.f32 %v547, %v2340
      %v2342 = vpop.f32.mrb[0].mxu0
      %v2343 = vpop.f32.mrb[0].mxu0
      %v2344 = vadd.f32 %v547, %v2343
      %v2345 = vpop.f32.mrb[0].mxu0
      %2346 = vmatprep.mubr.bf16.mxu0 %v1450
      %2347 = vmatmul.mubr.bf16.gmra.mrb[0].mxu0 %v1449
      %v2348 = vpop.f32.mrb[0].mxu0
      %v2349 = vadd.f32 %v547, %v2348
      %v2350 = vpop.f32.mrb[0].mxu0
      %v2351 = vpop.f32.mrb[0].mxu0
      %v2352 = vadd.f32 %v547, %v2351
      %v2353 = vpop.f32.mrb[0].mxu0
      %2354 = vmatprep.mubr.bf16.mxu0 %v1457
      %2355 = vmatmul.mubr.bf16.gmra.mrb[0].mxu0 %v1456
      %v2356 = vpop.f32.mrb[0].mxu0
      %v2357 = vadd.f32 %v547, %v2356
      %v2358 = vpop.f32.mrb[0].mxu0
      %v2359 = vpop.f32.mrb[0].mxu0
      %v2360 = vadd.f32 %v547, %v2359
      %v2361 = vpop.f32.mrb[0].mxu0
      %2362 = vmatprep.mubr.bf16.mxu0 %v1464
      %2363 = vmatmul.mubr.bf16.gmra.mrb[0].mxu0 %v1463
      %v2364 = vpop.f32.mrb[0].mxu0
      %v2365 = vadd.f32 %v547, %v2364
      %v2366 = vpop.f32.mrb[0].mxu0
      %v2367 = vpop.f32.mrb[0].mxu0
      %v2368 = vadd.f32 %v547, %v2367
      %v2369 = vpop.f32.mrb[0].mxu0
      %2370 = vmatprep.mubr.bf16.mxu0 %v1471
      %2371 = vmatmul.mubr.bf16.gmra.mrb[0].mxu0 %v1470
      %v2372 = vpop.f32.mrb[0].mxu0
      %v2373 = vadd.f32 %v547, %v2372
      %v2374 = vpop.f32.mrb[0].mxu0
      %v2375 = vpop.f32.mrb[0].mxu0
      %v2376 = vadd.f32 %v547, %v2375
      %v2377 = vpop.f32.mrb[0].mxu0
      %2378 = vdwg.mxu0
      %2379 = vmatprep.subr.bf16.mxu0 0
      %2380 = vmatpush1.bf16.msra.mxu0 %v1901
      %2381 = vmatprep.subr.bf16.mxu0 0
      %2382 = vmatpush1.bf16.msra.mxu0 %v1902
      %2383 = vmatprep.subr.bf16.mxu0 0
      %2384 = vmatpush1.bf16.msra.mxu0 %v1903
      %2385 = vmatprep.subr.bf16.mxu0 0
      %2386 = vmatpush1.bf16.msra.mxu0 %v1904
      %2387 = vmatprep.subr.bf16.mxu0 0
      %2388 = vmatpush1.bf16.msra.mxu0 %v1905
      %2389 = vmatprep.subr.bf16.mxu0 0
      %2390 = vmatpush1.bf16.msra.mxu0 %v1906
      %2391 = vmatprep.subr.bf16.mxu0 0
      %2392 = vmatpush1.bf16.msra.mxu0 %v1907
      %2393 = vmatprep.subr.bf16.mxu0 0
      %2394 = vmatpush1.bf16.msra.mxu0 %v1908
      %2395 = vmatprep.subr.bf16.mxu0 0
      %2396 = vmatpush1.bf16.msra.mxu0 %v1909
      %2397 = vmatprep.subr.bf16.mxu0 0
      %2398 = vmatpush1.bf16.msra.mxu0 %v1910
      %2399 = vmatprep.subr.bf16.mxu0 0
      %2400 = vmatpush1.bf16.msra.mxu0 %v1911
      %2401 = vmatprep.subr.bf16.mxu0 0
      %2402 = vmatpush1.bf16.msra.mxu0 %v1912
      %2403 = vmatprep.subr.bf16.mxu0 0
      %2404 = vmatpush1.bf16.msra.mxu0 %v1913
      %2405 = vmatprep.subr.bf16.mxu0 0
      %2406 = vmatpush1.bf16.msra.mxu0 %v1914
      %2407 = vmatprep.subr.bf16.mxu0 0
      %2408 = vmatpush1.bf16.msra.mxu0 %v1915
      %2409 = vmatprep.subr.bf16.mxu0 0
      %2410 = vmatpush1.bf16.msra.mxu0 %v1916
      %2411 = vmatprep.mubr.bf16.mxu0 %v1256
      %2412 = vmatmul.mubr.bf16.gmra.mrb[0].mxu0 %v1255
      %v2413 = vpop.f32.mrb[0].mxu0
      %v2414 = vadd.f32 %v2125, %v2413
      %v2415 = vpop.f32.mrb[0].mxu0
      %v2416 = vpop.f32.mrb[0].mxu0
      %v2417 = vadd.f32 %v2128, %v2416
      %v2418 = vpop.f32.mrb[0].mxu0
      %2419 = vmatprep.mubr.bf16.mxu0 %v1263
      %2420 = vmatmul.mubr.bf16.gmra.mrb[0].mxu0 %v1262
      %v2421 = vpop.f32.mrb[0].mxu0
      %v2422 = vadd.f32 %v2133, %v2421
      %v2423 = vpop.f32.mrb[0].mxu0
      %v2424 = vpop.f32.mrb[0].mxu0
      %v2425 = vadd.f32 %v2136, %v2424
      %v2426 = vpop.f32.mrb[0].mxu0
      %2427 = vmatprep.mubr.bf16.mxu0 %v1270
      %2428 = vmatmul.mubr.bf16.gmra.mrb[0].mxu0 %v1269
      %v2429 = vpop.f32.mrb[0].mxu0
      %v2430 = vadd.f32 %v2141, %v2429
      %v2431 = vpop.f32.mrb[0].mxu0
      %v2432 = vpop.f32.mrb[0].mxu0
      %v2433 = vadd.f32 %v2144, %v2432
      %v2434 = vpop.f32.mrb[0].mxu0
      %2435 = vmatprep.mubr.bf16.mxu0 %v1277
      %2436 = vmatmul.mubr.bf16.gmra.mrb[0].mxu0 %v1276
      %v2437 = vpop.f32.mrb[0].mxu0
      %v2438 = vadd.f32 %v2149, %v2437
      %v2439 = vpop.f32.mrb[0].mxu0
      %v2440 = vpop.f32.mrb[0].mxu0
      %v2441 = vadd.f32 %v2152, %v2440
      %v2442 = vpop.f32.mrb[0].mxu0
      %2443 = vmatprep.mubr.bf16.mxu0 %v1284
      %2444 = vmatmul.mubr.bf16.gmra.mrb[0].mxu0 %v1283
      %v2445 = vpop.f32.mrb[0].mxu0
      %v2446 = vadd.f32 %v2157, %v2445
      %v2447 = vpop.f32.mrb[0].mxu0
      %v2448 = vpop.f32.mrb[0].mxu0
      %v2449 = vadd.f32 %v2160, %v2448
      %v2450 = vpop.f32.mrb[0].mxu0
      %2451 = vmatprep.mubr.bf16.mxu0 %v1291
      %2452 = vmatmul.mubr.bf16.gmra.mrb[0].mxu0 %v1290
      %v2453 = vpop.f32.mrb[0].mxu0
      %v2454 = vadd.f32 %v2165, %v2453
      %v2455 = vpop.f32.mrb[0].mxu0
      %v2456 = vpop.f32.mrb[0].mxu0
      %v2457 = vadd.f32 %v2168, %v2456
      %v2458 = vpop.f32.mrb[0].mxu0
      %2459 = vmatprep.mubr.bf16.mxu0 %v1298
      %2460 = vmatmul.mubr.bf16.gmra.mrb[0].mxu0 %v1297
      %v2461 = vpop.f32.mrb[0].mxu0
      %v2462 = vadd.f32 %v2173, %v2461
      %v2463 = vpop.f32.mrb[0].mxu0
      %v2464 = vpop.f32.mrb[0].mxu0
      %v2465 = vadd.f32 %v2176, %v2464
      %v2466 = vpop.f32.mrb[0].mxu0
      %2467 = vmatprep.mubr.bf16.mxu0 %v1305
      %2468 = vmatmul.mubr.bf16.gmra.mrb[0].mxu0 %v1304
      %v2469 = vpop.f32.mrb[0].mxu0
      %v2470 = vadd.f32 %v2181, %v2469
      %v2471 = vpop.f32.mrb[0].mxu0
      %v2472 = vpop.f32.mrb[0].mxu0
      %v2473 = vadd.f32 %v2184, %v2472
      %v2474 = vpop.f32.mrb[0].mxu0
      %2475 = vmatprep.mubr.bf16.mxu0 %v1312
      %2476 = vmatmul.mubr.bf16.gmra.mrb[0].mxu0 %v1311
      %v2477 = vpop.f32.mrb[0].mxu0
      %v2478 = vadd.f32 %v2189, %v2477
      %v2479 = vpop.f32.mrb[0].mxu0
      %v2480 = vpop.f32.mrb[0].mxu0
      %v2481 = vadd.f32 %v2192, %v2480
      %v2482 = vpop.f32.mrb[0].mxu0
      %2483 = vmatprep.mubr.bf16.mxu0 %v1319
      %2484 = vmatmul.mubr.bf16.gmra.mrb[0].mxu0 %v1318
      %v2485 = vpop.f32.mrb[0].mxu0
      %v2486 = vadd.f32 %v2197, %v2485
      %v2487 = vpop.f32.mrb[0].mxu0
      %v2488 = vpop.f32.mrb[0].mxu0
      %v2489 = vadd.f32 %v2200, %v2488
      %v2490 = vpop.f32.mrb[0].mxu0
      %2491 = vmatprep.mubr.bf16.mxu0 %v1326
      %2492 = vmatmul.mubr.bf16.gmra.mrb[0].mxu0 %v1325
      %v2493 = vpop.f32.mrb[0].mxu0
      %v2494 = vadd.f32 %v2205, %v2493
      %v2495 = vpop.f32.mrb[0].mxu0
      %v2496 = vpop.f32.mrb[0].mxu0
      %v2497 = vadd.f32 %v2208, %v2496
      %v2498 = vpop.f32.mrb[0].mxu0
      %2499 = vmatprep.mubr.bf16.mxu0 %v1333
      %2500 = vmatmul.mubr.bf16.gmra.mrb[0].mxu0 %v1332
      %v2501 = vpop.f32.mrb[0].mxu0
      %v2502 = vadd.f32 %v2213, %v2501
      %v2503 = vpop.f32.mrb[0].mxu0
      %v2504 = vpop.f32.mrb[0].mxu0
      %v2505 = vadd.f32 %v2216, %v2504
      %v2506 = vpop.f32.mrb[0].mxu0
      %2507 = vmatprep.mubr.bf16.mxu0 %v1340
      %2508 = vmatmul.mubr.bf16.gmra.mrb[0].mxu0 %v1339
      %v2509 = vpop.f32.mrb[0].mxu0
      %v2510 = vadd.f32 %v2221, %v2509
      %v2511 = vpop.f32.mrb[0].mxu0
      %v2512 = vpop.f32.mrb[0].mxu0
      %v2513 = vadd.f32 %v2224, %v2512
      %v2514 = vpop.f32.mrb[0].mxu0
      %2515 = vmatprep.mubr.bf16.mxu0 %v1347
      %2516 = vmatmul.mubr.bf16.gmra.mrb[0].mxu0 %v1346
      %v2517 = vpop.f32.mrb[0].mxu0
      %v2518 = vadd.f32 %v2229, %v2517
      %v2519 = vpop.f32.mrb[0].mxu0
      %v2520 = vpop.f32.mrb[0].mxu0
      %v2521 = vadd.f32 %v2232, %v2520
      %v2522 = vpop.f32.mrb[0].mxu0
      %2523 = vmatprep.mubr.bf16.mxu0 %v1354
      %2524 = vmatmul.mubr.bf16.gmra.mrb[0].mxu0 %v1353
      %v2525 = vpop.f32.mrb[0].mxu0
      %v2526 = vadd.f32 %v2237, %v2525
      %v2527 = vpop.f32.mrb[0].mxu0
      %v2528 = vpop.f32.mrb[0].mxu0
      %v2529 = vadd.f32 %v2240, %v2528
      %v2530 = vpop.f32.mrb[0].mxu0
      %2531 = vmatprep.mubr.bf16.mxu0 %v1361
      %2532 = vmatmul.mubr.bf16.gmra.mrb[0].mxu0 %v1360
      %v2533 = vpop.f32.mrb[0].mxu0
      %v2534 = vadd.f32 %v2245, %v2533
      %v2535 = vpop.f32.mrb[0].mxu0
      %v2536 = vpop.f32.mrb[0].mxu0
      %v2537 = vadd.f32 %v2248, %v2536
      %v2538 = vpop.f32.mrb[0].mxu0
      %2539 = vmatprep.mubr.bf16.mxu0 %v1368
      %2540 = vmatmul.mubr.bf16.gmra.mrb[0].mxu0 %v1367
      %v2541 = vpop.f32.mrb[0].mxu0
      %v2542 = vadd.f32 %v2253, %v2541
      %v2543 = vpop.f32.mrb[0].mxu0
      %v2544 = vpop.f32.mrb[0].mxu0
      %v2545 = vadd.f32 %v2256, %v2544
      %v2546 = vpop.f32.mrb[0].mxu0
      %2547 = vmatprep.mubr.bf16.mxu0 %v1375
      %2548 = vmatmul.mubr.bf16.gmra.mrb[0].mxu0 %v1374
      %v2549 = vpop.f32.mrb[0].mxu0
      %v2550 = vadd.f32 %v2261, %v2549
      %v2551 = vpop.f32.mrb[0].mxu0
      %v2552 = vpop.f32.mrb[0].mxu0
      %v2553 = vadd.f32 %v2264, %v2552
      %v2554 = vpop.f32.mrb[0].mxu0
      %2555 = vmatprep.mubr.bf16.mxu0 %v1382
      %2556 = vmatmul.mubr.bf16.gmra.mrb[0].mxu0 %v1381
      %v2557 = vpop.f32.mrb[0].mxu0
      %v2558 = vadd.f32 %v2269, %v2557
      %v2559 = vpop.f32.mrb[0].mxu0
      %v2560 = vpop.f32.mrb[0].mxu0
      %v2561 = vadd.f32 %v2272, %v2560
      %v2562 = vpop.f32.mrb[0].mxu0
      %2563 = vmatprep.mubr.bf16.mxu0 %v1389
      %2564 = vmatmul.mubr.bf16.gmra.mrb[0].mxu0 %v1388
      %v2565 = vpop.f32.mrb[0].mxu0
      %v2566 = vadd.f32 %v2277, %v2565
      %v2567 = vpop.f32.mrb[0].mxu0
      %v2568 = vpop.f32.mrb[0].mxu0
      %v2569 = vadd.f32 %v2280, %v2568
      %v2570 = vpop.f32.mrb[0].mxu0
      %2571 = vmatprep.mubr.bf16.mxu0 %v1396
      %2572 = vmatmul.mubr.bf16.gmra.mrb[0].mxu0 %v1395
      %v2573 = vpop.f32.mrb[0].mxu0
      %v2574 = vadd.f32 %v2285, %v2573
      %v2575 = vpop.f32.mrb[0].mxu0
      %v2576 = vpop.f32.mrb[0].mxu0
      %v2577 = vadd.f32 %v2288, %v2576
      %v2578 = vpop.f32.mrb[0].mxu0
      %2579 = vmatprep.mubr.bf16.mxu0 %v1403
      %2580 = vmatmul.mubr.bf16.gmra.mrb[0].mxu0 %v1402
      %v2581 = vpop.f32.mrb[0].mxu0
      %v2582 = vadd.f32 %v2293, %v2581
      %v2583 = vpop.f32.mrb[0].mxu0
      %v2584 = vpop.f32.mrb[0].mxu0
      %v2585 = vadd.f32 %v2296, %v2584
      %v2586 = vpop.f32.mrb[0].mxu0
      %2587 = vmatprep.mubr.bf16.mxu0 %v1410
      %2588 = vmatmul.mubr.bf16.gmra.mrb[0].mxu0 %v1409
      %v2589 = vpop.f32.mrb[0].mxu0
      %v2590 = vadd.f32 %v2301, %v2589
      %v2591 = vpop.f32.mrb[0].mxu0
      %v2592 = vpop.f32.mrb[0].mxu0
      %v2593 = vadd.f32 %v2304, %v2592
      %v2594 = vpop.f32.mrb[0].mxu0
      %2595 = vmatprep.mubr.bf16.mxu0 %v1417
      %2596 = vmatmul.mubr.bf16.gmra.mrb[0].mxu0 %v1416
      %v2597 = vpop.f32.mrb[0].mxu0
      %v2598 = vadd.f32 %v2309, %v2597
      %v2599 = vpop.f32.mrb[0].mxu0
      %v2600 = vpop.f32.mrb[0].mxu0
      %v2601 = vadd.f32 %v2312, %v2600
      %v2602 = vpop.f32.mrb[0].mxu0
      %2603 = vmatprep.mubr.bf16.mxu0 %v1424
      %2604 = vmatmul.mubr.bf16.gmra.mrb[0].mxu0 %v1423
      %v2605 = vpop.f32.mrb[0].mxu0
      %v2606 = vadd.f32 %v2317, %v2605
      %v2607 = vpop.f32.mrb[0].mxu0
      %v2608 = vpop.f32.mrb[0].mxu0
      %v2609 = vadd.f32 %v2320, %v2608
      %v2610 = vpop.f32.mrb[0].mxu0
      %2611 = vmatprep.mubr.bf16.mxu0 %v1431
      %2612 = vmatmul.mubr.bf16.gmra.mrb[0].mxu0 %v1430
      %v2613 = vpop.f32.mrb[0].mxu0
      %v2614 = vadd.f32 %v2325, %v2613
      %v2615 = vpop.f32.mrb[0].mxu0
      %v2616 = vpop.f32.mrb[0].mxu0
      %v2617 = vadd.f32 %v2328, %v2616
      %v2618 = vpop.f32.mrb[0].mxu0
      %2619 = vmatprep.mubr.bf16.mxu0 %v1438
      %2620 = vmatmul.mubr.bf16.gmra.mrb[0].mxu0 %v1437
      %v2621 = vpop.f32.mrb[0].mxu0
      %v2622 = vadd.f32 %v2333, %v2621
      %v2623 = vpop.f32.mrb[0].mxu0
      %v2624 = vpop.f32.mrb[0].mxu0
      %v2625 = vadd.f32 %v2336, %v2624
      %v2626 = vpop.f32.mrb[0].mxu0
      %2627 = vmatprep.mubr.bf16.mxu0 %v1445
      %2628 = vmatmul.mubr.bf16.gmra.mrb[0].mxu0 %v1444
      %v2629 = vpop.f32.mrb[0].mxu0
      %v2630 = vadd.f32 %v2341, %v2629
      %v2631 = vpop.f32.mrb[0].mxu0
      %v2632 = vpop.f32.mrb[0].mxu0
      %v2633 = vadd.f32 %v2344, %v2632
      %v2634 = vpop.f32.mrb[0].mxu0
      %2635 = vmatprep.mubr.bf16.mxu0 %v1452
      %2636 = vmatmul.mubr.bf16.gmra.mrb[0].mxu0 %v1451
      %v2637 = vpop.f32.mrb[0].mxu0
      %v2638 = vadd.f32 %v2349, %v2637
      %v2639 = vpop.f32.mrb[0].mxu0
      %v2640 = vpop.f32.mrb[0].mxu0
      %v2641 = vadd.f32 %v2352, %v2640
      %v2642 = vpop.f32.mrb[0].mxu0
      %2643 = vmatprep.mubr.bf16.mxu0 %v1459
      %2644 = vmatmul.mubr.bf16.gmra.mrb[0].mxu0 %v1458
      %v2645 = vpop.f32.mrb[0].mxu0
      %v2646 = vadd.f32 %v2357, %v2645
      %v2647 = vpop.f32.mrb[0].mxu0
      %v2648 = vpop.f32.mrb[0].mxu0
      %v2649 = vadd.f32 %v2360, %v2648
      %v2650 = vpop.f32.mrb[0].mxu0
      %2651 = vmatprep.mubr.bf16.mxu0 %v1466
      %2652 = vmatmul.mubr.bf16.gmra.mrb[0].mxu0 %v1465
      %v2653 = vpop.f32.mrb[0].mxu0
      %v2654 = vadd.f32 %v2365, %v2653
      %v2655 = vpop.f32.mrb[0].mxu0
      %v2656 = vpop.f32.mrb[0].mxu0
      %v2657 = vadd.f32 %v2368, %v2656
      %v2658 = vpop.f32.mrb[0].mxu0
      %2659 = vmatprep.mubr.bf16.mxu0 %v1473
      %2660 = vmatmul.mubr.bf16.gmra.mrb[0].mxu0 %v1472
      %v2661 = vpop.f32.mrb[0].mxu0
      %v2662 = vadd.f32 %v2373, %v2661
      %v2663 = vpop.f32.mrb[0].mxu0
      %v2664 = vpop.f32.mrb[0].mxu0
      %v2665 = vadd.f32 %v2376, %v2664
      %v2666 = vpop.f32.mrb[0].mxu0
      %2667 = vdwg.mxu0
      %2668 = vmatprep.subr.bf16.mxu0 0
      %2669 = vmatpush1.bf16.msra.mxu0 %v1917
      %2670 = vmatprep.subr.bf16.mxu0 0
      %2671 = vmatpush1.bf16.msra.mxu0 %v1918
      %2672 = vmatprep.subr.bf16.mxu0 0
      %2673 = vmatpush1.bf16.msra.mxu0 %v1919
      %2674 = vmatprep.subr.bf16.mxu0 0
      %2675 = vmatpush1.bf16.msra.mxu0 %v1920
      %2676 = vmatprep.subr.bf16.mxu0 0
      %2677 = vmatpush1.bf16.msra.mxu0 %v1921
      %2678 = vmatprep.subr.bf16.mxu0 0
      %2679 = vmatpush1.bf16.msra.mxu0 %v1922
      %2680 = vmatprep.subr.bf16.mxu0 0
      %2681 = vmatpush1.bf16.msra.mxu0 %v1923
      %2682 = vmatprep.subr.bf16.mxu0 0
      %2683 = vmatpush1.bf16.msra.mxu0 %v1924
      %2684 = vmatprep.subr.bf16.mxu0 0
      %2685 = vmatpush1.bf16.msra.mxu0 %v1925
      %2686 = vmatprep.subr.bf16.mxu0 0
      %2687 = vmatpush1.bf16.msra.mxu0 %v1926
      %2688 = vmatprep.subr.bf16.mxu0 0
      %2689 = vmatpush1.bf16.msra.mxu0 %v1927
      %2690 = vmatprep.subr.bf16.mxu0 0
      %2691 = vmatpush1.bf16.msra.mxu0 %v1928
      %2692 = vmatprep.subr.bf16.mxu0 0
      %2693 = vmatpush1.bf16.msra.mxu0 %v1929
      %2694 = vmatprep.subr.bf16.mxu0 0
      %2695 = vmatpush1.bf16.msra.mxu0 %v1930
      %2696 = vmatprep.subr.bf16.mxu0 0
      %2697 = vmatpush1.bf16.msra.mxu0 %v1931
      %2698 = vmatprep.subr.bf16.mxu0 0
      %2699 = vmatpush1.bf16.msra.mxu0 %v1932
      %2700 = vmatprep.mubr.bf16.mxu0 %v1258
      %2701 = vmatmul.mubr.bf16.gmra.mrb[0].mxu0 %v1257
      %v2702 = vpop.f32.mrb[0].mxu0
      %v2703 = vadd.f32 %v2414, %v2702
      %v2704 = vpop.f32.mrb[0].mxu0
      %v2705 = vpop.f32.mrb[0].mxu0
      %v2706 = vadd.f32 %v2417, %v2705
      %v2707 = vpop.f32.mrb[0].mxu0
      %2708 = vmatprep.mubr.bf16.mxu0 %v1265
      %2709 = vmatmul.mubr.bf16.gmra.mrb[0].mxu0 %v1264
      %v2710 = vpop.f32.mrb[0].mxu0
      %v2711 = vadd.f32 %v2422, %v2710
      %v2712 = vpop.f32.mrb[0].mxu0
      %v2713 = vpop.f32.mrb[0].mxu0
      %v2714 = vadd.f32 %v2425, %v2713
      %v2715 = vpop.f32.mrb[0].mxu0
      %2716 = vmatprep.mubr.bf16.mxu0 %v1272
      %2717 = vmatmul.mubr.bf16.gmra.mrb[0].mxu0 %v1271
      %v2718 = vpop.f32.mrb[0].mxu0
      %v2719 = vadd.f32 %v2430, %v2718
      %v2720 = vpop.f32.mrb[0].mxu0
      %v2721 = vpop.f32.mrb[0].mxu0
      %v2722 = vadd.f32 %v2433, %v2721
      %v2723 = vpop.f32.mrb[0].mxu0
      %2724 = vmatprep.mubr.bf16.mxu0 %v1279
      %2725 = vmatmul.mubr.bf16.gmra.mrb[0].mxu0 %v1278
      %v2726 = vpop.f32.mrb[0].mxu0
      %v2727 = vadd.f32 %v2438, %v2726
      %v2728 = vpop.f32.mrb[0].mxu0
      %v2729 = vpop.f32.mrb[0].mxu0
      %v2730 = vadd.f32 %v2441, %v2729
      %v2731 = vpop.f32.mrb[0].mxu0
      %2732 = vmatprep.mubr.bf16.mxu0 %v1286
      %2733 = vmatmul.mubr.bf16.gmra.mrb[0].mxu0 %v1285
      %v2734 = vpop.f32.mrb[0].mxu0
      %v2735 = vadd.f32 %v2446, %v2734
      %v2736 = vpop.f32.mrb[0].mxu0
      %v2737 = vpop.f32.mrb[0].mxu0
      %v2738 = vadd.f32 %v2449, %v2737
      %v2739 = vpop.f32.mrb[0].mxu0
      %2740 = vmatprep.mubr.bf16.mxu0 %v1293
      %2741 = vmatmul.mubr.bf16.gmra.mrb[0].mxu0 %v1292
      %v2742 = vpop.f32.mrb[0].mxu0
      %v2743 = vadd.f32 %v2454, %v2742
      %v2744 = vpop.f32.mrb[0].mxu0
      %v2745 = vpop.f32.mrb[0].mxu0
      %v2746 = vadd.f32 %v2457, %v2745
      %v2747 = vpop.f32.mrb[0].mxu0
      %2748 = vmatprep.mubr.bf16.mxu0 %v1300
      %2749 = vmatmul.mubr.bf16.gmra.mrb[0].mxu0 %v1299
      %v2750 = vpop.f32.mrb[0].mxu0
      %v2751 = vadd.f32 %v2462, %v2750
      %v2752 = vpop.f32.mrb[0].mxu0
      %v2753 = vpop.f32.mrb[0].mxu0
      %v2754 = vadd.f32 %v2465, %v2753
      %v2755 = vpop.f32.mrb[0].mxu0
      %2756 = vmatprep.mubr.bf16.mxu0 %v1307
      %2757 = vmatmul.mubr.bf16.gmra.mrb[0].mxu0 %v1306
      %v2758 = vpop.f32.mrb[0].mxu0
      %v2759 = vadd.f32 %v2470, %v2758
      %v2760 = vpop.f32.mrb[0].mxu0
      %v2761 = vpop.f32.mrb[0].mxu0
      %v2762 = vadd.f32 %v2473, %v2761
      %v2763 = vpop.f32.mrb[0].mxu0
      %2764 = vmatprep.mubr.bf16.mxu0 %v1314
      %2765 = vmatmul.mubr.bf16.gmra.mrb[0].mxu0 %v1313
      %v2766 = vpop.f32.mrb[0].mxu0
      %v2767 = vadd.f32 %v2478, %v2766
      %v2768 = vpop.f32.mrb[0].mxu0
      %v2769 = vpop.f32.mrb[0].mxu0
      %v2770 = vadd.f32 %v2481, %v2769
      %v2771 = vpop.f32.mrb[0].mxu0
      %2772 = vmatprep.mubr.bf16.mxu0 %v1321
      %2773 = vmatmul.mubr.bf16.gmra.mrb[0].mxu0 %v1320
      %v2774 = vpop.f32.mrb[0].mxu0
      %v2775 = vadd.f32 %v2486, %v2774
      %v2776 = vpop.f32.mrb[0].mxu0
      %v2777 = vpop.f32.mrb[0].mxu0
      %v2778 = vadd.f32 %v2489, %v2777
      %v2779 = vpop.f32.mrb[0].mxu0
      %2780 = vmatprep.mubr.bf16.mxu0 %v1328
      %2781 = vmatmul.mubr.bf16.gmra.mrb[0].mxu0 %v1327
      %v2782 = vpop.f32.mrb[0].mxu0
      %v2783 = vadd.f32 %v2494, %v2782
      %v2784 = vpop.f32.mrb[0].mxu0
      %v2785 = vpop.f32.mrb[0].mxu0
      %v2786 = vadd.f32 %v2497, %v2785
      %v2787 = vpop.f32.mrb[0].mxu0
      %2788 = vmatprep.mubr.bf16.mxu0 %v1335
      %2789 = vmatmul.mubr.bf16.gmra.mrb[0].mxu0 %v1334
      %v2790 = vpop.f32.mrb[0].mxu0
      %v2791 = vadd.f32 %v2502, %v2790
      %v2792 = vpop.f32.mrb[0].mxu0
      %v2793 = vpop.f32.mrb[0].mxu0
      %v2794 = vadd.f32 %v2505, %v2793
      %v2795 = vpop.f32.mrb[0].mxu0
      %2796 = vmatprep.mubr.bf16.mxu0 %v1342
      %2797 = vmatmul.mubr.bf16.gmra.mrb[0].mxu0 %v1341
      %v2798 = vpop.f32.mrb[0].mxu0
      %v2799 = vadd.f32 %v2510, %v2798
      %v2800 = vpop.f32.mrb[0].mxu0
      %v2801 = vpop.f32.mrb[0].mxu0
      %v2802 = vadd.f32 %v2513, %v2801
      %v2803 = vpop.f32.mrb[0].mxu0
      %2804 = vmatprep.mubr.bf16.mxu0 %v1349
      %2805 = vmatmul.mubr.bf16.gmra.mrb[0].mxu0 %v1348
      %v2806 = vpop.f32.mrb[0].mxu0
      %v2807 = vadd.f32 %v2518, %v2806
      %v2808 = vpop.f32.mrb[0].mxu0
      %v2809 = vpop.f32.mrb[0].mxu0
      %v2810 = vadd.f32 %v2521, %v2809
      %v2811 = vpop.f32.mrb[0].mxu0
      %2812 = vmatprep.mubr.bf16.mxu0 %v1356
      %2813 = vmatmul.mubr.bf16.gmra.mrb[0].mxu0 %v1355
      %v2814 = vpop.f32.mrb[0].mxu0
      %v2815 = vadd.f32 %v2526, %v2814
      %v2816 = vpop.f32.mrb[0].mxu0
      %v2817 = vpop.f32.mrb[0].mxu0
      %v2818 = vadd.f32 %v2529, %v2817
      %v2819 = vpop.f32.mrb[0].mxu0
      %2820 = vmatprep.mubr.bf16.mxu0 %v1363
      %2821 = vmatmul.mubr.bf16.gmra.mrb[0].mxu0 %v1362
      %v2822 = vpop.f32.mrb[0].mxu0
      %v2823 = vadd.f32 %v2534, %v2822
      %v2824 = vpop.f32.mrb[0].mxu0
      %v2825 = vpop.f32.mrb[0].mxu0
      %v2826 = vadd.f32 %v2537, %v2825
      %v2827 = vpop.f32.mrb[0].mxu0
      %2828 = vmatprep.mubr.bf16.mxu0 %v1370
      %2829 = vmatmul.mubr.bf16.gmra.mrb[0].mxu0 %v1369
      %v2830 = vpop.f32.mrb[0].mxu0
      %v2831 = vadd.f32 %v2542, %v2830
      %v2832 = vpop.f32.mrb[0].mxu0
      %v2833 = vpop.f32.mrb[0].mxu0
      %v2834 = vadd.f32 %v2545, %v2833
      %v2835 = vpop.f32.mrb[0].mxu0
      %2836 = vmatprep.mubr.bf16.mxu0 %v1377
      %2837 = vmatmul.mubr.bf16.gmra.mrb[0].mxu0 %v1376
      %v2838 = vpop.f32.mrb[0].mxu0
      %v2839 = vadd.f32 %v2550, %v2838
      %v2840 = vpop.f32.mrb[0].mxu0
      %v2841 = vpop.f32.mrb[0].mxu0
      %v2842 = vadd.f32 %v2553, %v2841
      %v2843 = vpop.f32.mrb[0].mxu0
      %2844 = vmatprep.mubr.bf16.mxu0 %v1384
      %2845 = vmatmul.mubr.bf16.gmra.mrb[0].mxu0 %v1383
      %v2846 = vpop.f32.mrb[0].mxu0
      %v2847 = vadd.f32 %v2558, %v2846
      %v2848 = vpop.f32.mrb[0].mxu0
      %v2849 = vpop.f32.mrb[0].mxu0
      %v2850 = vadd.f32 %v2561, %v2849
      %v2851 = vpop.f32.mrb[0].mxu0
      %2852 = vmatprep.mubr.bf16.mxu0 %v1391
      %2853 = vmatmul.mubr.bf16.gmra.mrb[0].mxu0 %v1390
      %v2854 = vpop.f32.mrb[0].mxu0
      %v2855 = vadd.f32 %v2566, %v2854
      %v2856 = vpop.f32.mrb[0].mxu0
      %v2857 = vpop.f32.mrb[0].mxu0
      %v2858 = vadd.f32 %v2569, %v2857
      %v2859 = vpop.f32.mrb[0].mxu0
      %2860 = vmatprep.mubr.bf16.mxu0 %v1398
      %2861 = vmatmul.mubr.bf16.gmra.mrb[0].mxu0 %v1397
      %v2862 = vpop.f32.mrb[0].mxu0
      %v2863 = vadd.f32 %v2574, %v2862
      %v2864 = vpop.f32.mrb[0].mxu0
      %v2865 = vpop.f32.mrb[0].mxu0
      %v2866 = vadd.f32 %v2577, %v2865
      %v2867 = vpop.f32.mrb[0].mxu0
      %2868 = vmatprep.mubr.bf16.mxu0 %v1405
      %2869 = vmatmul.mubr.bf16.gmra.mrb[0].mxu0 %v1404
      %v2870 = vpop.f32.mrb[0].mxu0
      %v2871 = vadd.f32 %v2582, %v2870
      %v2872 = vpop.f32.mrb[0].mxu0
      %v2873 = vpop.f32.mrb[0].mxu0
      %v2874 = vadd.f32 %v2585, %v2873
      %v2875 = vpop.f32.mrb[0].mxu0
      %2876 = vmatprep.mubr.bf16.mxu0 %v1412
      %2877 = vmatmul.mubr.bf16.gmra.mrb[0].mxu0 %v1411
      %v2878 = vpop.f32.mrb[0].mxu0
      %v2879 = vadd.f32 %v2590, %v2878
      %v2880 = vpop.f32.mrb[0].mxu0
      %v2881 = vpop.f32.mrb[0].mxu0
      %v2882 = vadd.f32 %v2593, %v2881
      %v2883 = vpop.f32.mrb[0].mxu0
      %2884 = vmatprep.mubr.bf16.mxu0 %v1419
      %2885 = vmatmul.mubr.bf16.gmra.mrb[0].mxu0 %v1418
      %v2886 = vpop.f32.mrb[0].mxu0
      %v2887 = vadd.f32 %v2598, %v2886
      %v2888 = vpop.f32.mrb[0].mxu0
      %v2889 = vpop.f32.mrb[0].mxu0
      %v2890 = vadd.f32 %v2601, %v2889
      %v2891 = vpop.f32.mrb[0].mxu0
      %2892 = vmatprep.mubr.bf16.mxu0 %v1426
      %2893 = vmatmul.mubr.bf16.gmra.mrb[0].mxu0 %v1425
      %v2894 = vpop.f32.mrb[0].mxu0
      %v2895 = vadd.f32 %v2606, %v2894
      %v2896 = vpop.f32.mrb[0].mxu0
      %v2897 = vpop.f32.mrb[0].mxu0
      %v2898 = vadd.f32 %v2609, %v2897
      %v2899 = vpop.f32.mrb[0].mxu0
      %2900 = vmatprep.mubr.bf16.mxu0 %v1433
      %2901 = vmatmul.mubr.bf16.gmra.mrb[0].mxu0 %v1432
      %v2902 = vpop.f32.mrb[0].mxu0
      %v2903 = vadd.f32 %v2614, %v2902
      %v2904 = vpop.f32.mrb[0].mxu0
      %v2905 = vpop.f32.mrb[0].mxu0
      %v2906 = vadd.f32 %v2617, %v2905
      %v2907 = vpop.f32.mrb[0].mxu0
      %2908 = vmatprep.mubr.bf16.mxu0 %v1440
      %2909 = vmatmul.mubr.bf16.gmra.mrb[0].mxu0 %v1439
      %v2910 = vpop.f32.mrb[0].mxu0
      %v2911 = vadd.f32 %v2622, %v2910
      %v2912 = vpop.f32.mrb[0].mxu0
      %v2913 = vpop.f32.mrb[0].mxu0
      %v2914 = vadd.f32 %v2625, %v2913
      %v2915 = vpop.f32.mrb[0].mxu0
      %2916 = vmatprep.mubr.bf16.mxu0 %v1447
      %2917 = vmatmul.mubr.bf16.gmra.mrb[0].mxu0 %v1446
      %v2918 = vpop.f32.mrb[0].mxu0
      %v2919 = vadd.f32 %v2630, %v2918
      %v2920 = vpop.f32.mrb[0].mxu0
      %v2921 = vpop.f32.mrb[0].mxu0
      %v2922 = vadd.f32 %v2633, %v2921
      %v2923 = vpop.f32.mrb[0].mxu0
      %2924 = vmatprep.mubr.bf16.mxu0 %v1454
      %2925 = vmatmul.mubr.bf16.gmra.mrb[0].mxu0 %v1453
      %v2926 = vpop.f32.mrb[0].mxu0
      %v2927 = vadd.f32 %v2638, %v2926
      %v2928 = vpop.f32.mrb[0].mxu0
      %v2929 = vpop.f32.mrb[0].mxu0
      %v2930 = vadd.f32 %v2641, %v2929
      %v2931 = vpop.f32.mrb[0].mxu0
      %2932 = vmatprep.mubr.bf16.mxu0 %v1461
      %2933 = vmatmul.mubr.bf16.gmra.mrb[0].mxu0 %v1460
      %v2934 = vpop.f32.mrb[0].mxu0
      %v2935 = vadd.f32 %v2646, %v2934
      %v2936 = vpop.f32.mrb[0].mxu0
      %v2937 = vpop.f32.mrb[0].mxu0
      %v2938 = vadd.f32 %v2649, %v2937
      %v2939 = vpop.f32.mrb[0].mxu0
      %2940 = vmatprep.mubr.bf16.mxu0 %v1468
      %2941 = vmatmul.mubr.bf16.gmra.mrb[0].mxu0 %v1467
      %v2942 = vpop.f32.mrb[0].mxu0
      %v2943 = vadd.f32 %v2654, %v2942
      %v2944 = vpop.f32.mrb[0].mxu0
      %v2945 = vpop.f32.mrb[0].mxu0
      %v2946 = vadd.f32 %v2657, %v2945
      %v2947 = vpop.f32.mrb[0].mxu0
      %2948 = vmatprep.mubr.bf16.mxu0 %v1475
      %2949 = vmatmul.mubr.bf16.gmra.mrb[0].mxu0 %v1474
      %v2950 = vpop.f32.mrb[0].mxu0
      %v2951 = vadd.f32 %v2662, %v2950
      %v2952 = vpop.f32.mrb[0].mxu0
      %v2953 = vpop.f32.mrb[0].mxu0
      %v2954 = vadd.f32 %v2665, %v2953
      %v2955 = vpop.f32.mrb[0].mxu0
      %2956 = vdwg.mxu0
      %2957 = vmatprep.subr.bf16.mxu0 0
      %2958 = vmatpush1.bf16.msra.mxu0 %v1933
      %2959 = vmatprep.subr.bf16.mxu0 0
      %2960 = vmatpush1.bf16.msra.mxu0 %v1934
      %2961 = vmatprep.subr.bf16.mxu0 0
      %2962 = vmatpush1.bf16.msra.mxu0 %v1935
      %2963 = vmatprep.subr.bf16.mxu0 0
      %2964 = vmatpush1.bf16.msra.mxu0 %v1936
      %2965 = vmatprep.subr.bf16.mxu0 0
      %2966 = vmatpush1.bf16.msra.mxu0 %v1937
      %2967 = vmatprep.subr.bf16.mxu0 0
      %2968 = vmatpush1.bf16.msra.mxu0 %v1938
      %2969 = vmatprep.subr.bf16.mxu0 0
      %2970 = vmatpush1.bf16.msra.mxu0 0
      %2971 = vmatprep.subr.bf16.mxu0 0
      %2972 = vmatpush1.bf16.msra.mxu0 0
      %2973 = vmatprep.subr.bf16.mxu0 0
      %2974 = vmatpush1.bf16.msra.mxu0 0
      %2975 = vmatprep.subr.bf16.mxu0 0
      %2976 = vmatpush1.bf16.msra.mxu0 0
      %2977 = vmatprep.subr.bf16.mxu0 0
      %2978 = vmatpush1.bf16.msra.mxu0 0
      %2979 = vmatprep.subr.bf16.mxu0 0
      %2980 = vmatpush1.bf16.msra.mxu0 0
      %2981 = vmatprep.subr.bf16.mxu0 0
      %2982 = vmatpush1.bf16.msra.mxu0 0
      %2983 = vmatprep.subr.bf16.mxu0 0
      %2984 = vmatpush1.bf16.msra.mxu0 0
      %2985 = vmatprep.subr.bf16.mxu0 0
      %2986 = vmatpush1.bf16.msra.mxu0 0
      %2987 = vmatprep.subr.bf16.mxu0 0
      %2988 = vmatpush1.bf16.msra.mxu0 0
      %2989 = vmatprep.mubr.bf16.mxu0 0
      %2990 = vmatmul.mubr.bf16.gmra.mrb[0].mxu0 %v1995
      %v2991 = vpop.f32.mrb[0].mxu0
      %v2992 = vadd.f32 %v2703, %v2991
      %v2993 = vpop.f32.mrb[0].mxu0
      %v2994 = vpop.f32.mrb[0].mxu0
      %v2995 = vadd.f32 %v2706, %v2994
      %v2996 = vpop.f32.mrb[0].mxu0
      %2997 = vmatprep.mubr.bf16.mxu0 0
      %2998 = vmatmul.mubr.bf16.gmra.mrb[0].mxu0 %v1998
      %v2999 = vpop.f32.mrb[0].mxu0
      %v3000 = vadd.f32 %v2711, %v2999
      %v3001 = vpop.f32.mrb[0].mxu0
      %v3002 = vpop.f32.mrb[0].mxu0
      %v3003 = vadd.f32 %v2714, %v3002
      %v3004 = vpop.f32.mrb[0].mxu0
      %3005 = vmatprep.mubr.bf16.mxu0 0
      %3006 = vmatmul.mubr.bf16.gmra.mrb[0].mxu0 %v2001
      %v3007 = vpop.f32.mrb[0].mxu0
      %v3008 = vadd.f32 %v2719, %v3007
      %v3009 = vpop.f32.mrb[0].mxu0
      %v3010 = vpop.f32.mrb[0].mxu0
      %v3011 = vadd.f32 %v2722, %v3010
      %v3012 = vpop.f32.mrb[0].mxu0
      %3013 = vmatprep.mubr.bf16.mxu0 0
      %3014 = vmatmul.mubr.bf16.gmra.mrb[0].mxu0 %v2004
      %v3015 = vpop.f32.mrb[0].mxu0
      %v3016 = vadd.f32 %v2727, %v3015
      %v3017 = vpop.f32.mrb[0].mxu0
      %v3018 = vpop.f32.mrb[0].mxu0
      %v3019 = vadd.f32 %v2730, %v3018
      %v3020 = vpop.f32.mrb[0].mxu0
      %3021 = vmatprep.mubr.bf16.mxu0 0
      %3022 = vmatmul.mubr.bf16.gmra.mrb[0].mxu0 %v2007
      %v3023 = vpop.f32.mrb[0].mxu0
      %v3024 = vadd.f32 %v2735, %v3023
      %v3025 = vpop.f32.mrb[0].mxu0
      %v3026 = vpop.f32.mrb[0].mxu0
      %v3027 = vadd.f32 %v2738, %v3026
      %v3028 = vpop.f32.mrb[0].mxu0
      %3029 = vmatprep.mubr.bf16.mxu0 0
      %3030 = vmatmul.mubr.bf16.gmra.mrb[0].mxu0 %v2010
      %v3031 = vpop.f32.mrb[0].mxu0
      %v3032 = vadd.f32 %v2743, %v3031
      %v3033 = vpop.f32.mrb[0].mxu0
      %v3034 = vpop.f32.mrb[0].mxu0
      %v3035 = vadd.f32 %v2746, %v3034
      %v3036 = vpop.f32.mrb[0].mxu0
      %3037 = vmatprep.mubr.bf16.mxu0 0
      %3038 = vmatmul.mubr.bf16.gmra.mrb[0].mxu0 %v2013
      %v3039 = vpop.f32.mrb[0].mxu0
      %v3040 = vadd.f32 %v2751, %v3039
      %v3041 = vpop.f32.mrb[0].mxu0
      %v3042 = vpop.f32.mrb[0].mxu0
      %v3043 = vadd.f32 %v2754, %v3042
      %v3044 = vpop.f32.mrb[0].mxu0
      %3045 = vmatprep.mubr.bf16.mxu0 0
      %3046 = vmatmul.mubr.bf16.gmra.mrb[0].mxu0 %v2016
      %v3047 = vpop.f32.mrb[0].mxu0
      %v3048 = vadd.f32 %v2759, %v3047
      %v3049 = vpop.f32.mrb[0].mxu0
      %v3050 = vpop.f32.mrb[0].mxu0
      %v3051 = vadd.f32 %v2762, %v3050
      %v3052 = vpop.f32.mrb[0].mxu0
      %3053 = vmatprep.mubr.bf16.mxu0 0
      %3054 = vmatmul.mubr.bf16.gmra.mrb[0].mxu0 %v2019
      %v3055 = vpop.f32.mrb[0].mxu0
      %v3056 = vadd.f32 %v2767, %v3055
      %v3057 = vpop.f32.mrb[0].mxu0
      %v3058 = vpop.f32.mrb[0].mxu0
      %v3059 = vadd.f32 %v2770, %v3058
      %v3060 = vpop.f32.mrb[0].mxu0
      %3061 = vmatprep.mubr.bf16.mxu0 0
      %3062 = vmatmul.mubr.bf16.gmra.mrb[0].mxu0 %v2022
      %v3063 = vpop.f32.mrb[0].mxu0
      %v3064 = vadd.f32 %v2775, %v3063
      %v3065 = vpop.f32.mrb[0].mxu0
      %v3066 = vpop.f32.mrb[0].mxu0
      %v3067 = vadd.f32 %v2778, %v3066
      %v3068 = vpop.f32.mrb[0].mxu0
      %3069 = vmatprep.mubr.bf16.mxu0 0
      %3070 = vmatmul.mubr.bf16.gmra.mrb[0].mxu0 %v2025
      %v3071 = vpop.f32.mrb[0].mxu0
      %v3072 = vadd.f32 %v2783, %v3071
      %v3073 = vpop.f32.mrb[0].mxu0
      %v3074 = vpop.f32.mrb[0].mxu0
      %v3075 = vadd.f32 %v2786, %v3074
      %v3076 = vpop.f32.mrb[0].mxu0
      %3077 = vmatprep.mubr.bf16.mxu0 0
      %3078 = vmatmul.mubr.bf16.gmra.mrb[0].mxu0 %v2028
      %v3079 = vpop.f32.mrb[0].mxu0
      %v3080 = vadd.f32 %v2791, %v3079
      %v3081 = vpop.f32.mrb[0].mxu0
      %v3082 = vpop.f32.mrb[0].mxu0
      %v3083 = vadd.f32 %v2794, %v3082
      %v3084 = vpop.f32.mrb[0].mxu0
      %3085 = vmatprep.mubr.bf16.mxu0 0
      %3086 = vmatmul.mubr.bf16.gmra.mrb[0].mxu0 %v2031
      %v3087 = vpop.f32.mrb[0].mxu0
      %v3088 = vadd.f32 %v2799, %v3087
      %v3089 = vpop.f32.mrb[0].mxu0
      %v3090 = vpop.f32.mrb[0].mxu0
      %v3091 = vadd.f32 %v2802, %v3090
      %v3092 = vpop.f32.mrb[0].mxu0
      %3093 = vmatprep.mubr.bf16.mxu0 0
      %3094 = vmatmul.mubr.bf16.gmra.mrb[0].mxu0 %v2034
      %v3095 = vpop.f32.mrb[0].mxu0
      %v3096 = vadd.f32 %v2807, %v3095
      %v3097 = vpop.f32.mrb[0].mxu0
      %v3098 = vpop.f32.mrb[0].mxu0
      %v3099 = vadd.f32 %v2810, %v3098
      %v3100 = vpop.f32.mrb[0].mxu0
      %3101 = vmatprep.mubr.bf16.mxu0 0
      %3102 = vmatmul.mubr.bf16.gmra.mrb[0].mxu0 %v2037
      %v3103 = vpop.f32.mrb[0].mxu0
      %v3104 = vadd.f32 %v2815, %v3103
      %v3105 = vpop.f32.mrb[0].mxu0
      %v3106 = vpop.f32.mrb[0].mxu0
      %v3107 = vadd.f32 %v2818, %v3106
      %v3108 = vpop.f32.mrb[0].mxu0
      %3109 = vmatprep.mubr.bf16.mxu0 0
      %3110 = vmatmul.mubr.bf16.gmra.mrb[0].mxu0 %v2040
      %v3111 = vpop.f32.mrb[0].mxu0
      %v3112 = vadd.f32 %v2823, %v3111
      %v3113 = vpop.f32.mrb[0].mxu0
      %v3114 = vpop.f32.mrb[0].mxu0
      %v3115 = vadd.f32 %v2826, %v3114
      %v3116 = vpop.f32.mrb[0].mxu0
      %3117 = vmatprep.mubr.bf16.mxu0 0
      %3118 = vmatmul.mubr.bf16.gmra.mrb[0].mxu0 %v2043
      %v3119 = vpop.f32.mrb[0].mxu0
      %v3120 = vadd.f32 %v2831, %v3119
      %v3121 = vpop.f32.mrb[0].mxu0
      %v3122 = vpop.f32.mrb[0].mxu0
      %v3123 = vadd.f32 %v2834, %v3122
      %v3124 = vpop.f32.mrb[0].mxu0
      %3125 = vmatprep.mubr.bf16.mxu0 0
      %3126 = vmatmul.mubr.bf16.gmra.mrb[0].mxu0 %v2046
      %v3127 = vpop.f32.mrb[0].mxu0
      %v3128 = vadd.f32 %v2839, %v3127
      %v3129 = vpop.f32.mrb[0].mxu0
      %v3130 = vpop.f32.mrb[0].mxu0
      %v3131 = vadd.f32 %v2842, %v3130
      %v3132 = vpop.f32.mrb[0].mxu0
      %3133 = vmatprep.mubr.bf16.mxu0 0
      %3134 = vmatmul.mubr.bf16.gmra.mrb[0].mxu0 %v2049
      %v3135 = vpop.f32.mrb[0].mxu0
      %v3136 = vadd.f32 %v2847, %v3135
      %v3137 = vpop.f32.mrb[0].mxu0
      %v3138 = vpop.f32.mrb[0].mxu0
      %v3139 = vadd.f32 %v2850, %v3138
      %v3140 = vpop.f32.mrb[0].mxu0
      %3141 = vmatprep.mubr.bf16.mxu0 0
      %3142 = vmatmul.mubr.bf16.gmra.mrb[0].mxu0 %v2052
      %v3143 = vpop.f32.mrb[0].mxu0
      %v3144 = vadd.f32 %v2855, %v3143
      %v3145 = vpop.f32.mrb[0].mxu0
      %v3146 = vpop.f32.mrb[0].mxu0
      %v3147 = vadd.f32 %v2858, %v3146
      %v3148 = vpop.f32.mrb[0].mxu0
      %3149 = vmatprep.mubr.bf16.mxu0 0
      %3150 = vmatmul.mubr.bf16.gmra.mrb[0].mxu0 %v2055
      %v3151 = vpop.f32.mrb[0].mxu0
      %v3152 = vadd.f32 %v2863, %v3151
      %v3153 = vpop.f32.mrb[0].mxu0
      %v3154 = vpop.f32.mrb[0].mxu0
      %v3155 = vadd.f32 %v2866, %v3154
      %v3156 = vpop.f32.mrb[0].mxu0
      %3157 = vmatprep.mubr.bf16.mxu0 0
      %3158 = vmatmul.mubr.bf16.gmra.mrb[0].mxu0 %v2058
      %v3159 = vpop.f32.mrb[0].mxu0
      %v3160 = vadd.f32 %v2871, %v3159
      %v3161 = vpop.f32.mrb[0].mxu0
      %v3162 = vpop.f32.mrb[0].mxu0
      %v3163 = vadd.f32 %v2874, %v3162
      %v3164 = vpop.f32.mrb[0].mxu0
      %3165 = vmatprep.mubr.bf16.mxu0 0
      %3166 = vmatmul.mubr.bf16.gmra.mrb[0].mxu0 %v2061
      %v3167 = vpop.f32.mrb[0].mxu0
      %v3168 = vadd.f32 %v2879, %v3167
      %v3169 = vpop.f32.mrb[0].mxu0
      %v3170 = vpop.f32.mrb[0].mxu0
      %v3171 = vadd.f32 %v2882, %v3170
      %v3172 = vpop.f32.mrb[0].mxu0
      %3173 = vmatprep.mubr.bf16.mxu0 0
      %3174 = vmatmul.mubr.bf16.gmra.mrb[0].mxu0 %v2064
      %v3175 = vpop.f32.mrb[0].mxu0
      %v3176 = vadd.f32 %v2887, %v3175
      %v3177 = vpop.f32.mrb[0].mxu0
      %v3178 = vpop.f32.mrb[0].mxu0
      %v3179 = vadd.f32 %v2890, %v3178
      %v3180 = vpop.f32.mrb[0].mxu0
      %3181 = vmatprep.mubr.bf16.mxu0 0
      %3182 = vmatmul.mubr.bf16.gmra.mrb[0].mxu0 %v2067
      %v3183 = vpop.f32.mrb[0].mxu0
      %v3184 = vadd.f32 %v2895, %v3183
      %v3185 = vpop.f32.mrb[0].mxu0
      %v3186 = vpop.f32.mrb[0].mxu0
      %v3187 = vadd.f32 %v2898, %v3186
      %v3188 = vpop.f32.mrb[0].mxu0
      %3189 = vmatprep.mubr.bf16.mxu0 0
      %3190 = vmatmul.mubr.bf16.gmra.mrb[0].mxu0 %v2070
      %v3191 = vpop.f32.mrb[0].mxu0
      %v3192 = vadd.f32 %v2903, %v3191
      %v3193 = vpop.f32.mrb[0].mxu0
      %v3194 = vpop.f32.mrb[0].mxu0
      %v3195 = vadd.f32 %v2906, %v3194
      %v3196 = vpop.f32.mrb[0].mxu0
      %3197 = vmatprep.mubr.bf16.mxu0 0
      %3198 = vmatmul.mubr.bf16.gmra.mrb[0].mxu0 %v2073
      %v3199 = vpop.f32.mrb[0].mxu0
      %v3200 = vadd.f32 %v2911, %v3199
      %v3201 = vpop.f32.mrb[0].mxu0
      %v3202 = vpop.f32.mrb[0].mxu0
      %v3203 = vadd.f32 %v2914, %v3202
      %v3204 = vpop.f32.mrb[0].mxu0
      %3205 = vmatprep.mubr.bf16.mxu0 0
      %3206 = vmatmul.mubr.bf16.gmra.mrb[0].mxu0 %v2076
      %v3207 = vpop.f32.mrb[0].mxu0
      %v3208 = vadd.f32 %v2919, %v3207
      %v3209 = vpop.f32.mrb[0].mxu0
      %v3210 = vpop.f32.mrb[0].mxu0
      %v3211 = vadd.f32 %v2922, %v3210
      %v3212 = vpop.f32.mrb[0].mxu0
      %3213 = vmatprep.mubr.bf16.mxu0 0
      %3214 = vmatmul.mubr.bf16.gmra.mrb[0].mxu0 %v2079
      %v3215 = vpop.f32.mrb[0].mxu0
      %v3216 = vadd.f32 %v2927, %v3215
      %v3217 = vpop.f32.mrb[0].mxu0
      %v3218 = vpop.f32.mrb[0].mxu0
      %v3219 = vadd.f32 %v2930, %v3218
      %v3220 = vpop.f32.mrb[0].mxu0
      %3221 = vmatprep.mubr.bf16.mxu0 0
      %3222 = vmatmul.mubr.bf16.gmra.mrb[0].mxu0 %v2082
      %v3223 = vpop.f32.mrb[0].mxu0
      %v3224 = vadd.f32 %v2935, %v3223
      %v3225 = vpop.f32.mrb[0].mxu0
      %v3226 = vpop.f32.mrb[0].mxu0
      %v3227 = vadd.f32 %v2938, %v3226
      %v3228 = vpop.f32.mrb[0].mxu0
      %3229 = vmatprep.mubr.bf16.mxu0 0
      %3230 = vmatmul.mubr.bf16.gmra.mrb[0].mxu0 %v2085
      %v3231 = vpop.f32.mrb[0].mxu0
      %v3232 = vadd.f32 %v2943, %v3231
      %v3233 = vpop.f32.mrb[0].mxu0
      %v3234 = vpop.f32.mrb[0].mxu0
      %v3235 = vadd.f32 %v2946, %v3234
      %v3236 = vpop.f32.mrb[0].mxu0
      %3237 = vmatprep.mubr.bf16.mxu0 0
      %3238 = vmatmul.mubr.bf16.gmra.mrb[0].mxu0 %v2088
      %v3239 = vpop.f32.mrb[0].mxu0
      %v3240 = vadd.f32 %v2951, %v3239
      %v3241 = vpop.f32.mrb[0].mxu0
      %v3242 = vpop.f32.mrb[0].mxu0
      %v3243 = vadd.f32 %v2954, %v3242
      %v3244 = vpop.f32.mrb[0].mxu0
      %3245 = vdwg.mxu0
      %vm3246 = vcmask 261120
      %3247 = vst.msk [vmem:[%s175] sm:$0xff] %vm3246, %v2992
      %3248 = vst.msk [vmem:[%s175 + $0x8] sm:$0xff] %vm3246, %v2995
      %3249 = vst.msk [vmem:[%s175 + $0x10] sm:$0xff] %vm3246, %v3000
      %3250 = vst.msk [vmem:[%s175 + $0x18] sm:$0xff] %vm3246, %v3003
      %3251 = vst.msk [vmem:[%s175 + $0x20] sm:$0xff] %vm3246, %v3008
      %3252 = vst.msk [vmem:[%s175 + $0x28] sm:$0xff] %vm3246, %v3011
      %3253 = vst.msk [vmem:[%s175 + $0x30] sm:$0xff] %vm3246, %v3016
      %3254 = vst.msk [vmem:[%s175 + $0x38] sm:$0xff] %vm3246, %v3019
      %3255 = vst.msk [vmem:[%s175 + $0x40] sm:$0xff] %vm3246, %v3024
      %3256 = vst.msk [vmem:[%s175 + $0x48] sm:$0xff] %vm3246, %v3027
      %3257 = vst.msk [vmem:[%s175 + $0x50] sm:$0xff] %vm3246, %v3032
      %3258 = vst.msk [vmem:[%s175 + $0x58] sm:$0xff] %vm3246, %v3035
      %3259 = vst.msk [vmem:[%s175 + $0x60] sm:$0xff] %vm3246, %v3040
      %3260 = vst.msk [vmem:[%s175 + $0x68] sm:$0xff] %vm3246, %v3043
      %3261 = vst.msk [vmem:[%s175 + $0x70] sm:$0xff] %vm3246, %v3048
      %3262 = vst.msk [vmem:[%s175 + $0x78] sm:$0xff] %vm3246, %v3051
      %3263 = vst.msk [vmem:[%s175 + $0x80] sm:$0xff] %vm3246, %v3056
      %3264 = vst.msk [vmem:[%s175 + $0x88] sm:$0xff] %vm3246, %v3059
      %3265 = vst.msk [vmem:[%s175 + $0x90] sm:$0xff] %vm3246, %v3064
      %3266 = vst.msk [vmem:[%s175 + $0x98] sm:$0xff] %vm3246, %v3067
      %3267 = vst.msk [vmem:[%s175 + $0xa0] sm:$0xff] %vm3246, %v3072
      %3268 = vst.msk [vmem:[%s175 + $0xa8] sm:$0xff] %vm3246, %v3075
      %3269 = vst.msk [vmem:[%s175 + $0xb0] sm:$0xff] %vm3246, %v3080
      %3270 = vst.msk [vmem:[%s175 + $0xb8] sm:$0xff] %vm3246, %v3083
      %3271 = vst.msk [vmem:[%s175 + $0xc0] sm:$0xff] %vm3246, %v3088
      %3272 = vst.msk [vmem:[%s175 + $0xc8] sm:$0xff] %vm3246, %v3091
      %3273 = vst.msk [vmem:[%s175 + $0xd0] sm:$0xff] %vm3246, %v3096
      %3274 = vst.msk [vmem:[%s175 + $0xd8] sm:$0xff] %vm3246, %v3099
      %3275 = vst.msk [vmem:[%s175 + $0xe0] sm:$0xff] %vm3246, %v3104
      %3276 = vst.msk [vmem:[%s175 + $0xe8] sm:$0xff] %vm3246, %v3107
      %3277 = vst.msk [vmem:[%s175 + $0xf0] sm:$0xff] %vm3246, %v3112
      %3278 = vst.msk [vmem:[%s175 + $0xf8] sm:$0xff] %vm3246, %v3115
      %3279 = vst.msk [vmem:[%s175 + $0x100] sm:$0xff] %vm3246, %v3120
      %3280 = vst.msk [vmem:[%s175 + $0x108] sm:$0xff] %vm3246, %v3123
      %3281 = vst.msk [vmem:[%s175 + $0x110] sm:$0xff] %vm3246, %v3128
      %3282 = vst.msk [vmem:[%s175 + $0x118] sm:$0xff] %vm3246, %v3131
      %3283 = vst.msk [vmem:[%s175 + $0x120] sm:$0xff] %vm3246, %v3136
      %3284 = vst.msk [vmem:[%s175 + $0x128] sm:$0xff] %vm3246, %v3139
      %3285 = vst.msk [vmem:[%s175 + $0x130] sm:$0xff] %vm3246, %v3144
      %3286 = vst.msk [vmem:[%s175 + $0x138] sm:$0xff] %vm3246, %v3147
      %3287 = vst.msk [vmem:[%s175 + $0x140] sm:$0xff] %vm3246, %v3152
      %3288 = vst.msk [vmem:[%s175 + $0x148] sm:$0xff] %vm3246, %v3155
      %3289 = vst.msk [vmem:[%s175 + $0x150] sm:$0xff] %vm3246, %v3160
      %3290 = vst.msk [vmem:[%s175 + $0x158] sm:$0xff] %vm3246, %v3163
      %3291 = vst.msk [vmem:[%s175 + $0x160] sm:$0xff] %vm3246, %v3168
      %3292 = vst.msk [vmem:[%s175 + $0x168] sm:$0xff] %vm3246, %v3171
      %3293 = vst.msk [vmem:[%s175 + $0x170] sm:$0xff] %vm3246, %v3176
      %3294 = vst.msk [vmem:[%s175 + $0x178] sm:$0xff] %vm3246, %v3179
      %3295 = vst.msk [vmem:[%s175 + $0x180] sm:$0xff] %vm3246, %v3184
      %3296 = vst.msk [vmem:[%s175 + $0x188] sm:$0xff] %vm3246, %v3187
      %3297 = vst.msk [vmem:[%s175 + $0x190] sm:$0xff] %vm3246, %v3192
      %3298 = vst.msk [vmem:[%s175 + $0x198] sm:$0xff] %vm3246, %v3195
      %3299 = vst.msk [vmem:[%s175 + $0x1a0] sm:$0xff] %vm3246, %v3200
      %3300 = vst.msk [vmem:[%s175 + $0x1a8] sm:$0xff] %vm3246, %v3203
      %3301 = vst.msk [vmem:[%s175 + $0x1b0] sm:$0xff] %vm3246, %v3208
      %3302 = vst.msk [vmem:[%s175 + $0x1b8] sm:$0xff] %vm3246, %v3211
      %3303 = vst.msk [vmem:[%s175 + $0x1c0] sm:$0xff] %vm3246, %v3216
      %3304 = vst.msk [vmem:[%s175 + $0x1c8] sm:$0xff] %vm3246, %v3219
      %3305 = vst.msk [vmem:[%s175 + $0x1d0] sm:$0xff] %vm3246, %v3224
      %3306 = vst.msk [vmem:[%s175 + $0x1d8] sm:$0xff] %vm3246, %v3227
      %3307 = vst.msk [vmem:[%s175 + $0x1e0] sm:$0xff] %vm3246, %v3232
      %3308 = vst.msk [vmem:[%s175 + $0x1e8] sm:$0xff] %vm3246, %v3235
      %3309 = vst.msk [vmem:[%s175 + $0x1f0] sm:$0xff] %vm3246, %v3240
      %3310 = vst.msk [vmem:[%s175 + $0x1f8] sm:$0xff] %vm3246, %v3243
      %s3311 = smul.u32 64, %s14
      %p3312 = scmp.lt.s32.totalorder %s3311, 639
      %s3313 = scalar_select %p3312, %s3311, 639
      %s3314 = smul.addr %s3313, 8
      %s3315 = scalar_lea.vmem %s3, %s3314
      // Predicated region
      $region33: #{forward.24} parent=31 // pred_check
        %p3316 = pneg %p100
      $region34: #{forward.24} parent=31 // pred_check_branch
        %3318 = sbr.rel (%p3316) target = $region36
      $region35: #{forward.24} parent=31 // pred_region
        %s3319 = smul.u32 64, %s14
      $region36: #{forward.24} parent=31 // pred_fallthru
        _
    $region32: #{forward.24} parent=5 // pred_fallthru
      _
    %p3320 = scmp.le.s32.totalorder 2, %s9
    // Predicated region
    $region37: #{forward.24} parent=5 // pred_check
      %p3321 = pneg %p3320
    $region38: #{forward.24} parent=5 // pred_check_branch
      %3323 = sbr.rel (%p3321) target = $region40
    $region39: #{forward.24} parent=5 // pred_region
      %s3324 = ssub.s32 %s9, 2
      // Predicated region
      $region41: #{forward.24} parent=39 // pred_check
        %p3325 = pneg %p106
      $region42: #{forward.24} parent=39 // pred_check_branch
        %3327 = sbr.rel (%p3325) target = $region44
      $region43: #{forward.24} parent=39 // pred_region
        %s3328 = smul.u32 64, %s15
        %p3329 = scmp.lt.s32.totalorder %s3328, 639
        %s3330 = scalar_select %p3329, %s3328, 639
        %s3331 = smul.addr %s3330, 8
        %s3332 = scalar_lea.vmem %s3, %s3331
      $region44: #{forward.24} parent=39 // pred_fallthru
        _
    $region40: #{forward.24} parent=5 // pred_fallthru
      _
  $region6: #{forward.24} parent=0 // loop_footer
    %s13 = sadd.s32 1, %s9
  $region7: #{forward.24} parent=0 // loop_footer_branch
    %8 = sbr.rel target = $region3
  $region8: #{forward.24} parent=0 // loop_exit
    _

// kernel: forward.26
$region0: #{forward.26}
  #allocation0 [shape = 'u32[]', space=smem, size = 0x4, offset = 0x4, fixed_abs, tag = 'smem constant byte address 0x4 - core index']
  #allocation1 [shape = 'u32[144,128]{1,0:T(1,128)}', space=vmem, size = 0x12000, scoped, tag = 'internal scratch']
  %s0 = inlined_call_operand.vmem [shape: bf16[392,96], index: 0, kind: input, shape index: {}]
  %s1 = inlined_call_operand.vmem [shape: bf16[96,128], index: 1, kind: input, shape index: {}]
  %s2 = inlined_call_operand.vmem [shape: f32[1,128], index: 2, kind: input, shape index: {}]
  %s3 = inlined_call_operand.vmem [shape: f32[392,128], index: 3, kind: output, shape index: {}]
  %s4 = sld [smem:[#allocation0]]
  $region22: #{forward.26} parent=0
    _
  %s6 = ssub.s32 1, %s4
  %s7 = scalar_select 0, %s6, %s4
  // Predicated region
  $region2: #{forward.26} parent=0 // pred_check
    _
  $region3: #{forward.26} parent=0 // pred_check_branch
    %9 = sbr.rel (0) target = $region5
  $region4: #{forward.26} parent=0 // pred_region
    _
  $region5: #{forward.26} parent=0 // pred_fallthru
    _
  // Predicated region
  $region6: #{forward.26} parent=0 // pred_check
    _
  $region7: #{forward.26} parent=0 // pred_check_branch
    %11 = sbr.rel (0) target = $region9
  $region8: #{forward.26} parent=0 // pred_region
    _
  $region9: #{forward.26} parent=0 // pred_fallthru
    _
  // Predicated region
  $region10: #{forward.26} parent=0 // pred_check
    _
  $region11: #{forward.26} parent=0 // pred_check_branch
    %13 = sbr.rel (0) target = $region13
  $region12: #{forward.26} parent=0 // pred_region
    _
  $region13: #{forward.26} parent=0 // pred_fallthru
    _
  %v15 = vld [vmem:[%s0] sm:$0xf]
  %v16 = vld [vmem:[%s0 + $0x4] sm:$0xf]
  %v17 = vld [vmem:[%s0 + $0x8] sm:$0xf]
  %v18 = vld [vmem:[%s0 + $0xc] sm:$0xf]
  %v19 = vld [vmem:[%s0 + $0x10] sm:$0xf]
  %v20 = vld [vmem:[%s0 + $0x14] sm:$0xf]
  %v21 = vld [vmem:[%s0 + $0x18] sm:$0xf]
  %v22 = vld [vmem:[%s0 + $0x1c] sm:$0xf]
  %v23 = vld [vmem:[%s0 + $0x20] sm:$0xf]
  %v24 = vld [vmem:[%s0 + $0x24] sm:$0xf]
  %v25 = vld [vmem:[%s0 + $0x28] sm:$0xf]
  %v26 = vld [vmem:[%s0 + $0x2c] sm:$0xf]
  %v27 = vld [vmem:[%s0 + $0x30] sm:$0xf]
  %v28 = vld [vmem:[%s0 + $0x34] sm:$0xf]
  %v29 = vld [vmem:[%s0 + $0x38] sm:$0xf]
  %v30 = vld [vmem:[%s0 + $0x3c] sm:$0xf]
  %v31 = vld [vmem:[%s0 + $0x40] sm:$0xf]
  %v32 = vld [vmem:[%s0 + $0x44] sm:$0xf]
  %v33 = vld [vmem:[%s0 + $0x48] sm:$0xf]
  %v34 = vld [vmem:[%s0 + $0x4c] sm:$0xf]
  %v35 = vld [vmem:[%s0 + $0x50] sm:$0xf]
  %v36 = vld [vmem:[%s0 + $0x54] sm:$0xf]
  %v37 = vld [vmem:[%s0 + $0x58] sm:$0xf]
  %v38 = vld [vmem:[%s0 + $0x5c] sm:$0xf]
  %v39 = vld [vmem:[%s0 + $0x60] sm:$0xf]
  %v40 = vld [vmem:[%s0 + $0x64] sm:$0xf]
  %v41 = vld [vmem:[%s0 + $0x68] sm:$0xf]
  %v42 = vld [vmem:[%s0 + $0x6c] sm:$0xf]
  %v43 = vld [vmem:[%s0 + $0x70] sm:$0xf]
  %v44 = vld [vmem:[%s0 + $0x74] sm:$0xf]
  %v45 = vld [vmem:[%s0 + $0x78] sm:$0xf]
  %v46 = vld [vmem:[%s0 + $0x7c] sm:$0xf]
  %v47 = vld [vmem:[%s0 + $0x80] sm:$0xf]
  %v48 = vld [vmem:[%s0 + $0x84] sm:$0xf]
  %v49 = vld [vmem:[%s0 + $0x88] sm:$0xf]
  %v50 = vld [vmem:[%s0 + $0x8c] sm:$0xf]
  %v51 = vld [vmem:[%s0 + $0x90] sm:$0xf]
  %v52 = vld [vmem:[%s0 + $0x94] sm:$0xf]
  %v53 = vld [vmem:[%s0 + $0x98] sm:$0xf]
  %v54 = vld [vmem:[%s0 + $0x9c] sm:$0xf]
  %v55 = vld [vmem:[%s0 + $0xa0] sm:$0xf]
  %v56 = vld [vmem:[%s0 + $0xa4] sm:$0xf]
  %v57 = vld [vmem:[%s0 + $0xa8] sm:$0xf]
  %v58 = vld [vmem:[%s0 + $0xac] sm:$0xf]
  %v59 = vld [vmem:[%s0 + $0xb0] sm:$0xf]
  %v60 = vld [vmem:[%s0 + $0xb4] sm:$0xf]
  %v61 = vld [vmem:[%s0 + $0xb8] sm:$0xf]
  %v62 = vld [vmem:[%s0 + $0xbc] sm:$0xf]
  %v63 = vld [vmem:[%s0 + $0xc0] sm:$0xf]
  %v64 = vld [vmem:[%s1] sm:$0xf]
  %v65 = vld [vmem:[%s1 + $0x4] sm:$0xf]
  %v66 = vld [vmem:[%s1 + $0x8] sm:$0xf]
  %v67 = vld [vmem:[%s1 + $0xc] sm:$0xf]
  %v68 = vld [vmem:[%s1 + $0x10] sm:$0xf]
  %v69 = vld [vmem:[%s1 + $0x14] sm:$0xf]
  %v70 = vld [vmem:[%s1 + $0x18] sm:$0xf]
  %v71 = vld [vmem:[%s1 + $0x1c] sm:$0xf]
  %v72 = vld [vmem:[%s1 + $0x20] sm:$0xf]
  %v73 = vld [vmem:[%s1 + $0x24] sm:$0xf]
  %v74 = vld [vmem:[%s1 + $0x28] sm:$0xf]
  %v75 = vld [vmem:[%s1 + $0x2c] sm:$0xf]
  %v76 = vld [vmem:[%s2] sm:$0x1]
  %v78 = vlaneseq
  %v79 = vshrl.u32 %v78, 7
  %v80 = vsub.s32 0, %v79
  %v81 = vrot.slane %v76, %v80
  %v132 = vunpack.c.l.b16 %v15
  %v133 = vunpack.c.l.b16 %v16
  %v134 = vunpack.c.l.b16 %v17
  %v135 = vunpack.c.l.b16 %v18
  %v136 = vunpack.c.l.b16 %v19
  %v137 = vunpack.c.l.b16 %v20
  %v138 = vunpack.c.l.b16 %v21
  %v139 = vunpack.c.l.b16 %v22
  %v140 = vunpack.c.l.b16 %v23
  %v141 = vunpack.c.l.b16 %v24
  %v142 = vunpack.c.l.b16 %v25
  %v143 = vunpack.c.l.b16 %v26
  %v144 = vunpack.c.l.b16 %v27
  %v145 = vunpack.c.l.b16 %v28
  %v146 = vunpack.c.l.b16 %v29
  %v147 = vunpack.c.l.b16 %v30
  %v148 = vunpack.c.l.b16 %v31
  %v149 = vunpack.c.l.b16 %v32
  %v150 = vunpack.c.l.b16 %v33
  %v151 = vunpack.c.l.b16 %v34
  %v152 = vunpack.c.l.b16 %v35
  %v153 = vunpack.c.l.b16 %v36
  %v154 = vunpack.c.l.b16 %v37
  %v155 = vunpack.c.l.b16 %v38
  %v156 = vunpack.c.l.b16 %v39
  %v157 = vunpack.c.l.b16 %v40
  %v158 = vunpack.c.l.b16 %v41
  %v159 = vunpack.c.l.b16 %v42
  %v160 = vunpack.c.l.b16 %v43
  %v161 = vunpack.c.l.b16 %v44
  %v162 = vunpack.c.l.b16 %v45
  %v163 = vunpack.c.l.b16 %v46
  %v164 = vunpack.c.l.b16 %v47
  %v165 = vunpack.c.l.b16 %v48
  %v166 = vunpack.c.l.b16 %v49
  %v167 = vunpack.c.l.b16 %v50
  %v168 = vunpack.c.l.b16 %v51
  %v169 = vunpack.c.l.b16 %v52
  %v170 = vunpack.c.l.b16 %v53
  %v171 = vunpack.c.l.b16 %v54
  %v172 = vunpack.c.l.b16 %v55
  %v173 = vunpack.c.l.b16 %v56
  %v174 = vunpack.c.l.b16 %v57
  %v175 = vunpack.c.l.b16 %v58
  %v176 = vunpack.c.l.b16 %v59
  %v177 = vunpack.c.l.b16 %v60
  %v178 = vunpack.c.l.b16 %v61
  %v179 = vunpack.c.l.b16 %v62
  %v180 = vunpack.c.l.b16 %v63
  %v181 = vpack.c.b16 %v133, %v132
  %v182 = vpack.c.b16 %v135, %v134
  %v183 = vpack.c.b16 %v137, %v136
  %v184 = vpack.c.b16 %v139, %v138
  %v185 = vpack.c.b16 %v141, %v140
  %v186 = vpack.c.b16 %v143, %v142
  %v187 = vpack.c.b16 %v145, %v144
  %v188 = vpack.c.b16 %v147, %v146
  %v189 = vpack.c.b16 %v149, %v148
  %v190 = vpack.c.b16 %v151, %v150
  %v191 = vpack.c.b16 %v153, %v152
  %v192 = vpack.c.b16 %v155, %v154
  %v193 = vpack.c.b16 %v157, %v156
  %v194 = vpack.c.b16 %v159, %v158
  %v195 = vpack.c.b16 %v161, %v160
  %v196 = vpack.c.b16 %v163, %v162
  %v197 = vpack.c.b16 %v165, %v164
  %v198 = vpack.c.b16 %v167, %v166
  %v199 = vpack.c.b16 %v169, %v168
  %v200 = vpack.c.b16 %v171, %v170
  %v201 = vpack.c.b16 %v173, %v172
  %v202 = vpack.c.b16 %v175, %v174
  %v203 = vpack.c.b16 %v177, %v176
  %v204 = vpack.c.b16 %v179, %v178
  %v205 = vpack.c.b16 %v180, %v180
  %v218 = vunpack.c.l.b16 %v64
  %v219 = vunpack.c.l.b16 %v65
  %v220 = vunpack.c.l.b16 %v66
  %v221 = vunpack.c.l.b16 %v67
  %v222 = vunpack.c.l.b16 %v68
  %v223 = vunpack.c.l.b16 %v69
  %v224 = vunpack.c.l.b16 %v70
  %v225 = vunpack.c.l.b16 %v71
  %v226 = vunpack.c.l.b16 %v72
  %v227 = vunpack.c.l.b16 %v73
  %v228 = vunpack.c.l.b16 %v74
  %v229 = vunpack.c.l.b16 %v75
  %v230 = vpack.c.b16 %v219, %v218
  %v231 = vpack.c.b16 %v221, %v220
  %v232 = vpack.c.b16 %v223, %v222
  %v233 = vpack.c.b16 %v225, %v224
  %v234 = vpack.c.b16 %v227, %v226
  %v235 = vpack.c.b16 %v229, %v228
  %vm242 = vcmask 785408
  %v244 = vsel %vm242, %v181, 0
  %v247 = vsel %vm242, %v182, 0
  %v250 = vsel %vm242, %v183, 0
  %v253 = vsel %vm242, %v184, 0
  %v256 = vsel %vm242, %v185, 0
  %v259 = vsel %vm242, %v186, 0
  %v262 = vsel %vm242, %v187, 0
  %v265 = vsel %vm242, %v188, 0
  %v268 = vsel %vm242, %v189, 0
  %v271 = vsel %vm242, %v190, 0
  %v274 = vsel %vm242, %v191, 0
  %v277 = vsel %vm242, %v192, 0
  %v280 = vsel %vm242, %v193, 0
  %v283 = vsel %vm242, %v194, 0
  %v286 = vsel %vm242, %v195, 0
  %v289 = vsel %vm242, %v196, 0
  %v292 = vsel %vm242, %v197, 0
  %v295 = vsel %vm242, %v198, 0
  %v298 = vsel %vm242, %v199, 0
  %v301 = vsel %vm242, %v200, 0
  %v304 = vsel %vm242, %v201, 0
  %v307 = vsel %vm242, %v202, 0
  %v310 = vsel %vm242, %v203, 0
  %v313 = vsel %vm242, %v204, 0
  %v316 = vsel %vm242, %v205, 0
  %318 = vmatprep.subr.bf16.mxu0 0
  %319 = vmatpush1.bf16.msra.mxu0 %v230
  %320 = vmatprep.subr.bf16.mxu0 0
  %321 = vmatpush1.bf16.msra.mxu0 %v231
  %322 = vmatprep.subr.bf16.mxu0 0
  %323 = vmatpush1.bf16.msra.mxu0 %v232
  %324 = vmatprep.subr.bf16.mxu0 0
  %325 = vmatpush1.bf16.msra.mxu0 %v233
  %326 = vmatprep.subr.bf16.mxu0 0
  %327 = vmatpush1.bf16.msra.mxu0 %v234
  %328 = vmatprep.subr.bf16.mxu0 0
  %329 = vmatpush1.bf16.msra.mxu0 %v235
  %330 = vmatprep.subr.bf16.mxu0 0
  %331 = vmatpush1.bf16.msra.mxu0 0
  %332 = vmatprep.subr.bf16.mxu0 0
  %333 = vmatpush1.bf16.msra.mxu0 0
  %334 = vmatprep.subr.bf16.mxu0 0
  %335 = vmatpush1.bf16.msra.mxu0 0
  %336 = vmatprep.subr.bf16.mxu0 0
  %337 = vmatpush1.bf16.msra.mxu0 0
  %338 = vmatprep.subr.bf16.mxu0 0
  %339 = vmatpush1.bf16.msra.mxu0 0
  %340 = vmatprep.subr.bf16.mxu0 0
  %341 = vmatpush1.bf16.msra.mxu0 0
  %342 = vmatprep.subr.bf16.mxu0 0
  %343 = vmatpush1.bf16.msra.mxu0 0
  %344 = vmatprep.subr.bf16.mxu0 0
  %345 = vmatpush1.bf16.msra.mxu0 0
  %346 = vmatprep.subr.bf16.mxu0 0
  %347 = vmatpush1.bf16.msra.mxu0 0
  %348 = vmatprep.subr.bf16.mxu0 0
  %349 = vmatpush1.bf16.msra.mxu0 0
  %350 = vmatprep.mubr.bf16.mxu0 0
  %351 = vmatmul.mubr.bf16.gmra.mrb[0].mxu0 %v244
  %v352 = vpop.f32.mrb[0].mxu0
  %v353 = vadd.f32 %v81, %v352
  %v354 = vpop.f32.mrb[0].mxu0
  %v355 = vpop.f32.mrb[0].mxu0
  %v356 = vadd.f32 %v81, %v355
  %v357 = vpop.f32.mrb[0].mxu0
  %358 = vmatprep.mubr.bf16.mxu0 0
  %359 = vmatmul.mubr.bf16.gmra.mrb[0].mxu0 %v247
  %v360 = vpop.f32.mrb[0].mxu0
  %v361 = vadd.f32 %v81, %v360
  %v362 = vpop.f32.mrb[0].mxu0
  %v363 = vpop.f32.mrb[0].mxu0
  %v364 = vadd.f32 %v81, %v363
  %v365 = vpop.f32.mrb[0].mxu0
  %366 = vmatprep.mubr.bf16.mxu0 0
  %367 = vmatmul.mubr.bf16.gmra.mrb[0].mxu0 %v250
  %v368 = vpop.f32.mrb[0].mxu0
  %v369 = vadd.f32 %v81, %v368
  %v370 = vpop.f32.mrb[0].mxu0
  %v371 = vpop.f32.mrb[0].mxu0
  %v372 = vadd.f32 %v81, %v371
  %v373 = vpop.f32.mrb[0].mxu0
  %374 = vmatprep.mubr.bf16.mxu0 0
  %375 = vmatmul.mubr.bf16.gmra.mrb[0].mxu0 %v253
  %v376 = vpop.f32.mrb[0].mxu0
  %v377 = vadd.f32 %v81, %v376
  %v378 = vpop.f32.mrb[0].mxu0
  %v379 = vpop.f32.mrb[0].mxu0
  %v380 = vadd.f32 %v81, %v379
  %v381 = vpop.f32.mrb[0].mxu0
  %382 = vmatprep.mubr.bf16.mxu0 0
  %383 = vmatmul.mubr.bf16.gmra.mrb[0].mxu0 %v256
  %v384 = vpop.f32.mrb[0].mxu0
  %v385 = vadd.f32 %v81, %v384
  %v386 = vpop.f32.mrb[0].mxu0
  %v387 = vpop.f32.mrb[0].mxu0
  %v388 = vadd.f32 %v81, %v387
  %v389 = vpop.f32.mrb[0].mxu0
  %390 = vmatprep.mubr.bf16.mxu0 0
  %391 = vmatmul.mubr.bf16.gmra.mrb[0].mxu0 %v259
  %v392 = vpop.f32.mrb[0].mxu0
  %v393 = vadd.f32 %v81, %v392
  %v394 = vpop.f32.mrb[0].mxu0
  %v395 = vpop.f32.mrb[0].mxu0
  %v396 = vadd.f32 %v81, %v395
  %v397 = vpop.f32.mrb[0].mxu0
  %398 = vmatprep.mubr.bf16.mxu0 0
  %399 = vmatmul.mubr.bf16.gmra.mrb[0].mxu0 %v262
  %v400 = vpop.f32.mrb[0].mxu0
  %v401 = vadd.f32 %v81, %v400
  %v402 = vpop.f32.mrb[0].mxu0
  %v403 = vpop.f32.mrb[0].mxu0
  %v404 = vadd.f32 %v81, %v403
  %v405 = vpop.f32.mrb[0].mxu0
  %406 = vmatprep.mubr.bf16.mxu0 0
  %407 = vmatmul.mubr.bf16.gmra.mrb[0].mxu0 %v265
  %v408 = vpop.f32.mrb[0].mxu0
  %v409 = vadd.f32 %v81, %v408
  %v410 = vpop.f32.mrb[0].mxu0
  %v411 = vpop.f32.mrb[0].mxu0
  %v412 = vadd.f32 %v81, %v411
  %v413 = vpop.f32.mrb[0].mxu0
  %414 = vmatprep.mubr.bf16.mxu0 0
  %415 = vmatmul.mubr.bf16.gmra.mrb[0].mxu0 %v268
  %v416 = vpop.f32.mrb[0].mxu0
  %v417 = vadd.f32 %v81, %v416
  %v418 = vpop.f32.mrb[0].mxu0
  %v419 = vpop.f32.mrb[0].mxu0
  %v420 = vadd.f32 %v81, %v419
  %v421 = vpop.f32.mrb[0].mxu0
  %422 = vmatprep.mubr.bf16.mxu0 0
  %423 = vmatmul.mubr.bf16.gmra.mrb[0].mxu0 %v271
  %v424 = vpop.f32.mrb[0].mxu0
  %v425 = vadd.f32 %v81, %v424
  %v426 = vpop.f32.mrb[0].mxu0
  %v427 = vpop.f32.mrb[0].mxu0
  %v428 = vadd.f32 %v81, %v427
  %v429 = vpop.f32.mrb[0].mxu0
  %430 = vmatprep.mubr.bf16.mxu0 0
  %431 = vmatmul.mubr.bf16.gmra.mrb[0].mxu0 %v274
  %v432 = vpop.f32.mrb[0].mxu0
  %v433 = vadd.f32 %v81, %v432
  %v434 = vpop.f32.mrb[0].mxu0
  %v435 = vpop.f32.mrb[0].mxu0
  %v436 = vadd.f32 %v81, %v435
  %v437 = vpop.f32.mrb[0].mxu0
  %438 = vmatprep.mubr.bf16.mxu0 0
  %439 = vmatmul.mubr.bf16.gmra.mrb[0].mxu0 %v277
  %v440 = vpop.f32.mrb[0].mxu0
  %v441 = vadd.f32 %v81, %v440
  %v442 = vpop.f32.mrb[0].mxu0
  %v443 = vpop.f32.mrb[0].mxu0
  %v444 = vadd.f32 %v81, %v443
  %v445 = vpop.f32.mrb[0].mxu0
  %446 = vmatprep.mubr.bf16.mxu0 0
  %447 = vmatmul.mubr.bf16.gmra.mrb[0].mxu0 %v280
  %v448 = vpop.f32.mrb[0].mxu0
  %v449 = vadd.f32 %v81, %v448
  %v450 = vpop.f32.mrb[0].mxu0
  %v451 = vpop.f32.mrb[0].mxu0
  %v452 = vadd.f32 %v81, %v451
  %v453 = vpop.f32.mrb[0].mxu0
  %454 = vmatprep.mubr.bf16.mxu0 0
  %455 = vmatmul.mubr.bf16.gmra.mrb[0].mxu0 %v283
  %v456 = vpop.f32.mrb[0].mxu0
  %v457 = vadd.f32 %v81, %v456
  %v458 = vpop.f32.mrb[0].mxu0
  %v459 = vpop.f32.mrb[0].mxu0
  %v460 = vadd.f32 %v81, %v459
  %v461 = vpop.f32.mrb[0].mxu0
  %462 = vmatprep.mubr.bf16.mxu0 0
  %463 = vmatmul.mubr.bf16.gmra.mrb[0].mxu0 %v286
  %v464 = vpop.f32.mrb[0].mxu0
  %v465 = vadd.f32 %v81, %v464
  %v466 = vpop.f32.mrb[0].mxu0
  %v467 = vpop.f32.mrb[0].mxu0
  %v468 = vadd.f32 %v81, %v467
  %v469 = vpop.f32.mrb[0].mxu0
  %470 = vmatprep.mubr.bf16.mxu0 0
  %471 = vmatmul.mubr.bf16.gmra.mrb[0].mxu0 %v289
  %v472 = vpop.f32.mrb[0].mxu0
  %v473 = vadd.f32 %v81, %v472
  %v474 = vpop.f32.mrb[0].mxu0
  %v475 = vpop.f32.mrb[0].mxu0
  %v476 = vadd.f32 %v81, %v475
  %v477 = vpop.f32.mrb[0].mxu0
  %478 = vmatprep.mubr.bf16.mxu0 0
  %479 = vmatmul.mubr.bf16.gmra.mrb[0].mxu0 %v292
  %v480 = vpop.f32.mrb[0].mxu0
  %v481 = vadd.f32 %v81, %v480
  %v482 = vpop.f32.mrb[0].mxu0
  %v483 = vpop.f32.mrb[0].mxu0
  %v484 = vadd.f32 %v81, %v483
  %v485 = vpop.f32.mrb[0].mxu0
  %486 = vmatprep.mubr.bf16.mxu0 0
  %487 = vmatmul.mubr.bf16.gmra.mrb[0].mxu0 %v295
  %v488 = vpop.f32.mrb[0].mxu0
  %v489 = vadd.f32 %v81, %v488
  %v490 = vpop.f32.mrb[0].mxu0
  %v491 = vpop.f32.mrb[0].mxu0
  %v492 = vadd.f32 %v81, %v491
  %v493 = vpop.f32.mrb[0].mxu0
  %494 = vmatprep.mubr.bf16.mxu0 0
  %495 = vmatmul.mubr.bf16.gmra.mrb[0].mxu0 %v298
  %v496 = vpop.f32.mrb[0].mxu0
  %v497 = vadd.f32 %v81, %v496
  %v498 = vpop.f32.mrb[0].mxu0
  %v499 = vpop.f32.mrb[0].mxu0
  %v500 = vadd.f32 %v81, %v499
  %v501 = vpop.f32.mrb[0].mxu0
  %502 = vmatprep.mubr.bf16.mxu0 0
  %503 = vmatmul.mubr.bf16.gmra.mrb[0].mxu0 %v301
  %v504 = vpop.f32.mrb[0].mxu0
  %v505 = vadd.f32 %v81, %v504
  %v506 = vpop.f32.mrb[0].mxu0
  %v507 = vpop.f32.mrb[0].mxu0
  %v508 = vadd.f32 %v81, %v507
  %v509 = vpop.f32.mrb[0].mxu0
  %510 = vmatprep.mubr.bf16.mxu0 0
  %511 = vmatmul.mubr.bf16.gmra.mrb[0].mxu0 %v304
  %v512 = vpop.f32.mrb[0].mxu0
  %v513 = vadd.f32 %v81, %v512
  %v514 = vpop.f32.mrb[0].mxu0
  %v515 = vpop.f32.mrb[0].mxu0
  %v516 = vadd.f32 %v81, %v515
  %v517 = vpop.f32.mrb[0].mxu0
  %518 = vmatprep.mubr.bf16.mxu0 0
  %519 = vmatmul.mubr.bf16.gmra.mrb[0].mxu0 %v307
  %v520 = vpop.f32.mrb[0].mxu0
  %v521 = vadd.f32 %v81, %v520
  %v522 = vpop.f32.mrb[0].mxu0
  %v523 = vpop.f32.mrb[0].mxu0
  %v524 = vadd.f32 %v81, %v523
  %v525 = vpop.f32.mrb[0].mxu0
  %526 = vmatprep.mubr.bf16.mxu0 0
  %527 = vmatmul.mubr.bf16.gmra.mrb[0].mxu0 %v310
  %v528 = vpop.f32.mrb[0].mxu0
  %v529 = vadd.f32 %v81, %v528
  %v530 = vpop.f32.mrb[0].mxu0
  %v531 = vpop.f32.mrb[0].mxu0
  %v532 = vadd.f32 %v81, %v531
  %v533 = vpop.f32.mrb[0].mxu0
  %534 = vmatprep.mubr.bf16.mxu0 0
  %535 = vmatmul.mubr.bf16.gmra.mrb[0].mxu0 %v313
  %v536 = vpop.f32.mrb[0].mxu0
  %v537 = vadd.f32 %v81, %v536
  %v538 = vpop.f32.mrb[0].mxu0
  %v539 = vpop.f32.mrb[0].mxu0
  %v540 = vadd.f32 %v81, %v539
  %v541 = vpop.f32.mrb[0].mxu0
  %542 = vmatprep.mubr.bf16.mxu0 0
  %543 = vmatmul.mubr.bf16.gmra.mrb[0].mxu0 %v316
  %v544 = vpop.f32.mrb[0].mxu0
  %v545 = vadd.f32 %v81, %v544
  %v546 = vpop.f32.mrb[0].mxu0
  %v547 = vpop.f32.mrb[0].mxu0
  %v548 = vpop.f32.mrb[0].mxu0
  %549 = vdwg.mxu0
  %550 = vst [vmem:[%s3] sm:$0xff] %v353
  %551 = vst [vmem:[%s3 + $0x8] sm:$0xff] %v356
  %552 = vst [vmem:[%s3 + $0x10] sm:$0xff] %v361
  %553 = vst [vmem:[%s3 + $0x18] sm:$0xff] %v364
  %554 = vst [vmem:[%s3 + $0x20] sm:$0xff] %v369
  %555 = vst [vmem:[%s3 + $0x28] sm:$0xff] %v372
  %556 = vst [vmem:[%s3 + $0x30] sm:$0xff] %v377
  %557 = vst [vmem:[%s3 + $0x38] sm:$0xff] %v380
  %558 = vst [vmem:[%s3 + $0x40] sm:$0xff] %v385
  %559 = vst [vmem:[%s3 + $0x48] sm:$0xff] %v388
  %560 = vst [vmem:[%s3 + $0x50] sm:$0xff] %v393
  %561 = vst [vmem:[%s3 + $0x58] sm:$0xff] %v396
  %562 = vst [vmem:[%s3 + $0x60] sm:$0xff] %v401
  %563 = vst [vmem:[%s3 + $0x68] sm:$0xff] %v404
  %564 = vst [vmem:[%s3 + $0x70] sm:$0xff] %v409
  %565 = vst [vmem:[%s3 + $0x78] sm:$0xff] %v412
  %566 = vst [vmem:[%s3 + $0x80] sm:$0xff] %v417
  %567 = vst [vmem:[%s3 + $0x88] sm:$0xff] %v420
  %568 = vst [vmem:[%s3 + $0x90] sm:$0xff] %v425
  %569 = vst [vmem:[%s3 + $0x98] sm:$0xff] %v428
  %570 = vst [vmem:[%s3 + $0xa0] sm:$0xff] %v433
  %571 = vst [vmem:[%s3 + $0xa8] sm:$0xff] %v436
  %572 = vst [vmem:[%s3 + $0xb0] sm:$0xff] %v441
  %573 = vst [vmem:[%s3 + $0xb8] sm:$0xff] %v444
  %574 = vst [vmem:[%s3 + $0xc0] sm:$0xff] %v449
  %575 = vst [vmem:[%s3 + $0xc8] sm:$0xff] %v452
  %576 = vst [vmem:[%s3 + $0xd0] sm:$0xff] %v457
  %577 = vst [vmem:[%s3 + $0xd8] sm:$0xff] %v460
  %578 = vst [vmem:[%s3 + $0xe0] sm:$0xff] %v465
  %579 = vst [vmem:[%s3 + $0xe8] sm:$0xff] %v468
  %580 = vst [vmem:[%s3 + $0xf0] sm:$0xff] %v473
  %581 = vst [vmem:[%s3 + $0xf8] sm:$0xff] %v476
  %582 = vst [vmem:[%s3 + $0x100] sm:$0xff] %v481
  %583 = vst [vmem:[%s3 + $0x108] sm:$0xff] %v484
  %584 = vst [vmem:[%s3 + $0x110] sm:$0xff] %v489
  %585 = vst [vmem:[%s3 + $0x118] sm:$0xff] %v492
  %586 = vst [vmem:[%s3 + $0x120] sm:$0xff] %v497
  %587 = vst [vmem:[%s3 + $0x128] sm:$0xff] %v500
  %588 = vst [vmem:[%s3 + $0x130] sm:$0xff] %v505
  %589 = vst [vmem:[%s3 + $0x138] sm:$0xff] %v508
  %590 = vst [vmem:[%s3 + $0x140] sm:$0xff] %v513
  %591 = vst [vmem:[%s3 + $0x148] sm:$0xff] %v516
  %592 = vst [vmem:[%s3 + $0x150] sm:$0xff] %v521
  %593 = vst [vmem:[%s3 + $0x158] sm:$0xff] %v524
  %594 = vst [vmem:[%s3 + $0x160] sm:$0xff] %v529
  %595 = vst [vmem:[%s3 + $0x168] sm:$0xff] %v532
  %596 = vst [vmem:[%s3 + $0x170] sm:$0xff] %v537
  %597 = vst [vmem:[%s3 + $0x178] sm:$0xff] %v540
  %598 = vst [vmem:[%s3 + $0x180] sm:$0xff] %v545
  // Predicated region
  $region14: #{forward.26} parent=0 // pred_check
    _
  $region15: #{forward.26} parent=0 // pred_check_branch
    %600 = sbr.rel (0) target = $region17
  $region16: #{forward.26} parent=0 // pred_region
    _
  $region17: #{forward.26} parent=0 // pred_fallthru
    _
  // Predicated region
  $region18: #{forward.26} parent=0 // pred_check
    _
  $region19: #{forward.26} parent=0 // pred_check_branch
    %602 = sbr.rel (0) target = $region21
  $region20: #{forward.26} parent=0 // pred_region
    _
  $region21: #{forward.26} parent=0 // pred_fallthru
    _

// kernel: forward.27
$region0: #{forward.27}
  #allocation0 [shape = 'u32[]', space=smem, size = 0x4, offset = 0x4, fixed_abs, tag = 'smem constant byte address 0x4 - core index']
  #allocation1 [shape = 'u32[144,128]{1,0:T(1,128)}', space=vmem, size = 0x12000, scoped, tag = 'internal scratch']
  %s0 = inlined_call_operand.vmem [shape: bf16[392,1152], index: 0, kind: input, shape index: {}]
  %s1 = inlined_call_operand.vmem [shape: bf16[1152,128], index: 1, kind: input, shape index: {}]
  %s2 = inlined_call_operand.vmem [shape: f32[1,128], index: 2, kind: input, shape index: {}]
  %s3 = inlined_call_operand.vmem [shape: f32[392,128], index: 3, kind: output, shape index: {}]
  %s4 = sld [smem:[#allocation0]]
  $region22: #{forward.27} parent=0
    _
  %s6 = ssub.s32 1, %s4
  %s7 = scalar_select 0, %s6, %s4
  // Predicated region
  $region2: #{forward.27} parent=0 // pred_check
    _
  $region3: #{forward.27} parent=0 // pred_check_branch
    %9 = sbr.rel (0) target = $region5
  $region4: #{forward.27} parent=0 // pred_region
    _
  $region5: #{forward.27} parent=0 // pred_fallthru
    _
  // Predicated region
  $region6: #{forward.27} parent=0 // pred_check
    _
  $region7: #{forward.27} parent=0 // pred_check_branch
    %11 = sbr.rel (0) target = $region9
  $region8: #{forward.27} parent=0 // pred_region
    _
  $region9: #{forward.27} parent=0 // pred_fallthru
    _
  // Predicated region
  $region10: #{forward.27} parent=0 // pred_check
    _
  $region11: #{forward.27} parent=0 // pred_check_branch
    %13 = sbr.rel (0) target = $region13
  $region12: #{forward.27} parent=0 // pred_region
    _
  $region13: #{forward.27} parent=0 // pred_fallthru
    _
  %v15 = vld [vmem:[%s0] sm:$0xff]
  %v16 = vld [vmem:[%s0 + $0x8] sm:$0xff]
  %v17 = vld [vmem:[%s0 + $0x10] sm:$0xff]
  %v18 = vld [vmem:[%s0 + $0x18] sm:$0xff]
  %v19 = vld [vmem:[%s0 + $0x20] sm:$0xf]
  %v20 = vld [vmem:[%s0 + $0x24] sm:$0xff]
  %v21 = vld [vmem:[%s0 + $0x2c] sm:$0xff]
  %v22 = vld [vmem:[%s0 + $0x34] sm:$0xff]
  %v23 = vld [vmem:[%s0 + $0x3c] sm:$0xff]
  %v24 = vld [vmem:[%s0 + $0x44] sm:$0xf]
  %v25 = vld [vmem:[%s0 + $0x48] sm:$0xff]
  %v26 = vld [vmem:[%s0 + $0x50] sm:$0xff]
  %v27 = vld [vmem:[%s0 + $0x58] sm:$0xff]
  %v28 = vld [vmem:[%s0 + $0x60] sm:$0xff]
  %v29 = vld [vmem:[%s0 + $0x68] sm:$0xf]
  %v30 = vld [vmem:[%s0 + $0x6c] sm:$0xff]
  %v31 = vld [vmem:[%s0 + $0x74] sm:$0xff]
  %v32 = vld [vmem:[%s0 + $0x7c] sm:$0xff]
  %v33 = vld [vmem:[%s0 + $0x84] sm:$0xff]
  %v34 = vld [vmem:[%s0 + $0x8c] sm:$0xf]
  %v35 = vld [vmem:[%s0 + $0x90] sm:$0xff]
  %v36 = vld [vmem:[%s0 + $0x98] sm:$0xff]
  %v37 = vld [vmem:[%s0 + $0xa0] sm:$0xff]
  %v38 = vld [vmem:[%s0 + $0xa8] sm:$0xff]
  %v39 = vld [vmem:[%s0 + $0xb0] sm:$0xf]
  %v40 = vld [vmem:[%s0 + $0xb4] sm:$0xff]
  %v41 = vld [vmem:[%s0 + $0xbc] sm:$0xff]
  %v42 = vld [vmem:[%s0 + $0xc4] sm:$0xff]
  %v43 = vld [vmem:[%s0 + $0xcc] sm:$0xff]
  %v44 = vld [vmem:[%s0 + $0xd4] sm:$0xf]
  %v45 = vld [vmem:[%s0 + $0xd8] sm:$0xff]
  %v46 = vld [vmem:[%s0 + $0xe0] sm:$0xff]
  %v47 = vld [vmem:[%s0 + $0xe8] sm:$0xff]
  %v48 = vld [vmem:[%s0 + $0xf0] sm:$0xff]
  %v49 = vld [vmem:[%s0 + $0xf8] sm:$0xf]
  %v50 = vld [vmem:[%s0 + $0xfc] sm:$0xff]
  %v51 = vld [vmem:[%s0 + $0x104] sm:$0xff]
  %v52 = vld [vmem:[%s0 + $0x10c] sm:$0xff]
  %v53 = vld [vmem:[%s0 + $0x114] sm:$0xff]
  %v54 = vld [vmem:[%s0 + $0x11c] sm:$0xf]
  %v55 = vld [vmem:[%s0 + $0x120] sm:$0xff]
  %v56 = vld [vmem:[%s0 + $0x128] sm:$0xff]
  %v57 = vld [vmem:[%s0 + $0x130] sm:$0xff]
  %v58 = vld [vmem:[%s0 + $0x138] sm:$0xff]
  %v59 = vld [vmem:[%s0 + $0x140] sm:$0xf]
  %v60 = vld [vmem:[%s0 + $0x144] sm:$0xff]
  %v61 = vld [vmem:[%s0 + $0x14c] sm:$0xff]
  %v62 = vld [vmem:[%s0 + $0x154] sm:$0xff]
  %v63 = vld [vmem:[%s0 + $0x15c] sm:$0xff]
  %v64 = vld [vmem:[%s0 + $0x164] sm:$0xf]
  %v65 = vld [vmem:[%s0 + $0x168] sm:$0xff]
  %v66 = vld [vmem:[%s0 + $0x170] sm:$0xff]
  %v67 = vld [vmem:[%s0 + $0x178] sm:$0xff]
  %v68 = vld [vmem:[%s0 + $0x180] sm:$0xff]
  %v69 = vld [vmem:[%s0 + $0x188] sm:$0xf]
  %v70 = vld [vmem:[%s0 + $0x18c] sm:$0xff]
  %v71 = vld [vmem:[%s0 + $0x194] sm:$0xff]
  %v72 = vld [vmem:[%s0 + $0x19c] sm:$0xff]
  %v73 = vld [vmem:[%s0 + $0x1a4] sm:$0xff]
  %v74 = vld [vmem:[%s0 + $0x1ac] sm:$0xf]
  %v75 = vld [vmem:[%s0 + $0x1b0] sm:$0xff]
  %v76 = vld [vmem:[%s0 + $0x1b8] sm:$0xff]
  %v77 = vld [vmem:[%s0 + $0x1c0] sm:$0xff]
  %v78 = vld [vmem:[%s0 + $0x1c8] sm:$0xff]
  %v79 = vld [vmem:[%s0 + $0x1d0] sm:$0xf]
  %v80 = vld [vmem:[%s0 + $0x1d4] sm:$0xff]
  %v81 = vld [vmem:[%s0 + $0x1dc] sm:$0xff]
  %v82 = vld [vmem:[%s0 + $0x1e4] sm:$0xff]
  %v83 = vld [vmem:[%s0 + $0x1ec] sm:$0xff]
  %v84 = vld [vmem:[%s0 + $0x1f4] sm:$0xf]
  %v85 = vld [vmem:[%s0 + $0x1f8] sm:$0xff]
  %v86 = vld [vmem:[%s0 + $0x200] sm:$0xff]
  %v87 = vld [vmem:[%s0 + $0x208] sm:$0xff]
  %v88 = vld [vmem:[%s0 + $0x210] sm:$0xff]
  %v89 = vld [vmem:[%s0 + $0x218] sm:$0xf]
  %v90 = vld [vmem:[%s0 + $0x21c] sm:$0xff]
  %v91 = vld [vmem:[%s0 + $0x224] sm:$0xff]
  %v92 = vld [vmem:[%s0 + $0x22c] sm:$0xff]
  %v93 = vld [vmem:[%s0 + $0x234] sm:$0xff]
  %v94 = vld [vmem:[%s0 + $0x23c] sm:$0xf]
  %v95 = vld [vmem:[%s0 + $0x240] sm:$0xff]
  %v96 = vld [vmem:[%s0 + $0x248] sm:$0xff]
  %v97 = vld [vmem:[%s0 + $0x250] sm:$0xff]
  %v98 = vld [vmem:[%s0 + $0x258] sm:$0xff]
  %v99 = vld [vmem:[%s0 + $0x260] sm:$0xf]
  %v100 = vld [vmem:[%s0 + $0x264] sm:$0xff]
  %v101 = vld [vmem:[%s0 + $0x26c] sm:$0xff]
  %v102 = vld [vmem:[%s0 + $0x274] sm:$0xff]
  %v103 = vld [vmem:[%s0 + $0x27c] sm:$0xff]
  %v104 = vld [vmem:[%s0 + $0x284] sm:$0xf]
  %v105 = vld [vmem:[%s0 + $0x288] sm:$0xff]
  %v106 = vld [vmem:[%s0 + $0x290] sm:$0xff]
  %v107 = vld [vmem:[%s0 + $0x298] sm:$0xff]
  %v108 = vld [vmem:[%s0 + $0x2a0] sm:$0xff]
  %v109 = vld [vmem:[%s0 + $0x2a8] sm:$0xf]
  %v110 = vld [vmem:[%s0 + $0x2ac] sm:$0xff]
  %v111 = vld [vmem:[%s0 + $0x2b4] sm:$0xff]
  %v112 = vld [vmem:[%s0 + $0x2bc] sm:$0xff]
  %v113 = vld [vmem:[%s0 + $0x2c4] sm:$0xff]
  %v114 = vld [vmem:[%s0 + $0x2cc] sm:$0xf]
  %v115 = vld [vmem:[%s0 + $0x2d0] sm:$0xff]
  %v116 = vld [vmem:[%s0 + $0x2d8] sm:$0xff]
  %v117 = vld [vmem:[%s0 + $0x2e0] sm:$0xff]
  %v118 = vld [vmem:[%s0 + $0x2e8] sm:$0xff]
  %v119 = vld [vmem:[%s0 + $0x2f0] sm:$0xf]
  %v120 = vld [vmem:[%s0 + $0x2f4] sm:$0xff]
  %v121 = vld [vmem:[%s0 + $0x2fc] sm:$0xff]
  %v122 = vld [vmem:[%s0 + $0x304] sm:$0xff]
  %v123 = vld [vmem:[%s0 + $0x30c] sm:$0xff]
  %v124 = vld [vmem:[%s0 + $0x314] sm:$0xf]
  %v125 = vld [vmem:[%s0 + $0x318] sm:$0xff]
  %v126 = vld [vmem:[%s0 + $0x320] sm:$0xff]
  %v127 = vld [vmem:[%s0 + $0x328] sm:$0xff]
  %v128 = vld [vmem:[%s0 + $0x330] sm:$0xff]
  %v129 = vld [vmem:[%s0 + $0x338] sm:$0xf]
  %v130 = vld [vmem:[%s0 + $0x33c] sm:$0xff]
  %v131 = vld [vmem:[%s0 + $0x344] sm:$0xff]
  %v132 = vld [vmem:[%s0 + $0x34c] sm:$0xff]
  %v133 = vld [vmem:[%s0 + $0x354] sm:$0xff]
  %v134 = vld [vmem:[%s0 + $0x35c] sm:$0xf]
  %v135 = vld [vmem:[%s0 + $0x360] sm:$0xff]
  %v136 = vld [vmem:[%s0 + $0x368] sm:$0xff]
  %v137 = vld [vmem:[%s0 + $0x370] sm:$0xff]
  %v138 = vld [vmem:[%s0 + $0x378] sm:$0xff]
  %v139 = vld [vmem:[%s0 + $0x380] sm:$0xf]
  %v140 = vld [vmem:[%s0 + $0x384] sm:$0xff]
  %v141 = vld [vmem:[%s0 + $0x38c] sm:$0xff]
  %v142 = vld [vmem:[%s0 + $0x394] sm:$0xff]
  %v143 = vld [vmem:[%s0 + $0x39c] sm:$0xff]
  %v144 = vld [vmem:[%s0 + $0x3a4] sm:$0xf]
  %v145 = vld [vmem:[%s0 + $0x3a8] sm:$0xff]
  %v146 = vld [vmem:[%s0 + $0x3b0] sm:$0xff]
  %v147 = vld [vmem:[%s0 + $0x3b8] sm:$0xff]
  %v148 = vld [vmem:[%s0 + $0x3c0] sm:$0xff]
  %v149 = vld [vmem:[%s0 + $0x3c8] sm:$0xf]
  %v150 = vld [vmem:[%s0 + $0x3cc] sm:$0xff]
  %v151 = vld [vmem:[%s0 + $0x3d4] sm:$0xff]
  %v152 = vld [vmem:[%s0 + $0x3dc] sm:$0xff]
  %v153 = vld [vmem:[%s0 + $0x3e4] sm:$0xff]
  %v154 = vld [vmem:[%s0 + $0x3ec] sm:$0xf]
  %v155 = vld [vmem:[%s0 + $0x3f0] sm:$0xff]
  %v156 = vld [vmem:[%s0 + $0x3f8] sm:$0xff]
  %v157 = vld [vmem:[%s0 + $0x400] sm:$0xff]
  %v158 = vld [vmem:[%s0 + $0x408] sm:$0xff]
  %v159 = vld [vmem:[%s0 + $0x410] sm:$0xf]
  %v160 = vld [vmem:[%s0 + $0x414] sm:$0xff]
  %v161 = vld [vmem:[%s0 + $0x41c] sm:$0xff]
  %v162 = vld [vmem:[%s0 + $0x424] sm:$0xff]
  %v163 = vld [vmem:[%s0 + $0x42c] sm:$0xff]
  %v164 = vld [vmem:[%s0 + $0x434] sm:$0xf]
  %v165 = vld [vmem:[%s0 + $0x438] sm:$0xff]
  %v166 = vld [vmem:[%s0 + $0x440] sm:$0xff]
  %v167 = vld [vmem:[%s0 + $0x448] sm:$0xff]
  %v168 = vld [vmem:[%s0 + $0x450] sm:$0xff]
  %v169 = vld [vmem:[%s0 + $0x458] sm:$0xf]
  %v170 = vld [vmem:[%s0 + $0x45c] sm:$0xff]
  %v171 = vld [vmem:[%s0 + $0x464] sm:$0xff]
  %v172 = vld [vmem:[%s0 + $0x46c] sm:$0xff]
  %v173 = vld [vmem:[%s0 + $0x474] sm:$0xff]
  %v174 = vld [vmem:[%s0 + $0x47c] sm:$0xf]
  %v175 = vld [vmem:[%s0 + $0x480] sm:$0xff]
  %v176 = vld [vmem:[%s0 + $0x488] sm:$0xff]
  %v177 = vld [vmem:[%s0 + $0x490] sm:$0xff]
  %v178 = vld [vmem:[%s0 + $0x498] sm:$0xff]
  %v179 = vld [vmem:[%s0 + $0x4a0] sm:$0xf]
  %v180 = vld [vmem:[%s0 + $0x4a4] sm:$0xff]
  %v181 = vld [vmem:[%s0 + $0x4ac] sm:$0xff]
  %v182 = vld [vmem:[%s0 + $0x4b4] sm:$0xff]
  %v183 = vld [vmem:[%s0 + $0x4bc] sm:$0xff]
  %v184 = vld [vmem:[%s0 + $0x4c4] sm:$0xf]
  %v185 = vld [vmem:[%s0 + $0x4c8] sm:$0xff]
  %v186 = vld [vmem:[%s0 + $0x4d0] sm:$0xff]
  %v187 = vld [vmem:[%s0 + $0x4d8] sm:$0xff]
  %v188 = vld [vmem:[%s0 + $0x4e0] sm:$0xff]
  %v189 = vld [vmem:[%s0 + $0x4e8] sm:$0xf]
  %v190 = vld [vmem:[%s0 + $0x4ec] sm:$0xff]
  %v191 = vld [vmem:[%s0 + $0x4f4] sm:$0xff]
  %v192 = vld [vmem:[%s0 + $0x4fc] sm:$0xff]
  %v193 = vld [vmem:[%s0 + $0x504] sm:$0xff]
  %v194 = vld [vmem:[%s0 + $0x50c] sm:$0xf]
  %v195 = vld [vmem:[%s0 + $0x510] sm:$0xff]
  %v196 = vld [vmem:[%s0 + $0x518] sm:$0xff]
  %v197 = vld [vmem:[%s0 + $0x520] sm:$0xff]
  %v198 = vld [vmem:[%s0 + $0x528] sm:$0xff]
  %v199 = vld [vmem:[%s0 + $0x530] sm:$0xf]
  %v200 = vld [vmem:[%s0 + $0x534] sm:$0xff]
  %v201 = vld [vmem:[%s0 + $0x53c] sm:$0xff]
  %v202 = vld [vmem:[%s0 + $0x544] sm:$0xff]
  %v203 = vld [vmem:[%s0 + $0x54c] sm:$0xff]
  %v204 = vld [vmem:[%s0 + $0x554] sm:$0xf]
  %v205 = vld [vmem:[%s0 + $0x558] sm:$0xff]
  %v206 = vld [vmem:[%s0 + $0x560] sm:$0xff]
  %v207 = vld [vmem:[%s0 + $0x568] sm:$0xff]
  %v208 = vld [vmem:[%s0 + $0x570] sm:$0xff]
  %v209 = vld [vmem:[%s0 + $0x578] sm:$0xf]
  %v210 = vld [vmem:[%s0 + $0x57c] sm:$0xff]
  %v211 = vld [vmem:[%s0 + $0x584] sm:$0xff]
  %v212 = vld [vmem:[%s0 + $0x58c] sm:$0xff]
  %v213 = vld [vmem:[%s0 + $0x594] sm:$0xff]
  %v214 = vld [vmem:[%s0 + $0x59c] sm:$0xf]
  %v215 = vld [vmem:[%s0 + $0x5a0] sm:$0xff]
  %v216 = vld [vmem:[%s0 + $0x5a8] sm:$0xff]
  %v217 = vld [vmem:[%s0 + $0x5b0] sm:$0xff]
  %v218 = vld [vmem:[%s0 + $0x5b8] sm:$0xff]
  %v219 = vld [vmem:[%s0 + $0x5c0] sm:$0xf]
  %v220 = vld [vmem:[%s0 + $0x5c4] sm:$0xff]
  %v221 = vld [vmem:[%s0 + $0x5cc] sm:$0xff]
  %v222 = vld [vmem:[%s0 + $0x5d4] sm:$0xff]
  %v223 = vld [vmem:[%s0 + $0x5dc] sm:$0xff]
  %v224 = vld [vmem:[%s0 + $0x5e4] sm:$0xf]
  %v225 = vld [vmem:[%s0 + $0x5e8] sm:$0xff]
  %v226 = vld [vmem:[%s0 + $0x5f0] sm:$0xff]
  %v227 = vld [vmem:[%s0 + $0x5f8] sm:$0xff]
  %v228 = vld [vmem:[%s0 + $0x600] sm:$0xff]
  %v229 = vld [vmem:[%s0 + $0x608] sm:$0xf]
  %v230 = vld [vmem:[%s0 + $0x60c] sm:$0xff]
  %v231 = vld [vmem:[%s0 + $0x614] sm:$0xff]
  %v232 = vld [vmem:[%s0 + $0x61c] sm:$0xff]
  %v233 = vld [vmem:[%s0 + $0x624] sm:$0xff]
  %v234 = vld [vmem:[%s0 + $0x62c] sm:$0xf]
  %v235 = vld [vmem:[%s0 + $0x630] sm:$0xff]
  %v236 = vld [vmem:[%s0 + $0x638] sm:$0xff]
  %v237 = vld [vmem:[%s0 + $0x640] sm:$0xff]
  %v238 = vld [vmem:[%s0 + $0x648] sm:$0xff]
  %v239 = vld [vmem:[%s0 + $0x650] sm:$0xf]
  %v240 = vld [vmem:[%s0 + $0x654] sm:$0xff]
  %v241 = vld [vmem:[%s0 + $0x65c] sm:$0xff]
  %v242 = vld [vmem:[%s0 + $0x664] sm:$0xff]
  %v243 = vld [vmem:[%s0 + $0x66c] sm:$0xff]
  %v244 = vld [vmem:[%s0 + $0x674] sm:$0xf]
  %v245 = vld [vmem:[%s0 + $0x678] sm:$0xff]
  %v246 = vld [vmem:[%s0 + $0x680] sm:$0xff]
  %v247 = vld [vmem:[%s0 + $0x688] sm:$0xff]
  %v248 = vld [vmem:[%s0 + $0x690] sm:$0xff]
  %v249 = vld [vmem:[%s0 + $0x698] sm:$0xf]
  %v250 = vld [vmem:[%s0 + $0x69c] sm:$0xff]
  %v251 = vld [vmem:[%s0 + $0x6a4] sm:$0xff]
  %v252 = vld [vmem:[%s0 + $0x6ac] sm:$0xff]
  %v253 = vld [vmem:[%s0 + $0x6b4] sm:$0xff]
  %v254 = vld [vmem:[%s0 + $0x6bc] sm:$0xf]
  %v255 = vld [vmem:[%s0 + $0x6c0] sm:$0xff]
  %v256 = vld [vmem:[%s0 + $0x6c8] sm:$0xff]
  %v257 = vld [vmem:[%s0 + $0x6d0] sm:$0xff]
  %v258 = vld [vmem:[%s0 + $0x6d8] sm:$0xff]
  %v259 = vld [vmem:[%s0 + $0x6e0] sm:$0xf]
  %v260 = vld [vmem:[%s1] sm:$0xf]
  %v261 = vld [vmem:[%s1 + $0x4] sm:$0xf]
  %v262 = vld [vmem:[%s1 + $0x8] sm:$0xf]
  %v263 = vld [vmem:[%s1 + $0xc] sm:$0xf]
  %v264 = vld [vmem:[%s1 + $0x10] sm:$0xf]
  %v265 = vld [vmem:[%s1 + $0x14] sm:$0xf]
  %v266 = vld [vmem:[%s1 + $0x18] sm:$0xf]
  %v267 = vld [vmem:[%s1 + $0x1c] sm:$0xf]
  %v268 = vld [vmem:[%s1 + $0x20] sm:$0xf]
  %v269 = vld [vmem:[%s1 + $0x24] sm:$0xf]
  %v270 = vld [vmem:[%s1 + $0x28] sm:$0xf]
  %v271 = vld [vmem:[%s1 + $0x2c] sm:$0xf]
  %v272 = vld [vmem:[%s1 + $0x30] sm:$0xf]
  %v273 = vld [vmem:[%s1 + $0x34] sm:$0xf]
  %v274 = vld [vmem:[%s1 + $0x38] sm:$0xf]
  %v275 = vld [vmem:[%s1 + $0x3c] sm:$0xf]
  %v276 = vld [vmem:[%s1 + $0x40] sm:$0xf]
  %v277 = vld [vmem:[%s1 + $0x44] sm:$0xf]
  %v278 = vld [vmem:[%s1 + $0x48] sm:$0xf]
  %v279 = vld [vmem:[%s1 + $0x4c] sm:$0xf]
  %v280 = vld [vmem:[%s1 + $0x50] sm:$0xf]
  %v281 = vld [vmem:[%s1 + $0x54] sm:$0xf]
  %v282 = vld [vmem:[%s1 + $0x58] sm:$0xf]
  %v283 = vld [vmem:[%s1 + $0x5c] sm:$0xf]
  %v284 = vld [vmem:[%s1 + $0x60] sm:$0xf]
  %v285 = vld [vmem:[%s1 + $0x64] sm:$0xf]
  %v286 = vld [vmem:[%s1 + $0x68] sm:$0xf]
  %v287 = vld [vmem:[%s1 + $0x6c] sm:$0xf]
  %v288 = vld [vmem:[%s1 + $0x70] sm:$0xf]
  %v289 = vld [vmem:[%s1 + $0x74] sm:$0xf]
  %v290 = vld [vmem:[%s1 + $0x78] sm:$0xf]
  %v291 = vld [vmem:[%s1 + $0x7c] sm:$0xf]
  %v292 = vld [vmem:[%s1 + $0x80] sm:$0xf]
  %v293 = vld [vmem:[%s1 + $0x84] sm:$0xf]
  %v294 = vld [vmem:[%s1 + $0x88] sm:$0xf]
  %v295 = vld [vmem:[%s1 + $0x8c] sm:$0xf]
  %v296 = vld [vmem:[%s1 + $0x90] sm:$0xf]
  %v297 = vld [vmem:[%s1 + $0x94] sm:$0xf]
  %v298 = vld [vmem:[%s1 + $0x98] sm:$0xf]
  %v299 = vld [vmem:[%s1 + $0x9c] sm:$0xf]
  %v300 = vld [vmem:[%s1 + $0xa0] sm:$0xf]
  %v301 = vld [vmem:[%s1 + $0xa4] sm:$0xf]
  %v302 = vld [vmem:[%s1 + $0xa8] sm:$0xf]
  %v303 = vld [vmem:[%s1 + $0xac] sm:$0xf]
  %v304 = vld [vmem:[%s1 + $0xb0] sm:$0xf]
  %v305 = vld [vmem:[%s1 + $0xb4] sm:$0xf]
  %v306 = vld [vmem:[%s1 + $0xb8] sm:$0xf]
  %v307 = vld [vmem:[%s1 + $0xbc] sm:$0xf]
  %v308 = vld [vmem:[%s1 + $0xc0] sm:$0xf]
  %v309 = vld [vmem:[%s1 + $0xc4] sm:$0xf]
  %v310 = vld [vmem:[%s1 + $0xc8] sm:$0xf]
  %v311 = vld [vmem:[%s1 + $0xcc] sm:$0xf]
  %v312 = vld [vmem:[%s1 + $0xd0] sm:$0xf]
  %v313 = vld [vmem:[%s1 + $0xd4] sm:$0xf]
  %v314 = vld [vmem:[%s1 + $0xd8] sm:$0xf]
  %v315 = vld [vmem:[%s1 + $0xdc] sm:$0xf]
  %v316 = vld [vmem:[%s1 + $0xe0] sm:$0xf]
  %v317 = vld [vmem:[%s1 + $0xe4] sm:$0xf]
  %v318 = vld [vmem:[%s1 + $0xe8] sm:$0xf]
  %v319 = vld [vmem:[%s1 + $0xec] sm:$0xf]
  %v320 = vld [vmem:[%s1 + $0xf0] sm:$0xf]
  %v321 = vld [vmem:[%s1 + $0xf4] sm:$0xf]
  %v322 = vld [vmem:[%s1 + $0xf8] sm:$0xf]
  %v323 = vld [vmem:[%s1 + $0xfc] sm:$0xf]
  %v324 = vld [vmem:[%s1 + $0x100] sm:$0xf]
  %v325 = vld [vmem:[%s1 + $0x104] sm:$0xf]
  %v326 = vld [vmem:[%s1 + $0x108] sm:$0xf]
  %v327 = vld [vmem:[%s1 + $0x10c] sm:$0xf]
  %v328 = vld [vmem:[%s1 + $0x110] sm:$0xf]
  %v329 = vld [vmem:[%s1 + $0x114] sm:$0xf]
  %v330 = vld [vmem:[%s1 + $0x118] sm:$0xf]
  %v331 = vld [vmem:[%s1 + $0x11c] sm:$0xf]
  %v332 = vld [vmem:[%s1 + $0x120] sm:$0xf]
  %v333 = vld [vmem:[%s1 + $0x124] sm:$0xf]
  %v334 = vld [vmem:[%s1 + $0x128] sm:$0xf]
  %v335 = vld [vmem:[%s1 + $0x12c] sm:$0xf]
  %v336 = vld [vmem:[%s1 + $0x130] sm:$0xf]
  %v337 = vld [vmem:[%s1 + $0x134] sm:$0xf]
  %v338 = vld [vmem:[%s1 + $0x138] sm:$0xf]
  %v339 = vld [vmem:[%s1 + $0x13c] sm:$0xf]
  %v340 = vld [vmem:[%s1 + $0x140] sm:$0xf]
  %v341 = vld [vmem:[%s1 + $0x144] sm:$0xf]
  %v342 = vld [vmem:[%s1 + $0x148] sm:$0xf]
  %v343 = vld [vmem:[%s1 + $0x14c] sm:$0xf]
  %v344 = vld [vmem:[%s1 + $0x150] sm:$0xf]
  %v345 = vld [vmem:[%s1 + $0x154] sm:$0xf]
  %v346 = vld [vmem:[%s1 + $0x158] sm:$0xf]
  %v347 = vld [vmem:[%s1 + $0x15c] sm:$0xf]
  %v348 = vld [vmem:[%s1 + $0x160] sm:$0xf]
  %v349 = vld [vmem:[%s1 + $0x164] sm:$0xf]
  %v350 = vld [vmem:[%s1 + $0x168] sm:$0xf]
  %v351 = vld [vmem:[%s1 + $0x16c] sm:$0xf]
  %v352 = vld [vmem:[%s1 + $0x170] sm:$0xf]
  %v353 = vld [vmem:[%s1 + $0x174] sm:$0xf]
  %v354 = vld [vmem:[%s1 + $0x178] sm:$0xf]
  %v355 = vld [vmem:[%s1 + $0x17c] sm:$0xf]
  %v356 = vld [vmem:[%s1 + $0x180] sm:$0xf]
  %v357 = vld [vmem:[%s1 + $0x184] sm:$0xf]
  %v358 = vld [vmem:[%s1 + $0x188] sm:$0xf]
  %v359 = vld [vmem:[%s1 + $0x18c] sm:$0xf]
  %v360 = vld [vmem:[%s1 + $0x190] sm:$0xf]
  %v361 = vld [vmem:[%s1 + $0x194] sm:$0xf]
  %v362 = vld [vmem:[%s1 + $0x198] sm:$0xf]
  %v363 = vld [vmem:[%s1 + $0x19c] sm:$0xf]
  %v364 = vld [vmem:[%s1 + $0x1a0] sm:$0xf]
  %v365 = vld [vmem:[%s1 + $0x1a4] sm:$0xf]
  %v366 = vld [vmem:[%s1 + $0x1a8] sm:$0xf]
  %v367 = vld [vmem:[%s1 + $0x1ac] sm:$0xf]
  %v368 = vld [vmem:[%s1 + $0x1b0] sm:$0xf]
  %v369 = vld [vmem:[%s1 + $0x1b4] sm:$0xf]
  %v370 = vld [vmem:[%s1 + $0x1b8] sm:$0xf]
  %v371 = vld [vmem:[%s1 + $0x1bc] sm:$0xf]
  %v372 = vld [vmem:[%s1 + $0x1c0] sm:$0xf]
  %v373 = vld [vmem:[%s1 + $0x1c4] sm:$0xf]
  %v374 = vld [vmem:[%s1 + $0x1c8] sm:$0xf]
  %v375 = vld [vmem:[%s1 + $0x1cc] sm:$0xf]
  %v376 = vld [vmem:[%s1 + $0x1d0] sm:$0xf]
  %v377 = vld [vmem:[%s1 + $0x1d4] sm:$0xf]
  %v378 = vld [vmem:[%s1 + $0x1d8] sm:$0xf]
  %v379 = vld [vmem:[%s1 + $0x1dc] sm:$0xf]
  %v380 = vld [vmem:[%s1 + $0x1e0] sm:$0xf]
  %v381 = vld [vmem:[%s1 + $0x1e4] sm:$0xf]
  %v382 = vld [vmem:[%s1 + $0x1e8] sm:$0xf]
  %v383 = vld [vmem:[%s1 + $0x1ec] sm:$0xf]
  %v384 = vld [vmem:[%s1 + $0x1f0] sm:$0xf]
  %v385 = vld [vmem:[%s1 + $0x1f4] sm:$0xf]
  %v386 = vld [vmem:[%s1 + $0x1f8] sm:$0xf]
  %v387 = vld [vmem:[%s1 + $0x1fc] sm:$0xf]
  %v388 = vld [vmem:[%s1 + $0x200] sm:$0xf]
  %v389 = vld [vmem:[%s1 + $0x204] sm:$0xf]
  %v390 = vld [vmem:[%s1 + $0x208] sm:$0xf]
  %v391 = vld [vmem:[%s1 + $0x20c] sm:$0xf]
  %v392 = vld [vmem:[%s1 + $0x210] sm:$0xf]
  %v393 = vld [vmem:[%s1 + $0x214] sm:$0xf]
  %v394 = vld [vmem:[%s1 + $0x218] sm:$0xf]
  %v395 = vld [vmem:[%s1 + $0x21c] sm:$0xf]
  %v396 = vld [vmem:[%s1 + $0x220] sm:$0xf]
  %v397 = vld [vmem:[%s1 + $0x224] sm:$0xf]
  %v398 = vld [vmem:[%s1 + $0x228] sm:$0xf]
  %v399 = vld [vmem:[%s1 + $0x22c] sm:$0xf]
  %v400 = vld [vmem:[%s1 + $0x230] sm:$0xf]
  %v401 = vld [vmem:[%s1 + $0x234] sm:$0xf]
  %v402 = vld [vmem:[%s1 + $0x238] sm:$0xf]
  %v403 = vld [vmem:[%s1 + $0x23c] sm:$0xf]
  %v404 = vld [vmem:[%s2] sm:$0x1]
  %v406 = vlaneseq
  %v407 = vshrl.u32 %v406, 7
  %v408 = vsub.s32 0, %v407
  %v409 = vrot.slane %v404, %v408
  %v656 = vunpack.c.l.b16 %v15
  %v657 = vunpack.c.h.b16 %v15
  %v658 = vunpack.c.l.b16 %v16
  %v659 = vunpack.c.h.b16 %v16
  %v660 = vunpack.c.l.b16 %v17
  %v661 = vunpack.c.h.b16 %v17
  %v662 = vunpack.c.l.b16 %v18
  %v663 = vunpack.c.h.b16 %v18
  %v664 = vunpack.c.l.b16 %v19
  %v665 = vunpack.c.l.b16 %v20
  %v666 = vunpack.c.h.b16 %v20
  %v667 = vunpack.c.l.b16 %v21
  %v668 = vunpack.c.h.b16 %v21
  %v669 = vunpack.c.l.b16 %v22
  %v670 = vunpack.c.h.b16 %v22
  %v671 = vunpack.c.l.b16 %v23
  %v672 = vunpack.c.h.b16 %v23
  %v673 = vunpack.c.l.b16 %v24
  %v674 = vunpack.c.l.b16 %v25
  %v675 = vunpack.c.h.b16 %v25
  %v676 = vunpack.c.l.b16 %v26
  %v677 = vunpack.c.h.b16 %v26
  %v678 = vunpack.c.l.b16 %v27
  %v679 = vunpack.c.h.b16 %v27
  %v680 = vunpack.c.l.b16 %v28
  %v681 = vunpack.c.h.b16 %v28
  %v682 = vunpack.c.l.b16 %v29
  %v683 = vunpack.c.l.b16 %v30
  %v684 = vunpack.c.h.b16 %v30
  %v685 = vunpack.c.l.b16 %v31
  %v686 = vunpack.c.h.b16 %v31
  %v687 = vunpack.c.l.b16 %v32
  %v688 = vunpack.c.h.b16 %v32
  %v689 = vunpack.c.l.b16 %v33
  %v690 = vunpack.c.h.b16 %v33
  %v691 = vunpack.c.l.b16 %v34
  %v692 = vunpack.c.l.b16 %v35
  %v693 = vunpack.c.h.b16 %v35
  %v694 = vunpack.c.l.b16 %v36
  %v695 = vunpack.c.h.b16 %v36
  %v696 = vunpack.c.l.b16 %v37
  %v697 = vunpack.c.h.b16 %v37
  %v698 = vunpack.c.l.b16 %v38
  %v699 = vunpack.c.h.b16 %v38
  %v700 = vunpack.c.l.b16 %v39
  %v701 = vunpack.c.l.b16 %v40
  %v702 = vunpack.c.h.b16 %v40
  %v703 = vunpack.c.l.b16 %v41
  %v704 = vunpack.c.h.b16 %v41
  %v705 = vunpack.c.l.b16 %v42
  %v706 = vunpack.c.h.b16 %v42
  %v707 = vunpack.c.l.b16 %v43
  %v708 = vunpack.c.h.b16 %v43
  %v709 = vunpack.c.l.b16 %v44
  %v710 = vunpack.c.l.b16 %v45
  %v711 = vunpack.c.h.b16 %v45
  %v712 = vunpack.c.l.b16 %v46
  %v713 = vunpack.c.h.b16 %v46
  %v714 = vunpack.c.l.b16 %v47
  %v715 = vunpack.c.h.b16 %v47
  %v716 = vunpack.c.l.b16 %v48
  %v717 = vunpack.c.h.b16 %v48
  %v718 = vunpack.c.l.b16 %v49
  %v719 = vunpack.c.l.b16 %v50
  %v720 = vunpack.c.h.b16 %v50
  %v721 = vunpack.c.l.b16 %v51
  %v722 = vunpack.c.h.b16 %v51
  %v723 = vunpack.c.l.b16 %v52
  %v724 = vunpack.c.h.b16 %v52
  %v725 = vunpack.c.l.b16 %v53
  %v726 = vunpack.c.h.b16 %v53
  %v727 = vunpack.c.l.b16 %v54
  %v728 = vunpack.c.l.b16 %v55
  %v729 = vunpack.c.h.b16 %v55
  %v730 = vunpack.c.l.b16 %v56
  %v731 = vunpack.c.h.b16 %v56
  %v732 = vunpack.c.l.b16 %v57
  %v733 = vunpack.c.h.b16 %v57
  %v734 = vunpack.c.l.b16 %v58
  %v735 = vunpack.c.h.b16 %v58
  %v736 = vunpack.c.l.b16 %v59
  %v737 = vunpack.c.l.b16 %v60
  %v738 = vunpack.c.h.b16 %v60
  %v739 = vunpack.c.l.b16 %v61
  %v740 = vunpack.c.h.b16 %v61
  %v741 = vunpack.c.l.b16 %v62
  %v742 = vunpack.c.h.b16 %v62
  %v743 = vunpack.c.l.b16 %v63
  %v744 = vunpack.c.h.b16 %v63
  %v745 = vunpack.c.l.b16 %v64
  %v746 = vunpack.c.l.b16 %v65
  %v747 = vunpack.c.h.b16 %v65
  %v748 = vunpack.c.l.b16 %v66
  %v749 = vunpack.c.h.b16 %v66
  %v750 = vunpack.c.l.b16 %v67
  %v751 = vunpack.c.h.b16 %v67
  %v752 = vunpack.c.l.b16 %v68
  %v753 = vunpack.c.h.b16 %v68
  %v754 = vunpack.c.l.b16 %v69
  %v755 = vunpack.c.l.b16 %v70
  %v756 = vunpack.c.h.b16 %v70
  %v757 = vunpack.c.l.b16 %v71
  %v758 = vunpack.c.h.b16 %v71
  %v759 = vunpack.c.l.b16 %v72
  %v760 = vunpack.c.h.b16 %v72
  %v761 = vunpack.c.l.b16 %v73
  %v762 = vunpack.c.h.b16 %v73
  %v763 = vunpack.c.l.b16 %v74
  %v764 = vunpack.c.l.b16 %v75
  %v765 = vunpack.c.h.b16 %v75
  %v766 = vunpack.c.l.b16 %v76
  %v767 = vunpack.c.h.b16 %v76
  %v768 = vunpack.c.l.b16 %v77
  %v769 = vunpack.c.h.b16 %v77
  %v770 = vunpack.c.l.b16 %v78
  %v771 = vunpack.c.h.b16 %v78
  %v772 = vunpack.c.l.b16 %v79
  %v773 = vunpack.c.l.b16 %v80
  %v774 = vunpack.c.h.b16 %v80
  %v775 = vunpack.c.l.b16 %v81
  %v776 = vunpack.c.h.b16 %v81
  %v777 = vunpack.c.l.b16 %v82
  %v778 = vunpack.c.h.b16 %v82
  %v779 = vunpack.c.l.b16 %v83
  %v780 = vunpack.c.h.b16 %v83
  %v781 = vunpack.c.l.b16 %v84
  %v782 = vunpack.c.l.b16 %v85
  %v783 = vunpack.c.h.b16 %v85
  %v784 = vunpack.c.l.b16 %v86
  %v785 = vunpack.c.h.b16 %v86
  %v786 = vunpack.c.l.b16 %v87
  %v787 = vunpack.c.h.b16 %v87
  %v788 = vunpack.c.l.b16 %v88
  %v789 = vunpack.c.h.b16 %v88
  %v790 = vunpack.c.l.b16 %v89
  %v791 = vunpack.c.l.b16 %v90
  %v792 = vunpack.c.h.b16 %v90
  %v793 = vunpack.c.l.b16 %v91
  %v794 = vunpack.c.h.b16 %v91
  %v795 = vunpack.c.l.b16 %v92
  %v796 = vunpack.c.h.b16 %v92
  %v797 = vunpack.c.l.b16 %v93
  %v798 = vunpack.c.h.b16 %v93
  %v799 = vunpack.c.l.b16 %v94
  %v800 = vunpack.c.l.b16 %v95
  %v801 = vunpack.c.h.b16 %v95
  %v802 = vunpack.c.l.b16 %v96
  %v803 = vunpack.c.h.b16 %v96
  %v804 = vunpack.c.l.b16 %v97
  %v805 = vunpack.c.h.b16 %v97
  %v806 = vunpack.c.l.b16 %v98
  %v807 = vunpack.c.h.b16 %v98
  %v808 = vunpack.c.l.b16 %v99
  %v809 = vunpack.c.l.b16 %v100
  %v810 = vunpack.c.h.b16 %v100
  %v811 = vunpack.c.l.b16 %v101
  %v812 = vunpack.c.h.b16 %v101
  %v813 = vunpack.c.l.b16 %v102
  %v814 = vunpack.c.h.b16 %v102
  %v815 = vunpack.c.l.b16 %v103
  %v816 = vunpack.c.h.b16 %v103
  %v817 = vunpack.c.l.b16 %v104
  %v818 = vunpack.c.l.b16 %v105
  %v819 = vunpack.c.h.b16 %v105
  %v820 = vunpack.c.l.b16 %v106
  %v821 = vunpack.c.h.b16 %v106
  %v822 = vunpack.c.l.b16 %v107
  %v823 = vunpack.c.h.b16 %v107
  %v824 = vunpack.c.l.b16 %v108
  %v825 = vunpack.c.h.b16 %v108
  %v826 = vunpack.c.l.b16 %v109
  %v827 = vunpack.c.l.b16 %v110
  %v828 = vunpack.c.h.b16 %v110
  %v829 = vunpack.c.l.b16 %v111
  %v830 = vunpack.c.h.b16 %v111
  %v831 = vunpack.c.l.b16 %v112
  %v832 = vunpack.c.h.b16 %v112
  %v833 = vunpack.c.l.b16 %v113
  %v834 = vunpack.c.h.b16 %v113
  %v835 = vunpack.c.l.b16 %v114
  %v836 = vunpack.c.l.b16 %v115
  %v837 = vunpack.c.h.b16 %v115
  %v838 = vunpack.c.l.b16 %v116
  %v839 = vunpack.c.h.b16 %v116
  %v840 = vunpack.c.l.b16 %v117
  %v841 = vunpack.c.h.b16 %v117
  %v842 = vunpack.c.l.b16 %v118
  %v843 = vunpack.c.h.b16 %v118
  %v844 = vunpack.c.l.b16 %v119
  %v845 = vunpack.c.l.b16 %v120
  %v846 = vunpack.c.h.b16 %v120
  %v847 = vunpack.c.l.b16 %v121
  %v848 = vunpack.c.h.b16 %v121
  %v849 = vunpack.c.l.b16 %v122
  %v850 = vunpack.c.h.b16 %v122
  %v851 = vunpack.c.l.b16 %v123
  %v852 = vunpack.c.h.b16 %v123
  %v853 = vunpack.c.l.b16 %v124
  %v854 = vunpack.c.l.b16 %v125
  %v855 = vunpack.c.h.b16 %v125
  %v856 = vunpack.c.l.b16 %v126
  %v857 = vunpack.c.h.b16 %v126
  %v858 = vunpack.c.l.b16 %v127
  %v859 = vunpack.c.h.b16 %v127
  %v860 = vunpack.c.l.b16 %v128
  %v861 = vunpack.c.h.b16 %v128
  %v862 = vunpack.c.l.b16 %v129
  %v863 = vunpack.c.l.b16 %v130
  %v864 = vunpack.c.h.b16 %v130
  %v865 = vunpack.c.l.b16 %v131
  %v866 = vunpack.c.h.b16 %v131
  %v867 = vunpack.c.l.b16 %v132
  %v868 = vunpack.c.h.b16 %v132
  %v869 = vunpack.c.l.b16 %v133
  %v870 = vunpack.c.h.b16 %v133
  %v871 = vunpack.c.l.b16 %v134
  %v872 = vunpack.c.l.b16 %v135
  %v873 = vunpack.c.h.b16 %v135
  %v874 = vunpack.c.l.b16 %v136
  %v875 = vunpack.c.h.b16 %v136
  %v876 = vunpack.c.l.b16 %v137
  %v877 = vunpack.c.h.b16 %v137
  %v878 = vunpack.c.l.b16 %v138
  %v879 = vunpack.c.h.b16 %v138
  %v880 = vunpack.c.l.b16 %v139
  %v881 = vunpack.c.l.b16 %v140
  %v882 = vunpack.c.h.b16 %v140
  %v883 = vunpack.c.l.b16 %v141
  %v884 = vunpack.c.h.b16 %v141
  %v885 = vunpack.c.l.b16 %v142
  %v886 = vunpack.c.h.b16 %v142
  %v887 = vunpack.c.l.b16 %v143
  %v888 = vunpack.c.h.b16 %v143
  %v889 = vunpack.c.l.b16 %v144
  %v890 = vunpack.c.l.b16 %v145
  %v891 = vunpack.c.h.b16 %v145
  %v892 = vunpack.c.l.b16 %v146
  %v893 = vunpack.c.h.b16 %v146
  %v894 = vunpack.c.l.b16 %v147
  %v895 = vunpack.c.h.b16 %v147
  %v896 = vunpack.c.l.b16 %v148
  %v897 = vunpack.c.h.b16 %v148
  %v898 = vunpack.c.l.b16 %v149
  %v899 = vunpack.c.l.b16 %v150
  %v900 = vunpack.c.h.b16 %v150
  %v901 = vunpack.c.l.b16 %v151
  %v902 = vunpack.c.h.b16 %v151
  %v903 = vunpack.c.l.b16 %v152
  %v904 = vunpack.c.h.b16 %v152
  %v905 = vunpack.c.l.b16 %v153
  %v906 = vunpack.c.h.b16 %v153
  %v907 = vunpack.c.l.b16 %v154
  %v908 = vunpack.c.l.b16 %v155
  %v909 = vunpack.c.h.b16 %v155
  %v910 = vunpack.c.l.b16 %v156
  %v911 = vunpack.c.h.b16 %v156
  %v912 = vunpack.c.l.b16 %v157
  %v913 = vunpack.c.h.b16 %v157
  %v914 = vunpack.c.l.b16 %v158
  %v915 = vunpack.c.h.b16 %v158
  %v916 = vunpack.c.l.b16 %v159
  %v917 = vunpack.c.l.b16 %v160
  %v918 = vunpack.c.h.b16 %v160
  %v919 = vunpack.c.l.b16 %v161
  %v920 = vunpack.c.h.b16 %v161
  %v921 = vunpack.c.l.b16 %v162
  %v922 = vunpack.c.h.b16 %v162
  %v923 = vunpack.c.l.b16 %v163
  %v924 = vunpack.c.h.b16 %v163
  %v925 = vunpack.c.l.b16 %v164
  %v926 = vunpack.c.l.b16 %v165
  %v927 = vunpack.c.h.b16 %v165
  %v928 = vunpack.c.l.b16 %v166
  %v929 = vunpack.c.h.b16 %v166
  %v930 = vunpack.c.l.b16 %v167
  %v931 = vunpack.c.h.b16 %v167
  %v932 = vunpack.c.l.b16 %v168
  %v933 = vunpack.c.h.b16 %v168
  %v934 = vunpack.c.l.b16 %v169
  %v935 = vunpack.c.l.b16 %v170
  %v936 = vunpack.c.h.b16 %v170
  %v937 = vunpack.c.l.b16 %v171
  %v938 = vunpack.c.h.b16 %v171
  %v939 = vunpack.c.l.b16 %v172
  %v940 = vunpack.c.h.b16 %v172
  %v941 = vunpack.c.l.b16 %v173
  %v942 = vunpack.c.h.b16 %v173
  %v943 = vunpack.c.l.b16 %v174
  %v944 = vunpack.c.l.b16 %v175
  %v945 = vunpack.c.h.b16 %v175
  %v946 = vunpack.c.l.b16 %v176
  %v947 = vunpack.c.h.b16 %v176
  %v948 = vunpack.c.l.b16 %v177
  %v949 = vunpack.c.h.b16 %v177
  %v950 = vunpack.c.l.b16 %v178
  %v951 = vunpack.c.h.b16 %v178
  %v952 = vunpack.c.l.b16 %v179
  %v953 = vunpack.c.l.b16 %v180
  %v954 = vunpack.c.h.b16 %v180
  %v955 = vunpack.c.l.b16 %v181
  %v956 = vunpack.c.h.b16 %v181
  %v957 = vunpack.c.l.b16 %v182
  %v958 = vunpack.c.h.b16 %v182
  %v959 = vunpack.c.l.b16 %v183
  %v960 = vunpack.c.h.b16 %v183
  %v961 = vunpack.c.l.b16 %v184
  %v962 = vunpack.c.l.b16 %v185
  %v963 = vunpack.c.h.b16 %v185
  %v964 = vunpack.c.l.b16 %v186
  %v965 = vunpack.c.h.b16 %v186
  %v966 = vunpack.c.l.b16 %v187
  %v967 = vunpack.c.h.b16 %v187
  %v968 = vunpack.c.l.b16 %v188
  %v969 = vunpack.c.h.b16 %v188
  %v970 = vunpack.c.l.b16 %v189
  %v971 = vunpack.c.l.b16 %v190
  %v972 = vunpack.c.h.b16 %v190
  %v973 = vunpack.c.l.b16 %v191
  %v974 = vunpack.c.h.b16 %v191
  %v975 = vunpack.c.l.b16 %v192
  %v976 = vunpack.c.h.b16 %v192
  %v977 = vunpack.c.l.b16 %v193
  %v978 = vunpack.c.h.b16 %v193
  %v979 = vunpack.c.l.b16 %v194
  %v980 = vunpack.c.l.b16 %v195
  %v981 = vunpack.c.h.b16 %v195
  %v982 = vunpack.c.l.b16 %v196
  %v983 = vunpack.c.h.b16 %v196
  %v984 = vunpack.c.l.b16 %v197
  %v985 = vunpack.c.h.b16 %v197
  %v986 = vunpack.c.l.b16 %v198
  %v987 = vunpack.c.h.b16 %v198
  %v988 = vunpack.c.l.b16 %v199
  %v989 = vunpack.c.l.b16 %v200
  %v990 = vunpack.c.h.b16 %v200
  %v991 = vunpack.c.l.b16 %v201
  %v992 = vunpack.c.h.b16 %v201
  %v993 = vunpack.c.l.b16 %v202
  %v994 = vunpack.c.h.b16 %v202
  %v995 = vunpack.c.l.b16 %v203
  %v996 = vunpack.c.h.b16 %v203
  %v997 = vunpack.c.l.b16 %v204
  %v998 = vunpack.c.l.b16 %v205
  %v999 = vunpack.c.h.b16 %v205
  %v1000 = vunpack.c.l.b16 %v206
  %v1001 = vunpack.c.h.b16 %v206
  %v1002 = vunpack.c.l.b16 %v207
  %v1003 = vunpack.c.h.b16 %v207
  %v1004 = vunpack.c.l.b16 %v208
  %v1005 = vunpack.c.h.b16 %v208
  %v1006 = vunpack.c.l.b16 %v209
  %v1007 = vunpack.c.l.b16 %v210
  %v1008 = vunpack.c.h.b16 %v210
  %v1009 = vunpack.c.l.b16 %v211
  %v1010 = vunpack.c.h.b16 %v211
  %v1011 = vunpack.c.l.b16 %v212
  %v1012 = vunpack.c.h.b16 %v212
  %v1013 = vunpack.c.l.b16 %v213
  %v1014 = vunpack.c.h.b16 %v213
  %v1015 = vunpack.c.l.b16 %v214
  %v1016 = vunpack.c.l.b16 %v215
  %v1017 = vunpack.c.h.b16 %v215
  %v1018 = vunpack.c.l.b16 %v216
  %v1019 = vunpack.c.h.b16 %v216
  %v1020 = vunpack.c.l.b16 %v217
  %v1021 = vunpack.c.h.b16 %v217
  %v1022 = vunpack.c.l.b16 %v218
  %v1023 = vunpack.c.h.b16 %v218
  %v1024 = vunpack.c.l.b16 %v219
  %v1025 = vunpack.c.l.b16 %v220
  %v1026 = vunpack.c.h.b16 %v220
  %v1027 = vunpack.c.l.b16 %v221
  %v1028 = vunpack.c.h.b16 %v221
  %v1029 = vunpack.c.l.b16 %v222
  %v1030 = vunpack.c.h.b16 %v222
  %v1031 = vunpack.c.l.b16 %v223
  %v1032 = vunpack.c.h.b16 %v223
  %v1033 = vunpack.c.l.b16 %v224
  %v1034 = vunpack.c.l.b16 %v225
  %v1035 = vunpack.c.h.b16 %v225
  %v1036 = vunpack.c.l.b16 %v226
  %v1037 = vunpack.c.h.b16 %v226
  %v1038 = vunpack.c.l.b16 %v227
  %v1039 = vunpack.c.h.b16 %v227
  %v1040 = vunpack.c.l.b16 %v228
  %v1041 = vunpack.c.h.b16 %v228
  %v1042 = vunpack.c.l.b16 %v229
  %v1043 = vunpack.c.l.b16 %v230
  %v1044 = vunpack.c.h.b16 %v230
  %v1045 = vunpack.c.l.b16 %v231
  %v1046 = vunpack.c.h.b16 %v231
  %v1047 = vunpack.c.l.b16 %v232
  %v1048 = vunpack.c.h.b16 %v232
  %v1049 = vunpack.c.l.b16 %v233
  %v1050 = vunpack.c.h.b16 %v233
  %v1051 = vunpack.c.l.b16 %v234
  %v1052 = vunpack.c.l.b16 %v235
  %v1053 = vunpack.c.h.b16 %v235
  %v1054 = vunpack.c.l.b16 %v236
  %v1055 = vunpack.c.h.b16 %v236
  %v1056 = vunpack.c.l.b16 %v237
  %v1057 = vunpack.c.h.b16 %v237
  %v1058 = vunpack.c.l.b16 %v238
  %v1059 = vunpack.c.h.b16 %v238
  %v1060 = vunpack.c.l.b16 %v239
  %v1061 = vunpack.c.l.b16 %v240
  %v1062 = vunpack.c.h.b16 %v240
  %v1063 = vunpack.c.l.b16 %v241
  %v1064 = vunpack.c.h.b16 %v241
  %v1065 = vunpack.c.l.b16 %v242
  %v1066 = vunpack.c.h.b16 %v242
  %v1067 = vunpack.c.l.b16 %v243
  %v1068 = vunpack.c.h.b16 %v243
  %v1069 = vunpack.c.l.b16 %v244
  %v1070 = vunpack.c.l.b16 %v245
  %v1071 = vunpack.c.h.b16 %v245
  %v1072 = vunpack.c.l.b16 %v246
  %v1073 = vunpack.c.h.b16 %v246
  %v1074 = vunpack.c.l.b16 %v247
  %v1075 = vunpack.c.h.b16 %v247
  %v1076 = vunpack.c.l.b16 %v248
  %v1077 = vunpack.c.h.b16 %v248
  %v1078 = vunpack.c.l.b16 %v249
  %v1079 = vunpack.c.l.b16 %v250
  %v1080 = vunpack.c.h.b16 %v250
  %v1081 = vunpack.c.l.b16 %v251
  %v1082 = vunpack.c.h.b16 %v251
  %v1083 = vunpack.c.l.b16 %v252
  %v1084 = vunpack.c.h.b16 %v252
  %v1085 = vunpack.c.l.b16 %v253
  %v1086 = vunpack.c.h.b16 %v253
  %v1087 = vunpack.c.l.b16 %v254
  %v1088 = vunpack.c.l.b16 %v255
  %v1089 = vunpack.c.h.b16 %v255
  %v1090 = vunpack.c.l.b16 %v256
  %v1091 = vunpack.c.h.b16 %v256
  %v1092 = vunpack.c.l.b16 %v257
  %v1093 = vunpack.c.h.b16 %v257
  %v1094 = vunpack.c.l.b16 %v258
  %v1095 = vunpack.c.h.b16 %v258
  %v1096 = vunpack.c.l.b16 %v259
  %v1097 = vpack.c.b16 %v665, %v656
  %v1098 = vpack.c.b16 %v666, %v657
  %v1099 = vpack.c.b16 %v667, %v658
  %v1100 = vpack.c.b16 %v668, %v659
  %v1101 = vpack.c.b16 %v669, %v660
  %v1102 = vpack.c.b16 %v670, %v661
  %v1103 = vpack.c.b16 %v671, %v662
  %v1104 = vpack.c.b16 %v672, %v663
  %v1105 = vpack.c.b16 %v673, %v664
  %v1106 = vpack.c.b16 %v683, %v674
  %v1107 = vpack.c.b16 %v684, %v675
  %v1108 = vpack.c.b16 %v685, %v676
  %v1109 = vpack.c.b16 %v686, %v677
  %v1110 = vpack.c.b16 %v687, %v678
  %v1111 = vpack.c.b16 %v688, %v679
  %v1112 = vpack.c.b16 %v689, %v680
  %v1113 = vpack.c.b16 %v690, %v681
  %v1114 = vpack.c.b16 %v691, %v682
  %v1115 = vpack.c.b16 %v701, %v692
  %v1116 = vpack.c.b16 %v702, %v693
  %v1117 = vpack.c.b16 %v703, %v694
  %v1118 = vpack.c.b16 %v704, %v695
  %v1119 = vpack.c.b16 %v705, %v696
  %v1120 = vpack.c.b16 %v706, %v697
  %v1121 = vpack.c.b16 %v707, %v698
  %v1122 = vpack.c.b16 %v708, %v699
  %v1123 = vpack.c.b16 %v709, %v700
  %v1124 = vpack.c.b16 %v719, %v710
  %v1125 = vpack.c.b16 %v720, %v711
  %v1126 = vpack.c.b16 %v721, %v712
  %v1127 = vpack.c.b16 %v722, %v713
  %v1128 = vpack.c.b16 %v723, %v714
  %v1129 = vpack.c.b16 %v724, %v715
  %v1130 = vpack.c.b16 %v725, %v716
  %v1131 = vpack.c.b16 %v726, %v717
  %v1132 = vpack.c.b16 %v727, %v718
  %v1133 = vpack.c.b16 %v737, %v728
  %v1134 = vpack.c.b16 %v738, %v729
  %v1135 = vpack.c.b16 %v739, %v730
  %v1136 = vpack.c.b16 %v740, %v731
  %v1137 = vpack.c.b16 %v741, %v732
  %v1138 = vpack.c.b16 %v742, %v733
  %v1139 = vpack.c.b16 %v743, %v734
  %v1140 = vpack.c.b16 %v744, %v735
  %v1141 = vpack.c.b16 %v745, %v736
  %v1142 = vpack.c.b16 %v755, %v746
  %v1143 = vpack.c.b16 %v756, %v747
  %v1144 = vpack.c.b16 %v757, %v748
  %v1145 = vpack.c.b16 %v758, %v749
  %v1146 = vpack.c.b16 %v759, %v750
  %v1147 = vpack.c.b16 %v760, %v751
  %v1148 = vpack.c.b16 %v761, %v752
  %v1149 = vpack.c.b16 %v762, %v753
  %v1150 = vpack.c.b16 %v763, %v754
  %v1151 = vpack.c.b16 %v773, %v764
  %v1152 = vpack.c.b16 %v774, %v765
  %v1153 = vpack.c.b16 %v775, %v766
  %v1154 = vpack.c.b16 %v776, %v767
  %v1155 = vpack.c.b16 %v777, %v768
  %v1156 = vpack.c.b16 %v778, %v769
  %v1157 = vpack.c.b16 %v779, %v770
  %v1158 = vpack.c.b16 %v780, %v771
  %v1159 = vpack.c.b16 %v781, %v772
  %v1160 = vpack.c.b16 %v791, %v782
  %v1161 = vpack.c.b16 %v792, %v783
  %v1162 = vpack.c.b16 %v793, %v784
  %v1163 = vpack.c.b16 %v794, %v785
  %v1164 = vpack.c.b16 %v795, %v786
  %v1165 = vpack.c.b16 %v796, %v787
  %v1166 = vpack.c.b16 %v797, %v788
  %v1167 = vpack.c.b16 %v798, %v789
  %v1168 = vpack.c.b16 %v799, %v790
  %v1169 = vpack.c.b16 %v809, %v800
  %v1170 = vpack.c.b16 %v810, %v801
  %v1171 = vpack.c.b16 %v811, %v802
  %v1172 = vpack.c.b16 %v812, %v803
  %v1173 = vpack.c.b16 %v813, %v804
  %v1174 = vpack.c.b16 %v814, %v805
  %v1175 = vpack.c.b16 %v815, %v806
  %v1176 = vpack.c.b16 %v816, %v807
  %v1177 = vpack.c.b16 %v817, %v808
  %v1178 = vpack.c.b16 %v827, %v818
  %v1179 = vpack.c.b16 %v828, %v819
  %v1180 = vpack.c.b16 %v829, %v820
  %v1181 = vpack.c.b16 %v830, %v821
  %v1182 = vpack.c.b16 %v831, %v822
  %v1183 = vpack.c.b16 %v832, %v823
  %v1184 = vpack.c.b16 %v833, %v824
  %v1185 = vpack.c.b16 %v834, %v825
  %v1186 = vpack.c.b16 %v835, %v826
  %v1187 = vpack.c.b16 %v845, %v836
  %v1188 = vpack.c.b16 %v846, %v837
  %v1189 = vpack.c.b16 %v847, %v838
  %v1190 = vpack.c.b16 %v848, %v839
  %v1191 = vpack.c.b16 %v849, %v840
  %v1192 = vpack.c.b16 %v850, %v841
  %v1193 = vpack.c.b16 %v851, %v842
  %v1194 = vpack.c.b16 %v852, %v843
  %v1195 = vpack.c.b16 %v853, %v844
  %v1196 = vpack.c.b16 %v863, %v854
  %v1197 = vpack.c.b16 %v864, %v855
  %v1198 = vpack.c.b16 %v865, %v856
  %v1199 = vpack.c.b16 %v866, %v857
  %v1200 = vpack.c.b16 %v867, %v858
  %v1201 = vpack.c.b16 %v868, %v859
  %v1202 = vpack.c.b16 %v869, %v860
  %v1203 = vpack.c.b16 %v870, %v861
  %v1204 = vpack.c.b16 %v871, %v862
  %v1205 = vpack.c.b16 %v881, %v872
  %v1206 = vpack.c.b16 %v882, %v873
  %v1207 = vpack.c.b16 %v883, %v874
  %v1208 = vpack.c.b16 %v884, %v875
  %v1209 = vpack.c.b16 %v885, %v876
  %v1210 = vpack.c.b16 %v886, %v877
  %v1211 = vpack.c.b16 %v887, %v878
  %v1212 = vpack.c.b16 %v888, %v879
  %v1213 = vpack.c.b16 %v889, %v880
  %v1214 = vpack.c.b16 %v899, %v890
  %v1215 = vpack.c.b16 %v900, %v891
  %v1216 = vpack.c.b16 %v901, %v892
  %v1217 = vpack.c.b16 %v902, %v893
  %v1218 = vpack.c.b16 %v903, %v894
  %v1219 = vpack.c.b16 %v904, %v895
  %v1220 = vpack.c.b16 %v905, %v896
  %v1221 = vpack.c.b16 %v906, %v897
  %v1222 = vpack.c.b16 %v907, %v898
  %v1223 = vpack.c.b16 %v917, %v908
  %v1224 = vpack.c.b16 %v918, %v909
  %v1225 = vpack.c.b16 %v919, %v910
  %v1226 = vpack.c.b16 %v920, %v911
  %v1227 = vpack.c.b16 %v921, %v912
  %v1228 = vpack.c.b16 %v922, %v913
  %v1229 = vpack.c.b16 %v923, %v914
  %v1230 = vpack.c.b16 %v924, %v915
  %v1231 = vpack.c.b16 %v925, %v916
  %v1232 = vpack.c.b16 %v935, %v926
  %v1233 = vpack.c.b16 %v936, %v927
  %v1234 = vpack.c.b16 %v937, %v928
  %v1235 = vpack.c.b16 %v938, %v929
  %v1236 = vpack.c.b16 %v939, %v930
  %v1237 = vpack.c.b16 %v940, %v931
  %v1238 = vpack.c.b16 %v941, %v932
  %v1239 = vpack.c.b16 %v942, %v933
  %v1240 = vpack.c.b16 %v943, %v934
  %v1241 = vpack.c.b16 %v953, %v944
  %v1242 = vpack.c.b16 %v954, %v945
  %v1243 = vpack.c.b16 %v955, %v946
  %v1244 = vpack.c.b16 %v956, %v947
  %v1245 = vpack.c.b16 %v957, %v948
  %v1246 = vpack.c.b16 %v958, %v949
  %v1247 = vpack.c.b16 %v959, %v950
  %v1248 = vpack.c.b16 %v960, %v951
  %v1249 = vpack.c.b16 %v961, %v952
  %v1250 = vpack.c.b16 %v971, %v962
  %v1251 = vpack.c.b16 %v972, %v963
  %v1252 = vpack.c.b16 %v973, %v964
  %v1253 = vpack.c.b16 %v974, %v965
  %v1254 = vpack.c.b16 %v975, %v966
  %v1255 = vpack.c.b16 %v976, %v967
  %v1256 = vpack.c.b16 %v977, %v968
  %v1257 = vpack.c.b16 %v978, %v969
  %v1258 = vpack.c.b16 %v979, %v970
  %v1259 = vpack.c.b16 %v989, %v980
  %v1260 = vpack.c.b16 %v990, %v981
  %v1261 = vpack.c.b16 %v991, %v982
  %v1262 = vpack.c.b16 %v992, %v983
  %v1263 = vpack.c.b16 %v993, %v984
  %v1264 = vpack.c.b16 %v994, %v985
  %v1265 = vpack.c.b16 %v995, %v986
  %v1266 = vpack.c.b16 %v996, %v987
  %v1267 = vpack.c.b16 %v997, %v988
  %v1268 = vpack.c.b16 %v1007, %v998
  %v1269 = vpack.c.b16 %v1008, %v999
  %v1270 = vpack.c.b16 %v1009, %v1000
  %v1271 = vpack.c.b16 %v1010, %v1001
  %v1272 = vpack.c.b16 %v1011, %v1002
  %v1273 = vpack.c.b16 %v1012, %v1003
  %v1274 = vpack.c.b16 %v1013, %v1004
  %v1275 = vpack.c.b16 %v1014, %v1005
  %v1276 = vpack.c.b16 %v1015, %v1006
  %v1277 = vpack.c.b16 %v1025, %v1016
  %v1278 = vpack.c.b16 %v1026, %v1017
  %v1279 = vpack.c.b16 %v1027, %v1018
  %v1280 = vpack.c.b16 %v1028, %v1019
  %v1281 = vpack.c.b16 %v1029, %v1020
  %v1282 = vpack.c.b16 %v1030, %v1021
  %v1283 = vpack.c.b16 %v1031, %v1022
  %v1284 = vpack.c.b16 %v1032, %v1023
  %v1285 = vpack.c.b16 %v1033, %v1024
  %v1286 = vpack.c.b16 %v1043, %v1034
  %v1287 = vpack.c.b16 %v1044, %v1035
  %v1288 = vpack.c.b16 %v1045, %v1036
  %v1289 = vpack.c.b16 %v1046, %v1037
  %v1290 = vpack.c.b16 %v1047, %v1038
  %v1291 = vpack.c.b16 %v1048, %v1039
  %v1292 = vpack.c.b16 %v1049, %v1040
  %v1293 = vpack.c.b16 %v1050, %v1041
  %v1294 = vpack.c.b16 %v1051, %v1042
  %v1295 = vpack.c.b16 %v1061, %v1052
  %v1296 = vpack.c.b16 %v1062, %v1053
  %v1297 = vpack.c.b16 %v1063, %v1054
  %v1298 = vpack.c.b16 %v1064, %v1055
  %v1299 = vpack.c.b16 %v1065, %v1056
  %v1300 = vpack.c.b16 %v1066, %v1057
  %v1301 = vpack.c.b16 %v1067, %v1058
  %v1302 = vpack.c.b16 %v1068, %v1059
  %v1303 = vpack.c.b16 %v1069, %v1060
  %v1304 = vpack.c.b16 %v1079, %v1070
  %v1305 = vpack.c.b16 %v1080, %v1071
  %v1306 = vpack.c.b16 %v1081, %v1072
  %v1307 = vpack.c.b16 %v1082, %v1073
  %v1308 = vpack.c.b16 %v1083, %v1074
  %v1309 = vpack.c.b16 %v1084, %v1075
  %v1310 = vpack.c.b16 %v1085, %v1076
  %v1311 = vpack.c.b16 %v1086, %v1077
  %v1312 = vpack.c.b16 %v1087, %v1078
  %v1313 = vpack.c.b16 %v1088, %v1088
  %v1314 = vpack.c.b16 %v1089, %v1089
  %v1315 = vpack.c.b16 %v1090, %v1090
  %v1316 = vpack.c.b16 %v1091, %v1091
  %v1317 = vpack.c.b16 %v1092, %v1092
  %v1318 = vpack.c.b16 %v1093, %v1093
  %v1319 = vpack.c.b16 %v1094, %v1094
  %v1320 = vpack.c.b16 %v1095, %v1095
  %v1321 = vpack.c.b16 %v1096, %v1096
  %v1691 = vunpack.c.l.b16 %v260
  %v1692 = vunpack.c.l.b16 %v261
  %v1693 = vunpack.c.l.b16 %v262
  %v1694 = vunpack.c.l.b16 %v263
  %v1695 = vunpack.c.l.b16 %v264
  %v1696 = vunpack.c.l.b16 %v265
  %v1697 = vunpack.c.l.b16 %v266
  %v1698 = vunpack.c.l.b16 %v267
  %v1699 = vunpack.c.l.b16 %v268
  %v1700 = vunpack.c.l.b16 %v269
  %v1701 = vunpack.c.l.b16 %v270
  %v1702 = vunpack.c.l.b16 %v271
  %v1703 = vunpack.c.l.b16 %v272
  %v1704 = vunpack.c.l.b16 %v273
  %v1705 = vunpack.c.l.b16 %v274
  %v1706 = vunpack.c.l.b16 %v275
  %v1707 = vunpack.c.l.b16 %v276
  %v1708 = vunpack.c.l.b16 %v277
  %v1709 = vunpack.c.l.b16 %v278
  %v1710 = vunpack.c.l.b16 %v279
  %v1711 = vunpack.c.l.b16 %v280
  %v1712 = vunpack.c.l.b16 %v281
  %v1713 = vunpack.c.l.b16 %v282
  %v1714 = vunpack.c.l.b16 %v283
  %v1715 = vunpack.c.l.b16 %v284
  %v1716 = vunpack.c.l.b16 %v285
  %v1717 = vunpack.c.l.b16 %v286
  %v1718 = vunpack.c.l.b16 %v287
  %v1719 = vunpack.c.l.b16 %v288
  %v1720 = vunpack.c.l.b16 %v289
  %v1721 = vunpack.c.l.b16 %v290
  %v1722 = vunpack.c.l.b16 %v291
  %v1723 = vunpack.c.l.b16 %v292
  %v1724 = vunpack.c.l.b16 %v293
  %v1725 = vunpack.c.l.b16 %v294
  %v1726 = vunpack.c.l.b16 %v295
  %v1727 = vunpack.c.l.b16 %v296
  %v1728 = vunpack.c.l.b16 %v297
  %v1729 = vunpack.c.l.b16 %v298
  %v1730 = vunpack.c.l.b16 %v299
  %v1731 = vunpack.c.l.b16 %v300
  %v1732 = vunpack.c.l.b16 %v301
  %v1733 = vunpack.c.l.b16 %v302
  %v1734 = vunpack.c.l.b16 %v303
  %v1735 = vunpack.c.l.b16 %v304
  %v1736 = vunpack.c.l.b16 %v305
  %v1737 = vunpack.c.l.b16 %v306
  %v1738 = vunpack.c.l.b16 %v307
  %v1739 = vunpack.c.l.b16 %v308
  %v1740 = vunpack.c.l.b16 %v309
  %v1741 = vunpack.c.l.b16 %v310
  %v1742 = vunpack.c.l.b16 %v311
  %v1743 = vunpack.c.l.b16 %v312
  %v1744 = vunpack.c.l.b16 %v313
  %v1745 = vunpack.c.l.b16 %v314
  %v1746 = vunpack.c.l.b16 %v315
  %v1747 = vunpack.c.l.b16 %v316
  %v1748 = vunpack.c.l.b16 %v317
  %v1749 = vunpack.c.l.b16 %v318
  %v1750 = vunpack.c.l.b16 %v319
  %v1751 = vunpack.c.l.b16 %v320
  %v1752 = vunpack.c.l.b16 %v321
  %v1753 = vunpack.c.l.b16 %v322
  %v1754 = vunpack.c.l.b16 %v323
  %v1755 = vunpack.c.l.b16 %v324
  %v1756 = vunpack.c.l.b16 %v325
  %v1757 = vunpack.c.l.b16 %v326
  %v1758 = vunpack.c.l.b16 %v327
  %v1759 = vunpack.c.l.b16 %v328
  %v1760 = vunpack.c.l.b16 %v329
  %v1761 = vunpack.c.l.b16 %v330
  %v1762 = vunpack.c.l.b16 %v331
  %v1763 = vunpack.c.l.b16 %v332
  %v1764 = vunpack.c.l.b16 %v333
  %v1765 = vunpack.c.l.b16 %v334
  %v1766 = vunpack.c.l.b16 %v335
  %v1767 = vunpack.c.l.b16 %v336
  %v1768 = vunpack.c.l.b16 %v337
  %v1769 = vunpack.c.l.b16 %v338
  %v1770 = vunpack.c.l.b16 %v339
  %v1771 = vunpack.c.l.b16 %v340
  %v1772 = vunpack.c.l.b16 %v341
  %v1773 = vunpack.c.l.b16 %v342
  %v1774 = vunpack.c.l.b16 %v343
  %v1775 = vunpack.c.l.b16 %v344
  %v1776 = vunpack.c.l.b16 %v345
  %v1777 = vunpack.c.l.b16 %v346
  %v1778 = vunpack.c.l.b16 %v347
  %v1779 = vunpack.c.l.b16 %v348
  %v1780 = vunpack.c.l.b16 %v349
  %v1781 = vunpack.c.l.b16 %v350
  %v1782 = vunpack.c.l.b16 %v351
  %v1783 = vunpack.c.l.b16 %v352
  %v1784 = vunpack.c.l.b16 %v353
  %v1785 = vunpack.c.l.b16 %v354
  %v1786 = vunpack.c.l.b16 %v355
  %v1787 = vunpack.c.l.b16 %v356
  %v1788 = vunpack.c.l.b16 %v357
  %v1789 = vunpack.c.l.b16 %v358
  %v1790 = vunpack.c.l.b16 %v359
  %v1791 = vunpack.c.l.b16 %v360
  %v1792 = vunpack.c.l.b16 %v361
  %v1793 = vunpack.c.l.b16 %v362
  %v1794 = vunpack.c.l.b16 %v363
  %v1795 = vunpack.c.l.b16 %v364
  %v1796 = vunpack.c.l.b16 %v365
  %v1797 = vunpack.c.l.b16 %v366
  %v1798 = vunpack.c.l.b16 %v367
  %v1799 = vunpack.c.l.b16 %v368
  %v1800 = vunpack.c.l.b16 %v369
  %v1801 = vunpack.c.l.b16 %v370
  %v1802 = vunpack.c.l.b16 %v371
  %v1803 = vunpack.c.l.b16 %v372
  %v1804 = vunpack.c.l.b16 %v373
  %v1805 = vunpack.c.l.b16 %v374
  %v1806 = vunpack.c.l.b16 %v375
  %v1807 = vunpack.c.l.b16 %v376
  %v1808 = vunpack.c.l.b16 %v377
  %v1809 = vunpack.c.l.b16 %v378
  %v1810 = vunpack.c.l.b16 %v379
  %v1811 = vunpack.c.l.b16 %v380
  %v1812 = vunpack.c.l.b16 %v381
  %v1813 = vunpack.c.l.b16 %v382
  %v1814 = vunpack.c.l.b16 %v383
  %v1815 = vunpack.c.l.b16 %v384
  %v1816 = vunpack.c.l.b16 %v385
  %v1817 = vunpack.c.l.b16 %v386
  %v1818 = vunpack.c.l.b16 %v387
  %v1819 = vunpack.c.l.b16 %v388
  %v1820 = vunpack.c.l.b16 %v389
  %v1821 = vunpack.c.l.b16 %v390
  %v1822 = vunpack.c.l.b16 %v391
  %v1823 = vunpack.c.l.b16 %v392
  %v1824 = vunpack.c.l.b16 %v393
  %v1825 = vunpack.c.l.b16 %v394
  %v1826 = vunpack.c.l.b16 %v395
  %v1827 = vunpack.c.l.b16 %v396
  %v1828 = vunpack.c.l.b16 %v397
  %v1829 = vunpack.c.l.b16 %v398
  %v1830 = vunpack.c.l.b16 %v399
  %v1831 = vunpack.c.l.b16 %v400
  %v1832 = vunpack.c.l.b16 %v401
  %v1833 = vunpack.c.l.b16 %v402
  %v1834 = vunpack.c.l.b16 %v403
  %v1835 = vpack.c.b16 %v1692, %v1691
  %v1836 = vpack.c.b16 %v1694, %v1693
  %v1837 = vpack.c.b16 %v1696, %v1695
  %v1838 = vpack.c.b16 %v1698, %v1697
  %v1839 = vpack.c.b16 %v1700, %v1699
  %v1840 = vpack.c.b16 %v1702, %v1701
  %v1841 = vpack.c.b16 %v1704, %v1703
  %v1842 = vpack.c.b16 %v1706, %v1705
  %v1843 = vpack.c.b16 %v1708, %v1707
  %v1844 = vpack.c.b16 %v1710, %v1709
  %v1845 = vpack.c.b16 %v1712, %v1711
  %v1846 = vpack.c.b16 %v1714, %v1713
  %v1847 = vpack.c.b16 %v1716, %v1715
  %v1848 = vpack.c.b16 %v1718, %v1717
  %v1849 = vpack.c.b16 %v1720, %v1719
  %v1850 = vpack.c.b16 %v1722, %v1721
  %v1851 = vpack.c.b16 %v1724, %v1723
  %v1852 = vpack.c.b16 %v1726, %v1725
  %v1853 = vpack.c.b16 %v1728, %v1727
  %v1854 = vpack.c.b16 %v1730, %v1729
  %v1855 = vpack.c.b16 %v1732, %v1731
  %v1856 = vpack.c.b16 %v1734, %v1733
  %v1857 = vpack.c.b16 %v1736, %v1735
  %v1858 = vpack.c.b16 %v1738, %v1737
  %v1859 = vpack.c.b16 %v1740, %v1739
  %v1860 = vpack.c.b16 %v1742, %v1741
  %v1861 = vpack.c.b16 %v1744, %v1743
  %v1862 = vpack.c.b16 %v1746, %v1745
  %v1863 = vpack.c.b16 %v1748, %v1747
  %v1864 = vpack.c.b16 %v1750, %v1749
  %v1865 = vpack.c.b16 %v1752, %v1751
  %v1866 = vpack.c.b16 %v1754, %v1753
  %v1867 = vpack.c.b16 %v1756, %v1755
  %v1868 = vpack.c.b16 %v1758, %v1757
  %v1869 = vpack.c.b16 %v1760, %v1759
  %v1870 = vpack.c.b16 %v1762, %v1761
  %v1871 = vpack.c.b16 %v1764, %v1763
  %v1872 = vpack.c.b16 %v1766, %v1765
  %v1873 = vpack.c.b16 %v1768, %v1767
  %v1874 = vpack.c.b16 %v1770, %v1769
  %v1875 = vpack.c.b16 %v1772, %v1771
  %v1876 = vpack.c.b16 %v1774, %v1773
  %v1877 = vpack.c.b16 %v1776, %v1775
  %v1878 = vpack.c.b16 %v1778, %v1777
  %v1879 = vpack.c.b16 %v1780, %v1779
  %v1880 = vpack.c.b16 %v1782, %v1781
  %v1881 = vpack.c.b16 %v1784, %v1783
  %v1882 = vpack.c.b16 %v1786, %v1785
  %v1883 = vpack.c.b16 %v1788, %v1787
  %v1884 = vpack.c.b16 %v1790, %v1789
  %v1885 = vpack.c.b16 %v1792, %v1791
  %v1886 = vpack.c.b16 %v1794, %v1793
  %v1887 = vpack.c.b16 %v1796, %v1795
  %v1888 = vpack.c.b16 %v1798, %v1797
  %v1889 = vpack.c.b16 %v1800, %v1799
  %v1890 = vpack.c.b16 %v1802, %v1801
  %v1891 = vpack.c.b16 %v1804, %v1803
  %v1892 = vpack.c.b16 %v1806, %v1805
  %v1893 = vpack.c.b16 %v1808, %v1807
  %v1894 = vpack.c.b16 %v1810, %v1809
  %v1895 = vpack.c.b16 %v1812, %v1811
  %v1896 = vpack.c.b16 %v1814, %v1813
  %v1897 = vpack.c.b16 %v1816, %v1815
  %v1898 = vpack.c.b16 %v1818, %v1817
  %v1899 = vpack.c.b16 %v1820, %v1819
  %v1900 = vpack.c.b16 %v1822, %v1821
  %v1901 = vpack.c.b16 %v1824, %v1823
  %v1902 = vpack.c.b16 %v1826, %v1825
  %v1903 = vpack.c.b16 %v1828, %v1827
  %v1904 = vpack.c.b16 %v1830, %v1829
  %v1905 = vpack.c.b16 %v1832, %v1831
  %v1906 = vpack.c.b16 %v1834, %v1833
  %1979 = vmatprep.subr.bf16.mxu0 0
  %1980 = vmatpush1.bf16.msra.mxu0 %v1835
  %1981 = vmatprep.subr.bf16.mxu0 0
  %1982 = vmatpush1.bf16.msra.mxu0 %v1836
  %1983 = vmatprep.subr.bf16.mxu0 0
  %1984 = vmatpush1.bf16.msra.mxu0 %v1837
  %1985 = vmatprep.subr.bf16.mxu0 0
  %1986 = vmatpush1.bf16.msra.mxu0 %v1838
  %1987 = vmatprep.subr.bf16.mxu0 0
  %1988 = vmatpush1.bf16.msra.mxu0 %v1839
  %1989 = vmatprep.subr.bf16.mxu0 0
  %1990 = vmatpush1.bf16.msra.mxu0 %v1840
  %1991 = vmatprep.subr.bf16.mxu0 0
  %1992 = vmatpush1.bf16.msra.mxu0 %v1841
  %1993 = vmatprep.subr.bf16.mxu0 0
  %1994 = vmatpush1.bf16.msra.mxu0 %v1842
  %1995 = vmatprep.subr.bf16.mxu0 0
  %1996 = vmatpush1.bf16.msra.mxu0 %v1843
  %1997 = vmatprep.subr.bf16.mxu0 0
  %1998 = vmatpush1.bf16.msra.mxu0 %v1844
  %1999 = vmatprep.subr.bf16.mxu0 0
  %2000 = vmatpush1.bf16.msra.mxu0 %v1845
  %2001 = vmatprep.subr.bf16.mxu0 0
  %2002 = vmatpush1.bf16.msra.mxu0 %v1846
  %2003 = vmatprep.subr.bf16.mxu0 0
  %2004 = vmatpush1.bf16.msra.mxu0 %v1847
  %2005 = vmatprep.subr.bf16.mxu0 0
  %2006 = vmatpush1.bf16.msra.mxu0 %v1848
  %2007 = vmatprep.subr.bf16.mxu0 0
  %2008 = vmatpush1.bf16.msra.mxu0 %v1849
  %2009 = vmatprep.subr.bf16.mxu0 0
  %2010 = vmatpush1.bf16.msra.mxu0 %v1850
  %2011 = vmatprep.mubr.bf16.mxu0 %v1098
  %2012 = vmatmul.mubr.bf16.gmra.mrb[0].mxu0 %v1097
  %v2013 = vpop.f32.mrb[0].mxu0
  %v2014 = vadd.f32 %v409, %v2013
  %v2015 = vpop.f32.mrb[0].mxu0
  %v2016 = vpop.f32.mrb[0].mxu0
  %v2017 = vadd.f32 %v409, %v2016
  %v2018 = vpop.f32.mrb[0].mxu0
  %2019 = vmatprep.mubr.bf16.mxu0 %v1107
  %2020 = vmatmul.mubr.bf16.gmra.mrb[0].mxu0 %v1106
  %v2021 = vpop.f32.mrb[0].mxu0
  %v2022 = vadd.f32 %v409, %v2021
  %v2023 = vpop.f32.mrb[0].mxu0
  %v2024 = vpop.f32.mrb[0].mxu0
  %v2025 = vadd.f32 %v409, %v2024
  %v2026 = vpop.f32.mrb[0].mxu0
  %2027 = vmatprep.mubr.bf16.mxu0 %v1116
  %2028 = vmatmul.mubr.bf16.gmra.mrb[0].mxu0 %v1115
  %v2029 = vpop.f32.mrb[0].mxu0
  %v2030 = vadd.f32 %v409, %v2029
  %v2031 = vpop.f32.mrb[0].mxu0
  %v2032 = vpop.f32.mrb[0].mxu0
  %v2033 = vadd.f32 %v409, %v2032
  %v2034 = vpop.f32.mrb[0].mxu0
  %2035 = vmatprep.mubr.bf16.mxu0 %v1125
  %2036 = vmatmul.mubr.bf16.gmra.mrb[0].mxu0 %v1124
  %v2037 = vpop.f32.mrb[0].mxu0
  %v2038 = vadd.f32 %v409, %v2037
  %v2039 = vpop.f32.mrb[0].mxu0
  %v2040 = vpop.f32.mrb[0].mxu0
  %v2041 = vadd.f32 %v409, %v2040
  %v2042 = vpop.f32.mrb[0].mxu0
  %2043 = vmatprep.mubr.bf16.mxu0 %v1134
  %2044 = vmatmul.mubr.bf16.gmra.mrb[0].mxu0 %v1133
  %v2045 = vpop.f32.mrb[0].mxu0
  %v2046 = vadd.f32 %v409, %v2045
  %v2047 = vpop.f32.mrb[0].mxu0
  %v2048 = vpop.f32.mrb[0].mxu0
  %v2049 = vadd.f32 %v409, %v2048
  %v2050 = vpop.f32.mrb[0].mxu0
  %2051 = vmatprep.mubr.bf16.mxu0 %v1143
  %2052 = vmatmul.mubr.bf16.gmra.mrb[0].mxu0 %v1142
  %v2053 = vpop.f32.mrb[0].mxu0
  %v2054 = vadd.f32 %v409, %v2053
  %v2055 = vpop.f32.mrb[0].mxu0
  %v2056 = vpop.f32.mrb[0].mxu0
  %v2057 = vadd.f32 %v409, %v2056
  %v2058 = vpop.f32.mrb[0].mxu0
  %2059 = vmatprep.mubr.bf16.mxu0 %v1152
  %2060 = vmatmul.mubr.bf16.gmra.mrb[0].mxu0 %v1151
  %v2061 = vpop.f32.mrb[0].mxu0
  %v2062 = vadd.f32 %v409, %v2061
  %v2063 = vpop.f32.mrb[0].mxu0
  %v2064 = vpop.f32.mrb[0].mxu0
  %v2065 = vadd.f32 %v409, %v2064
  %v2066 = vpop.f32.mrb[0].mxu0
  %2067 = vmatprep.mubr.bf16.mxu0 %v1161
  %2068 = vmatmul.mubr.bf16.gmra.mrb[0].mxu0 %v1160
  %v2069 = vpop.f32.mrb[0].mxu0
  %v2070 = vadd.f32 %v409, %v2069
  %v2071 = vpop.f32.mrb[0].mxu0
  %v2072 = vpop.f32.mrb[0].mxu0
  %v2073 = vadd.f32 %v409, %v2072
  %v2074 = vpop.f32.mrb[0].mxu0
  %2075 = vmatprep.mubr.bf16.mxu0 %v1170
  %2076 = vmatmul.mubr.bf16.gmra.mrb[0].mxu0 %v1169
  %v2077 = vpop.f32.mrb[0].mxu0
  %v2078 = vadd.f32 %v409, %v2077
  %v2079 = vpop.f32.mrb[0].mxu0
  %v2080 = vpop.f32.mrb[0].mxu0
  %v2081 = vadd.f32 %v409, %v2080
  %v2082 = vpop.f32.mrb[0].mxu0
  %2083 = vmatprep.mubr.bf16.mxu0 %v1179
  %2084 = vmatmul.mubr.bf16.gmra.mrb[0].mxu0 %v1178
  %v2085 = vpop.f32.mrb[0].mxu0
  %v2086 = vadd.f32 %v409, %v2085
  %v2087 = vpop.f32.mrb[0].mxu0
  %v2088 = vpop.f32.mrb[0].mxu0
  %v2089 = vadd.f32 %v409, %v2088
  %v2090 = vpop.f32.mrb[0].mxu0
  %2091 = vmatprep.mubr.bf16.mxu0 %v1188
  %2092 = vmatmul.mubr.bf16.gmra.mrb[0].mxu0 %v1187
  %v2093 = vpop.f32.mrb[0].mxu0
  %v2094 = vadd.f32 %v409, %v2093
  %v2095 = vpop.f32.mrb[0].mxu0
  %v2096 = vpop.f32.mrb[0].mxu0
  %v2097 = vadd.f32 %v409, %v2096
  %v2098 = vpop.f32.mrb[0].mxu0
  %2099 = vmatprep.mubr.bf16.mxu0 %v1197
  %2100 = vmatmul.mubr.bf16.gmra.mrb[0].mxu0 %v1196
  %v2101 = vpop.f32.mrb[0].mxu0
  %v2102 = vadd.f32 %v409, %v2101
  %v2103 = vpop.f32.mrb[0].mxu0
  %v2104 = vpop.f32.mrb[0].mxu0
  %v2105 = vadd.f32 %v409, %v2104
  %v2106 = vpop.f32.mrb[0].mxu0
  %2107 = vmatprep.mubr.bf16.mxu0 %v1206
  %2108 = vmatmul.mubr.bf16.gmra.mrb[0].mxu0 %v1205
  %v2109 = vpop.f32.mrb[0].mxu0
  %v2110 = vadd.f32 %v409, %v2109
  %v2111 = vpop.f32.mrb[0].mxu0
  %v2112 = vpop.f32.mrb[0].mxu0
  %v2113 = vadd.f32 %v409, %v2112
  %v2114 = vpop.f32.mrb[0].mxu0
  %2115 = vmatprep.mubr.bf16.mxu0 %v1215
  %2116 = vmatmul.mubr.bf16.gmra.mrb[0].mxu0 %v1214
  %v2117 = vpop.f32.mrb[0].mxu0
  %v2118 = vadd.f32 %v409, %v2117
  %v2119 = vpop.f32.mrb[0].mxu0
  %v2120 = vpop.f32.mrb[0].mxu0
  %v2121 = vadd.f32 %v409, %v2120
  %v2122 = vpop.f32.mrb[0].mxu0
  %2123 = vmatprep.mubr.bf16.mxu0 %v1224
  %2124 = vmatmul.mubr.bf16.gmra.mrb[0].mxu0 %v1223
  %v2125 = vpop.f32.mrb[0].mxu0
  %v2126 = vadd.f32 %v409, %v2125
  %v2127 = vpop.f32.mrb[0].mxu0
  %v2128 = vpop.f32.mrb[0].mxu0
  %v2129 = vadd.f32 %v409, %v2128
  %v2130 = vpop.f32.mrb[0].mxu0
  %2131 = vmatprep.mubr.bf16.mxu0 %v1233
  %2132 = vmatmul.mubr.bf16.gmra.mrb[0].mxu0 %v1232
  %v2133 = vpop.f32.mrb[0].mxu0
  %v2134 = vadd.f32 %v409, %v2133
  %v2135 = vpop.f32.mrb[0].mxu0
  %v2136 = vpop.f32.mrb[0].mxu0
  %v2137 = vadd.f32 %v409, %v2136
  %v2138 = vpop.f32.mrb[0].mxu0
  %2139 = vmatprep.mubr.bf16.mxu0 %v1242
  %2140 = vmatmul.mubr.bf16.gmra.mrb[0].mxu0 %v1241
  %v2141 = vpop.f32.mrb[0].mxu0
  %v2142 = vadd.f32 %v409, %v2141
  %v2143 = vpop.f32.mrb[0].mxu0
  %v2144 = vpop.f32.mrb[0].mxu0
  %v2145 = vadd.f32 %v409, %v2144
  %v2146 = vpop.f32.mrb[0].mxu0
  %2147 = vmatprep.mubr.bf16.mxu0 %v1251
  %2148 = vmatmul.mubr.bf16.gmra.mrb[0].mxu0 %v1250
  %v2149 = vpop.f32.mrb[0].mxu0
  %v2150 = vadd.f32 %v409, %v2149
  %v2151 = vpop.f32.mrb[0].mxu0
  %v2152 = vpop.f32.mrb[0].mxu0
  %v2153 = vadd.f32 %v409, %v2152
  %v2154 = vpop.f32.mrb[0].mxu0
  %2155 = vmatprep.mubr.bf16.mxu0 %v1260
  %2156 = vmatmul.mubr.bf16.gmra.mrb[0].mxu0 %v1259
  %v2157 = vpop.f32.mrb[0].mxu0
  %v2158 = vadd.f32 %v409, %v2157
  %v2159 = vpop.f32.mrb[0].mxu0
  %v2160 = vpop.f32.mrb[0].mxu0
  %v2161 = vadd.f32 %v409, %v2160
  %v2162 = vpop.f32.mrb[0].mxu0
  %2163 = vmatprep.mubr.bf16.mxu0 %v1269
  %2164 = vmatmul.mubr.bf16.gmra.mrb[0].mxu0 %v1268
  %v2165 = vpop.f32.mrb[0].mxu0
  %v2166 = vadd.f32 %v409, %v2165
  %v2167 = vpop.f32.mrb[0].mxu0
  %v2168 = vpop.f32.mrb[0].mxu0
  %v2169 = vadd.f32 %v409, %v2168
  %v2170 = vpop.f32.mrb[0].mxu0
  %2171 = vmatprep.mubr.bf16.mxu0 %v1278
  %2172 = vmatmul.mubr.bf16.gmra.mrb[0].mxu0 %v1277
  %v2173 = vpop.f32.mrb[0].mxu0
  %v2174 = vadd.f32 %v409, %v2173
  %v2175 = vpop.f32.mrb[0].mxu0
  %v2176 = vpop.f32.mrb[0].mxu0
  %v2177 = vadd.f32 %v409, %v2176
  %v2178 = vpop.f32.mrb[0].mxu0
  %2179 = vmatprep.mubr.bf16.mxu0 %v1287
  %2180 = vmatmul.mubr.bf16.gmra.mrb[0].mxu0 %v1286
  %v2181 = vpop.f32.mrb[0].mxu0
  %v2182 = vadd.f32 %v409, %v2181
  %v2183 = vpop.f32.mrb[0].mxu0
  %v2184 = vpop.f32.mrb[0].mxu0
  %v2185 = vadd.f32 %v409, %v2184
  %v2186 = vpop.f32.mrb[0].mxu0
  %2187 = vmatprep.mubr.bf16.mxu0 %v1296
  %2188 = vmatmul.mubr.bf16.gmra.mrb[0].mxu0 %v1295
  %v2189 = vpop.f32.mrb[0].mxu0
  %v2190 = vadd.f32 %v409, %v2189
  %v2191 = vpop.f32.mrb[0].mxu0
  %v2192 = vpop.f32.mrb[0].mxu0
  %v2193 = vadd.f32 %v409, %v2192
  %v2194 = vpop.f32.mrb[0].mxu0
  %2195 = vmatprep.mubr.bf16.mxu0 %v1305
  %2196 = vmatmul.mubr.bf16.gmra.mrb[0].mxu0 %v1304
  %v2197 = vpop.f32.mrb[0].mxu0
  %v2198 = vadd.f32 %v409, %v2197
  %v2199 = vpop.f32.mrb[0].mxu0
  %v2200 = vpop.f32.mrb[0].mxu0
  %v2201 = vadd.f32 %v409, %v2200
  %v2202 = vpop.f32.mrb[0].mxu0
  %2203 = vmatprep.mubr.bf16.mxu0 %v1314
  %2204 = vmatmul.mubr.bf16.gmra.mrb[0].mxu0 %v1313
  %v2205 = vpop.f32.mrb[0].mxu0
  %v2206 = vadd.f32 %v409, %v2205
  %v2207 = vpop.f32.mrb[0].mxu0
  %v2208 = vpop.f32.mrb[0].mxu0
  %v2209 = vpop.f32.mrb[0].mxu0
  %2210 = vdwg.mxu0
  %2211 = vmatprep.subr.bf16.mxu0 0
  %2212 = vmatpush1.bf16.msra.mxu0 %v1851
  %2213 = vmatprep.subr.bf16.mxu0 0
  %2214 = vmatpush1.bf16.msra.mxu0 %v1852
  %2215 = vmatprep.subr.bf16.mxu0 0
  %2216 = vmatpush1.bf16.msra.mxu0 %v1853
  %2217 = vmatprep.subr.bf16.mxu0 0
  %2218 = vmatpush1.bf16.msra.mxu0 %v1854
  %2219 = vmatprep.subr.bf16.mxu0 0
  %2220 = vmatpush1.bf16.msra.mxu0 %v1855
  %2221 = vmatprep.subr.bf16.mxu0 0
  %2222 = vmatpush1.bf16.msra.mxu0 %v1856
  %2223 = vmatprep.subr.bf16.mxu0 0
  %2224 = vmatpush1.bf16.msra.mxu0 %v1857
  %2225 = vmatprep.subr.bf16.mxu0 0
  %2226 = vmatpush1.bf16.msra.mxu0 %v1858
  %2227 = vmatprep.subr.bf16.mxu0 0
  %2228 = vmatpush1.bf16.msra.mxu0 %v1859
  %2229 = vmatprep.subr.bf16.mxu0 0
  %2230 = vmatpush1.bf16.msra.mxu0 %v1860
  %2231 = vmatprep.subr.bf16.mxu0 0
  %2232 = vmatpush1.bf16.msra.mxu0 %v1861
  %2233 = vmatprep.subr.bf16.mxu0 0
  %2234 = vmatpush1.bf16.msra.mxu0 %v1862
  %2235 = vmatprep.subr.bf16.mxu0 0
  %2236 = vmatpush1.bf16.msra.mxu0 %v1863
  %2237 = vmatprep.subr.bf16.mxu0 0
  %2238 = vmatpush1.bf16.msra.mxu0 %v1864
  %2239 = vmatprep.subr.bf16.mxu0 0
  %2240 = vmatpush1.bf16.msra.mxu0 %v1865
  %2241 = vmatprep.subr.bf16.mxu0 0
  %2242 = vmatpush1.bf16.msra.mxu0 %v1866
  %2243 = vmatprep.mubr.bf16.mxu0 %v1100
  %2244 = vmatmul.mubr.bf16.gmra.mrb[0].mxu0 %v1099
  %v2245 = vpop.f32.mrb[0].mxu0
  %v2246 = vadd.f32 %v2014, %v2245
  %v2247 = vpop.f32.mrb[0].mxu0
  %v2248 = vpop.f32.mrb[0].mxu0
  %v2249 = vadd.f32 %v2017, %v2248
  %v2250 = vpop.f32.mrb[0].mxu0
  %2251 = vmatprep.mubr.bf16.mxu0 %v1109
  %2252 = vmatmul.mubr.bf16.gmra.mrb[0].mxu0 %v1108
  %v2253 = vpop.f32.mrb[0].mxu0
  %v2254 = vadd.f32 %v2022, %v2253
  %v2255 = vpop.f32.mrb[0].mxu0
  %v2256 = vpop.f32.mrb[0].mxu0
  %v2257 = vadd.f32 %v2025, %v2256
  %v2258 = vpop.f32.mrb[0].mxu0
  %2259 = vmatprep.mubr.bf16.mxu0 %v1118
  %2260 = vmatmul.mubr.bf16.gmra.mrb[0].mxu0 %v1117
  %v2261 = vpop.f32.mrb[0].mxu0
  %v2262 = vadd.f32 %v2030, %v2261
  %v2263 = vpop.f32.mrb[0].mxu0
  %v2264 = vpop.f32.mrb[0].mxu0
  %v2265 = vadd.f32 %v2033, %v2264
  %v2266 = vpop.f32.mrb[0].mxu0
  %2267 = vmatprep.mubr.bf16.mxu0 %v1127
  %2268 = vmatmul.mubr.bf16.gmra.mrb[0].mxu0 %v1126
  %v2269 = vpop.f32.mrb[0].mxu0
  %v2270 = vadd.f32 %v2038, %v2269
  %v2271 = vpop.f32.mrb[0].mxu0
  %v2272 = vpop.f32.mrb[0].mxu0
  %v2273 = vadd.f32 %v2041, %v2272
  %v2274 = vpop.f32.mrb[0].mxu0
  %2275 = vmatprep.mubr.bf16.mxu0 %v1136
  %2276 = vmatmul.mubr.bf16.gmra.mrb[0].mxu0 %v1135
  %v2277 = vpop.f32.mrb[0].mxu0
  %v2278 = vadd.f32 %v2046, %v2277
  %v2279 = vpop.f32.mrb[0].mxu0
  %v2280 = vpop.f32.mrb[0].mxu0
  %v2281 = vadd.f32 %v2049, %v2280
  %v2282 = vpop.f32.mrb[0].mxu0
  %2283 = vmatprep.mubr.bf16.mxu0 %v1145
  %2284 = vmatmul.mubr.bf16.gmra.mrb[0].mxu0 %v1144
  %v2285 = vpop.f32.mrb[0].mxu0
  %v2286 = vadd.f32 %v2054, %v2285
  %v2287 = vpop.f32.mrb[0].mxu0
  %v2288 = vpop.f32.mrb[0].mxu0
  %v2289 = vadd.f32 %v2057, %v2288
  %v2290 = vpop.f32.mrb[0].mxu0
  %2291 = vmatprep.mubr.bf16.mxu0 %v1154
  %2292 = vmatmul.mubr.bf16.gmra.mrb[0].mxu0 %v1153
  %v2293 = vpop.f32.mrb[0].mxu0
  %v2294 = vadd.f32 %v2062, %v2293
  %v2295 = vpop.f32.mrb[0].mxu0
  %v2296 = vpop.f32.mrb[0].mxu0
  %v2297 = vadd.f32 %v2065, %v2296
  %v2298 = vpop.f32.mrb[0].mxu0
  %2299 = vmatprep.mubr.bf16.mxu0 %v1163
  %2300 = vmatmul.mubr.bf16.gmra.mrb[0].mxu0 %v1162
  %v2301 = vpop.f32.mrb[0].mxu0
  %v2302 = vadd.f32 %v2070, %v2301
  %v2303 = vpop.f32.mrb[0].mxu0
  %v2304 = vpop.f32.mrb[0].mxu0
  %v2305 = vadd.f32 %v2073, %v2304
  %v2306 = vpop.f32.mrb[0].mxu0
  %2307 = vmatprep.mubr.bf16.mxu0 %v1172
  %2308 = vmatmul.mubr.bf16.gmra.mrb[0].mxu0 %v1171
  %v2309 = vpop.f32.mrb[0].mxu0
  %v2310 = vadd.f32 %v2078, %v2309
  %v2311 = vpop.f32.mrb[0].mxu0
  %v2312 = vpop.f32.mrb[0].mxu0
  %v2313 = vadd.f32 %v2081, %v2312
  %v2314 = vpop.f32.mrb[0].mxu0
  %2315 = vmatprep.mubr.bf16.mxu0 %v1181
  %2316 = vmatmul.mubr.bf16.gmra.mrb[0].mxu0 %v1180
  %v2317 = vpop.f32.mrb[0].mxu0
  %v2318 = vadd.f32 %v2086, %v2317
  %v2319 = vpop.f32.mrb[0].mxu0
  %v2320 = vpop.f32.mrb[0].mxu0
  %v2321 = vadd.f32 %v2089, %v2320
  %v2322 = vpop.f32.mrb[0].mxu0
  %2323 = vmatprep.mubr.bf16.mxu0 %v1190
  %2324 = vmatmul.mubr.bf16.gmra.mrb[0].mxu0 %v1189
  %v2325 = vpop.f32.mrb[0].mxu0
  %v2326 = vadd.f32 %v2094, %v2325
  %v2327 = vpop.f32.mrb[0].mxu0
  %v2328 = vpop.f32.mrb[0].mxu0
  %v2329 = vadd.f32 %v2097, %v2328
  %v2330 = vpop.f32.mrb[0].mxu0
  %2331 = vmatprep.mubr.bf16.mxu0 %v1199
  %2332 = vmatmul.mubr.bf16.gmra.mrb[0].mxu0 %v1198
  %v2333 = vpop.f32.mrb[0].mxu0
  %v2334 = vadd.f32 %v2102, %v2333
  %v2335 = vpop.f32.mrb[0].mxu0
  %v2336 = vpop.f32.mrb[0].mxu0
  %v2337 = vadd.f32 %v2105, %v2336
  %v2338 = vpop.f32.mrb[0].mxu0
  %2339 = vmatprep.mubr.bf16.mxu0 %v1208
  %2340 = vmatmul.mubr.bf16.gmra.mrb[0].mxu0 %v1207
  %v2341 = vpop.f32.mrb[0].mxu0
  %v2342 = vadd.f32 %v2110, %v2341
  %v2343 = vpop.f32.mrb[0].mxu0
  %v2344 = vpop.f32.mrb[0].mxu0
  %v2345 = vadd.f32 %v2113, %v2344
  %v2346 = vpop.f32.mrb[0].mxu0
  %2347 = vmatprep.mubr.bf16.mxu0 %v1217
  %2348 = vmatmul.mubr.bf16.gmra.mrb[0].mxu0 %v1216
  %v2349 = vpop.f32.mrb[0].mxu0
  %v2350 = vadd.f32 %v2118, %v2349
  %v2351 = vpop.f32.mrb[0].mxu0
  %v2352 = vpop.f32.mrb[0].mxu0
  %v2353 = vadd.f32 %v2121, %v2352
  %v2354 = vpop.f32.mrb[0].mxu0
  %2355 = vmatprep.mubr.bf16.mxu0 %v1226
  %2356 = vmatmul.mubr.bf16.gmra.mrb[0].mxu0 %v1225
  %v2357 = vpop.f32.mrb[0].mxu0
  %v2358 = vadd.f32 %v2126, %v2357
  %v2359 = vpop.f32.mrb[0].mxu0
  %v2360 = vpop.f32.mrb[0].mxu0
  %v2361 = vadd.f32 %v2129, %v2360
  %v2362 = vpop.f32.mrb[0].mxu0
  %2363 = vmatprep.mubr.bf16.mxu0 %v1235
  %2364 = vmatmul.mubr.bf16.gmra.mrb[0].mxu0 %v1234
  %v2365 = vpop.f32.mrb[0].mxu0
  %v2366 = vadd.f32 %v2134, %v2365
  %v2367 = vpop.f32.mrb[0].mxu0
  %v2368 = vpop.f32.mrb[0].mxu0
  %v2369 = vadd.f32 %v2137, %v2368
  %v2370 = vpop.f32.mrb[0].mxu0
  %2371 = vmatprep.mubr.bf16.mxu0 %v1244
  %2372 = vmatmul.mubr.bf16.gmra.mrb[0].mxu0 %v1243
  %v2373 = vpop.f32.mrb[0].mxu0
  %v2374 = vadd.f32 %v2142, %v2373
  %v2375 = vpop.f32.mrb[0].mxu0
  %v2376 = vpop.f32.mrb[0].mxu0
  %v2377 = vadd.f32 %v2145, %v2376
  %v2378 = vpop.f32.mrb[0].mxu0
  %2379 = vmatprep.mubr.bf16.mxu0 %v1253
  %2380 = vmatmul.mubr.bf16.gmra.mrb[0].mxu0 %v1252
  %v2381 = vpop.f32.mrb[0].mxu0
  %v2382 = vadd.f32 %v2150, %v2381
  %v2383 = vpop.f32.mrb[0].mxu0
  %v2384 = vpop.f32.mrb[0].mxu0
  %v2385 = vadd.f32 %v2153, %v2384
  %v2386 = vpop.f32.mrb[0].mxu0
  %2387 = vmatprep.mubr.bf16.mxu0 %v1262
  %2388 = vmatmul.mubr.bf16.gmra.mrb[0].mxu0 %v1261
  %v2389 = vpop.f32.mrb[0].mxu0
  %v2390 = vadd.f32 %v2158, %v2389
  %v2391 = vpop.f32.mrb[0].mxu0
  %v2392 = vpop.f32.mrb[0].mxu0
  %v2393 = vadd.f32 %v2161, %v2392
  %v2394 = vpop.f32.mrb[0].mxu0
  %2395 = vmatprep.mubr.bf16.mxu0 %v1271
  %2396 = vmatmul.mubr.bf16.gmra.mrb[0].mxu0 %v1270
  %v2397 = vpop.f32.mrb[0].mxu0
  %v2398 = vadd.f32 %v2166, %v2397
  %v2399 = vpop.f32.mrb[0].mxu0
  %v2400 = vpop.f32.mrb[0].mxu0
  %v2401 = vadd.f32 %v2169, %v2400
  %v2402 = vpop.f32.mrb[0].mxu0
  %2403 = vmatprep.mubr.bf16.mxu0 %v1280
  %2404 = vmatmul.mubr.bf16.gmra.mrb[0].mxu0 %v1279
  %v2405 = vpop.f32.mrb[0].mxu0
  %v2406 = vadd.f32 %v2174, %v2405
  %v2407 = vpop.f32.mrb[0].mxu0
  %v2408 = vpop.f32.mrb[0].mxu0
  %v2409 = vadd.f32 %v2177, %v2408
  %v2410 = vpop.f32.mrb[0].mxu0
  %2411 = vmatprep.mubr.bf16.mxu0 %v1289
  %2412 = vmatmul.mubr.bf16.gmra.mrb[0].mxu0 %v1288
  %v2413 = vpop.f32.mrb[0].mxu0
  %v2414 = vadd.f32 %v2182, %v2413
  %v2415 = vpop.f32.mrb[0].mxu0
  %v2416 = vpop.f32.mrb[0].mxu0
  %v2417 = vadd.f32 %v2185, %v2416
  %v2418 = vpop.f32.mrb[0].mxu0
  %2419 = vmatprep.mubr.bf16.mxu0 %v1298
  %2420 = vmatmul.mubr.bf16.gmra.mrb[0].mxu0 %v1297
  %v2421 = vpop.f32.mrb[0].mxu0
  %v2422 = vadd.f32 %v2190, %v2421
  %v2423 = vpop.f32.mrb[0].mxu0
  %v2424 = vpop.f32.mrb[0].mxu0
  %v2425 = vadd.f32 %v2193, %v2424
  %v2426 = vpop.f32.mrb[0].mxu0
  %2427 = vmatprep.mubr.bf16.mxu0 %v1307
  %2428 = vmatmul.mubr.bf16.gmra.mrb[0].mxu0 %v1306
  %v2429 = vpop.f32.mrb[0].mxu0
  %v2430 = vadd.f32 %v2198, %v2429
  %v2431 = vpop.f32.mrb[0].mxu0
  %v2432 = vpop.f32.mrb[0].mxu0
  %v2433 = vadd.f32 %v2201, %v2432
  %v2434 = vpop.f32.mrb[0].mxu0
  %2435 = vmatprep.mubr.bf16.mxu0 %v1316
  %2436 = vmatmul.mubr.bf16.gmra.mrb[0].mxu0 %v1315
  %v2437 = vpop.f32.mrb[0].mxu0
  %v2438 = vadd.f32 %v2206, %v2437
  %v2439 = vpop.f32.mrb[0].mxu0
  %v2440 = vpop.f32.mrb[0].mxu0
  %v2441 = vpop.f32.mrb[0].mxu0
  %2442 = vdwg.mxu0
  %2443 = vmatprep.subr.bf16.mxu0 0
  %2444 = vmatpush1.bf16.msra.mxu0 %v1867
  %2445 = vmatprep.subr.bf16.mxu0 0
  %2446 = vmatpush1.bf16.msra.mxu0 %v1868
  %2447 = vmatprep.subr.bf16.mxu0 0
  %2448 = vmatpush1.bf16.msra.mxu0 %v1869
  %2449 = vmatprep.subr.bf16.mxu0 0
  %2450 = vmatpush1.bf16.msra.mxu0 %v1870
  %2451 = vmatprep.subr.bf16.mxu0 0
  %2452 = vmatpush1.bf16.msra.mxu0 %v1871
  %2453 = vmatprep.subr.bf16.mxu0 0
  %2454 = vmatpush1.bf16.msra.mxu0 %v1872
  %2455 = vmatprep.subr.bf16.mxu0 0
  %2456 = vmatpush1.bf16.msra.mxu0 %v1873
  %2457 = vmatprep.subr.bf16.mxu0 0
  %2458 = vmatpush1.bf16.msra.mxu0 %v1874
  %2459 = vmatprep.subr.bf16.mxu0 0
  %2460 = vmatpush1.bf16.msra.mxu0 %v1875
  %2461 = vmatprep.subr.bf16.mxu0 0
  %2462 = vmatpush1.bf16.msra.mxu0 %v1876
  %2463 = vmatprep.subr.bf16.mxu0 0
  %2464 = vmatpush1.bf16.msra.mxu0 %v1877
  %2465 = vmatprep.subr.bf16.mxu0 0
  %2466 = vmatpush1.bf16.msra.mxu0 %v1878
  %2467 = vmatprep.subr.bf16.mxu0 0
  %2468 = vmatpush1.bf16.msra.mxu0 %v1879
  %2469 = vmatprep.subr.bf16.mxu0 0
  %2470 = vmatpush1.bf16.msra.mxu0 %v1880
  %2471 = vmatprep.subr.bf16.mxu0 0
  %2472 = vmatpush1.bf16.msra.mxu0 %v1881
  %2473 = vmatprep.subr.bf16.mxu0 0
  %2474 = vmatpush1.bf16.msra.mxu0 %v1882
  %2475 = vmatprep.mubr.bf16.mxu0 %v1102
  %2476 = vmatmul.mubr.bf16.gmra.mrb[0].mxu0 %v1101
  %v2477 = vpop.f32.mrb[0].mxu0
  %v2478 = vadd.f32 %v2246, %v2477
  %v2479 = vpop.f32.mrb[0].mxu0
  %v2480 = vpop.f32.mrb[0].mxu0
  %v2481 = vadd.f32 %v2249, %v2480
  %v2482 = vpop.f32.mrb[0].mxu0
  %2483 = vmatprep.mubr.bf16.mxu0 %v1111
  %2484 = vmatmul.mubr.bf16.gmra.mrb[0].mxu0 %v1110
  %v2485 = vpop.f32.mrb[0].mxu0
  %v2486 = vadd.f32 %v2254, %v2485
  %v2487 = vpop.f32.mrb[0].mxu0
  %v2488 = vpop.f32.mrb[0].mxu0
  %v2489 = vadd.f32 %v2257, %v2488
  %v2490 = vpop.f32.mrb[0].mxu0
  %2491 = vmatprep.mubr.bf16.mxu0 %v1120
  %2492 = vmatmul.mubr.bf16.gmra.mrb[0].mxu0 %v1119
  %v2493 = vpop.f32.mrb[0].mxu0
  %v2494 = vadd.f32 %v2262, %v2493
  %v2495 = vpop.f32.mrb[0].mxu0
  %v2496 = vpop.f32.mrb[0].mxu0
  %v2497 = vadd.f32 %v2265, %v2496
  %v2498 = vpop.f32.mrb[0].mxu0
  %2499 = vmatprep.mubr.bf16.mxu0 %v1129
  %2500 = vmatmul.mubr.bf16.gmra.mrb[0].mxu0 %v1128
  %v2501 = vpop.f32.mrb[0].mxu0
  %v2502 = vadd.f32 %v2270, %v2501
  %v2503 = vpop.f32.mrb[0].mxu0
  %v2504 = vpop.f32.mrb[0].mxu0
  %v2505 = vadd.f32 %v2273, %v2504
  %v2506 = vpop.f32.mrb[0].mxu0
  %2507 = vmatprep.mubr.bf16.mxu0 %v1138
  %2508 = vmatmul.mubr.bf16.gmra.mrb[0].mxu0 %v1137
  %v2509 = vpop.f32.mrb[0].mxu0
  %v2510 = vadd.f32 %v2278, %v2509
  %v2511 = vpop.f32.mrb[0].mxu0
  %v2512 = vpop.f32.mrb[0].mxu0
  %v2513 = vadd.f32 %v2281, %v2512
  %v2514 = vpop.f32.mrb[0].mxu0
  %2515 = vmatprep.mubr.bf16.mxu0 %v1147
  %2516 = vmatmul.mubr.bf16.gmra.mrb[0].mxu0 %v1146
  %v2517 = vpop.f32.mrb[0].mxu0
  %v2518 = vadd.f32 %v2286, %v2517
  %v2519 = vpop.f32.mrb[0].mxu0
  %v2520 = vpop.f32.mrb[0].mxu0
  %v2521 = vadd.f32 %v2289, %v2520
  %v2522 = vpop.f32.mrb[0].mxu0
  %2523 = vmatprep.mubr.bf16.mxu0 %v1156
  %2524 = vmatmul.mubr.bf16.gmra.mrb[0].mxu0 %v1155
  %v2525 = vpop.f32.mrb[0].mxu0
  %v2526 = vadd.f32 %v2294, %v2525
  %v2527 = vpop.f32.mrb[0].mxu0
  %v2528 = vpop.f32.mrb[0].mxu0
  %v2529 = vadd.f32 %v2297, %v2528
  %v2530 = vpop.f32.mrb[0].mxu0
  %2531 = vmatprep.mubr.bf16.mxu0 %v1165
  %2532 = vmatmul.mubr.bf16.gmra.mrb[0].mxu0 %v1164
  %v2533 = vpop.f32.mrb[0].mxu0
  %v2534 = vadd.f32 %v2302, %v2533
  %v2535 = vpop.f32.mrb[0].mxu0
  %v2536 = vpop.f32.mrb[0].mxu0
  %v2537 = vadd.f32 %v2305, %v2536
  %v2538 = vpop.f32.mrb[0].mxu0
  %2539 = vmatprep.mubr.bf16.mxu0 %v1174
  %2540 = vmatmul.mubr.bf16.gmra.mrb[0].mxu0 %v1173
  %v2541 = vpop.f32.mrb[0].mxu0
  %v2542 = vadd.f32 %v2310, %v2541
  %v2543 = vpop.f32.mrb[0].mxu0
  %v2544 = vpop.f32.mrb[0].mxu0
  %v2545 = vadd.f32 %v2313, %v2544
  %v2546 = vpop.f32.mrb[0].mxu0
  %2547 = vmatprep.mubr.bf16.mxu0 %v1183
  %2548 = vmatmul.mubr.bf16.gmra.mrb[0].mxu0 %v1182
  %v2549 = vpop.f32.mrb[0].mxu0
  %v2550 = vadd.f32 %v2318, %v2549
  %v2551 = vpop.f32.mrb[0].mxu0
  %v2552 = vpop.f32.mrb[0].mxu0
  %v2553 = vadd.f32 %v2321, %v2552
  %v2554 = vpop.f32.mrb[0].mxu0
  %2555 = vmatprep.mubr.bf16.mxu0 %v1192
  %2556 = vmatmul.mubr.bf16.gmra.mrb[0].mxu0 %v1191
  %v2557 = vpop.f32.mrb[0].mxu0
  %v2558 = vadd.f32 %v2326, %v2557
  %v2559 = vpop.f32.mrb[0].mxu0
  %v2560 = vpop.f32.mrb[0].mxu0
  %v2561 = vadd.f32 %v2329, %v2560
  %v2562 = vpop.f32.mrb[0].mxu0
  %2563 = vmatprep.mubr.bf16.mxu0 %v1201
  %2564 = vmatmul.mubr.bf16.gmra.mrb[0].mxu0 %v1200
  %v2565 = vpop.f32.mrb[0].mxu0
  %v2566 = vadd.f32 %v2334, %v2565
  %v2567 = vpop.f32.mrb[0].mxu0
  %v2568 = vpop.f32.mrb[0].mxu0
  %v2569 = vadd.f32 %v2337, %v2568
  %v2570 = vpop.f32.mrb[0].mxu0
  %2571 = vmatprep.mubr.bf16.mxu0 %v1210
  %2572 = vmatmul.mubr.bf16.gmra.mrb[0].mxu0 %v1209
  %v2573 = vpop.f32.mrb[0].mxu0
  %v2574 = vadd.f32 %v2342, %v2573
  %v2575 = vpop.f32.mrb[0].mxu0
  %v2576 = vpop.f32.mrb[0].mxu0
  %v2577 = vadd.f32 %v2345, %v2576
  %v2578 = vpop.f32.mrb[0].mxu0
  %2579 = vmatprep.mubr.bf16.mxu0 %v1219
  %2580 = vmatmul.mubr.bf16.gmra.mrb[0].mxu0 %v1218
  %v2581 = vpop.f32.mrb[0].mxu0
  %v2582 = vadd.f32 %v2350, %v2581
  %v2583 = vpop.f32.mrb[0].mxu0
  %v2584 = vpop.f32.mrb[0].mxu0
  %v2585 = vadd.f32 %v2353, %v2584
  %v2586 = vpop.f32.mrb[0].mxu0
  %2587 = vmatprep.mubr.bf16.mxu0 %v1228
  %2588 = vmatmul.mubr.bf16.gmra.mrb[0].mxu0 %v1227
  %v2589 = vpop.f32.mrb[0].mxu0
  %v2590 = vadd.f32 %v2358, %v2589
  %v2591 = vpop.f32.mrb[0].mxu0
  %v2592 = vpop.f32.mrb[0].mxu0
  %v2593 = vadd.f32 %v2361, %v2592
  %v2594 = vpop.f32.mrb[0].mxu0
  %2595 = vmatprep.mubr.bf16.mxu0 %v1237
  %2596 = vmatmul.mubr.bf16.gmra.mrb[0].mxu0 %v1236
  %v2597 = vpop.f32.mrb[0].mxu0
  %v2598 = vadd.f32 %v2366, %v2597
  %v2599 = vpop.f32.mrb[0].mxu0
  %v2600 = vpop.f32.mrb[0].mxu0
  %v2601 = vadd.f32 %v2369, %v2600
  %v2602 = vpop.f32.mrb[0].mxu0
  %2603 = vmatprep.mubr.bf16.mxu0 %v1246
  %2604 = vmatmul.mubr.bf16.gmra.mrb[0].mxu0 %v1245
  %v2605 = vpop.f32.mrb[0].mxu0
  %v2606 = vadd.f32 %v2374, %v2605
  %v2607 = vpop.f32.mrb[0].mxu0
  %v2608 = vpop.f32.mrb[0].mxu0
  %v2609 = vadd.f32 %v2377, %v2608
  %v2610 = vpop.f32.mrb[0].mxu0
  %2611 = vmatprep.mubr.bf16.mxu0 %v1255
  %2612 = vmatmul.mubr.bf16.gmra.mrb[0].mxu0 %v1254
  %v2613 = vpop.f32.mrb[0].mxu0
  %v2614 = vadd.f32 %v2382, %v2613
  %v2615 = vpop.f32.mrb[0].mxu0
  %v2616 = vpop.f32.mrb[0].mxu0
  %v2617 = vadd.f32 %v2385, %v2616
  %v2618 = vpop.f32.mrb[0].mxu0
  %2619 = vmatprep.mubr.bf16.mxu0 %v1264
  %2620 = vmatmul.mubr.bf16.gmra.mrb[0].mxu0 %v1263
  %v2621 = vpop.f32.mrb[0].mxu0
  %v2622 = vadd.f32 %v2390, %v2621
  %v2623 = vpop.f32.mrb[0].mxu0
  %v2624 = vpop.f32.mrb[0].mxu0
  %v2625 = vadd.f32 %v2393, %v2624
  %v2626 = vpop.f32.mrb[0].mxu0
  %2627 = vmatprep.mubr.bf16.mxu0 %v1273
  %2628 = vmatmul.mubr.bf16.gmra.mrb[0].mxu0 %v1272
  %v2629 = vpop.f32.mrb[0].mxu0
  %v2630 = vadd.f32 %v2398, %v2629
  %v2631 = vpop.f32.mrb[0].mxu0
  %v2632 = vpop.f32.mrb[0].mxu0
  %v2633 = vadd.f32 %v2401, %v2632
  %v2634 = vpop.f32.mrb[0].mxu0
  %2635 = vmatprep.mubr.bf16.mxu0 %v1282
  %2636 = vmatmul.mubr.bf16.gmra.mrb[0].mxu0 %v1281
  %v2637 = vpop.f32.mrb[0].mxu0
  %v2638 = vadd.f32 %v2406, %v2637
  %v2639 = vpop.f32.mrb[0].mxu0
  %v2640 = vpop.f32.mrb[0].mxu0
  %v2641 = vadd.f32 %v2409, %v2640
  %v2642 = vpop.f32.mrb[0].mxu0
  %2643 = vmatprep.mubr.bf16.mxu0 %v1291
  %2644 = vmatmul.mubr.bf16.gmra.mrb[0].mxu0 %v1290
  %v2645 = vpop.f32.mrb[0].mxu0
  %v2646 = vadd.f32 %v2414, %v2645
  %v2647 = vpop.f32.mrb[0].mxu0
  %v2648 = vpop.f32.mrb[0].mxu0
  %v2649 = vadd.f32 %v2417, %v2648
  %v2650 = vpop.f32.mrb[0].mxu0
  %2651 = vmatprep.mubr.bf16.mxu0 %v1300
  %2652 = vmatmul.mubr.bf16.gmra.mrb[0].mxu0 %v1299
  %v2653 = vpop.f32.mrb[0].mxu0
  %v2654 = vadd.f32 %v2422, %v2653
  %v2655 = vpop.f32.mrb[0].mxu0
  %v2656 = vpop.f32.mrb[0].mxu0
  %v2657 = vadd.f32 %v2425, %v2656
  %v2658 = vpop.f32.mrb[0].mxu0
  %2659 = vmatprep.mubr.bf16.mxu0 %v1309
  %2660 = vmatmul.mubr.bf16.gmra.mrb[0].mxu0 %v1308
  %v2661 = vpop.f32.mrb[0].mxu0
  %v2662 = vadd.f32 %v2430, %v2661
  %v2663 = vpop.f32.mrb[0].mxu0
  %v2664 = vpop.f32.mrb[0].mxu0
  %v2665 = vadd.f32 %v2433, %v2664
  %v2666 = vpop.f32.mrb[0].mxu0
  %2667 = vmatprep.mubr.bf16.mxu0 %v1318
  %2668 = vmatmul.mubr.bf16.gmra.mrb[0].mxu0 %v1317
  %v2669 = vpop.f32.mrb[0].mxu0
  %v2670 = vadd.f32 %v2438, %v2669
  %v2671 = vpop.f32.mrb[0].mxu0
  %v2672 = vpop.f32.mrb[0].mxu0
  %v2673 = vpop.f32.mrb[0].mxu0
  %2674 = vdwg.mxu0
  %2675 = vmatprep.subr.bf16.mxu0 0
  %2676 = vmatpush1.bf16.msra.mxu0 %v1883
  %2677 = vmatprep.subr.bf16.mxu0 0
  %2678 = vmatpush1.bf16.msra.mxu0 %v1884
  %2679 = vmatprep.subr.bf16.mxu0 0
  %2680 = vmatpush1.bf16.msra.mxu0 %v1885
  %2681 = vmatprep.subr.bf16.mxu0 0
  %2682 = vmatpush1.bf16.msra.mxu0 %v1886
  %2683 = vmatprep.subr.bf16.mxu0 0
  %2684 = vmatpush1.bf16.msra.mxu0 %v1887
  %2685 = vmatprep.subr.bf16.mxu0 0
  %2686 = vmatpush1.bf16.msra.mxu0 %v1888
  %2687 = vmatprep.subr.bf16.mxu0 0
  %2688 = vmatpush1.bf16.msra.mxu0 %v1889
  %2689 = vmatprep.subr.bf16.mxu0 0
  %2690 = vmatpush1.bf16.msra.mxu0 %v1890
  %2691 = vmatprep.subr.bf16.mxu0 0
  %2692 = vmatpush1.bf16.msra.mxu0 %v1891
  %2693 = vmatprep.subr.bf16.mxu0 0
  %2694 = vmatpush1.bf16.msra.mxu0 %v1892
  %2695 = vmatprep.subr.bf16.mxu0 0
  %2696 = vmatpush1.bf16.msra.mxu0 %v1893
  %2697 = vmatprep.subr.bf16.mxu0 0
  %2698 = vmatpush1.bf16.msra.mxu0 %v1894
  %2699 = vmatprep.subr.bf16.mxu0 0
  %2700 = vmatpush1.bf16.msra.mxu0 %v1895
  %2701 = vmatprep.subr.bf16.mxu0 0
  %2702 = vmatpush1.bf16.msra.mxu0 %v1896
  %2703 = vmatprep.subr.bf16.mxu0 0
  %2704 = vmatpush1.bf16.msra.mxu0 %v1897
  %2705 = vmatprep.subr.bf16.mxu0 0
  %2706 = vmatpush1.bf16.msra.mxu0 %v1898
  %2707 = vmatprep.mubr.bf16.mxu0 %v1104
  %2708 = vmatmul.mubr.bf16.gmra.mrb[0].mxu0 %v1103
  %v2709 = vpop.f32.mrb[0].mxu0
  %v2710 = vadd.f32 %v2478, %v2709
  %v2711 = vpop.f32.mrb[0].mxu0
  %v2712 = vpop.f32.mrb[0].mxu0
  %v2713 = vadd.f32 %v2481, %v2712
  %v2714 = vpop.f32.mrb[0].mxu0
  %2715 = vmatprep.mubr.bf16.mxu0 %v1113
  %2716 = vmatmul.mubr.bf16.gmra.mrb[0].mxu0 %v1112
  %v2717 = vpop.f32.mrb[0].mxu0
  %v2718 = vadd.f32 %v2486, %v2717
  %v2719 = vpop.f32.mrb[0].mxu0
  %v2720 = vpop.f32.mrb[0].mxu0
  %v2721 = vadd.f32 %v2489, %v2720
  %v2722 = vpop.f32.mrb[0].mxu0
  %2723 = vmatprep.mubr.bf16.mxu0 %v1122
  %2724 = vmatmul.mubr.bf16.gmra.mrb[0].mxu0 %v1121
  %v2725 = vpop.f32.mrb[0].mxu0
  %v2726 = vadd.f32 %v2494, %v2725
  %v2727 = vpop.f32.mrb[0].mxu0
  %v2728 = vpop.f32.mrb[0].mxu0
  %v2729 = vadd.f32 %v2497, %v2728
  %v2730 = vpop.f32.mrb[0].mxu0
  %2731 = vmatprep.mubr.bf16.mxu0 %v1131
  %2732 = vmatmul.mubr.bf16.gmra.mrb[0].mxu0 %v1130
  %v2733 = vpop.f32.mrb[0].mxu0
  %v2734 = vadd.f32 %v2502, %v2733
  %v2735 = vpop.f32.mrb[0].mxu0
  %v2736 = vpop.f32.mrb[0].mxu0
  %v2737 = vadd.f32 %v2505, %v2736
  %v2738 = vpop.f32.mrb[0].mxu0
  %2739 = vmatprep.mubr.bf16.mxu0 %v1140
  %2740 = vmatmul.mubr.bf16.gmra.mrb[0].mxu0 %v1139
  %v2741 = vpop.f32.mrb[0].mxu0
  %v2742 = vadd.f32 %v2510, %v2741
  %v2743 = vpop.f32.mrb[0].mxu0
  %v2744 = vpop.f32.mrb[0].mxu0
  %v2745 = vadd.f32 %v2513, %v2744
  %v2746 = vpop.f32.mrb[0].mxu0
  %2747 = vmatprep.mubr.bf16.mxu0 %v1149
  %2748 = vmatmul.mubr.bf16.gmra.mrb[0].mxu0 %v1148
  %v2749 = vpop.f32.mrb[0].mxu0
  %v2750 = vadd.f32 %v2518, %v2749
  %v2751 = vpop.f32.mrb[0].mxu0
  %v2752 = vpop.f32.mrb[0].mxu0
  %v2753 = vadd.f32 %v2521, %v2752
  %v2754 = vpop.f32.mrb[0].mxu0
  %2755 = vmatprep.mubr.bf16.mxu0 %v1158
  %2756 = vmatmul.mubr.bf16.gmra.mrb[0].mxu0 %v1157
  %v2757 = vpop.f32.mrb[0].mxu0
  %v2758 = vadd.f32 %v2526, %v2757
  %v2759 = vpop.f32.mrb[0].mxu0
  %v2760 = vpop.f32.mrb[0].mxu0
  %v2761 = vadd.f32 %v2529, %v2760
  %v2762 = vpop.f32.mrb[0].mxu0
  %2763 = vmatprep.mubr.bf16.mxu0 %v1167
  %2764 = vmatmul.mubr.bf16.gmra.mrb[0].mxu0 %v1166
  %v2765 = vpop.f32.mrb[0].mxu0
  %v2766 = vadd.f32 %v2534, %v2765
  %v2767 = vpop.f32.mrb[0].mxu0
  %v2768 = vpop.f32.mrb[0].mxu0
  %v2769 = vadd.f32 %v2537, %v2768
  %v2770 = vpop.f32.mrb[0].mxu0
  %2771 = vmatprep.mubr.bf16.mxu0 %v1176
  %2772 = vmatmul.mubr.bf16.gmra.mrb[0].mxu0 %v1175
  %v2773 = vpop.f32.mrb[0].mxu0
  %v2774 = vadd.f32 %v2542, %v2773
  %v2775 = vpop.f32.mrb[0].mxu0
  %v2776 = vpop.f32.mrb[0].mxu0
  %v2777 = vadd.f32 %v2545, %v2776
  %v2778 = vpop.f32.mrb[0].mxu0
  %2779 = vmatprep.mubr.bf16.mxu0 %v1185
  %2780 = vmatmul.mubr.bf16.gmra.mrb[0].mxu0 %v1184
  %v2781 = vpop.f32.mrb[0].mxu0
  %v2782 = vadd.f32 %v2550, %v2781
  %v2783 = vpop.f32.mrb[0].mxu0
  %v2784 = vpop.f32.mrb[0].mxu0
  %v2785 = vadd.f32 %v2553, %v2784
  %v2786 = vpop.f32.mrb[0].mxu0
  %2787 = vmatprep.mubr.bf16.mxu0 %v1194
  %2788 = vmatmul.mubr.bf16.gmra.mrb[0].mxu0 %v1193
  %v2789 = vpop.f32.mrb[0].mxu0
  %v2790 = vadd.f32 %v2558, %v2789
  %v2791 = vpop.f32.mrb[0].mxu0
  %v2792 = vpop.f32.mrb[0].mxu0
  %v2793 = vadd.f32 %v2561, %v2792
  %v2794 = vpop.f32.mrb[0].mxu0
  %2795 = vmatprep.mubr.bf16.mxu0 %v1203
  %2796 = vmatmul.mubr.bf16.gmra.mrb[0].mxu0 %v1202
  %v2797 = vpop.f32.mrb[0].mxu0
  %v2798 = vadd.f32 %v2566, %v2797
  %v2799 = vpop.f32.mrb[0].mxu0
  %v2800 = vpop.f32.mrb[0].mxu0
  %v2801 = vadd.f32 %v2569, %v2800
  %v2802 = vpop.f32.mrb[0].mxu0
  %2803 = vmatprep.mubr.bf16.mxu0 %v1212
  %2804 = vmatmul.mubr.bf16.gmra.mrb[0].mxu0 %v1211
  %v2805 = vpop.f32.mrb[0].mxu0
  %v2806 = vadd.f32 %v2574, %v2805
  %v2807 = vpop.f32.mrb[0].mxu0
  %v2808 = vpop.f32.mrb[0].mxu0
  %v2809 = vadd.f32 %v2577, %v2808
  %v2810 = vpop.f32.mrb[0].mxu0
  %2811 = vmatprep.mubr.bf16.mxu0 %v1221
  %2812 = vmatmul.mubr.bf16.gmra.mrb[0].mxu0 %v1220
  %v2813 = vpop.f32.mrb[0].mxu0
  %v2814 = vadd.f32 %v2582, %v2813
  %v2815 = vpop.f32.mrb[0].mxu0
  %v2816 = vpop.f32.mrb[0].mxu0
  %v2817 = vadd.f32 %v2585, %v2816
  %v2818 = vpop.f32.mrb[0].mxu0
  %2819 = vmatprep.mubr.bf16.mxu0 %v1230
  %2820 = vmatmul.mubr.bf16.gmra.mrb[0].mxu0 %v1229
  %v2821 = vpop.f32.mrb[0].mxu0
  %v2822 = vadd.f32 %v2590, %v2821
  %v2823 = vpop.f32.mrb[0].mxu0
  %v2824 = vpop.f32.mrb[0].mxu0
  %v2825 = vadd.f32 %v2593, %v2824
  %v2826 = vpop.f32.mrb[0].mxu0
  %2827 = vmatprep.mubr.bf16.mxu0 %v1239
  %2828 = vmatmul.mubr.bf16.gmra.mrb[0].mxu0 %v1238
  %v2829 = vpop.f32.mrb[0].mxu0
  %v2830 = vadd.f32 %v2598, %v2829
  %v2831 = vpop.f32.mrb[0].mxu0
  %v2832 = vpop.f32.mrb[0].mxu0
  %v2833 = vadd.f32 %v2601, %v2832
  %v2834 = vpop.f32.mrb[0].mxu0
  %2835 = vmatprep.mubr.bf16.mxu0 %v1248
  %2836 = vmatmul.mubr.bf16.gmra.mrb[0].mxu0 %v1247
  %v2837 = vpop.f32.mrb[0].mxu0
  %v2838 = vadd.f32 %v2606, %v2837
  %v2839 = vpop.f32.mrb[0].mxu0
  %v2840 = vpop.f32.mrb[0].mxu0
  %v2841 = vadd.f32 %v2609, %v2840
  %v2842 = vpop.f32.mrb[0].mxu0
  %2843 = vmatprep.mubr.bf16.mxu0 %v1257
  %2844 = vmatmul.mubr.bf16.gmra.mrb[0].mxu0 %v1256
  %v2845 = vpop.f32.mrb[0].mxu0
  %v2846 = vadd.f32 %v2614, %v2845
  %v2847 = vpop.f32.mrb[0].mxu0
  %v2848 = vpop.f32.mrb[0].mxu0
  %v2849 = vadd.f32 %v2617, %v2848
  %v2850 = vpop.f32.mrb[0].mxu0
  %2851 = vmatprep.mubr.bf16.mxu0 %v1266
  %2852 = vmatmul.mubr.bf16.gmra.mrb[0].mxu0 %v1265
  %v2853 = vpop.f32.mrb[0].mxu0
  %v2854 = vadd.f32 %v2622, %v2853
  %v2855 = vpop.f32.mrb[0].mxu0
  %v2856 = vpop.f32.mrb[0].mxu0
  %v2857 = vadd.f32 %v2625, %v2856
  %v2858 = vpop.f32.mrb[0].mxu0
  %2859 = vmatprep.mubr.bf16.mxu0 %v1275
  %2860 = vmatmul.mubr.bf16.gmra.mrb[0].mxu0 %v1274
  %v2861 = vpop.f32.mrb[0].mxu0
  %v2862 = vadd.f32 %v2630, %v2861
  %v2863 = vpop.f32.mrb[0].mxu0
  %v2864 = vpop.f32.mrb[0].mxu0
  %v2865 = vadd.f32 %v2633, %v2864
  %v2866 = vpop.f32.mrb[0].mxu0
  %2867 = vmatprep.mubr.bf16.mxu0 %v1284
  %2868 = vmatmul.mubr.bf16.gmra.mrb[0].mxu0 %v1283
  %v2869 = vpop.f32.mrb[0].mxu0
  %v2870 = vadd.f32 %v2638, %v2869
  %v2871 = vpop.f32.mrb[0].mxu0
  %v2872 = vpop.f32.mrb[0].mxu0
  %v2873 = vadd.f32 %v2641, %v2872
  %v2874 = vpop.f32.mrb[0].mxu0
  %2875 = vmatprep.mubr.bf16.mxu0 %v1293
  %2876 = vmatmul.mubr.bf16.gmra.mrb[0].mxu0 %v1292
  %v2877 = vpop.f32.mrb[0].mxu0
  %v2878 = vadd.f32 %v2646, %v2877
  %v2879 = vpop.f32.mrb[0].mxu0
  %v2880 = vpop.f32.mrb[0].mxu0
  %v2881 = vadd.f32 %v2649, %v2880
  %v2882 = vpop.f32.mrb[0].mxu0
  %2883 = vmatprep.mubr.bf16.mxu0 %v1302
  %2884 = vmatmul.mubr.bf16.gmra.mrb[0].mxu0 %v1301
  %v2885 = vpop.f32.mrb[0].mxu0
  %v2886 = vadd.f32 %v2654, %v2885
  %v2887 = vpop.f32.mrb[0].mxu0
  %v2888 = vpop.f32.mrb[0].mxu0
  %v2889 = vadd.f32 %v2657, %v2888
  %v2890 = vpop.f32.mrb[0].mxu0
  %2891 = vmatprep.mubr.bf16.mxu0 %v1311
  %2892 = vmatmul.mubr.bf16.gmra.mrb[0].mxu0 %v1310
  %v2893 = vpop.f32.mrb[0].mxu0
  %v2894 = vadd.f32 %v2662, %v2893
  %v2895 = vpop.f32.mrb[0].mxu0
  %v2896 = vpop.f32.mrb[0].mxu0
  %v2897 = vadd.f32 %v2665, %v2896
  %v2898 = vpop.f32.mrb[0].mxu0
  %2899 = vmatprep.mubr.bf16.mxu0 %v1320
  %2900 = vmatmul.mubr.bf16.gmra.mrb[0].mxu0 %v1319
  %v2901 = vpop.f32.mrb[0].mxu0
  %v2902 = vadd.f32 %v2670, %v2901
  %v2903 = vpop.f32.mrb[0].mxu0
  %v2904 = vpop.f32.mrb[0].mxu0
  %v2905 = vpop.f32.mrb[0].mxu0
  %2906 = vdwg.mxu0
  %2907 = vmatprep.subr.bf16.mxu0 0
  %2908 = vmatpush1.bf16.msra.mxu0 %v1899
  %2909 = vmatprep.subr.bf16.mxu0 0
  %2910 = vmatpush1.bf16.msra.mxu0 %v1900
  %2911 = vmatprep.subr.bf16.mxu0 0
  %2912 = vmatpush1.bf16.msra.mxu0 %v1901
  %2913 = vmatprep.subr.bf16.mxu0 0
  %2914 = vmatpush1.bf16.msra.mxu0 %v1902
  %2915 = vmatprep.subr.bf16.mxu0 0
  %2916 = vmatpush1.bf16.msra.mxu0 %v1903
  %2917 = vmatprep.subr.bf16.mxu0 0
  %2918 = vmatpush1.bf16.msra.mxu0 %v1904
  %2919 = vmatprep.subr.bf16.mxu0 0
  %2920 = vmatpush1.bf16.msra.mxu0 %v1905
  %2921 = vmatprep.subr.bf16.mxu0 0
  %2922 = vmatpush1.bf16.msra.mxu0 %v1906
  %2923 = vmatprep.subr.bf16.mxu0 0
  %2924 = vmatpush1.bf16.msra.mxu0 0
  %2925 = vmatprep.subr.bf16.mxu0 0
  %2926 = vmatpush1.bf16.msra.mxu0 0
  %2927 = vmatprep.subr.bf16.mxu0 0
  %2928 = vmatpush1.bf16.msra.mxu0 0
  %2929 = vmatprep.subr.bf16.mxu0 0
  %2930 = vmatpush1.bf16.msra.mxu0 0
  %2931 = vmatprep.subr.bf16.mxu0 0
  %2932 = vmatpush1.bf16.msra.mxu0 0
  %2933 = vmatprep.subr.bf16.mxu0 0
  %2934 = vmatpush1.bf16.msra.mxu0 0
  %2935 = vmatprep.subr.bf16.mxu0 0
  %2936 = vmatpush1.bf16.msra.mxu0 0
  %2937 = vmatprep.subr.bf16.mxu0 0
  %2938 = vmatpush1.bf16.msra.mxu0 0
  %2939 = vmatprep.mubr.bf16.mxu0 0
  %2940 = vmatmul.mubr.bf16.gmra.mrb[0].mxu0 %v1105
  %v2941 = vpop.f32.mrb[0].mxu0
  %v2942 = vadd.f32 %v2710, %v2941
  %v2943 = vpop.f32.mrb[0].mxu0
  %v2944 = vpop.f32.mrb[0].mxu0
  %v2945 = vadd.f32 %v2713, %v2944
  %v2946 = vpop.f32.mrb[0].mxu0
  %2947 = vmatprep.mubr.bf16.mxu0 0
  %2948 = vmatmul.mubr.bf16.gmra.mrb[0].mxu0 %v1114
  %v2949 = vpop.f32.mrb[0].mxu0
  %v2950 = vadd.f32 %v2718, %v2949
  %v2951 = vpop.f32.mrb[0].mxu0
  %v2952 = vpop.f32.mrb[0].mxu0
  %v2953 = vadd.f32 %v2721, %v2952
  %v2954 = vpop.f32.mrb[0].mxu0
  %2955 = vmatprep.mubr.bf16.mxu0 0
  %2956 = vmatmul.mubr.bf16.gmra.mrb[0].mxu0 %v1123
  %v2957 = vpop.f32.mrb[0].mxu0
  %v2958 = vadd.f32 %v2726, %v2957
  %v2959 = vpop.f32.mrb[0].mxu0
  %v2960 = vpop.f32.mrb[0].mxu0
  %v2961 = vadd.f32 %v2729, %v2960
  %v2962 = vpop.f32.mrb[0].mxu0
  %2963 = vmatprep.mubr.bf16.mxu0 0
  %2964 = vmatmul.mubr.bf16.gmra.mrb[0].mxu0 %v1132
  %v2965 = vpop.f32.mrb[0].mxu0
  %v2966 = vadd.f32 %v2734, %v2965
  %v2967 = vpop.f32.mrb[0].mxu0
  %v2968 = vpop.f32.mrb[0].mxu0
  %v2969 = vadd.f32 %v2737, %v2968
  %v2970 = vpop.f32.mrb[0].mxu0
  %2971 = vmatprep.mubr.bf16.mxu0 0
  %2972 = vmatmul.mubr.bf16.gmra.mrb[0].mxu0 %v1141
  %v2973 = vpop.f32.mrb[0].mxu0
  %v2974 = vadd.f32 %v2742, %v2973
  %v2975 = vpop.f32.mrb[0].mxu0
  %v2976 = vpop.f32.mrb[0].mxu0
  %v2977 = vadd.f32 %v2745, %v2976
  %v2978 = vpop.f32.mrb[0].mxu0
  %2979 = vmatprep.mubr.bf16.mxu0 0
  %2980 = vmatmul.mubr.bf16.gmra.mrb[0].mxu0 %v1150
  %v2981 = vpop.f32.mrb[0].mxu0
  %v2982 = vadd.f32 %v2750, %v2981
  %v2983 = vpop.f32.mrb[0].mxu0
  %v2984 = vpop.f32.mrb[0].mxu0
  %v2985 = vadd.f32 %v2753, %v2984
  %v2986 = vpop.f32.mrb[0].mxu0
  %2987 = vmatprep.mubr.bf16.mxu0 0
  %2988 = vmatmul.mubr.bf16.gmra.mrb[0].mxu0 %v1159
  %v2989 = vpop.f32.mrb[0].mxu0
  %v2990 = vadd.f32 %v2758, %v2989
  %v2991 = vpop.f32.mrb[0].mxu0
  %v2992 = vpop.f32.mrb[0].mxu0
  %v2993 = vadd.f32 %v2761, %v2992
  %v2994 = vpop.f32.mrb[0].mxu0
  %2995 = vmatprep.mubr.bf16.mxu0 0
  %2996 = vmatmul.mubr.bf16.gmra.mrb[0].mxu0 %v1168
  %v2997 = vpop.f32.mrb[0].mxu0
  %v2998 = vadd.f32 %v2766, %v2997
  %v2999 = vpop.f32.mrb[0].mxu0
  %v3000 = vpop.f32.mrb[0].mxu0
  %v3001 = vadd.f32 %v2769, %v3000
  %v3002 = vpop.f32.mrb[0].mxu0
  %3003 = vmatprep.mubr.bf16.mxu0 0
  %3004 = vmatmul.mubr.bf16.gmra.mrb[0].mxu0 %v1177
  %v3005 = vpop.f32.mrb[0].mxu0
  %v3006 = vadd.f32 %v2774, %v3005
  %v3007 = vpop.f32.mrb[0].mxu0
  %v3008 = vpop.f32.mrb[0].mxu0
  %v3009 = vadd.f32 %v2777, %v3008
  %v3010 = vpop.f32.mrb[0].mxu0
  %3011 = vmatprep.mubr.bf16.mxu0 0
  %3012 = vmatmul.mubr.bf16.gmra.mrb[0].mxu0 %v1186
  %v3013 = vpop.f32.mrb[0].mxu0
  %v3014 = vadd.f32 %v2782, %v3013
  %v3015 = vpop.f32.mrb[0].mxu0
  %v3016 = vpop.f32.mrb[0].mxu0
  %v3017 = vadd.f32 %v2785, %v3016
  %v3018 = vpop.f32.mrb[0].mxu0
  %3019 = vmatprep.mubr.bf16.mxu0 0
  %3020 = vmatmul.mubr.bf16.gmra.mrb[0].mxu0 %v1195
  %v3021 = vpop.f32.mrb[0].mxu0
  %v3022 = vadd.f32 %v2790, %v3021
  %v3023 = vpop.f32.mrb[0].mxu0
  %v3024 = vpop.f32.mrb[0].mxu0
  %v3025 = vadd.f32 %v2793, %v3024
  %v3026 = vpop.f32.mrb[0].mxu0
  %3027 = vmatprep.mubr.bf16.mxu0 0
  %3028 = vmatmul.mubr.bf16.gmra.mrb[0].mxu0 %v1204
  %v3029 = vpop.f32.mrb[0].mxu0
  %v3030 = vadd.f32 %v2798, %v3029
  %v3031 = vpop.f32.mrb[0].mxu0
  %v3032 = vpop.f32.mrb[0].mxu0
  %v3033 = vadd.f32 %v2801, %v3032
  %v3034 = vpop.f32.mrb[0].mxu0
  %3035 = vmatprep.mubr.bf16.mxu0 0
  %3036 = vmatmul.mubr.bf16.gmra.mrb[0].mxu0 %v1213
  %v3037 = vpop.f32.mrb[0].mxu0
  %v3038 = vadd.f32 %v2806, %v3037
  %v3039 = vpop.f32.mrb[0].mxu0
  %v3040 = vpop.f32.mrb[0].mxu0
  %v3041 = vadd.f32 %v2809, %v3040
  %v3042 = vpop.f32.mrb[0].mxu0
  %3043 = vmatprep.mubr.bf16.mxu0 0
  %3044 = vmatmul.mubr.bf16.gmra.mrb[0].mxu0 %v1222
  %v3045 = vpop.f32.mrb[0].mxu0
  %v3046 = vadd.f32 %v2814, %v3045
  %v3047 = vpop.f32.mrb[0].mxu0
  %v3048 = vpop.f32.mrb[0].mxu0
  %v3049 = vadd.f32 %v2817, %v3048
  %v3050 = vpop.f32.mrb[0].mxu0
  %3051 = vmatprep.mubr.bf16.mxu0 0
  %3052 = vmatmul.mubr.bf16.gmra.mrb[0].mxu0 %v1231
  %v3053 = vpop.f32.mrb[0].mxu0
  %v3054 = vadd.f32 %v2822, %v3053
  %v3055 = vpop.f32.mrb[0].mxu0
  %v3056 = vpop.f32.mrb[0].mxu0
  %v3057 = vadd.f32 %v2825, %v3056
  %v3058 = vpop.f32.mrb[0].mxu0
  %3059 = vmatprep.mubr.bf16.mxu0 0
  %3060 = vmatmul.mubr.bf16.gmra.mrb[0].mxu0 %v1240
  %v3061 = vpop.f32.mrb[0].mxu0
  %v3062 = vadd.f32 %v2830, %v3061
  %v3063 = vpop.f32.mrb[0].mxu0
  %v3064 = vpop.f32.mrb[0].mxu0
  %v3065 = vadd.f32 %v2833, %v3064
  %v3066 = vpop.f32.mrb[0].mxu0
  %3067 = vmatprep.mubr.bf16.mxu0 0
  %3068 = vmatmul.mubr.bf16.gmra.mrb[0].mxu0 %v1249
  %v3069 = vpop.f32.mrb[0].mxu0
  %v3070 = vadd.f32 %v2838, %v3069
  %v3071 = vpop.f32.mrb[0].mxu0
  %v3072 = vpop.f32.mrb[0].mxu0
  %v3073 = vadd.f32 %v2841, %v3072
  %v3074 = vpop.f32.mrb[0].mxu0
  %3075 = vmatprep.mubr.bf16.mxu0 0
  %3076 = vmatmul.mubr.bf16.gmra.mrb[0].mxu0 %v1258
  %v3077 = vpop.f32.mrb[0].mxu0
  %v3078 = vadd.f32 %v2846, %v3077
  %v3079 = vpop.f32.mrb[0].mxu0
  %v3080 = vpop.f32.mrb[0].mxu0
  %v3081 = vadd.f32 %v2849, %v3080
  %v3082 = vpop.f32.mrb[0].mxu0
  %3083 = vmatprep.mubr.bf16.mxu0 0
  %3084 = vmatmul.mubr.bf16.gmra.mrb[0].mxu0 %v1267
  %v3085 = vpop.f32.mrb[0].mxu0
  %v3086 = vadd.f32 %v2854, %v3085
  %v3087 = vpop.f32.mrb[0].mxu0
  %v3088 = vpop.f32.mrb[0].mxu0
  %v3089 = vadd.f32 %v2857, %v3088
  %v3090 = vpop.f32.mrb[0].mxu0
  %3091 = vmatprep.mubr.bf16.mxu0 0
  %3092 = vmatmul.mubr.bf16.gmra.mrb[0].mxu0 %v1276
  %v3093 = vpop.f32.mrb[0].mxu0
  %v3094 = vadd.f32 %v2862, %v3093
  %v3095 = vpop.f32.mrb[0].mxu0
  %v3096 = vpop.f32.mrb[0].mxu0
  %v3097 = vadd.f32 %v2865, %v3096
  %v3098 = vpop.f32.mrb[0].mxu0
  %3099 = vmatprep.mubr.bf16.mxu0 0
  %3100 = vmatmul.mubr.bf16.gmra.mrb[0].mxu0 %v1285
  %v3101 = vpop.f32.mrb[0].mxu0
  %v3102 = vadd.f32 %v2870, %v3101
  %v3103 = vpop.f32.mrb[0].mxu0
  %v3104 = vpop.f32.mrb[0].mxu0
  %v3105 = vadd.f32 %v2873, %v3104
  %v3106 = vpop.f32.mrb[0].mxu0
  %3107 = vmatprep.mubr.bf16.mxu0 0
  %3108 = vmatmul.mubr.bf16.gmra.mrb[0].mxu0 %v1294
  %v3109 = vpop.f32.mrb[0].mxu0
  %v3110 = vadd.f32 %v2878, %v3109
  %v3111 = vpop.f32.mrb[0].mxu0
  %v3112 = vpop.f32.mrb[0].mxu0
  %v3113 = vadd.f32 %v2881, %v3112
  %v3114 = vpop.f32.mrb[0].mxu0
  %3115 = vmatprep.mubr.bf16.mxu0 0
  %3116 = vmatmul.mubr.bf16.gmra.mrb[0].mxu0 %v1303
  %v3117 = vpop.f32.mrb[0].mxu0
  %v3118 = vadd.f32 %v2886, %v3117
  %v3119 = vpop.f32.mrb[0].mxu0
  %v3120 = vpop.f32.mrb[0].mxu0
  %v3121 = vadd.f32 %v2889, %v3120
  %v3122 = vpop.f32.mrb[0].mxu0
  %3123 = vmatprep.mubr.bf16.mxu0 0
  %3124 = vmatmul.mubr.bf16.gmra.mrb[0].mxu0 %v1312
  %v3125 = vpop.f32.mrb[0].mxu0
  %v3126 = vadd.f32 %v2894, %v3125
  %v3127 = vpop.f32.mrb[0].mxu0
  %v3128 = vpop.f32.mrb[0].mxu0
  %v3129 = vadd.f32 %v2897, %v3128
  %v3130 = vpop.f32.mrb[0].mxu0
  %3131 = vmatprep.mubr.bf16.mxu0 0
  %3132 = vmatmul.mubr.bf16.gmra.mrb[0].mxu0 %v1321
  %v3133 = vpop.f32.mrb[0].mxu0
  %v3134 = vadd.f32 %v2902, %v3133
  %v3135 = vpop.f32.mrb[0].mxu0
  %v3136 = vpop.f32.mrb[0].mxu0
  %v3137 = vpop.f32.mrb[0].mxu0
  %3138 = vdwg.mxu0
  %3139 = vst [vmem:[%s3] sm:$0xff] %v2942
  %3140 = vst [vmem:[%s3 + $0x8] sm:$0xff] %v2945
  %3141 = vst [vmem:[%s3 + $0x10] sm:$0xff] %v2950
  %3142 = vst [vmem:[%s3 + $0x18] sm:$0xff] %v2953
  %3143 = vst [vmem:[%s3 + $0x20] sm:$0xff] %v2958
  %3144 = vst [vmem:[%s3 + $0x28] sm:$0xff] %v2961
  %3145 = vst [vmem:[%s3 + $0x30] sm:$0xff] %v2966
  %3146 = vst [vmem:[%s3 + $0x38] sm:$0xff] %v2969
  %3147 = vst [vmem:[%s3 + $0x40] sm:$0xff] %v2974
  %3148 = vst [vmem:[%s3 + $0x48] sm:$0xff] %v2977
  %3149 = vst [vmem:[%s3 + $0x50] sm:$0xff] %v2982
  %3150 = vst [vmem:[%s3 + $0x58] sm:$0xff] %v2985
  %3151 = vst [vmem:[%s3 + $0x60] sm:$0xff] %v2990
  %3152 = vst [vmem:[%s3 + $0x68] sm:$0xff] %v2993
  %3153 = vst [vmem:[%s3 + $0x70] sm:$0xff] %v2998
  %3154 = vst [vmem:[%s3 + $0x78] sm:$0xff] %v3001
  %3155 = vst [vmem:[%s3 + $0x80] sm:$0xff] %v3006
  %3156 = vst [vmem:[%s3 + $0x88] sm:$0xff] %v3009
  %3157 = vst [vmem:[%s3 + $0x90] sm:$0xff] %v3014
  %3158 = vst [vmem:[%s3 + $0x98] sm:$0xff] %v3017
  %3159 = vst [vmem:[%s3 + $0xa0] sm:$0xff] %v3022
  %3160 = vst [vmem:[%s3 + $0xa8] sm:$0xff] %v3025
  %3161 = vst [vmem:[%s3 + $0xb0] sm:$0xff] %v3030
  %3162 = vst [vmem:[%s3 + $0xb8] sm:$0xff] %v3033
  %3163 = vst [vmem:[%s3 + $0xc0] sm:$0xff] %v3038
  %3164 = vst [vmem:[%s3 + $0xc8] sm:$0xff] %v3041
  %3165 = vst [vmem:[%s3 + $0xd0] sm:$0xff] %v3046
  %3166 = vst [vmem:[%s3 + $0xd8] sm:$0xff] %v3049
  %3167 = vst [vmem:[%s3 + $0xe0] sm:$0xff] %v3054
  %3168 = vst [vmem:[%s3 + $0xe8] sm:$0xff] %v3057
  %3169 = vst [vmem:[%s3 + $0xf0] sm:$0xff] %v3062
  %3170 = vst [vmem:[%s3 + $0xf8] sm:$0xff] %v3065
  %3171 = vst [vmem:[%s3 + $0x100] sm:$0xff] %v3070
  %3172 = vst [vmem:[%s3 + $0x108] sm:$0xff] %v3073
  %3173 = vst [vmem:[%s3 + $0x110] sm:$0xff] %v3078
  %3174 = vst [vmem:[%s3 + $0x118] sm:$0xff] %v3081
  %3175 = vst [vmem:[%s3 + $0x120] sm:$0xff] %v3086
  %3176 = vst [vmem:[%s3 + $0x128] sm:$0xff] %v3089
  %3177 = vst [vmem:[%s3 + $0x130] sm:$0xff] %v3094
  %3178 = vst [vmem:[%s3 + $0x138] sm:$0xff] %v3097
  %3179 = vst [vmem:[%s3 + $0x140] sm:$0xff] %v3102
  %3180 = vst [vmem:[%s3 + $0x148] sm:$0xff] %v3105
  %3181 = vst [vmem:[%s3 + $0x150] sm:$0xff] %v3110
  %3182 = vst [vmem:[%s3 + $0x158] sm:$0xff] %v3113
  %3183 = vst [vmem:[%s3 + $0x160] sm:$0xff] %v3118
  %3184 = vst [vmem:[%s3 + $0x168] sm:$0xff] %v3121
  %3185 = vst [vmem:[%s3 + $0x170] sm:$0xff] %v3126
  %3186 = vst [vmem:[%s3 + $0x178] sm:$0xff] %v3129
  %3187 = vst [vmem:[%s3 + $0x180] sm:$0xff] %v3134
  // Predicated region
  $region14: #{forward.27} parent=0 // pred_check
    _
  $region15: #{forward.27} parent=0 // pred_check_branch
    %3189 = sbr.rel (0) target = $region17
  $region16: #{forward.27} parent=0 // pred_region
    _
  $region17: #{forward.27} parent=0 // pred_fallthru
    _
  // Predicated region
  $region18: #{forward.27} parent=0 // pred_check
    _
  $region19: #{forward.27} parent=0 // pred_check_branch
    %3191 = sbr.rel (0) target = $region21
  $region20: #{forward.27} parent=0 // pred_region
    _
  $region21: #{forward.27} parent=0 // pred_fallthru
    _

// kernel: forward.29
$region0: #{forward.29}
  #allocation0 [shape = 'u32[]', space=smem, size = 0x4, offset = 0x4, fixed_abs, tag = 'smem constant byte address 0x4 - core index']
  #allocation1 [shape = 'u32[144,128]{1,0:T(1,128)}', space=vmem, size = 0x12000, scoped, tag = 'internal scratch']
  %s0 = inlined_call_operand.vmem [shape: bf16[104,1152], index: 0, kind: input, shape index: {}]
  %s1 = inlined_call_operand.vmem [shape: bf16[1152,128], index: 1, kind: input, shape index: {}]
  %s2 = inlined_call_operand.vmem [shape: f32[1,128], index: 2, kind: input, shape index: {}]
  %s3 = inlined_call_operand.vmem [shape: f32[104,128], index: 3, kind: output, shape index: {}]
  %s4 = sld [smem:[#allocation0]]
  $region22: #{forward.29} parent=0
    _
  %s6 = ssub.s32 1, %s4
  %s7 = scalar_select 0, %s6, %s4
  // Predicated region
  $region2: #{forward.29} parent=0 // pred_check
    _
  $region3: #{forward.29} parent=0 // pred_check_branch
    %9 = sbr.rel (0) target = $region5
  $region4: #{forward.29} parent=0 // pred_region
    _
  $region5: #{forward.29} parent=0 // pred_fallthru
    _
  // Predicated region
  $region6: #{forward.29} parent=0 // pred_check
    _
  $region7: #{forward.29} parent=0 // pred_check_branch
    %11 = sbr.rel (0) target = $region9
  $region8: #{forward.29} parent=0 // pred_region
    _
  $region9: #{forward.29} parent=0 // pred_fallthru
    _
  // Predicated region
  $region10: #{forward.29} parent=0 // pred_check
    _
  $region11: #{forward.29} parent=0 // pred_check_branch
    %13 = sbr.rel (0) target = $region13
  $region12: #{forward.29} parent=0 // pred_region
    _
  $region13: #{forward.29} parent=0 // pred_fallthru
    _
  %v15 = vld [vmem:[%s0] sm:$0xff]
  %v16 = vld [vmem:[%s0 + $0x8] sm:$0xff]
  %v17 = vld [vmem:[%s0 + $0x10] sm:$0xff]
  %v18 = vld [vmem:[%s0 + $0x18] sm:$0xff]
  %v19 = vld [vmem:[%s0 + $0x20] sm:$0xf]
  %v20 = vld [vmem:[%s0 + $0x24] sm:$0xff]
  %v21 = vld [vmem:[%s0 + $0x2c] sm:$0xff]
  %v22 = vld [vmem:[%s0 + $0x34] sm:$0xff]
  %v23 = vld [vmem:[%s0 + $0x3c] sm:$0xff]
  %v24 = vld [vmem:[%s0 + $0x44] sm:$0xf]
  %v25 = vld [vmem:[%s0 + $0x48] sm:$0xff]
  %v26 = vld [vmem:[%s0 + $0x50] sm:$0xff]
  %v27 = vld [vmem:[%s0 + $0x58] sm:$0xff]
  %v28 = vld [vmem:[%s0 + $0x60] sm:$0xff]
  %v29 = vld [vmem:[%s0 + $0x68] sm:$0xf]
  %v30 = vld [vmem:[%s0 + $0x6c] sm:$0xff]
  %v31 = vld [vmem:[%s0 + $0x74] sm:$0xff]
  %v32 = vld [vmem:[%s0 + $0x7c] sm:$0xff]
  %v33 = vld [vmem:[%s0 + $0x84] sm:$0xff]
  %v34 = vld [vmem:[%s0 + $0x8c] sm:$0xf]
  %v35 = vld [vmem:[%s0 + $0x90] sm:$0xff]
  %v36 = vld [vmem:[%s0 + $0x98] sm:$0xff]
  %v37 = vld [vmem:[%s0 + $0xa0] sm:$0xff]
  %v38 = vld [vmem:[%s0 + $0xa8] sm:$0xff]
  %v39 = vld [vmem:[%s0 + $0xb0] sm:$0xf]
  %v40 = vld [vmem:[%s0 + $0xb4] sm:$0xff]
  %v41 = vld [vmem:[%s0 + $0xbc] sm:$0xff]
  %v42 = vld [vmem:[%s0 + $0xc4] sm:$0xff]
  %v43 = vld [vmem:[%s0 + $0xcc] sm:$0xff]
  %v44 = vld [vmem:[%s0 + $0xd4] sm:$0xf]
  %v45 = vld [vmem:[%s0 + $0xd8] sm:$0xff]
  %v46 = vld [vmem:[%s0 + $0xe0] sm:$0xff]
  %v47 = vld [vmem:[%s0 + $0xe8] sm:$0xff]
  %v48 = vld [vmem:[%s0 + $0xf0] sm:$0xff]
  %v49 = vld [vmem:[%s0 + $0xf8] sm:$0xf]
  %v50 = vld [vmem:[%s0 + $0xfc] sm:$0xff]
  %v51 = vld [vmem:[%s0 + $0x104] sm:$0xff]
  %v52 = vld [vmem:[%s0 + $0x10c] sm:$0xff]
  %v53 = vld [vmem:[%s0 + $0x114] sm:$0xff]
  %v54 = vld [vmem:[%s0 + $0x11c] sm:$0xf]
  %v55 = vld [vmem:[%s0 + $0x120] sm:$0xff]
  %v56 = vld [vmem:[%s0 + $0x128] sm:$0xff]
  %v57 = vld [vmem:[%s0 + $0x130] sm:$0xff]
  %v58 = vld [vmem:[%s0 + $0x138] sm:$0xff]
  %v59 = vld [vmem:[%s0 + $0x140] sm:$0xf]
  %v60 = vld [vmem:[%s0 + $0x144] sm:$0xff]
  %v61 = vld [vmem:[%s0 + $0x14c] sm:$0xff]
  %v62 = vld [vmem:[%s0 + $0x154] sm:$0xff]
  %v63 = vld [vmem:[%s0 + $0x15c] sm:$0xff]
  %v64 = vld [vmem:[%s0 + $0x164] sm:$0xf]
  %v65 = vld [vmem:[%s0 + $0x168] sm:$0xff]
  %v66 = vld [vmem:[%s0 + $0x170] sm:$0xff]
  %v67 = vld [vmem:[%s0 + $0x178] sm:$0xff]
  %v68 = vld [vmem:[%s0 + $0x180] sm:$0xff]
  %v69 = vld [vmem:[%s0 + $0x188] sm:$0xf]
  %v70 = vld [vmem:[%s0 + $0x18c] sm:$0xff]
  %v71 = vld [vmem:[%s0 + $0x194] sm:$0xff]
  %v72 = vld [vmem:[%s0 + $0x19c] sm:$0xff]
  %v73 = vld [vmem:[%s0 + $0x1a4] sm:$0xff]
  %v74 = vld [vmem:[%s0 + $0x1ac] sm:$0xf]
  %v75 = vld [vmem:[%s0 + $0x1b0] sm:$0xff]
  %v76 = vld [vmem:[%s0 + $0x1b8] sm:$0xff]
  %v77 = vld [vmem:[%s0 + $0x1c0] sm:$0xff]
  %v78 = vld [vmem:[%s0 + $0x1c8] sm:$0xff]
  %v79 = vld [vmem:[%s0 + $0x1d0] sm:$0xf]
  %v80 = vld [vmem:[%s1] sm:$0xf]
  %v81 = vld [vmem:[%s1 + $0x4] sm:$0xf]
  %v82 = vld [vmem:[%s1 + $0x8] sm:$0xf]
  %v83 = vld [vmem:[%s1 + $0xc] sm:$0xf]
  %v84 = vld [vmem:[%s1 + $0x10] sm:$0xf]
  %v85 = vld [vmem:[%s1 + $0x14] sm:$0xf]
  %v86 = vld [vmem:[%s1 + $0x18] sm:$0xf]
  %v87 = vld [vmem:[%s1 + $0x1c] sm:$0xf]
  %v88 = vld [vmem:[%s1 + $0x20] sm:$0xf]
  %v89 = vld [vmem:[%s1 + $0x24] sm:$0xf]
  %v90 = vld [vmem:[%s1 + $0x28] sm:$0xf]
  %v91 = vld [vmem:[%s1 + $0x2c] sm:$0xf]
  %v92 = vld [vmem:[%s1 + $0x30] sm:$0xf]
  %v93 = vld [vmem:[%s1 + $0x34] sm:$0xf]
  %v94 = vld [vmem:[%s1 + $0x38] sm:$0xf]
  %v95 = vld [vmem:[%s1 + $0x3c] sm:$0xf]
  %v96 = vld [vmem:[%s1 + $0x40] sm:$0xf]
  %v97 = vld [vmem:[%s1 + $0x44] sm:$0xf]
  %v98 = vld [vmem:[%s1 + $0x48] sm:$0xf]
  %v99 = vld [vmem:[%s1 + $0x4c] sm:$0xf]
  %v100 = vld [vmem:[%s1 + $0x50] sm:$0xf]
  %v101 = vld [vmem:[%s1 + $0x54] sm:$0xf]
  %v102 = vld [vmem:[%s1 + $0x58] sm:$0xf]
  %v103 = vld [vmem:[%s1 + $0x5c] sm:$0xf]
  %v104 = vld [vmem:[%s1 + $0x60] sm:$0xf]
  %v105 = vld [vmem:[%s1 + $0x64] sm:$0xf]
  %v106 = vld [vmem:[%s1 + $0x68] sm:$0xf]
  %v107 = vld [vmem:[%s1 + $0x6c] sm:$0xf]
  %v108 = vld [vmem:[%s1 + $0x70] sm:$0xf]
  %v109 = vld [vmem:[%s1 + $0x74] sm:$0xf]
  %v110 = vld [vmem:[%s1 + $0x78] sm:$0xf]
  %v111 = vld [vmem:[%s1 + $0x7c] sm:$0xf]
  %v112 = vld [vmem:[%s1 + $0x80] sm:$0xf]
  %v113 = vld [vmem:[%s1 + $0x84] sm:$0xf]
  %v114 = vld [vmem:[%s1 + $0x88] sm:$0xf]
  %v115 = vld [vmem:[%s1 + $0x8c] sm:$0xf]
  %v116 = vld [vmem:[%s1 + $0x90] sm:$0xf]
  %v117 = vld [vmem:[%s1 + $0x94] sm:$0xf]
  %v118 = vld [vmem:[%s1 + $0x98] sm:$0xf]
  %v119 = vld [vmem:[%s1 + $0x9c] sm:$0xf]
  %v120 = vld [vmem:[%s1 + $0xa0] sm:$0xf]
  %v121 = vld [vmem:[%s1 + $0xa4] sm:$0xf]
  %v122 = vld [vmem:[%s1 + $0xa8] sm:$0xf]
  %v123 = vld [vmem:[%s1 + $0xac] sm:$0xf]
  %v124 = vld [vmem:[%s1 + $0xb0] sm:$0xf]
  %v125 = vld [vmem:[%s1 + $0xb4] sm:$0xf]
  %v126 = vld [vmem:[%s1 + $0xb8] sm:$0xf]
  %v127 = vld [vmem:[%s1 + $0xbc] sm:$0xf]
  %v128 = vld [vmem:[%s1 + $0xc0] sm:$0xf]
  %v129 = vld [vmem:[%s1 + $0xc4] sm:$0xf]
  %v130 = vld [vmem:[%s1 + $0xc8] sm:$0xf]
  %v131 = vld [vmem:[%s1 + $0xcc] sm:$0xf]
  %v132 = vld [vmem:[%s1 + $0xd0] sm:$0xf]
  %v133 = vld [vmem:[%s1 + $0xd4] sm:$0xf]
  %v134 = vld [vmem:[%s1 + $0xd8] sm:$0xf]
  %v135 = vld [vmem:[%s1 + $0xdc] sm:$0xf]
  %v136 = vld [vmem:[%s1 + $0xe0] sm:$0xf]
  %v137 = vld [vmem:[%s1 + $0xe4] sm:$0xf]
  %v138 = vld [vmem:[%s1 + $0xe8] sm:$0xf]
  %v139 = vld [vmem:[%s1 + $0xec] sm:$0xf]
  %v140 = vld [vmem:[%s1 + $0xf0] sm:$0xf]
  %v141 = vld [vmem:[%s1 + $0xf4] sm:$0xf]
  %v142 = vld [vmem:[%s1 + $0xf8] sm:$0xf]
  %v143 = vld [vmem:[%s1 + $0xfc] sm:$0xf]
  %v144 = vld [vmem:[%s1 + $0x100] sm:$0xf]
  %v145 = vld [vmem:[%s1 + $0x104] sm:$0xf]
  %v146 = vld [vmem:[%s1 + $0x108] sm:$0xf]
  %v147 = vld [vmem:[%s1 + $0x10c] sm:$0xf]
  %v148 = vld [vmem:[%s1 + $0x110] sm:$0xf]
  %v149 = vld [vmem:[%s1 + $0x114] sm:$0xf]
  %v150 = vld [vmem:[%s1 + $0x118] sm:$0xf]
  %v151 = vld [vmem:[%s1 + $0x11c] sm:$0xf]
  %v152 = vld [vmem:[%s1 + $0x120] sm:$0xf]
  %v153 = vld [vmem:[%s1 + $0x124] sm:$0xf]
  %v154 = vld [vmem:[%s1 + $0x128] sm:$0xf]
  %v155 = vld [vmem:[%s1 + $0x12c] sm:$0xf]
  %v156 = vld [vmem:[%s1 + $0x130] sm:$0xf]
  %v157 = vld [vmem:[%s1 + $0x134] sm:$0xf]
  %v158 = vld [vmem:[%s1 + $0x138] sm:$0xf]
  %v159 = vld [vmem:[%s1 + $0x13c] sm:$0xf]
  %v160 = vld [vmem:[%s1 + $0x140] sm:$0xf]
  %v161 = vld [vmem:[%s1 + $0x144] sm:$0xf]
  %v162 = vld [vmem:[%s1 + $0x148] sm:$0xf]
  %v163 = vld [vmem:[%s1 + $0x14c] sm:$0xf]
  %v164 = vld [vmem:[%s1 + $0x150] sm:$0xf]
  %v165 = vld [vmem:[%s1 + $0x154] sm:$0xf]
  %v166 = vld [vmem:[%s1 + $0x158] sm:$0xf]
  %v167 = vld [vmem:[%s1 + $0x15c] sm:$0xf]
  %v168 = vld [vmem:[%s1 + $0x160] sm:$0xf]
  %v169 = vld [vmem:[%s1 + $0x164] sm:$0xf]
  %v170 = vld [vmem:[%s1 + $0x168] sm:$0xf]
  %v171 = vld [vmem:[%s1 + $0x16c] sm:$0xf]
  %v172 = vld [vmem:[%s1 + $0x170] sm:$0xf]
  %v173 = vld [vmem:[%s1 + $0x174] sm:$0xf]
  %v174 = vld [vmem:[%s1 + $0x178] sm:$0xf]
  %v175 = vld [vmem:[%s1 + $0x17c] sm:$0xf]
  %v176 = vld [vmem:[%s1 + $0x180] sm:$0xf]
  %v177 = vld [vmem:[%s1 + $0x184] sm:$0xf]
  %v178 = vld [vmem:[%s1 + $0x188] sm:$0xf]
  %v179 = vld [vmem:[%s1 + $0x18c] sm:$0xf]
  %v180 = vld [vmem:[%s1 + $0x190] sm:$0xf]
  %v181 = vld [vmem:[%s1 + $0x194] sm:$0xf]
  %v182 = vld [vmem:[%s1 + $0x198] sm:$0xf]
  %v183 = vld [vmem:[%s1 + $0x19c] sm:$0xf]
  %v184 = vld [vmem:[%s1 + $0x1a0] sm:$0xf]
  %v185 = vld [vmem:[%s1 + $0x1a4] sm:$0xf]
  %v186 = vld [vmem:[%s1 + $0x1a8] sm:$0xf]
  %v187 = vld [vmem:[%s1 + $0x1ac] sm:$0xf]
  %v188 = vld [vmem:[%s1 + $0x1b0] sm:$0xf]
  %v189 = vld [vmem:[%s1 + $0x1b4] sm:$0xf]
  %v190 = vld [vmem:[%s1 + $0x1b8] sm:$0xf]
  %v191 = vld [vmem:[%s1 + $0x1bc] sm:$0xf]
  %v192 = vld [vmem:[%s1 + $0x1c0] sm:$0xf]
  %v193 = vld [vmem:[%s1 + $0x1c4] sm:$0xf]
  %v194 = vld [vmem:[%s1 + $0x1c8] sm:$0xf]
  %v195 = vld [vmem:[%s1 + $0x1cc] sm:$0xf]
  %v196 = vld [vmem:[%s1 + $0x1d0] sm:$0xf]
  %v197 = vld [vmem:[%s1 + $0x1d4] sm:$0xf]
  %v198 = vld [vmem:[%s1 + $0x1d8] sm:$0xf]
  %v199 = vld [vmem:[%s1 + $0x1dc] sm:$0xf]
  %v200 = vld [vmem:[%s1 + $0x1e0] sm:$0xf]
  %v201 = vld [vmem:[%s1 + $0x1e4] sm:$0xf]
  %v202 = vld [vmem:[%s1 + $0x1e8] sm:$0xf]
  %v203 = vld [vmem:[%s1 + $0x1ec] sm:$0xf]
  %v204 = vld [vmem:[%s1 + $0x1f0] sm:$0xf]
  %v205 = vld [vmem:[%s1 + $0x1f4] sm:$0xf]
  %v206 = vld [vmem:[%s1 + $0x1f8] sm:$0xf]
  %v207 = vld [vmem:[%s1 + $0x1fc] sm:$0xf]
  %v208 = vld [vmem:[%s1 + $0x200] sm:$0xf]
  %v209 = vld [vmem:[%s1 + $0x204] sm:$0xf]
  %v210 = vld [vmem:[%s1 + $0x208] sm:$0xf]
  %v211 = vld [vmem:[%s1 + $0x20c] sm:$0xf]
  %v212 = vld [vmem:[%s1 + $0x210] sm:$0xf]
  %v213 = vld [vmem:[%s1 + $0x214] sm:$0xf]
  %v214 = vld [vmem:[%s1 + $0x218] sm:$0xf]
  %v215 = vld [vmem:[%s1 + $0x21c] sm:$0xf]
  %v216 = vld [vmem:[%s1 + $0x220] sm:$0xf]
  %v217 = vld [vmem:[%s1 + $0x224] sm:$0xf]
  %v218 = vld [vmem:[%s1 + $0x228] sm:$0xf]
  %v219 = vld [vmem:[%s1 + $0x22c] sm:$0xf]
  %v220 = vld [vmem:[%s1 + $0x230] sm:$0xf]
  %v221 = vld [vmem:[%s1 + $0x234] sm:$0xf]
  %v222 = vld [vmem:[%s1 + $0x238] sm:$0xf]
  %v223 = vld [vmem:[%s1 + $0x23c] sm:$0xf]
  %v224 = vld [vmem:[%s2] sm:$0x1]
  %v226 = vlaneseq
  %v227 = vshrl.u32 %v226, 7
  %v228 = vsub.s32 0, %v227
  %v229 = vrot.slane %v224, %v228
  %v296 = vunpack.c.l.b16 %v15
  %v297 = vunpack.c.h.b16 %v15
  %v298 = vunpack.c.l.b16 %v16
  %v299 = vunpack.c.h.b16 %v16
  %v300 = vunpack.c.l.b16 %v17
  %v301 = vunpack.c.h.b16 %v17
  %v302 = vunpack.c.l.b16 %v18
  %v303 = vunpack.c.h.b16 %v18
  %v304 = vunpack.c.l.b16 %v19
  %v305 = vunpack.c.l.b16 %v20
  %v306 = vunpack.c.h.b16 %v20
  %v307 = vunpack.c.l.b16 %v21
  %v308 = vunpack.c.h.b16 %v21
  %v309 = vunpack.c.l.b16 %v22
  %v310 = vunpack.c.h.b16 %v22
  %v311 = vunpack.c.l.b16 %v23
  %v312 = vunpack.c.h.b16 %v23
  %v313 = vunpack.c.l.b16 %v24
  %v314 = vunpack.c.l.b16 %v25
  %v315 = vunpack.c.h.b16 %v25
  %v316 = vunpack.c.l.b16 %v26
  %v317 = vunpack.c.h.b16 %v26
  %v318 = vunpack.c.l.b16 %v27
  %v319 = vunpack.c.h.b16 %v27
  %v320 = vunpack.c.l.b16 %v28
  %v321 = vunpack.c.h.b16 %v28
  %v322 = vunpack.c.l.b16 %v29
  %v323 = vunpack.c.l.b16 %v30
  %v324 = vunpack.c.h.b16 %v30
  %v325 = vunpack.c.l.b16 %v31
  %v326 = vunpack.c.h.b16 %v31
  %v327 = vunpack.c.l.b16 %v32
  %v328 = vunpack.c.h.b16 %v32
  %v329 = vunpack.c.l.b16 %v33
  %v330 = vunpack.c.h.b16 %v33
  %v331 = vunpack.c.l.b16 %v34
  %v332 = vunpack.c.l.b16 %v35
  %v333 = vunpack.c.h.b16 %v35
  %v334 = vunpack.c.l.b16 %v36
  %v335 = vunpack.c.h.b16 %v36
  %v336 = vunpack.c.l.b16 %v37
  %v337 = vunpack.c.h.b16 %v37
  %v338 = vunpack.c.l.b16 %v38
  %v339 = vunpack.c.h.b16 %v38
  %v340 = vunpack.c.l.b16 %v39
  %v341 = vunpack.c.l.b16 %v40
  %v342 = vunpack.c.h.b16 %v40
  %v343 = vunpack.c.l.b16 %v41
  %v344 = vunpack.c.h.b16 %v41
  %v345 = vunpack.c.l.b16 %v42
  %v346 = vunpack.c.h.b16 %v42
  %v347 = vunpack.c.l.b16 %v43
  %v348 = vunpack.c.h.b16 %v43
  %v349 = vunpack.c.l.b16 %v44
  %v350 = vunpack.c.l.b16 %v45
  %v351 = vunpack.c.h.b16 %v45
  %v352 = vunpack.c.l.b16 %v46
  %v353 = vunpack.c.h.b16 %v46
  %v354 = vunpack.c.l.b16 %v47
  %v355 = vunpack.c.h.b16 %v47
  %v356 = vunpack.c.l.b16 %v48
  %v357 = vunpack.c.h.b16 %v48
  %v358 = vunpack.c.l.b16 %v49
  %v359 = vunpack.c.l.b16 %v50
  %v360 = vunpack.c.h.b16 %v50
  %v361 = vunpack.c.l.b16 %v51
  %v362 = vunpack.c.h.b16 %v51
  %v363 = vunpack.c.l.b16 %v52
  %v364 = vunpack.c.h.b16 %v52
  %v365 = vunpack.c.l.b16 %v53
  %v366 = vunpack.c.h.b16 %v53
  %v367 = vunpack.c.l.b16 %v54
  %v368 = vunpack.c.l.b16 %v55
  %v369 = vunpack.c.h.b16 %v55
  %v370 = vunpack.c.l.b16 %v56
  %v371 = vunpack.c.h.b16 %v56
  %v372 = vunpack.c.l.b16 %v57
  %v373 = vunpack.c.h.b16 %v57
  %v374 = vunpack.c.l.b16 %v58
  %v375 = vunpack.c.h.b16 %v58
  %v376 = vunpack.c.l.b16 %v59
  %v377 = vunpack.c.l.b16 %v60
  %v378 = vunpack.c.h.b16 %v60
  %v379 = vunpack.c.l.b16 %v61
  %v380 = vunpack.c.h.b16 %v61
  %v381 = vunpack.c.l.b16 %v62
  %v382 = vunpack.c.h.b16 %v62
  %v383 = vunpack.c.l.b16 %v63
  %v384 = vunpack.c.h.b16 %v63
  %v385 = vunpack.c.l.b16 %v64
  %v386 = vunpack.c.l.b16 %v65
  %v387 = vunpack.c.h.b16 %v65
  %v388 = vunpack.c.l.b16 %v66
  %v389 = vunpack.c.h.b16 %v66
  %v390 = vunpack.c.l.b16 %v67
  %v391 = vunpack.c.h.b16 %v67
  %v392 = vunpack.c.l.b16 %v68
  %v393 = vunpack.c.h.b16 %v68
  %v394 = vunpack.c.l.b16 %v69
  %v395 = vunpack.c.l.b16 %v70
  %v396 = vunpack.c.h.b16 %v70
  %v397 = vunpack.c.l.b16 %v71
  %v398 = vunpack.c.h.b16 %v71
  %v399 = vunpack.c.l.b16 %v72
  %v400 = vunpack.c.h.b16 %v72
  %v401 = vunpack.c.l.b16 %v73
  %v402 = vunpack.c.h.b16 %v73
  %v403 = vunpack.c.l.b16 %v74
  %v404 = vunpack.c.l.b16 %v75
  %v405 = vunpack.c.h.b16 %v75
  %v406 = vunpack.c.l.b16 %v76
  %v407 = vunpack.c.h.b16 %v76
  %v408 = vunpack.c.l.b16 %v77
  %v409 = vunpack.c.h.b16 %v77
  %v410 = vunpack.c.l.b16 %v78
  %v411 = vunpack.c.h.b16 %v78
  %v412 = vunpack.c.l.b16 %v79
  %v413 = vpack.c.b16 %v305, %v296
  %v414 = vpack.c.b16 %v306, %v297
  %v415 = vpack.c.b16 %v307, %v298
  %v416 = vpack.c.b16 %v308, %v299
  %v417 = vpack.c.b16 %v309, %v300
  %v418 = vpack.c.b16 %v310, %v301
  %v419 = vpack.c.b16 %v311, %v302
  %v420 = vpack.c.b16 %v312, %v303
  %v421 = vpack.c.b16 %v313, %v304
  %v422 = vpack.c.b16 %v323, %v314
  %v423 = vpack.c.b16 %v324, %v315
  %v424 = vpack.c.b16 %v325, %v316
  %v425 = vpack.c.b16 %v326, %v317
  %v426 = vpack.c.b16 %v327, %v318
  %v427 = vpack.c.b16 %v328, %v319
  %v428 = vpack.c.b16 %v329, %v320
  %v429 = vpack.c.b16 %v330, %v321
  %v430 = vpack.c.b16 %v331, %v322
  %v431 = vpack.c.b16 %v341, %v332
  %v432 = vpack.c.b16 %v342, %v333
  %v433 = vpack.c.b16 %v343, %v334
  %v434 = vpack.c.b16 %v344, %v335
  %v435 = vpack.c.b16 %v345, %v336
  %v436 = vpack.c.b16 %v346, %v337
  %v437 = vpack.c.b16 %v347, %v338
  %v438 = vpack.c.b16 %v348, %v339
  %v439 = vpack.c.b16 %v349, %v340
  %v440 = vpack.c.b16 %v359, %v350
  %v441 = vpack.c.b16 %v360, %v351
  %v442 = vpack.c.b16 %v361, %v352
  %v443 = vpack.c.b16 %v362, %v353
  %v444 = vpack.c.b16 %v363, %v354
  %v445 = vpack.c.b16 %v364, %v355
  %v446 = vpack.c.b16 %v365, %v356
  %v447 = vpack.c.b16 %v366, %v357
  %v448 = vpack.c.b16 %v367, %v358
  %v449 = vpack.c.b16 %v377, %v368
  %v450 = vpack.c.b16 %v378, %v369
  %v451 = vpack.c.b16 %v379, %v370
  %v452 = vpack.c.b16 %v380, %v371
  %v453 = vpack.c.b16 %v381, %v372
  %v454 = vpack.c.b16 %v382, %v373
  %v455 = vpack.c.b16 %v383, %v374
  %v456 = vpack.c.b16 %v384, %v375
  %v457 = vpack.c.b16 %v385, %v376
  %v458 = vpack.c.b16 %v395, %v386
  %v459 = vpack.c.b16 %v396, %v387
  %v460 = vpack.c.b16 %v397, %v388
  %v461 = vpack.c.b16 %v398, %v389
  %v462 = vpack.c.b16 %v399, %v390
  %v463 = vpack.c.b16 %v400, %v391
  %v464 = vpack.c.b16 %v401, %v392
  %v465 = vpack.c.b16 %v402, %v393
  %v466 = vpack.c.b16 %v403, %v394
  %v467 = vpack.c.b16 %v404, %v404
  %v468 = vpack.c.b16 %v405, %v405
  %v469 = vpack.c.b16 %v406, %v406
  %v470 = vpack.c.b16 %v407, %v407
  %v471 = vpack.c.b16 %v408, %v408
  %v472 = vpack.c.b16 %v409, %v409
  %v473 = vpack.c.b16 %v410, %v410
  %v474 = vpack.c.b16 %v411, %v411
  %v475 = vpack.c.b16 %v412, %v412
  %v683 = vunpack.c.l.b16 %v80
  %v684 = vunpack.c.l.b16 %v81
  %v685 = vunpack.c.l.b16 %v82
  %v686 = vunpack.c.l.b16 %v83
  %v687 = vunpack.c.l.b16 %v84
  %v688 = vunpack.c.l.b16 %v85
  %v689 = vunpack.c.l.b16 %v86
  %v690 = vunpack.c.l.b16 %v87
  %v691 = vunpack.c.l.b16 %v88
  %v692 = vunpack.c.l.b16 %v89
  %v693 = vunpack.c.l.b16 %v90
  %v694 = vunpack.c.l.b16 %v91
  %v695 = vunpack.c.l.b16 %v92
  %v696 = vunpack.c.l.b16 %v93
  %v697 = vunpack.c.l.b16 %v94
  %v698 = vunpack.c.l.b16 %v95
  %v699 = vunpack.c.l.b16 %v96
  %v700 = vunpack.c.l.b16 %v97
  %v701 = vunpack.c.l.b16 %v98
  %v702 = vunpack.c.l.b16 %v99
  %v703 = vunpack.c.l.b16 %v100
  %v704 = vunpack.c.l.b16 %v101
  %v705 = vunpack.c.l.b16 %v102
  %v706 = vunpack.c.l.b16 %v103
  %v707 = vunpack.c.l.b16 %v104
  %v708 = vunpack.c.l.b16 %v105
  %v709 = vunpack.c.l.b16 %v106
  %v710 = vunpack.c.l.b16 %v107
  %v711 = vunpack.c.l.b16 %v108
  %v712 = vunpack.c.l.b16 %v109
  %v713 = vunpack.c.l.b16 %v110
  %v714 = vunpack.c.l.b16 %v111
  %v715 = vunpack.c.l.b16 %v112
  %v716 = vunpack.c.l.b16 %v113
  %v717 = vunpack.c.l.b16 %v114
  %v718 = vunpack.c.l.b16 %v115
  %v719 = vunpack.c.l.b16 %v116
  %v720 = vunpack.c.l.b16 %v117
  %v721 = vunpack.c.l.b16 %v118
  %v722 = vunpack.c.l.b16 %v119
  %v723 = vunpack.c.l.b16 %v120
  %v724 = vunpack.c.l.b16 %v121
  %v725 = vunpack.c.l.b16 %v122
  %v726 = vunpack.c.l.b16 %v123
  %v727 = vunpack.c.l.b16 %v124
  %v728 = vunpack.c.l.b16 %v125
  %v729 = vunpack.c.l.b16 %v126
  %v730 = vunpack.c.l.b16 %v127
  %v731 = vunpack.c.l.b16 %v128
  %v732 = vunpack.c.l.b16 %v129
  %v733 = vunpack.c.l.b16 %v130
  %v734 = vunpack.c.l.b16 %v131
  %v735 = vunpack.c.l.b16 %v132
  %v736 = vunpack.c.l.b16 %v133
  %v737 = vunpack.c.l.b16 %v134
  %v738 = vunpack.c.l.b16 %v135
  %v739 = vunpack.c.l.b16 %v136
  %v740 = vunpack.c.l.b16 %v137
  %v741 = vunpack.c.l.b16 %v138
  %v742 = vunpack.c.l.b16 %v139
  %v743 = vunpack.c.l.b16 %v140
  %v744 = vunpack.c.l.b16 %v141
  %v745 = vunpack.c.l.b16 %v142
  %v746 = vunpack.c.l.b16 %v143
  %v747 = vunpack.c.l.b16 %v144
  %v748 = vunpack.c.l.b16 %v145
  %v749 = vunpack.c.l.b16 %v146
  %v750 = vunpack.c.l.b16 %v147
  %v751 = vunpack.c.l.b16 %v148
  %v752 = vunpack.c.l.b16 %v149
  %v753 = vunpack.c.l.b16 %v150
  %v754 = vunpack.c.l.b16 %v151
  %v755 = vunpack.c.l.b16 %v152
  %v756 = vunpack.c.l.b16 %v153
  %v757 = vunpack.c.l.b16 %v154
  %v758 = vunpack.c.l.b16 %v155
  %v759 = vunpack.c.l.b16 %v156
  %v760 = vunpack.c.l.b16 %v157
  %v761 = vunpack.c.l.b16 %v158
  %v762 = vunpack.c.l.b16 %v159
  %v763 = vunpack.c.l.b16 %v160
  %v764 = vunpack.c.l.b16 %v161
  %v765 = vunpack.c.l.b16 %v162
  %v766 = vunpack.c.l.b16 %v163
  %v767 = vunpack.c.l.b16 %v164
  %v768 = vunpack.c.l.b16 %v165
  %v769 = vunpack.c.l.b16 %v166
  %v770 = vunpack.c.l.b16 %v167
  %v771 = vunpack.c.l.b16 %v168
  %v772 = vunpack.c.l.b16 %v169
  %v773 = vunpack.c.l.b16 %v170
  %v774 = vunpack.c.l.b16 %v171
  %v775 = vunpack.c.l.b16 %v172
  %v776 = vunpack.c.l.b16 %v173
  %v777 = vunpack.c.l.b16 %v174
  %v778 = vunpack.c.l.b16 %v175
  %v779 = vunpack.c.l.b16 %v176
  %v780 = vunpack.c.l.b16 %v177
  %v781 = vunpack.c.l.b16 %v178
  %v782 = vunpack.c.l.b16 %v179
  %v783 = vunpack.c.l.b16 %v180
  %v784 = vunpack.c.l.b16 %v181
  %v785 = vunpack.c.l.b16 %v182
  %v786 = vunpack.c.l.b16 %v183
  %v787 = vunpack.c.l.b16 %v184
  %v788 = vunpack.c.l.b16 %v185
  %v789 = vunpack.c.l.b16 %v186
  %v790 = vunpack.c.l.b16 %v187
  %v791 = vunpack.c.l.b16 %v188
  %v792 = vunpack.c.l.b16 %v189
  %v793 = vunpack.c.l.b16 %v190
  %v794 = vunpack.c.l.b16 %v191
  %v795 = vunpack.c.l.b16 %v192
  %v796 = vunpack.c.l.b16 %v193
  %v797 = vunpack.c.l.b16 %v194
  %v798 = vunpack.c.l.b16 %v195
  %v799 = vunpack.c.l.b16 %v196
  %v800 = vunpack.c.l.b16 %v197
  %v801 = vunpack.c.l.b16 %v198
  %v802 = vunpack.c.l.b16 %v199
  %v803 = vunpack.c.l.b16 %v200
  %v804 = vunpack.c.l.b16 %v201
  %v805 = vunpack.c.l.b16 %v202
  %v806 = vunpack.c.l.b16 %v203
  %v807 = vunpack.c.l.b16 %v204
  %v808 = vunpack.c.l.b16 %v205
  %v809 = vunpack.c.l.b16 %v206
  %v810 = vunpack.c.l.b16 %v207
  %v811 = vunpack.c.l.b16 %v208
  %v812 = vunpack.c.l.b16 %v209
  %v813 = vunpack.c.l.b16 %v210
  %v814 = vunpack.c.l.b16 %v211
  %v815 = vunpack.c.l.b16 %v212
  %v816 = vunpack.c.l.b16 %v213
  %v817 = vunpack.c.l.b16 %v214
  %v818 = vunpack.c.l.b16 %v215
  %v819 = vunpack.c.l.b16 %v216
  %v820 = vunpack.c.l.b16 %v217
  %v821 = vunpack.c.l.b16 %v218
  %v822 = vunpack.c.l.b16 %v219
  %v823 = vunpack.c.l.b16 %v220
  %v824 = vunpack.c.l.b16 %v221
  %v825 = vunpack.c.l.b16 %v222
  %v826 = vunpack.c.l.b16 %v223
  %v827 = vpack.c.b16 %v684, %v683
  %v828 = vpack.c.b16 %v686, %v685
  %v829 = vpack.c.b16 %v688, %v687
  %v830 = vpack.c.b16 %v690, %v689
  %v831 = vpack.c.b16 %v692, %v691
  %v832 = vpack.c.b16 %v694, %v693
  %v833 = vpack.c.b16 %v696, %v695
  %v834 = vpack.c.b16 %v698, %v697
  %v835 = vpack.c.b16 %v700, %v699
  %v836 = vpack.c.b16 %v702, %v701
  %v837 = vpack.c.b16 %v704, %v703
  %v838 = vpack.c.b16 %v706, %v705
  %v839 = vpack.c.b16 %v708, %v707
  %v840 = vpack.c.b16 %v710, %v709
  %v841 = vpack.c.b16 %v712, %v711
  %v842 = vpack.c.b16 %v714, %v713
  %v843 = vpack.c.b16 %v716, %v715
  %v844 = vpack.c.b16 %v718, %v717
  %v845 = vpack.c.b16 %v720, %v719
  %v846 = vpack.c.b16 %v722, %v721
  %v847 = vpack.c.b16 %v724, %v723
  %v848 = vpack.c.b16 %v726, %v725
  %v849 = vpack.c.b16 %v728, %v727
  %v850 = vpack.c.b16 %v730, %v729
  %v851 = vpack.c.b16 %v732, %v731
  %v852 = vpack.c.b16 %v734, %v733
  %v853 = vpack.c.b16 %v736, %v735
  %v854 = vpack.c.b16 %v738, %v737
  %v855 = vpack.c.b16 %v740, %v739
  %v856 = vpack.c.b16 %v742, %v741
  %v857 = vpack.c.b16 %v744, %v743
  %v858 = vpack.c.b16 %v746, %v745
  %v859 = vpack.c.b16 %v748, %v747
  %v860 = vpack.c.b16 %v750, %v749
  %v861 = vpack.c.b16 %v752, %v751
  %v862 = vpack.c.b16 %v754, %v753
  %v863 = vpack.c.b16 %v756, %v755
  %v864 = vpack.c.b16 %v758, %v757
  %v865 = vpack.c.b16 %v760, %v759
  %v866 = vpack.c.b16 %v762, %v761
  %v867 = vpack.c.b16 %v764, %v763
  %v868 = vpack.c.b16 %v766, %v765
  %v869 = vpack.c.b16 %v768, %v767
  %v870 = vpack.c.b16 %v770, %v769
  %v871 = vpack.c.b16 %v772, %v771
  %v872 = vpack.c.b16 %v774, %v773
  %v873 = vpack.c.b16 %v776, %v775
  %v874 = vpack.c.b16 %v778, %v777
  %v875 = vpack.c.b16 %v780, %v779
  %v876 = vpack.c.b16 %v782, %v781
  %v877 = vpack.c.b16 %v784, %v783
  %v878 = vpack.c.b16 %v786, %v785
  %v879 = vpack.c.b16 %v788, %v787
  %v880 = vpack.c.b16 %v790, %v789
  %v881 = vpack.c.b16 %v792, %v791
  %v882 = vpack.c.b16 %v794, %v793
  %v883 = vpack.c.b16 %v796, %v795
  %v884 = vpack.c.b16 %v798, %v797
  %v885 = vpack.c.b16 %v800, %v799
  %v886 = vpack.c.b16 %v802, %v801
  %v887 = vpack.c.b16 %v804, %v803
  %v888 = vpack.c.b16 %v806, %v805
  %v889 = vpack.c.b16 %v808, %v807
  %v890 = vpack.c.b16 %v810, %v809
  %v891 = vpack.c.b16 %v812, %v811
  %v892 = vpack.c.b16 %v814, %v813
  %v893 = vpack.c.b16 %v816, %v815
  %v894 = vpack.c.b16 %v818, %v817
  %v895 = vpack.c.b16 %v820, %v819
  %v896 = vpack.c.b16 %v822, %v821
  %v897 = vpack.c.b16 %v824, %v823
  %v898 = vpack.c.b16 %v826, %v825
  %971 = vmatprep.subr.bf16.mxu0 0
  %972 = vmatpush1.bf16.msra.mxu0 %v827
  %973 = vmatprep.subr.bf16.mxu0 0
  %974 = vmatpush1.bf16.msra.mxu0 %v828
  %975 = vmatprep.subr.bf16.mxu0 0
  %976 = vmatpush1.bf16.msra.mxu0 %v829
  %977 = vmatprep.subr.bf16.mxu0 0
  %978 = vmatpush1.bf16.msra.mxu0 %v830
  %979 = vmatprep.subr.bf16.mxu0 0
  %980 = vmatpush1.bf16.msra.mxu0 %v831
  %981 = vmatprep.subr.bf16.mxu0 0
  %982 = vmatpush1.bf16.msra.mxu0 %v832
  %983 = vmatprep.subr.bf16.mxu0 0
  %984 = vmatpush1.bf16.msra.mxu0 %v833
  %985 = vmatprep.subr.bf16.mxu0 0
  %986 = vmatpush1.bf16.msra.mxu0 %v834
  %987 = vmatprep.subr.bf16.mxu0 0
  %988 = vmatpush1.bf16.msra.mxu0 %v835
  %989 = vmatprep.subr.bf16.mxu0 0
  %990 = vmatpush1.bf16.msra.mxu0 %v836
  %991 = vmatprep.subr.bf16.mxu0 0
  %992 = vmatpush1.bf16.msra.mxu0 %v837
  %993 = vmatprep.subr.bf16.mxu0 0
  %994 = vmatpush1.bf16.msra.mxu0 %v838
  %995 = vmatprep.subr.bf16.mxu0 0
  %996 = vmatpush1.bf16.msra.mxu0 %v839
  %997 = vmatprep.subr.bf16.mxu0 0
  %998 = vmatpush1.bf16.msra.mxu0 %v840
  %999 = vmatprep.subr.bf16.mxu0 0
  %1000 = vmatpush1.bf16.msra.mxu0 %v841
  %1001 = vmatprep.subr.bf16.mxu0 0
  %1002 = vmatpush1.bf16.msra.mxu0 %v842
  %1003 = vmatprep.mubr.bf16.mxu0 %v414
  %1004 = vmatmul.mubr.bf16.gmra.mrb[0].mxu0 %v413
  %v1005 = vpop.f32.mrb[0].mxu0
  %v1006 = vadd.f32 %v229, %v1005
  %v1007 = vpop.f32.mrb[0].mxu0
  %v1008 = vpop.f32.mrb[0].mxu0
  %v1009 = vadd.f32 %v229, %v1008
  %v1010 = vpop.f32.mrb[0].mxu0
  %1011 = vmatprep.mubr.bf16.mxu0 %v423
  %1012 = vmatmul.mubr.bf16.gmra.mrb[0].mxu0 %v422
  %v1013 = vpop.f32.mrb[0].mxu0
  %v1014 = vadd.f32 %v229, %v1013
  %v1015 = vpop.f32.mrb[0].mxu0
  %v1016 = vpop.f32.mrb[0].mxu0
  %v1017 = vadd.f32 %v229, %v1016
  %v1018 = vpop.f32.mrb[0].mxu0
  %1019 = vmatprep.mubr.bf16.mxu0 %v432
  %1020 = vmatmul.mubr.bf16.gmra.mrb[0].mxu0 %v431
  %v1021 = vpop.f32.mrb[0].mxu0
  %v1022 = vadd.f32 %v229, %v1021
  %v1023 = vpop.f32.mrb[0].mxu0
  %v1024 = vpop.f32.mrb[0].mxu0
  %v1025 = vadd.f32 %v229, %v1024
  %v1026 = vpop.f32.mrb[0].mxu0
  %1027 = vmatprep.mubr.bf16.mxu0 %v441
  %1028 = vmatmul.mubr.bf16.gmra.mrb[0].mxu0 %v440
  %v1029 = vpop.f32.mrb[0].mxu0
  %v1030 = vadd.f32 %v229, %v1029
  %v1031 = vpop.f32.mrb[0].mxu0
  %v1032 = vpop.f32.mrb[0].mxu0
  %v1033 = vadd.f32 %v229, %v1032
  %v1034 = vpop.f32.mrb[0].mxu0
  %1035 = vmatprep.mubr.bf16.mxu0 %v450
  %1036 = vmatmul.mubr.bf16.gmra.mrb[0].mxu0 %v449
  %v1037 = vpop.f32.mrb[0].mxu0
  %v1038 = vadd.f32 %v229, %v1037
  %v1039 = vpop.f32.mrb[0].mxu0
  %v1040 = vpop.f32.mrb[0].mxu0
  %v1041 = vadd.f32 %v229, %v1040
  %v1042 = vpop.f32.mrb[0].mxu0
  %1043 = vmatprep.mubr.bf16.mxu0 %v459
  %1044 = vmatmul.mubr.bf16.gmra.mrb[0].mxu0 %v458
  %v1045 = vpop.f32.mrb[0].mxu0
  %v1046 = vadd.f32 %v229, %v1045
  %v1047 = vpop.f32.mrb[0].mxu0
  %v1048 = vpop.f32.mrb[0].mxu0
  %v1049 = vadd.f32 %v229, %v1048
  %v1050 = vpop.f32.mrb[0].mxu0
  %1051 = vmatprep.mubr.bf16.mxu0 %v468
  %1052 = vmatmul.mubr.bf16.gmra.mrb[0].mxu0 %v467
  %v1053 = vpop.f32.mrb[0].mxu0
  %v1054 = vadd.f32 %v229, %v1053
  %v1055 = vpop.f32.mrb[0].mxu0
  %v1056 = vpop.f32.mrb[0].mxu0
  %v1057 = vpop.f32.mrb[0].mxu0
  %1058 = vdwg.mxu0
  %1059 = vmatprep.subr.bf16.mxu0 0
  %1060 = vmatpush1.bf16.msra.mxu0 %v843
  %1061 = vmatprep.subr.bf16.mxu0 0
  %1062 = vmatpush1.bf16.msra.mxu0 %v844
  %1063 = vmatprep.subr.bf16.mxu0 0
  %1064 = vmatpush1.bf16.msra.mxu0 %v845
  %1065 = vmatprep.subr.bf16.mxu0 0
  %1066 = vmatpush1.bf16.msra.mxu0 %v846
  %1067 = vmatprep.subr.bf16.mxu0 0
  %1068 = vmatpush1.bf16.msra.mxu0 %v847
  %1069 = vmatprep.subr.bf16.mxu0 0
  %1070 = vmatpush1.bf16.msra.mxu0 %v848
  %1071 = vmatprep.subr.bf16.mxu0 0
  %1072 = vmatpush1.bf16.msra.mxu0 %v849
  %1073 = vmatprep.subr.bf16.mxu0 0
  %1074 = vmatpush1.bf16.msra.mxu0 %v850
  %1075 = vmatprep.subr.bf16.mxu0 0
  %1076 = vmatpush1.bf16.msra.mxu0 %v851
  %1077 = vmatprep.subr.bf16.mxu0 0
  %1078 = vmatpush1.bf16.msra.mxu0 %v852
  %1079 = vmatprep.subr.bf16.mxu0 0
  %1080 = vmatpush1.bf16.msra.mxu0 %v853
  %1081 = vmatprep.subr.bf16.mxu0 0
  %1082 = vmatpush1.bf16.msra.mxu0 %v854
  %1083 = vmatprep.subr.bf16.mxu0 0
  %1084 = vmatpush1.bf16.msra.mxu0 %v855
  %1085 = vmatprep.subr.bf16.mxu0 0
  %1086 = vmatpush1.bf16.msra.mxu0 %v856
  %1087 = vmatprep.subr.bf16.mxu0 0
  %1088 = vmatpush1.bf16.msra.mxu0 %v857
  %1089 = vmatprep.subr.bf16.mxu0 0
  %1090 = vmatpush1.bf16.msra.mxu0 %v858
  %1091 = vmatprep.mubr.bf16.mxu0 %v416
  %1092 = vmatmul.mubr.bf16.gmra.mrb[0].mxu0 %v415
  %v1093 = vpop.f32.mrb[0].mxu0
  %v1094 = vadd.f32 %v1006, %v1093
  %v1095 = vpop.f32.mrb[0].mxu0
  %v1096 = vpop.f32.mrb[0].mxu0
  %v1097 = vadd.f32 %v1009, %v1096
  %v1098 = vpop.f32.mrb[0].mxu0
  %1099 = vmatprep.mubr.bf16.mxu0 %v425
  %1100 = vmatmul.mubr.bf16.gmra.mrb[0].mxu0 %v424
  %v1101 = vpop.f32.mrb[0].mxu0
  %v1102 = vadd.f32 %v1014, %v1101
  %v1103 = vpop.f32.mrb[0].mxu0
  %v1104 = vpop.f32.mrb[0].mxu0
  %v1105 = vadd.f32 %v1017, %v1104
  %v1106 = vpop.f32.mrb[0].mxu0
  %1107 = vmatprep.mubr.bf16.mxu0 %v434
  %1108 = vmatmul.mubr.bf16.gmra.mrb[0].mxu0 %v433
  %v1109 = vpop.f32.mrb[0].mxu0
  %v1110 = vadd.f32 %v1022, %v1109
  %v1111 = vpop.f32.mrb[0].mxu0
  %v1112 = vpop.f32.mrb[0].mxu0
  %v1113 = vadd.f32 %v1025, %v1112
  %v1114 = vpop.f32.mrb[0].mxu0
  %1115 = vmatprep.mubr.bf16.mxu0 %v443
  %1116 = vmatmul.mubr.bf16.gmra.mrb[0].mxu0 %v442
  %v1117 = vpop.f32.mrb[0].mxu0
  %v1118 = vadd.f32 %v1030, %v1117
  %v1119 = vpop.f32.mrb[0].mxu0
  %v1120 = vpop.f32.mrb[0].mxu0
  %v1121 = vadd.f32 %v1033, %v1120
  %v1122 = vpop.f32.mrb[0].mxu0
  %1123 = vmatprep.mubr.bf16.mxu0 %v452
  %1124 = vmatmul.mubr.bf16.gmra.mrb[0].mxu0 %v451
  %v1125 = vpop.f32.mrb[0].mxu0
  %v1126 = vadd.f32 %v1038, %v1125
  %v1127 = vpop.f32.mrb[0].mxu0
  %v1128 = vpop.f32.mrb[0].mxu0
  %v1129 = vadd.f32 %v1041, %v1128
  %v1130 = vpop.f32.mrb[0].mxu0
  %1131 = vmatprep.mubr.bf16.mxu0 %v461
  %1132 = vmatmul.mubr.bf16.gmra.mrb[0].mxu0 %v460
  %v1133 = vpop.f32.mrb[0].mxu0
  %v1134 = vadd.f32 %v1046, %v1133
  %v1135 = vpop.f32.mrb[0].mxu0
  %v1136 = vpop.f32.mrb[0].mxu0
  %v1137 = vadd.f32 %v1049, %v1136
  %v1138 = vpop.f32.mrb[0].mxu0
  %1139 = vmatprep.mubr.bf16.mxu0 %v470
  %1140 = vmatmul.mubr.bf16.gmra.mrb[0].mxu0 %v469
  %v1141 = vpop.f32.mrb[0].mxu0
  %v1142 = vadd.f32 %v1054, %v1141
  %v1143 = vpop.f32.mrb[0].mxu0
  %v1144 = vpop.f32.mrb[0].mxu0
  %v1145 = vpop.f32.mrb[0].mxu0
  %1146 = vdwg.mxu0
  %1147 = vmatprep.subr.bf16.mxu0 0
  %1148 = vmatpush1.bf16.msra.mxu0 %v859
  %1149 = vmatprep.subr.bf16.mxu0 0
  %1150 = vmatpush1.bf16.msra.mxu0 %v860
  %1151 = vmatprep.subr.bf16.mxu0 0
  %1152 = vmatpush1.bf16.msra.mxu0 %v861
  %1153 = vmatprep.subr.bf16.mxu0 0
  %1154 = vmatpush1.bf16.msra.mxu0 %v862
  %1155 = vmatprep.subr.bf16.mxu0 0
  %1156 = vmatpush1.bf16.msra.mxu0 %v863
  %1157 = vmatprep.subr.bf16.mxu0 0
  %1158 = vmatpush1.bf16.msra.mxu0 %v864
  %1159 = vmatprep.subr.bf16.mxu0 0
  %1160 = vmatpush1.bf16.msra.mxu0 %v865
  %1161 = vmatprep.subr.bf16.mxu0 0
  %1162 = vmatpush1.bf16.msra.mxu0 %v866
  %1163 = vmatprep.subr.bf16.mxu0 0
  %1164 = vmatpush1.bf16.msra.mxu0 %v867
  %1165 = vmatprep.subr.bf16.mxu0 0
  %1166 = vmatpush1.bf16.msra.mxu0 %v868
  %1167 = vmatprep.subr.bf16.mxu0 0
  %1168 = vmatpush1.bf16.msra.mxu0 %v869
  %1169 = vmatprep.subr.bf16.mxu0 0
  %1170 = vmatpush1.bf16.msra.mxu0 %v870
  %1171 = vmatprep.subr.bf16.mxu0 0
  %1172 = vmatpush1.bf16.msra.mxu0 %v871
  %1173 = vmatprep.subr.bf16.mxu0 0
  %1174 = vmatpush1.bf16.msra.mxu0 %v872
  %1175 = vmatprep.subr.bf16.mxu0 0
  %1176 = vmatpush1.bf16.msra.mxu0 %v873
  %1177 = vmatprep.subr.bf16.mxu0 0
  %1178 = vmatpush1.bf16.msra.mxu0 %v874
  %1179 = vmatprep.mubr.bf16.mxu0 %v418
  %1180 = vmatmul.mubr.bf16.gmra.mrb[0].mxu0 %v417
  %v1181 = vpop.f32.mrb[0].mxu0
  %v1182 = vadd.f32 %v1094, %v1181
  %v1183 = vpop.f32.mrb[0].mxu0
  %v1184 = vpop.f32.mrb[0].mxu0
  %v1185 = vadd.f32 %v1097, %v1184
  %v1186 = vpop.f32.mrb[0].mxu0
  %1187 = vmatprep.mubr.bf16.mxu0 %v427
  %1188 = vmatmul.mubr.bf16.gmra.mrb[0].mxu0 %v426
  %v1189 = vpop.f32.mrb[0].mxu0
  %v1190 = vadd.f32 %v1102, %v1189
  %v1191 = vpop.f32.mrb[0].mxu0
  %v1192 = vpop.f32.mrb[0].mxu0
  %v1193 = vadd.f32 %v1105, %v1192
  %v1194 = vpop.f32.mrb[0].mxu0
  %1195 = vmatprep.mubr.bf16.mxu0 %v436
  %1196 = vmatmul.mubr.bf16.gmra.mrb[0].mxu0 %v435
  %v1197 = vpop.f32.mrb[0].mxu0
  %v1198 = vadd.f32 %v1110, %v1197
  %v1199 = vpop.f32.mrb[0].mxu0
  %v1200 = vpop.f32.mrb[0].mxu0
  %v1201 = vadd.f32 %v1113, %v1200
  %v1202 = vpop.f32.mrb[0].mxu0
  %1203 = vmatprep.mubr.bf16.mxu0 %v445
  %1204 = vmatmul.mubr.bf16.gmra.mrb[0].mxu0 %v444
  %v1205 = vpop.f32.mrb[0].mxu0
  %v1206 = vadd.f32 %v1118, %v1205
  %v1207 = vpop.f32.mrb[0].mxu0
  %v1208 = vpop.f32.mrb[0].mxu0
  %v1209 = vadd.f32 %v1121, %v1208
  %v1210 = vpop.f32.mrb[0].mxu0
  %1211 = vmatprep.mubr.bf16.mxu0 %v454
  %1212 = vmatmul.mubr.bf16.gmra.mrb[0].mxu0 %v453
  %v1213 = vpop.f32.mrb[0].mxu0
  %v1214 = vadd.f32 %v1126, %v1213
  %v1215 = vpop.f32.mrb[0].mxu0
  %v1216 = vpop.f32.mrb[0].mxu0
  %v1217 = vadd.f32 %v1129, %v1216
  %v1218 = vpop.f32.mrb[0].mxu0
  %1219 = vmatprep.mubr.bf16.mxu0 %v463
  %1220 = vmatmul.mubr.bf16.gmra.mrb[0].mxu0 %v462
  %v1221 = vpop.f32.mrb[0].mxu0
  %v1222 = vadd.f32 %v1134, %v1221
  %v1223 = vpop.f32.mrb[0].mxu0
  %v1224 = vpop.f32.mrb[0].mxu0
  %v1225 = vadd.f32 %v1137, %v1224
  %v1226 = vpop.f32.mrb[0].mxu0
  %1227 = vmatprep.mubr.bf16.mxu0 %v472
  %1228 = vmatmul.mubr.bf16.gmra.mrb[0].mxu0 %v471
  %v1229 = vpop.f32.mrb[0].mxu0
  %v1230 = vadd.f32 %v1142, %v1229
  %v1231 = vpop.f32.mrb[0].mxu0
  %v1232 = vpop.f32.mrb[0].mxu0
  %v1233 = vpop.f32.mrb[0].mxu0
  %1234 = vdwg.mxu0
  %1235 = vmatprep.subr.bf16.mxu0 0
  %1236 = vmatpush1.bf16.msra.mxu0 %v875
  %1237 = vmatprep.subr.bf16.mxu0 0
  %1238 = vmatpush1.bf16.msra.mxu0 %v876
  %1239 = vmatprep.subr.bf16.mxu0 0
  %1240 = vmatpush1.bf16.msra.mxu0 %v877
  %1241 = vmatprep.subr.bf16.mxu0 0
  %1242 = vmatpush1.bf16.msra.mxu0 %v878
  %1243 = vmatprep.subr.bf16.mxu0 0
  %1244 = vmatpush1.bf16.msra.mxu0 %v879
  %1245 = vmatprep.subr.bf16.mxu0 0
  %1246 = vmatpush1.bf16.msra.mxu0 %v880
  %1247 = vmatprep.subr.bf16.mxu0 0
  %1248 = vmatpush1.bf16.msra.mxu0 %v881
  %1249 = vmatprep.subr.bf16.mxu0 0
  %1250 = vmatpush1.bf16.msra.mxu0 %v882
  %1251 = vmatprep.subr.bf16.mxu0 0
  %1252 = vmatpush1.bf16.msra.mxu0 %v883
  %1253 = vmatprep.subr.bf16.mxu0 0
  %1254 = vmatpush1.bf16.msra.mxu0 %v884
  %1255 = vmatprep.subr.bf16.mxu0 0
  %1256 = vmatpush1.bf16.msra.mxu0 %v885
  %1257 = vmatprep.subr.bf16.mxu0 0
  %1258 = vmatpush1.bf16.msra.mxu0 %v886
  %1259 = vmatprep.subr.bf16.mxu0 0
  %1260 = vmatpush1.bf16.msra.mxu0 %v887
  %1261 = vmatprep.subr.bf16.mxu0 0
  %1262 = vmatpush1.bf16.msra.mxu0 %v888
  %1263 = vmatprep.subr.bf16.mxu0 0
  %1264 = vmatpush1.bf16.msra.mxu0 %v889
  %1265 = vmatprep.subr.bf16.mxu0 0
  %1266 = vmatpush1.bf16.msra.mxu0 %v890
  %1267 = vmatprep.mubr.bf16.mxu0 %v420
  %1268 = vmatmul.mubr.bf16.gmra.mrb[0].mxu0 %v419
  %v1269 = vpop.f32.mrb[0].mxu0
  %v1270 = vadd.f32 %v1182, %v1269
  %v1271 = vpop.f32.mrb[0].mxu0
  %v1272 = vpop.f32.mrb[0].mxu0
  %v1273 = vadd.f32 %v1185, %v1272
  %v1274 = vpop.f32.mrb[0].mxu0
  %1275 = vmatprep.mubr.bf16.mxu0 %v429
  %1276 = vmatmul.mubr.bf16.gmra.mrb[0].mxu0 %v428
  %v1277 = vpop.f32.mrb[0].mxu0
  %v1278 = vadd.f32 %v1190, %v1277
  %v1279 = vpop.f32.mrb[0].mxu0
  %v1280 = vpop.f32.mrb[0].mxu0
  %v1281 = vadd.f32 %v1193, %v1280
  %v1282 = vpop.f32.mrb[0].mxu0
  %1283 = vmatprep.mubr.bf16.mxu0 %v438
  %1284 = vmatmul.mubr.bf16.gmra.mrb[0].mxu0 %v437
  %v1285 = vpop.f32.mrb[0].mxu0
  %v1286 = vadd.f32 %v1198, %v1285
  %v1287 = vpop.f32.mrb[0].mxu0
  %v1288 = vpop.f32.mrb[0].mxu0
  %v1289 = vadd.f32 %v1201, %v1288
  %v1290 = vpop.f32.mrb[0].mxu0
  %1291 = vmatprep.mubr.bf16.mxu0 %v447
  %1292 = vmatmul.mubr.bf16.gmra.mrb[0].mxu0 %v446
  %v1293 = vpop.f32.mrb[0].mxu0
  %v1294 = vadd.f32 %v1206, %v1293
  %v1295 = vpop.f32.mrb[0].mxu0
  %v1296 = vpop.f32.mrb[0].mxu0
  %v1297 = vadd.f32 %v1209, %v1296
  %v1298 = vpop.f32.mrb[0].mxu0
  %1299 = vmatprep.mubr.bf16.mxu0 %v456
  %1300 = vmatmul.mubr.bf16.gmra.mrb[0].mxu0 %v455
  %v1301 = vpop.f32.mrb[0].mxu0
  %v1302 = vadd.f32 %v1214, %v1301
  %v1303 = vpop.f32.mrb[0].mxu0
  %v1304 = vpop.f32.mrb[0].mxu0
  %v1305 = vadd.f32 %v1217, %v1304
  %v1306 = vpop.f32.mrb[0].mxu0
  %1307 = vmatprep.mubr.bf16.mxu0 %v465
  %1308 = vmatmul.mubr.bf16.gmra.mrb[0].mxu0 %v464
  %v1309 = vpop.f32.mrb[0].mxu0
  %v1310 = vadd.f32 %v1222, %v1309
  %v1311 = vpop.f32.mrb[0].mxu0
  %v1312 = vpop.f32.mrb[0].mxu0
  %v1313 = vadd.f32 %v1225, %v1312
  %v1314 = vpop.f32.mrb[0].mxu0
  %1315 = vmatprep.mubr.bf16.mxu0 %v474
  %1316 = vmatmul.mubr.bf16.gmra.mrb[0].mxu0 %v473
  %v1317 = vpop.f32.mrb[0].mxu0
  %v1318 = vadd.f32 %v1230, %v1317
  %v1319 = vpop.f32.mrb[0].mxu0
  %v1320 = vpop.f32.mrb[0].mxu0
  %v1321 = vpop.f32.mrb[0].mxu0
  %1322 = vdwg.mxu0
  %1323 = vmatprep.subr.bf16.mxu0 0
  %1324 = vmatpush1.bf16.msra.mxu0 %v891
  %1325 = vmatprep.subr.bf16.mxu0 0
  %1326 = vmatpush1.bf16.msra.mxu0 %v892
  %1327 = vmatprep.subr.bf16.mxu0 0
  %1328 = vmatpush1.bf16.msra.mxu0 %v893
  %1329 = vmatprep.subr.bf16.mxu0 0
  %1330 = vmatpush1.bf16.msra.mxu0 %v894
  %1331 = vmatprep.subr.bf16.mxu0 0
  %1332 = vmatpush1.bf16.msra.mxu0 %v895
  %1333 = vmatprep.subr.bf16.mxu0 0
  %1334 = vmatpush1.bf16.msra.mxu0 %v896
  %1335 = vmatprep.subr.bf16.mxu0 0
  %1336 = vmatpush1.bf16.msra.mxu0 %v897
  %1337 = vmatprep.subr.bf16.mxu0 0
  %1338 = vmatpush1.bf16.msra.mxu0 %v898
  %1339 = vmatprep.subr.bf16.mxu0 0
  %1340 = vmatpush1.bf16.msra.mxu0 0
  %1341 = vmatprep.subr.bf16.mxu0 0
  %1342 = vmatpush1.bf16.msra.mxu0 0
  %1343 = vmatprep.subr.bf16.mxu0 0
  %1344 = vmatpush1.bf16.msra.mxu0 0
  %1345 = vmatprep.subr.bf16.mxu0 0
  %1346 = vmatpush1.bf16.msra.mxu0 0
  %1347 = vmatprep.subr.bf16.mxu0 0
  %1348 = vmatpush1.bf16.msra.mxu0 0
  %1349 = vmatprep.subr.bf16.mxu0 0
  %1350 = vmatpush1.bf16.msra.mxu0 0
  %1351 = vmatprep.subr.bf16.mxu0 0
  %1352 = vmatpush1.bf16.msra.mxu0 0
  %1353 = vmatprep.subr.bf16.mxu0 0
  %1354 = vmatpush1.bf16.msra.mxu0 0
  %1355 = vmatprep.mubr.bf16.mxu0 0
  %1356 = vmatmul.mubr.bf16.gmra.mrb[0].mxu0 %v421
  %v1357 = vpop.f32.mrb[0].mxu0
  %v1358 = vadd.f32 %v1270, %v1357
  %v1359 = vpop.f32.mrb[0].mxu0
  %v1360 = vpop.f32.mrb[0].mxu0
  %v1361 = vadd.f32 %v1273, %v1360
  %v1362 = vpop.f32.mrb[0].mxu0
  %1363 = vmatprep.mubr.bf16.mxu0 0
  %1364 = vmatmul.mubr.bf16.gmra.mrb[0].mxu0 %v430
  %v1365 = vpop.f32.mrb[0].mxu0
  %v1366 = vadd.f32 %v1278, %v1365
  %v1367 = vpop.f32.mrb[0].mxu0
  %v1368 = vpop.f32.mrb[0].mxu0
  %v1369 = vadd.f32 %v1281, %v1368
  %v1370 = vpop.f32.mrb[0].mxu0
  %1371 = vmatprep.mubr.bf16.mxu0 0
  %1372 = vmatmul.mubr.bf16.gmra.mrb[0].mxu0 %v439
  %v1373 = vpop.f32.mrb[0].mxu0
  %v1374 = vadd.f32 %v1286, %v1373
  %v1375 = vpop.f32.mrb[0].mxu0
  %v1376 = vpop.f32.mrb[0].mxu0
  %v1377 = vadd.f32 %v1289, %v1376
  %v1378 = vpop.f32.mrb[0].mxu0
  %1379 = vmatprep.mubr.bf16.mxu0 0
  %1380 = vmatmul.mubr.bf16.gmra.mrb[0].mxu0 %v448
  %v1381 = vpop.f32.mrb[0].mxu0
  %v1382 = vadd.f32 %v1294, %v1381
  %v1383 = vpop.f32.mrb[0].mxu0
  %v1384 = vpop.f32.mrb[0].mxu0
  %v1385 = vadd.f32 %v1297, %v1384
  %v1386 = vpop.f32.mrb[0].mxu0
  %1387 = vmatprep.mubr.bf16.mxu0 0
  %1388 = vmatmul.mubr.bf16.gmra.mrb[0].mxu0 %v457
  %v1389 = vpop.f32.mrb[0].mxu0
  %v1390 = vadd.f32 %v1302, %v1389
  %v1391 = vpop.f32.mrb[0].mxu0
  %v1392 = vpop.f32.mrb[0].mxu0
  %v1393 = vadd.f32 %v1305, %v1392
  %v1394 = vpop.f32.mrb[0].mxu0
  %1395 = vmatprep.mubr.bf16.mxu0 0
  %1396 = vmatmul.mubr.bf16.gmra.mrb[0].mxu0 %v466
  %v1397 = vpop.f32.mrb[0].mxu0
  %v1398 = vadd.f32 %v1310, %v1397
  %v1399 = vpop.f32.mrb[0].mxu0
  %v1400 = vpop.f32.mrb[0].mxu0
  %v1401 = vadd.f32 %v1313, %v1400
  %v1402 = vpop.f32.mrb[0].mxu0
  %1403 = vmatprep.mubr.bf16.mxu0 0
  %1404 = vmatmul.mubr.bf16.gmra.mrb[0].mxu0 %v475
  %v1405 = vpop.f32.mrb[0].mxu0
  %v1406 = vadd.f32 %v1318, %v1405
  %v1407 = vpop.f32.mrb[0].mxu0
  %v1408 = vpop.f32.mrb[0].mxu0
  %v1409 = vpop.f32.mrb[0].mxu0
  %1410 = vdwg.mxu0
  %1411 = vst [vmem:[%s3] sm:$0xff] %v1358
  %1412 = vst [vmem:[%s3 + $0x8] sm:$0xff] %v1361
  %1413 = vst [vmem:[%s3 + $0x10] sm:$0xff] %v1366
  %1414 = vst [vmem:[%s3 + $0x18] sm:$0xff] %v1369
  %1415 = vst [vmem:[%s3 + $0x20] sm:$0xff] %v1374
  %1416 = vst [vmem:[%s3 + $0x28] sm:$0xff] %v1377
  %1417 = vst [vmem:[%s3 + $0x30] sm:$0xff] %v1382
  %1418 = vst [vmem:[%s3 + $0x38] sm:$0xff] %v1385
  %1419 = vst [vmem:[%s3 + $0x40] sm:$0xff] %v1390
  %1420 = vst [vmem:[%s3 + $0x48] sm:$0xff] %v1393
  %1421 = vst [vmem:[%s3 + $0x50] sm:$0xff] %v1398
  %1422 = vst [vmem:[%s3 + $0x58] sm:$0xff] %v1401
  %1423 = vst [vmem:[%s3 + $0x60] sm:$0xff] %v1406
  // Predicated region
  $region14: #{forward.29} parent=0 // pred_check
    _
  $region15: #{forward.29} parent=0 // pred_check_branch
    %1425 = sbr.rel (0) target = $region17
  $region16: #{forward.29} parent=0 // pred_region
    _
  $region17: #{forward.29} parent=0 // pred_fallthru
    _
  // Predicated region
  $region18: #{forward.29} parent=0 // pred_check
    _
  $region19: #{forward.29} parent=0 // pred_check_branch
    %1427 = sbr.rel (0) target = $region21
  $region20: #{forward.29} parent=0 // pred_region
    _
  $region21: #{forward.29} parent=0 // pred_fallthru
    _

// kernel: forward.31
$region0: #{forward.31}
  #allocation0 [shape = 'u32[]', space=smem, size = 0x4, offset = 0x4, fixed_abs, tag = 'smem constant byte address 0x4 - core index']
  #allocation1 [shape = 'u32[144,128]{1,0:T(1,128)}', space=vmem, size = 0x12000, scoped, tag = 'internal scratch']
  %s0 = inlined_call_operand.vmem [shape: bf16[104,128], index: 0, kind: input, shape index: {}]
  %s1 = inlined_call_operand.vmem [shape: bf16[128,128], index: 1, kind: input, shape index: {}]
  %s2 = inlined_call_operand.vmem [shape: f32[1,128], index: 2, kind: input, shape index: {}]
  %s3 = inlined_call_operand.vmem [shape: f32[104,128], index: 3, kind: output, shape index: {}]
  %s4 = sld [smem:[#allocation0]]
  $region22: #{forward.31} parent=0
    _
  %s6 = ssub.s32 1, %s4
  %s7 = scalar_select 0, %s6, %s4
  // Predicated region
  $region2: #{forward.31} parent=0 // pred_check
    _
  $region3: #{forward.31} parent=0 // pred_check_branch
    %9 = sbr.rel (0) target = $region5
  $region4: #{forward.31} parent=0 // pred_region
    _
  $region5: #{forward.31} parent=0 // pred_fallthru
    _
  // Predicated region
  $region6: #{forward.31} parent=0 // pred_check
    _
  $region7: #{forward.31} parent=0 // pred_check_branch
    %11 = sbr.rel (0) target = $region9
  $region8: #{forward.31} parent=0 // pred_region
    _
  $region9: #{forward.31} parent=0 // pred_fallthru
    _
  // Predicated region
  $region10: #{forward.31} parent=0 // pred_check
    _
  $region11: #{forward.31} parent=0 // pred_check_branch
    %13 = sbr.rel (0) target = $region13
  $region12: #{forward.31} parent=0 // pred_region
    _
  $region13: #{forward.31} parent=0 // pred_fallthru
    _
  %v15 = vld [vmem:[%s0] sm:$0xf]
  %v16 = vld [vmem:[%s0 + $0x4] sm:$0xf]
  %v17 = vld [vmem:[%s0 + $0x8] sm:$0xf]
  %v18 = vld [vmem:[%s0 + $0xc] sm:$0xf]
  %v19 = vld [vmem:[%s0 + $0x10] sm:$0xf]
  %v20 = vld [vmem:[%s0 + $0x14] sm:$0xf]
  %v21 = vld [vmem:[%s0 + $0x18] sm:$0xf]
  %v22 = vld [vmem:[%s0 + $0x1c] sm:$0xf]
  %v23 = vld [vmem:[%s0 + $0x20] sm:$0xf]
  %v24 = vld [vmem:[%s0 + $0x24] sm:$0xf]
  %v25 = vld [vmem:[%s0 + $0x28] sm:$0xf]
  %v26 = vld [vmem:[%s0 + $0x2c] sm:$0xf]
  %v27 = vld [vmem:[%s0 + $0x30] sm:$0xf]
  %v28 = vld [vmem:[%s1] sm:$0xf]
  %v29 = vld [vmem:[%s1 + $0x4] sm:$0xf]
  %v30 = vld [vmem:[%s1 + $0x8] sm:$0xf]
  %v31 = vld [vmem:[%s1 + $0xc] sm:$0xf]
  %v32 = vld [vmem:[%s1 + $0x10] sm:$0xf]
  %v33 = vld [vmem:[%s1 + $0x14] sm:$0xf]
  %v34 = vld [vmem:[%s1 + $0x18] sm:$0xf]
  %v35 = vld [vmem:[%s1 + $0x1c] sm:$0xf]
  %v36 = vld [vmem:[%s1 + $0x20] sm:$0xf]
  %v37 = vld [vmem:[%s1 + $0x24] sm:$0xf]
  %v38 = vld [vmem:[%s1 + $0x28] sm:$0xf]
  %v39 = vld [vmem:[%s1 + $0x2c] sm:$0xf]
  %v40 = vld [vmem:[%s1 + $0x30] sm:$0xf]
  %v41 = vld [vmem:[%s1 + $0x34] sm:$0xf]
  %v42 = vld [vmem:[%s1 + $0x38] sm:$0xf]
  %v43 = vld [vmem:[%s1 + $0x3c] sm:$0xf]
  %v44 = vld [vmem:[%s2] sm:$0x1]
  %v46 = vlaneseq
  %v47 = vshrl.u32 %v46, 7
  %v48 = vsub.s32 0, %v47
  %v49 = vrot.slane %v44, %v48
  %v64 = vunpack.c.l.b16 %v15
  %v65 = vunpack.c.l.b16 %v16
  %v66 = vunpack.c.l.b16 %v17
  %v67 = vunpack.c.l.b16 %v18
  %v68 = vunpack.c.l.b16 %v19
  %v69 = vunpack.c.l.b16 %v20
  %v70 = vunpack.c.l.b16 %v21
  %v71 = vunpack.c.l.b16 %v22
  %v72 = vunpack.c.l.b16 %v23
  %v73 = vunpack.c.l.b16 %v24
  %v74 = vunpack.c.l.b16 %v25
  %v75 = vunpack.c.l.b16 %v26
  %v76 = vunpack.c.l.b16 %v27
  %v77 = vpack.c.b16 %v65, %v64
  %v78 = vpack.c.b16 %v67, %v66
  %v79 = vpack.c.b16 %v69, %v68
  %v80 = vpack.c.b16 %v71, %v70
  %v81 = vpack.c.b16 %v73, %v72
  %v82 = vpack.c.b16 %v75, %v74
  %v83 = vpack.c.b16 %v76, %v76
  %v107 = vunpack.c.l.b16 %v28
  %v108 = vunpack.c.l.b16 %v29
  %v109 = vunpack.c.l.b16 %v30
  %v110 = vunpack.c.l.b16 %v31
  %v111 = vunpack.c.l.b16 %v32
  %v112 = vunpack.c.l.b16 %v33
  %v113 = vunpack.c.l.b16 %v34
  %v114 = vunpack.c.l.b16 %v35
  %v115 = vunpack.c.l.b16 %v36
  %v116 = vunpack.c.l.b16 %v37
  %v117 = vunpack.c.l.b16 %v38
  %v118 = vunpack.c.l.b16 %v39
  %v119 = vunpack.c.l.b16 %v40
  %v120 = vunpack.c.l.b16 %v41
  %v121 = vunpack.c.l.b16 %v42
  %v122 = vunpack.c.l.b16 %v43
  %v123 = vpack.c.b16 %v108, %v107
  %v124 = vpack.c.b16 %v110, %v109
  %v125 = vpack.c.b16 %v112, %v111
  %v126 = vpack.c.b16 %v114, %v113
  %v127 = vpack.c.b16 %v116, %v115
  %v128 = vpack.c.b16 %v118, %v117
  %v129 = vpack.c.b16 %v120, %v119
  %v130 = vpack.c.b16 %v122, %v121
  %139 = vmatprep.subr.bf16.mxu0 0
  %140 = vmatpush1.bf16.msra.mxu0 %v123
  %141 = vmatprep.subr.bf16.mxu0 0
  %142 = vmatpush1.bf16.msra.mxu0 %v124
  %143 = vmatprep.subr.bf16.mxu0 0
  %144 = vmatpush1.bf16.msra.mxu0 %v125
  %145 = vmatprep.subr.bf16.mxu0 0
  %146 = vmatpush1.bf16.msra.mxu0 %v126
  %147 = vmatprep.subr.bf16.mxu0 0
  %148 = vmatpush1.bf16.msra.mxu0 %v127
  %149 = vmatprep.subr.bf16.mxu0 0
  %150 = vmatpush1.bf16.msra.mxu0 %v128
  %151 = vmatprep.subr.bf16.mxu0 0
  %152 = vmatpush1.bf16.msra.mxu0 %v129
  %153 = vmatprep.subr.bf16.mxu0 0
  %154 = vmatpush1.bf16.msra.mxu0 %v130
  %155 = vmatprep.subr.bf16.mxu0 0
  %156 = vmatpush1.bf16.msra.mxu0 0
  %157 = vmatprep.subr.bf16.mxu0 0
  %158 = vmatpush1.bf16.msra.mxu0 0
  %159 = vmatprep.subr.bf16.mxu0 0
  %160 = vmatpush1.bf16.msra.mxu0 0
  %161 = vmatprep.subr.bf16.mxu0 0
  %162 = vmatpush1.bf16.msra.mxu0 0
  %163 = vmatprep.subr.bf16.mxu0 0
  %164 = vmatpush1.bf16.msra.mxu0 0
  %165 = vmatprep.subr.bf16.mxu0 0
  %166 = vmatpush1.bf16.msra.mxu0 0
  %167 = vmatprep.subr.bf16.mxu0 0
  %168 = vmatpush1.bf16.msra.mxu0 0
  %169 = vmatprep.subr.bf16.mxu0 0
  %170 = vmatpush1.bf16.msra.mxu0 0
  %171 = vmatprep.mubr.bf16.mxu0 0
  %172 = vmatmul.mubr.bf16.gmra.mrb[0].mxu0 %v77
  %v173 = vpop.f32.mrb[0].mxu0
  %v174 = vadd.f32 %v49, %v173
  %v175 = vpop.f32.mrb[0].mxu0
  %v176 = vpop.f32.mrb[0].mxu0
  %v177 = vadd.f32 %v49, %v176
  %v178 = vpop.f32.mrb[0].mxu0
  %179 = vmatprep.mubr.bf16.mxu0 0
  %180 = vmatmul.mubr.bf16.gmra.mrb[0].mxu0 %v78
  %v181 = vpop.f32.mrb[0].mxu0
  %v182 = vadd.f32 %v49, %v181
  %v183 = vpop.f32.mrb[0].mxu0
  %v184 = vpop.f32.mrb[0].mxu0
  %v185 = vadd.f32 %v49, %v184
  %v186 = vpop.f32.mrb[0].mxu0
  %187 = vmatprep.mubr.bf16.mxu0 0
  %188 = vmatmul.mubr.bf16.gmra.mrb[0].mxu0 %v79
  %v189 = vpop.f32.mrb[0].mxu0
  %v190 = vadd.f32 %v49, %v189
  %v191 = vpop.f32.mrb[0].mxu0
  %v192 = vpop.f32.mrb[0].mxu0
  %v193 = vadd.f32 %v49, %v192
  %v194 = vpop.f32.mrb[0].mxu0
  %195 = vmatprep.mubr.bf16.mxu0 0
  %196 = vmatmul.mubr.bf16.gmra.mrb[0].mxu0 %v80
  %v197 = vpop.f32.mrb[0].mxu0
  %v198 = vadd.f32 %v49, %v197
  %v199 = vpop.f32.mrb[0].mxu0
  %v200 = vpop.f32.mrb[0].mxu0
  %v201 = vadd.f32 %v49, %v200
  %v202 = vpop.f32.mrb[0].mxu0
  %203 = vmatprep.mubr.bf16.mxu0 0
  %204 = vmatmul.mubr.bf16.gmra.mrb[0].mxu0 %v81
  %v205 = vpop.f32.mrb[0].mxu0
  %v206 = vadd.f32 %v49, %v205
  %v207 = vpop.f32.mrb[0].mxu0
  %v208 = vpop.f32.mrb[0].mxu0
  %v209 = vadd.f32 %v49, %v208
  %v210 = vpop.f32.mrb[0].mxu0
  %211 = vmatprep.mubr.bf16.mxu0 0
  %212 = vmatmul.mubr.bf16.gmra.mrb[0].mxu0 %v82
  %v213 = vpop.f32.mrb[0].mxu0
  %v214 = vadd.f32 %v49, %v213
  %v215 = vpop.f32.mrb[0].mxu0
  %v216 = vpop.f32.mrb[0].mxu0
  %v217 = vadd.f32 %v49, %v216
  %v218 = vpop.f32.mrb[0].mxu0
  %219 = vmatprep.mubr.bf16.mxu0 0
  %220 = vmatmul.mubr.bf16.gmra.mrb[0].mxu0 %v83
  %v221 = vpop.f32.mrb[0].mxu0
  %v222 = vadd.f32 %v49, %v221
  %v223 = vpop.f32.mrb[0].mxu0
  %v224 = vpop.f32.mrb[0].mxu0
  %v225 = vpop.f32.mrb[0].mxu0
  %226 = vdwg.mxu0
  %227 = vst [vmem:[%s3] sm:$0xff] %v174
  %228 = vst [vmem:[%s3 + $0x8] sm:$0xff] %v177
  %229 = vst [vmem:[%s3 + $0x10] sm:$0xff] %v182
  %230 = vst [vmem:[%s3 + $0x18] sm:$0xff] %v185
  %231 = vst [vmem:[%s3 + $0x20] sm:$0xff] %v190
  %232 = vst [vmem:[%s3 + $0x28] sm:$0xff] %v193
  %233 = vst [vmem:[%s3 + $0x30] sm:$0xff] %v198
  %234 = vst [vmem:[%s3 + $0x38] sm:$0xff] %v201
  %235 = vst [vmem:[%s3 + $0x40] sm:$0xff] %v206
  %236 = vst [vmem:[%s3 + $0x48] sm:$0xff] %v209
  %237 = vst [vmem:[%s3 + $0x50] sm:$0xff] %v214
  %238 = vst [vmem:[%s3 + $0x58] sm:$0xff] %v217
  %239 = vst [vmem:[%s3 + $0x60] sm:$0xff] %v222
  // Predicated region
  $region14: #{forward.31} parent=0 // pred_check
    _
  $region15: #{forward.31} parent=0 // pred_check_branch
    %241 = sbr.rel (0) target = $region17
  $region16: #{forward.31} parent=0 // pred_region
    _
  $region17: #{forward.31} parent=0 // pred_fallthru
    _
  // Predicated region
  $region18: #{forward.31} parent=0 // pred_check
    _
  $region19: #{forward.31} parent=0 // pred_check_branch
    %243 = sbr.rel (0) target = $region21
  $region20: #{forward.31} parent=0 // pred_region
    _
  $region21: #{forward.31} parent=0 // pred_fallthru
    _

</llo_original>
